<compile_context>
chip_gen: v6e
topology: v6e:2x2x1
jax: 0.10.0
libtpu: 0.0.40
codegen_flags: <defaults>
</compile_context>

<pallas_src>
import math

import jax
import jax.numpy as jnp
from jax import lax
from jax.experimental import pallas as pl
from jax.experimental.pallas import tpu as pltpu


def _round_up(x, m):
    return ((x + m - 1) // m) * m


# ----------------------------------------------------------------------------
# Fused bidirectional-LSTM + MLP-head forward.
# ----------------------------------------------------------------------------
def text_classifier_forward(x_note, kp, *, time_block=64, num_batch_chunks=1):
    """x_note: (B, T, D) float32. Returns logits (B, Y). Eval mode (dropout=id).

    num_batch_chunks: set to 2 on v7x to shard the recurrence across the two
    TensorCores (leading "parallel" grid axis); keep 1 on single-TC chips.
    """
    B, T, D = x_note.shape
    Y = kp["Y"]
    Hp, Dp, Ep, Yp = kp["Hp"], kp["Dp"], kp["Ep"], kp["Yp"]
    G4, G8 = 4 * Hp, 8 * Hp

    P = num_batch_chunks
    Bp = _round_up(B, 8 * P)
    Bc = Bp // P                            # per-chunk batch rows (multiple of 8)

    TB = min(time_block, _round_up(T, 8))   # fixed time block; remainder masked
    nblk = pl.cdiv(T, TB)
    Tp = nblk * TB

    # (P, Tp*Bc, Dp) bf16, chunk-major then time-major: row t*Bc + j of chunk p
    # holds batch index p*Bc + j at time t.  Feature dim zero-padded to Dp.
    x_pad = jnp.zeros((Bp, Tp, Dp), jnp.bfloat16)
    x_pad = x_pad.at[:B, :T, :D].set(x_note.astype(jnp.bfloat16))
    x_chunks = (x_pad.reshape(P, Bc, Tp, Dp)
                     .transpose(0, 2, 1, 3)
                     .reshape(P, Tp * Bc, Dp))

    def kernel(xf_ref, xb_ref, wih_ref, b_ref, whh_ref,
               w1_ref, b1_ref, w2_ref, b2_ref, out_ref,
               gf_scr, gb_scr, h_scr, c_scr):
        tb = pl.program_id(1)               # time-block index ("arbitrary" axis)

        @pl.when(tb == 0)
        def _init():
            h_scr[...] = jnp.zeros_like(h_scr)      # rows [:Bc]=fwd, [Bc:]=bwd
            c_scr[...] = jnp.zeros_like(c_scr)
            out_ref[...] = jnp.zeros_like(out_ref)  # avoid undefined writeback

        # --- per-block input projection: bf16 MXU, f32 accumulation ---------
        gf_scr[...] = (jnp.dot(xf_ref[...], wih_ref[:, :G4],
                               preferred_element_type=jnp.float32)
                       + b_ref[:, :G4]).reshape(TB, Bc, G4)
        gb_scr[...] = (jnp.dot(xb_ref[...], wih_ref[:, G4:],
                               preferred_element_type=jnp.float32)
                       + b_ref[:, G4:]).reshape(TB, Bc, G4)

        row_is_fwd = lax.broadcasted_iota(jnp.int32, (2 * Bc, 1), 0) < Bc

        def step(k, carry):
            h, c = carry                                        # (2Bc, Hp) f32
            # One combined fwd+bwd hidden matmul.  whh is read inside the loop
            # so the (Hp, 8Hp) weight is not held in vregs across the unroll.
            g_hh = jnp.dot(h.astype(jnp.bfloat16), whh_ref[...],
                           preferred_element_type=jnp.float32)  # (2Bc, 8Hp)
            g_in = jnp.concatenate([gf_scr[k], gb_scr[TB - 1 - k]], axis=0)
            gates = g_in + jnp.where(row_is_fwd, g_hh[:, :G4], g_hh[:, G4:])
            # Gate order [i, f, o, g]: one contiguous sigmoid + one tanh.
            sg = jax.nn.sigmoid(gates[:, :3 * Hp])
            gg = jnp.tanh(gates[:, 3 * Hp:])
            c_new = sg[:, Hp:2 * Hp] * c + sg[:, :Hp] * gg
            h_new = sg[:, 2 * Hp:] * jnp.tanh(c_new)
            if Tp != T:                     # static: mask padded time steps only
                t_f = tb * TB + k
                t_b = (nblk - 1 - tb) * TB + (TB - 1 - k)
                valid = jnp.where(row_is_fwd, t_f < T, t_b < T)
                h_new = jnp.where(valid, h_new, h)
                c_new = jnp.where(valid, c_new, c)
            return h_new, c_new

        h, c = lax.fori_loop(0, TB, step, (h_scr[...], c_scr[...]),
                             unroll=True if TB <= 32 else 8)
        h_scr[...] = h
        c_scr[...] = c

        @pl.when(tb == nblk - 1)
        def _head():
            # z = concat(h_n[0], h_n[1]); dropout is identity in eval mode.
            z = jnp.concatenate([h[:Bc], h[Bc:]], axis=-1)          # (Bc, 2Hp)
            hid = jnp.tanh(
                jnp.dot(z.astype(jnp.bfloat16), w1_ref[...],
                        preferred_element_type=jnp.float32) + b1_ref[...])
            logits = (jnp.dot(hid.astype(jnp.bfloat16), w2_ref[...],
                              preferred_element_type=jnp.float32) + b2_ref[...])
            out_ref[...] = logits.astype(out_ref.dtype)

    def build(resident_mode):
        def resident(shape):
            kw = {} if resident_mode is None else {"pipeline_mode": resident_mode}
            return pl.BlockSpec(shape, lambda p, b: (0,) * len(shape), **kw)

        grid_spec = pltpu.PrefetchScalarGridSpec(
            num_scalar_prefetch=0,
            grid=(P, nblk),
            in_specs=[
                pl.BlockSpec((None, TB * Bc, Dp), lambda p, b: (p, b, 0)),
                pl.BlockSpec((None, TB * Bc, Dp),
                             lambda p, b: (p, nblk - 1 - b, 0)),
                resident((Dp, G8)),        # [W_ih_f | W_ih_b]   bf16
                resident((1, G8)),         # folded biases        f32
                resident((Hp, G8)),        # [W_hh_f | W_hh_b]   bf16
                resident((2 * Hp, Ep)),    # fc1 weight           bf16
                resident((1, Ep)),         # fc1 bias             f32
                resident((Ep, Yp)),        # fc2 weight           bf16
                resident((1, Yp)),         # fc2 bias             f32
            ],
            out_specs=pl.BlockSpec((Bc, Yp), lambda p, b: (p, 0)),
            scratch_shapes=[
                pltpu.VMEM((TB, Bc, G4), jnp.float32),   # fwd input gates
                pltpu.VMEM((TB, Bc, G4), jnp.float32),   # bwd input gates
                pltpu.VMEM((2 * Bc, Hp), jnp.float32),   # h carries (fwd|bwd)
                pltpu.VMEM((2 * Bc, Hp), jnp.float32),   # c carries (fwd|bwd)
            ])
        return pl.pallas_call(
            kernel,
            out_shape=jax.ShapeDtypeStruct((Bp, Yp), jnp.float32),
            grid_spec=grid_spec,
            compiler_params=pltpu.CompilerParams(
                dimension_semantics=("parallel", "arbitrary"),
                vmem_limit_bytes=48 * 1024 * 1024))

    args = (x_chunks, x_chunks, kp["w_ih_cat"], kp["b_cat"], kp["whh_cat"],
            kp["w1_p"], kp["b1_p"], kp["w2_p"], kp["b2_p"])

    resident_mode = pl.Buffered(1) if hasattr(pl, "Buffered") else None
    try:
        out = build(resident_mode)(*args)
        jax.block_until_ready(out)
    except Exception:
        # Fallback: default double-buffered resident weights (VMEM cost only).
        out = build(None)(*args)

    return out[:B, :Y]


# ----------------------------------------------------------------------------
# Parameter construction (PyTorch layout) + padded / fused kernel layout.
# ----------------------------------------------------------------------------
def init_raw_params(key, input_size, hidden_size, Y):
    """PyTorch-style uniform(-1/sqrt(fan), 1/sqrt(fan)) init, torch layouts."""
    H, D = hidden_size, input_size
    E = 2 * H
    k = 1.0 / math.sqrt(H)
    k1 = 1.0 / math.sqrt(E)
    ks = jax.random.split(key, 12)
    u = lambda kk, shape, s: jax.random.uniform(kk, shape, jnp.float32, -s, s)
    return {
        "w_ih_f": u(ks[0], (4 * H, D), k), "w_hh_f": u(ks[1], (4 * H, H), k),
        "b_ih_f": u(ks[2], (4 * H,), k),   "b_hh_f": u(ks[3], (4 * H,), k),
        "w_ih_b": u(ks[4], (4 * H, D), k), "w_hh_b": u(ks[5], (4 * H, H), k),
        "b_ih_b": u(ks[6], (4 * H,), k),   "b_hh_b": u(ks[7], (4 * H,), k),
        "w1": u(ks[8], (E, E), k1), "b1": u(ks[9], (E,), k1),
        "w2": u(ks[10], (Y, E), k1), "b2": u(ks[11], (Y,), k1),
    }


def prepare_kernel_params(raw):
    H = raw["w_hh_f"].shape[1]
    D = raw["w_ih_f"].shape[1]
    Y = raw["w2"].shape[0]
    E = 2 * H
    Hp = _round_up(H, 128)     # each gate lane-aligned to 128
    Dp = _round_up(D, 128)     # MXU K / lane alignment of the x block
    Ep = _round_up(E, 128)
    Yp = _round_up(Y, 128)

    GATE_ORDER = (0, 1, 3, 2)  # torch [i, f, g, o] -> kernel [i, f, o, g]

    def reorder_pad_cols(w_t):               # (rows, 4H) -> (rows, 4Hp)
        parts = [jnp.pad(w_t[:, g * H:(g + 1) * H], ((0, 0), (0, Hp - H)))
                 for g in GATE_ORDER]
        return jnp.concatenate(parts, axis=-1)

    def prep_w_ih(w):                        # torch (4H, D) -> (Dp, 4Hp)
        return jnp.pad(reorder_pad_cols(w.T), ((0, Dp - D), (0, 0)))

    def prep_w_hh(w):                        # torch (4H, H) -> (Hp, 4Hp)
        return jnp.pad(reorder_pad_cols(w.T), ((0, Hp - H), (0, 0)))

    def prep_bias(b_ih, b_hh):               # fold both biases -> (1, 4Hp)
        return reorder_pad_cols((b_ih + b_hh)[None, :])

    w_ih_cat = jnp.concatenate([prep_w_ih(raw["w_ih_f"]),
                                prep_w_ih(raw["w_ih_b"])],
                               axis=-1).astype(jnp.bfloat16)       # (Dp, 8Hp)
    b_cat = jnp.concatenate([prep_bias(raw["b_ih_f"], raw["b_hh_f"]),
                             prep_bias(raw["b_ih_b"], raw["b_hh_b"])],
                            axis=-1).astype(jnp.float32)           # (1, 8Hp)
    whh_cat = jnp.concatenate([prep_w_hh(raw["w_hh_f"]),
                               prep_w_hh(raw["w_hh_b"])],
                              axis=-1).astype(jnp.bfloat16)        # (Hp, 8Hp)

    w1_t = raw["w1"].T                                             # (2H, E)
    w1_p = jnp.zeros((2 * Hp, Ep), jnp.float32)
    w1_p = w1_p.at[:H, :E].set(w1_t[:H]).at[Hp:Hp + H, :E].set(w1_t[H:])
    w1_p = w1_p.astype(jnp.bfloat16)
    b1_p = jnp.zeros((1, Ep), jnp.float32).at[0, :E].set(raw["b1"])
    w2_p = (jnp.zeros((Ep, Yp), jnp.float32)
            .at[:E, :Y].set(raw["w2"].T).astype(jnp.bfloat16))
    b2_p = jnp.zeros((1, Yp), jnp.float32).at[0, :Y].set(raw["b2"])

    return dict(H=H, D=D, Y=Y, Hp=Hp, Dp=Dp, Ep=Ep, Yp=Yp,
                w_ih_cat=w_ih_cat, b_cat=b_cat, whh_cat=whh_cat,
                w1_p=w1_p, b1_p=b1_p, w2_p=w2_p, b2_p=b2_p)


# ----------------------------------------------------------------------------
# Pure-JAX reference (mirrors the PyTorch module) for a sanity check.
# ----------------------------------------------------------------------------
def reference_forward(x_note, raw):
    B, T, _ = x_note.shape
    H = raw["w_hh_f"].shape[1]

    def run_dir(w_ih, w_hh, b_ih, b_hh, reverse):
        h = jnp.zeros((B, H), jnp.float32)
        c = jnp.zeros((B, H), jnp.float32)
        ts = range(T - 1, -1, -1) if reverse else range(T)
        for t in ts:
            x_t = x_note[:, t, :]
            gates = x_t @ w_ih.T + b_ih + h @ w_hh.T + b_hh
            i = jax.nn.sigmoid(gates[:, 0:H])
            f = jax.nn.sigmoid(gates[:, H:2 * H])
            g = jnp.tanh(gates[:, 2 * H:3 * H])
            o = jax.nn.sigmoid(gates[:, 3 * H:4 * H])
            c = f * c + i * g
            h = o * jnp.tanh(c)
        return h

    hf = run_dir(raw["w_ih_f"], raw["w_hh_f"], raw["b_ih_f"], raw["b_hh_f"], False)
    hb = run_dir(raw["w_ih_b"], raw["w_hh_b"], raw["b_ih_b"], raw["b_hh_b"], True)
    z = jnp.concatenate([hf, hb], axis=-1)
    hid = jnp.tanh(z @ raw["w1"].T + raw["b1"])
    return hid @ raw["w2"].T + raw["b2"]


if __name__ == "__main__":
    B, T, D, H, Y = 2, 8, 16, 32, 5
    key = jax.random.PRNGKey(0)
    k_x, k_p = jax.random.split(key)
    x_note = jax.random.normal(k_x, (B, T, D), jnp.float32)

    raw = init_raw_params(k_p, input_size=D, hidden_size=H, Y=Y)
    kparams = prepare_kernel_params(raw)

    logits = text_classifier_forward(x_note, kparams)
    jax.block_until_ready(logits)
    assert logits.shape == (B, Y)

    ref = reference_forward(x_note, raw)
    # bf16 MXU inputs with f32 accumulation -> allow a few e-2 absolute error.
    err = float(jnp.max(jnp.abs(logits - ref)))
    assert err < 5e-2, f"kernel deviates from reference by {err}"

    # Also exercise the multi-time-block + remainder-masking path (T % TB != 0).
    T2 = 12
    x2 = jax.random.normal(jax.random.fold_in(k_x, 1), (B, T2, D), jnp.float32)
    logits2 = text_classifier_forward(x2, kparams, time_block=8)
    jax.block_until_ready(logits2)
    ref2 = reference_forward(x2, raw)
    err2 = float(jnp.max(jnp.abs(logits2 - ref2)))
    assert err2 < 5e-2, f"multi-block path deviates from reference by {err2}"

    print("KERNEL_OK")
</pallas_src>

<mosaic_0001>
module attributes {stable_mosaic.version = 11 : i64} {
  func.func @kernel(%arg0: i32, %arg1: i32, %arg2: memref<1x64x128xbf16, #tpu.memory_space<vmem>>, %arg3: memref<1x64x128xbf16, #tpu.memory_space<vmem>>, %arg4: memref<128x1024xbf16, #tpu.memory_space<vmem>>, %arg5: memref<1x1024xf32, #tpu.memory_space<vmem>>, %arg6: memref<128x1024xbf16, #tpu.memory_space<vmem>>, %arg7: memref<256x128xbf16, #tpu.memory_space<vmem>>, %arg8: memref<1x128xf32, #tpu.memory_space<vmem>>, %arg9: memref<128x128xbf16, #tpu.memory_space<vmem>>, %arg10: memref<1x128xf32, #tpu.memory_space<vmem>>, %arg11: memref<8x128xf32, #tpu.memory_space<vmem>>, %arg12: memref<8x8x512xf32, #tpu.memory_space<vmem>>, %arg13: memref<8x8x512xf32, #tpu.memory_space<vmem>>, %arg14: memref<16x128xf32, #tpu.memory_space<vmem>>, %arg15: memref<16x128xf32, #tpu.memory_space<vmem>>) attributes {dimension_semantics = [#tpu.dimension_semantics<parallel>, #tpu.dimension_semantics<arbitrary>], iteration_bounds = array<i64: 1, 1>, scalar_prefetch = 0 : i64, scratch_operands = 4 : i64, tpu.core_type = #tpu.core_type<tc>, window_params = [{transform_indices = @transform_0, window_bounds = array<i64: 1, 64, 128>}, {transform_indices = @transform_1, window_bounds = array<i64: 1, 64, 128>}, {pipeline_mode = #tpu.pipeline_mode<synchronous>, transform_indices = @transform_2, window_bounds = array<i64: 128, 1024>}, {pipeline_mode = #tpu.pipeline_mode<synchronous>, transform_indices = @transform_3, window_bounds = array<i64: 1, 1024>}, {pipeline_mode = #tpu.pipeline_mode<synchronous>, transform_indices = @transform_4, window_bounds = array<i64: 128, 1024>}, {pipeline_mode = #tpu.pipeline_mode<synchronous>, transform_indices = @transform_5, window_bounds = array<i64: 256, 128>}, {pipeline_mode = #tpu.pipeline_mode<synchronous>, transform_indices = @transform_6, window_bounds = array<i64: 1, 128>}, {pipeline_mode = #tpu.pipeline_mode<synchronous>, transform_indices = @transform_7, window_bounds = array<i64: 128, 128>}, {pipeline_mode = #tpu.pipeline_mode<synchronous>, transform_indices = @transform_8, window_bounds = array<i64: 1, 128>}, {transform_indices = @transform_9, window_bounds = array<i64: 8, 128>}]} {
    %c0_i32 = arith.constant 0 : i32
    %0 = arith.cmpi eq, %arg1, %c0_i32 : i32
    %1 = arith.extui %0 : i1 to i32
    %c0_i32_0 = arith.constant 0 : i32
    %2 = arith.cmpi ne, %1, %c0_i32_0 : i32
    scf.if %2 {
      %cst_104 = arith.constant 0.000000e+00 : f32
      %295 = vector.broadcast %cst_104 : f32 to vector<16x128xf32>
      %c0_105 = arith.constant 0 : index
      %c0_106 = arith.constant 0 : index
      %296 = vector.load %arg14[%c0_105, %c0_106] : memref<16x128xf32, #tpu.memory_space<vmem>>, vector<16x128xf32>
      tpu.vector_store %arg14[%c0_105, %c0_106], %295 {strides = array<i32>} : memref<16x128xf32, #tpu.memory_space<vmem>>, vector<16x128xf32>,
      %cst_107 = arith.constant 0.000000e+00 : f32
      %297 = vector.broadcast %cst_107 : f32 to vector<16x128xf32>
      %c0_108 = arith.constant 0 : index
      %c0_109 = arith.constant 0 : index
      %298 = vector.load %arg15[%c0_108, %c0_109] : memref<16x128xf32, #tpu.memory_space<vmem>>, vector<16x128xf32>
      tpu.vector_store %arg15[%c0_108, %c0_109], %297 {strides = array<i32>} : memref<16x128xf32, #tpu.memory_space<vmem>>, vector<16x128xf32>,
      %cst_110 = arith.constant 0.000000e+00 : f32
      %299 = vector.broadcast %cst_110 : f32 to vector<8x128xf32>
      %c0_111 = arith.constant 0 : index
      %c0_112 = arith.constant 0 : index
      %300 = vector.load %arg11[%c0_111, %c0_112] : memref<8x128xf32, #tpu.memory_space<vmem>>, vector<8x128xf32>
      tpu.vector_store %arg11[%c0_111, %c0_112], %299 {strides = array<i32>} : memref<8x128xf32, #tpu.memory_space<vmem>>, vector<8x128xf32>,
    } else {
    }
    %c0 = arith.constant 0 : index
    %c0_1 = arith.constant 0 : index
    %c0_2 = arith.constant 0 : index
    %3 = vector.load %arg2[%c0, %c0_1, %c0_2] : memref<1x64x128xbf16, #tpu.memory_space<vmem>>, vector<1x64x128xbf16>
    %4 = vector.shape_cast %3 : vector<1x64x128xbf16> to vector<64x128xbf16>
    %c0_3 = arith.constant 0 : index
    %c0_4 = arith.constant 0 : index
    %5 = vector.load %arg4[%c0_3, %c0_4] : memref<128x1024xbf16, #tpu.memory_space<vmem>>, vector<128x512xbf16>
    %cst = arith.constant dense<0.000000e+00> : vector<64x512xf32>
    %6 = tpu.matmul %4, %5, %cst {dimension_numbers = #tpu.dot_dimension_numbers<[1], [0], [0], [1], [0, 0, 1, 1], [], []>} : vector<64x128xbf16>, vector<128x512xbf16>, vector<64x512xf32> -> vector<64x512xf32>
    %c0_5 = arith.constant 0 : index
    %c0_6 = arith.constant 0 : index
    %7 = vector.load %arg5[%c0_5, %c0_6] : memref<1x1024xf32, #tpu.memory_space<vmem>>, vector<1x512xf32>
    %8 = vector.broadcast %7 : vector<1x512xf32> to vector<64x512xf32>
    %9 = arith.addf %6, %8 : vector<64x512xf32>
    %10 = vector.shape_cast %9 : vector<64x512xf32> to vector<8x8x512xf32>
    %c0_7 = arith.constant 0 : index
    %c0_8 = arith.constant 0 : index
    %c0_9 = arith.constant 0 : index
    %11 = vector.load %arg12[%c0_7, %c0_8, %c0_9] : memref<8x8x512xf32, #tpu.memory_space<vmem>>, vector<8x8x512xf32>
    tpu.vector_store %arg12[%c0_7, %c0_8, %c0_9], %10 {strides = array<i32>} : memref<8x8x512xf32, #tpu.memory_space<vmem>>, vector<8x8x512xf32>,
    %c0_10 = arith.constant 0 : index
    %c0_11 = arith.constant 0 : index
    %c0_12 = arith.constant 0 : index
    %12 = vector.load %arg3[%c0_10, %c0_11, %c0_12] : memref<1x64x128xbf16, #tpu.memory_space<vmem>>, vector<1x64x128xbf16>
    %13 = vector.shape_cast %12 : vector<1x64x128xbf16> to vector<64x128xbf16>
    %c0_13 = arith.constant 0 : index
    %c512 = arith.constant 512 : index
    %14 = vector.load %arg4[%c0_13, %c512] : memref<128x1024xbf16, #tpu.memory_space<vmem>>, vector<128x512xbf16>
    %cst_14 = arith.constant dense<0.000000e+00> : vector<64x512xf32>
    %15 = tpu.matmul %13, %14, %cst_14 {dimension_numbers = #tpu.dot_dimension_numbers<[1], [0], [0], [1], [0, 0, 1, 1], [], []>} : vector<64x128xbf16>, vector<128x512xbf16>, vector<64x512xf32> -> vector<64x512xf32>
    %c0_15 = arith.constant 0 : index
    %c512_16 = arith.constant 512 : index
    %16 = vector.load %arg5[%c0_15, %c512_16] : memref<1x1024xf32, #tpu.memory_space<vmem>>, vector<1x512xf32>
    %17 = vector.broadcast %16 : vector<1x512xf32> to vector<64x512xf32>
    %18 = arith.addf %15, %17 : vector<64x512xf32>
    %19 = vector.shape_cast %18 : vector<64x512xf32> to vector<8x8x512xf32>
    %c0_17 = arith.constant 0 : index
    %c0_18 = arith.constant 0 : index
    %c0_19 = arith.constant 0 : index
    %20 = vector.load %arg13[%c0_17, %c0_18, %c0_19] : memref<8x8x512xf32, #tpu.memory_space<vmem>>, vector<8x8x512xf32>
    tpu.vector_store %arg13[%c0_17, %c0_18, %c0_19], %19 {strides = array<i32>} : memref<8x8x512xf32, #tpu.memory_space<vmem>>, vector<8x8x512xf32>,
    %21 = tpu.iota {dimensions = array<i32: 0>} : vector<16x1xi32>
    %c8_i32 = arith.constant 8 : i32
    %22 = vector.broadcast %c8_i32 : i32 to vector<16x1xi32>
    %23 = arith.cmpi slt, %21, %22 : vector<16x1xi32>
    %c0_20 = arith.constant 0 : index
    %c0_21 = arith.constant 0 : index
    %24 = vector.load %arg14[%c0_20, %c0_21] : memref<16x128xf32, #tpu.memory_space<vmem>>, vector<16x128xf32>
    %c0_22 = arith.constant 0 : index
    %c0_23 = arith.constant 0 : index
    %25 = vector.load %arg15[%c0_22, %c0_23] : memref<16x128xf32, #tpu.memory_space<vmem>>, vector<16x128xf32>
    %c0_i32_24 = arith.constant 0 : i32
    %26 = arith.truncf %24 : vector<16x128xf32> to vector<16x128xbf16>
    %c0_25 = arith.constant 0 : index
    %c0_26 = arith.constant 0 : index
    %27 = vector.load %arg6[%c0_25, %c0_26] : memref<128x1024xbf16, #tpu.memory_space<vmem>>, vector<128x1024xbf16>
    %cst_27 = arith.constant dense<0.000000e+00> : vector<16x1024xf32>
    %28 = tpu.matmul %26, %27, %cst_27 {dimension_numbers = #tpu.dot_dimension_numbers<[1], [0], [0], [1], [0, 0, 1, 1], [], []>} : vector<16x128xbf16>, vector<128x1024xbf16>, vector<16x1024xf32> -> vector<16x1024xf32>
    %29 = arith.index_cast %c0_i32_24 : i32 to index
    %c0_28 = arith.constant 0 : index
    %c0_29 = arith.constant 0 : index
    %30 = vector.load %arg12[%29, %c0_28, %c0_29] : memref<8x8x512xf32, #tpu.memory_space<vmem>>, vector<1x8x512xf32>
    %31 = vector.shape_cast %30 : vector<1x8x512xf32> to vector<8x512xf32>
    %c7_i32 = arith.constant 7 : i32
    %32 = arith.subi %c7_i32, %c0_i32_24 : i32
    %33 = arith.index_cast %32 : i32 to index
    %c0_30 = arith.constant 0 : index
    %c0_31 = arith.constant 0 : index
    %34 = vector.load %arg13[%33, %c0_30, %c0_31] : memref<8x8x512xf32, #tpu.memory_space<vmem>>, vector<1x8x512xf32>
    %35 = vector.shape_cast %34 : vector<1x8x512xf32> to vector<8x512xf32>
    %36 = tpu.concatenate %31, %35 in 0 : vector<8x512xf32>, vector<8x512xf32> -> vector<16x512xf32>
    %37 = vector.extract_strided_slice %28 {offsets = [0, 0], sizes = [16, 512], strides = [1, 1]} : vector<16x1024xf32> to vector<16x512xf32>
    %38 = vector.extract_strided_slice %28 {offsets = [0, 512], sizes = [16, 512], strides = [1, 1]} : vector<16x1024xf32> to vector<16x512xf32>
    %39 = vector.shape_cast %23 : vector<16x1xi1> to vector<16x1xi1>
    %40 = vector.broadcast %39 : vector<16x1xi1> to vector<16x512xi1>
    %41 = arith.select %40, %37, %38 : vector<16x512xi1>, vector<16x512xf32>
    %42 = arith.addf %36, %41 : vector<16x512xf32>
    %43 = vector.extract_strided_slice %42 {offsets = [0, 0], sizes = [16, 384], strides = [1, 1]} : vector<16x512xf32> to vector<16x384xf32>
    %44 = arith.negf %43 : vector<16x384xf32>
    %45 = math.exp %44 : vector<16x384xf32>
    %cst_32 = arith.constant 1.000000e+00 : f32
    %46 = vector.broadcast %cst_32 : f32 to vector<16x384xf32>
    %47 = arith.addf %46, %45 : vector<16x384xf32>
    %48 = arith.divf %46, %47 : vector<16x384xf32>
    %49 = vector.extract_strided_slice %42 {offsets = [0, 384], sizes = [16, 128], strides = [1, 1]} : vector<16x512xf32> to vector<16x128xf32>
    %50 = math.tanh %49 : vector<16x128xf32>
    %51 = vector.extract_strided_slice %48 {offsets = [0, 128], sizes = [16, 128], strides = [1, 1]} : vector<16x384xf32> to vector<16x128xf32>
    %52 = arith.mulf %51, %25 : vector<16x128xf32>
    %53 = vector.extract_strided_slice %48 {offsets = [0, 0], sizes = [16, 128], strides = [1, 1]} : vector<16x384xf32> to vector<16x128xf32>
    %54 = arith.mulf %53, %50 : vector<16x128xf32>
    %55 = arith.addf %52, %54 : vector<16x128xf32>
    %56 = vector.extract_strided_slice %48 {offsets = [0, 256], sizes = [16, 128], strides = [1, 1]} : vector<16x384xf32> to vector<16x128xf32>
    %57 = math.tanh %55 : vector<16x128xf32>
    %58 = arith.mulf %56, %57 : vector<16x128xf32>
    %c1_i32 = arith.constant 1 : i32
    %59 = arith.truncf %58 : vector<16x128xf32> to vector<16x128xbf16>
    %c0_33 = arith.constant 0 : index
    %c0_34 = arith.constant 0 : index
    %60 = vector.load %arg6[%c0_33, %c0_34] : memref<128x1024xbf16, #tpu.memory_space<vmem>>, vector<128x1024xbf16>
    %cst_35 = arith.constant dense<0.000000e+00> : vector<16x1024xf32>
    %61 = tpu.matmul %59, %60, %cst_35 {dimension_numbers = #tpu.dot_dimension_numbers<[1], [0], [0], [1], [0, 0, 1, 1], [], []>} : vector<16x128xbf16>, vector<128x1024xbf16>, vector<16x1024xf32> -> vector<16x1024xf32>
    %62 = arith.index_cast %c1_i32 : i32 to index
    %c0_36 = arith.constant 0 : index
    %c0_37 = arith.constant 0 : index
    %63 = vector.load %arg12[%62, %c0_36, %c0_37] : memref<8x8x512xf32, #tpu.memory_space<vmem>>, vector<1x8x512xf32>
    %64 = vector.shape_cast %63 : vector<1x8x512xf32> to vector<8x512xf32>
    %c7_i32_38 = arith.constant 7 : i32
    %65 = arith.subi %c7_i32_38, %c1_i32 : i32
    %66 = arith.index_cast %65 : i32 to index
    %c0_39 = arith.constant 0 : index
    %c0_40 = arith.constant 0 : index
    %67 = vector.load %arg13[%66, %c0_39, %c0_40] : memref<8x8x512xf32, #tpu.memory_space<vmem>>, vector<1x8x512xf32>
    %68 = vector.shape_cast %67 : vector<1x8x512xf32> to vector<8x512xf32>
    %69 = tpu.concatenate %64, %68 in 0 : vector<8x512xf32>, vector<8x512xf32> -> vector<16x512xf32>
    %70 = vector.extract_strided_slice %61 {offsets = [0, 0], sizes = [16, 512], strides = [1, 1]} : vector<16x1024xf32> to vector<16x512xf32>
    %71 = vector.extract_strided_slice %61 {offsets = [0, 512], sizes = [16, 512], strides = [1, 1]} : vector<16x1024xf32> to vector<16x512xf32>
    %72 = vector.shape_cast %23 : vector<16x1xi1> to vector<16x1xi1>
    %73 = vector.broadcast %72 : vector<16x1xi1> to vector<16x512xi1>
    %74 = arith.select %73, %70, %71 : vector<16x512xi1>, vector<16x512xf32>
    %75 = arith.addf %69, %74 : vector<16x512xf32>
    %76 = vector.extract_strided_slice %75 {offsets = [0, 0], sizes = [16, 384], strides = [1, 1]} : vector<16x512xf32> to vector<16x384xf32>
    %77 = arith.negf %76 : vector<16x384xf32>
    %78 = math.exp %77 : vector<16x384xf32>
    %cst_41 = arith.constant 1.000000e+00 : f32
    %79 = vector.broadcast %cst_41 : f32 to vector<16x384xf32>
    %80 = arith.addf %79, %78 : vector<16x384xf32>
    %81 = arith.divf %79, %80 : vector<16x384xf32>
    %82 = vector.extract_strided_slice %75 {offsets = [0, 384], sizes = [16, 128], strides = [1, 1]} : vector<16x512xf32> to vector<16x128xf32>
    %83 = math.tanh %82 : vector<16x128xf32>
    %84 = vector.extract_strided_slice %81 {offsets = [0, 128], sizes = [16, 128], strides = [1, 1]} : vector<16x384xf32> to vector<16x128xf32>
    %85 = arith.mulf %84, %55 : vector<16x128xf32>
    %86 = vector.extract_strided_slice %81 {offsets = [0, 0], sizes = [16, 128], strides = [1, 1]} : vector<16x384xf32> to vector<16x128xf32>
    %87 = arith.mulf %86, %83 : vector<16x128xf32>
    %88 = arith.addf %85, %87 : vector<16x128xf32>
    %89 = vector.extract_strided_slice %81 {offsets = [0, 256], sizes = [16, 128], strides = [1, 1]} : vector<16x384xf32> to vector<16x128xf32>
    %90 = math.tanh %88 : vector<16x128xf32>
    %91 = arith.mulf %89, %90 : vector<16x128xf32>
    %c2_i32 = arith.constant 2 : i32
    %92 = arith.truncf %91 : vector<16x128xf32> to vector<16x128xbf16>
    %c0_42 = arith.constant 0 : index
    %c0_43 = arith.constant 0 : index
    %93 = vector.load %arg6[%c0_42, %c0_43] : memref<128x1024xbf16, #tpu.memory_space<vmem>>, vector<128x1024xbf16>
    %cst_44 = arith.constant dense<0.000000e+00> : vector<16x1024xf32>
    %94 = tpu.matmul %92, %93, %cst_44 {dimension_numbers = #tpu.dot_dimension_numbers<[1], [0], [0], [1], [0, 0, 1, 1], [], []>} : vector<16x128xbf16>, vector<128x1024xbf16>, vector<16x1024xf32> -> vector<16x1024xf32>
    %95 = arith.index_cast %c2_i32 : i32 to index
    %c0_45 = arith.constant 0 : index
    %c0_46 = arith.constant 0 : index
    %96 = vector.load %arg12[%95, %c0_45, %c0_46] : memref<8x8x512xf32, #tpu.memory_space<vmem>>, vector<1x8x512xf32>
    %97 = vector.shape_cast %96 : vector<1x8x512xf32> to vector<8x512xf32>
    %c7_i32_47 = arith.constant 7 : i32
    %98 = arith.subi %c7_i32_47, %c2_i32 : i32
    %99 = arith.index_cast %98 : i32 to index
    %c0_48 = arith.constant 0 : index
    %c0_49 = arith.constant 0 : index
    %100 = vector.load %arg13[%99, %c0_48, %c0_49] : memref<8x8x512xf32, #tpu.memory_space<vmem>>, vector<1x8x512xf32>
    %101 = vector.shape_cast %100 : vector<1x8x512xf32> to vector<8x512xf32>
    %102 = tpu.concatenate %97, %101 in 0 : vector<8x512xf32>, vector<8x512xf32> -> vector<16x512xf32>
    %103 = vector.extract_strided_slice %94 {offsets = [0, 0], sizes = [16, 512], strides = [1, 1]} : vector<16x1024xf32> to vector<16x512xf32>
    %104 = vector.extract_strided_slice %94 {offsets = [0, 512], sizes = [16, 512], strides = [1, 1]} : vector<16x1024xf32> to vector<16x512xf32>
    %105 = vector.shape_cast %23 : vector<16x1xi1> to vector<16x1xi1>
    %106 = vector.broadcast %105 : vector<16x1xi1> to vector<16x512xi1>
    %107 = arith.select %106, %103, %104 : vector<16x512xi1>, vector<16x512xf32>
    %108 = arith.addf %102, %107 : vector<16x512xf32>
    %109 = vector.extract_strided_slice %108 {offsets = [0, 0], sizes = [16, 384], strides = [1, 1]} : vector<16x512xf32> to vector<16x384xf32>
    %110 = arith.negf %109 : vector<16x384xf32>
    %111 = math.exp %110 : vector<16x384xf32>
    %cst_50 = arith.constant 1.000000e+00 : f32
    %112 = vector.broadcast %cst_50 : f32 to vector<16x384xf32>
    %113 = arith.addf %112, %111 : vector<16x384xf32>
    %114 = arith.divf %112, %113 : vector<16x384xf32>
    %115 = vector.extract_strided_slice %108 {offsets = [0, 384], sizes = [16, 128], strides = [1, 1]} : vector<16x512xf32> to vector<16x128xf32>
    %116 = math.tanh %115 : vector<16x128xf32>
    %117 = vector.extract_strided_slice %114 {offsets = [0, 128], sizes = [16, 128], strides = [1, 1]} : vector<16x384xf32> to vector<16x128xf32>
    %118 = arith.mulf %117, %88 : vector<16x128xf32>
    %119 = vector.extract_strided_slice %114 {offsets = [0, 0], sizes = [16, 128], strides = [1, 1]} : vector<16x384xf32> to vector<16x128xf32>
    %120 = arith.mulf %119, %116 : vector<16x128xf32>
    %121 = arith.addf %118, %120 : vector<16x128xf32>
    %122 = vector.extract_strided_slice %114 {offsets = [0, 256], sizes = [16, 128], strides = [1, 1]} : vector<16x384xf32> to vector<16x128xf32>
    %123 = math.tanh %121 : vector<16x128xf32>
    %124 = arith.mulf %122, %123 : vector<16x128xf32>
    %c3_i32 = arith.constant 3 : i32
    %125 = arith.truncf %124 : vector<16x128xf32> to vector<16x128xbf16>
    %c0_51 = arith.constant 0 : index
    %c0_52 = arith.constant 0 : index
    %126 = vector.load %arg6[%c0_51, %c0_52] : memref<128x1024xbf16, #tpu.memory_space<vmem>>, vector<128x1024xbf16>
    %cst_53 = arith.constant dense<0.000000e+00> : vector<16x1024xf32>
    %127 = tpu.matmul %125, %126, %cst_53 {dimension_numbers = #tpu.dot_dimension_numbers<[1], [0], [0], [1], [0, 0, 1, 1], [], []>} : vector<16x128xbf16>, vector<128x1024xbf16>, vector<16x1024xf32> -> vector<16x1024xf32>
    %128 = arith.index_cast %c3_i32 : i32 to index
    %c0_54 = arith.constant 0 : index
    %c0_55 = arith.constant 0 : index
    %129 = vector.load %arg12[%128, %c0_54, %c0_55] : memref<8x8x512xf32, #tpu.memory_space<vmem>>, vector<1x8x512xf32>
    %130 = vector.shape_cast %129 : vector<1x8x512xf32> to vector<8x512xf32>
    %c7_i32_56 = arith.constant 7 : i32
    %131 = arith.subi %c7_i32_56, %c3_i32 : i32
    %132 = arith.index_cast %131 : i32 to index
    %c0_57 = arith.constant 0 : index
    %c0_58 = arith.constant 0 : index
    %133 = vector.load %arg13[%132, %c0_57, %c0_58] : memref<8x8x512xf32, #tpu.memory_space<vmem>>, vector<1x8x512xf32>
    %134 = vector.shape_cast %133 : vector<1x8x512xf32> to vector<8x512xf32>
    %135 = tpu.concatenate %130, %134 in 0 : vector<8x512xf32>, vector<8x512xf32> -> vector<16x512xf32>
    %136 = vector.extract_strided_slice %127 {offsets = [0, 0], sizes = [16, 512], strides = [1, 1]} : vector<16x1024xf32> to vector<16x512xf32>
    %137 = vector.extract_strided_slice %127 {offsets = [0, 512], sizes = [16, 512], strides = [1, 1]} : vector<16x1024xf32> to vector<16x512xf32>
    %138 = vector.shape_cast %23 : vector<16x1xi1> to vector<16x1xi1>
    %139 = vector.broadcast %138 : vector<16x1xi1> to vector<16x512xi1>
    %140 = arith.select %139, %136, %137 : vector<16x512xi1>, vector<16x512xf32>
    %141 = arith.addf %135, %140 : vector<16x512xf32>
    %142 = vector.extract_strided_slice %141 {offsets = [0, 0], sizes = [16, 384], strides = [1, 1]} : vector<16x512xf32> to vector<16x384xf32>
    %143 = arith.negf %142 : vector<16x384xf32>
    %144 = math.exp %143 : vector<16x384xf32>
    %cst_59 = arith.constant 1.000000e+00 : f32
    %145 = vector.broadcast %cst_59 : f32 to vector<16x384xf32>
    %146 = arith.addf %145, %144 : vector<16x384xf32>
    %147 = arith.divf %145, %146 : vector<16x384xf32>
    %148 = vector.extract_strided_slice %141 {offsets = [0, 384], sizes = [16, 128], strides = [1, 1]} : vector<16x512xf32> to vector<16x128xf32>
    %149 = math.tanh %148 : vector<16x128xf32>
    %150 = vector.extract_strided_slice %147 {offsets = [0, 128], sizes = [16, 128], strides = [1, 1]} : vector<16x384xf32> to vector<16x128xf32>
    %151 = arith.mulf %150, %121 : vector<16x128xf32>
    %152 = vector.extract_strided_slice %147 {offsets = [0, 0], sizes = [16, 128], strides = [1, 1]} : vector<16x384xf32> to vector<16x128xf32>
    %153 = arith.mulf %152, %149 : vector<16x128xf32>
    %154 = arith.addf %151, %153 : vector<16x128xf32>
    %155 = vector.extract_strided_slice %147 {offsets = [0, 256], sizes = [16, 128], strides = [1, 1]} : vector<16x384xf32> to vector<16x128xf32>
    %156 = math.tanh %154 : vector<16x128xf32>
    %157 = arith.mulf %155, %156 : vector<16x128xf32>
    %c4_i32 = arith.constant 4 : i32
    %158 = arith.truncf %157 : vector<16x128xf32> to vector<16x128xbf16>
    %c0_60 = arith.constant 0 : index
    %c0_61 = arith.constant 0 : index
    %159 = vector.load %arg6[%c0_60, %c0_61] : memref<128x1024xbf16, #tpu.memory_space<vmem>>, vector<128x1024xbf16>
    %cst_62 = arith.constant dense<0.000000e+00> : vector<16x1024xf32>
    %160 = tpu.matmul %158, %159, %cst_62 {dimension_numbers = #tpu.dot_dimension_numbers<[1], [0], [0], [1], [0, 0, 1, 1], [], []>} : vector<16x128xbf16>, vector<128x1024xbf16>, vector<16x1024xf32> -> vector<16x1024xf32>
    %161 = arith.index_cast %c4_i32 : i32 to index
    %c0_63 = arith.constant 0 : index
    %c0_64 = arith.constant 0 : index
    %162 = vector.load %arg12[%161, %c0_63, %c0_64] : memref<8x8x512xf32, #tpu.memory_space<vmem>>, vector<1x8x512xf32>
    %163 = vector.shape_cast %162 : vector<1x8x512xf32> to vector<8x512xf32>
    %c7_i32_65 = arith.constant 7 : i32
    %164 = arith.subi %c7_i32_65, %c4_i32 : i32
    %165 = arith.index_cast %164 : i32 to index
    %c0_66 = arith.constant 0 : index
    %c0_67 = arith.constant 0 : index
    %166 = vector.load %arg13[%165, %c0_66, %c0_67] : memref<8x8x512xf32, #tpu.memory_space<vmem>>, vector<1x8x512xf32>
    %167 = vector.shape_cast %166 : vector<1x8x512xf32> to vector<8x512xf32>
    %168 = tpu.concatenate %163, %167 in 0 : vector<8x512xf32>, vector<8x512xf32> -> vector<16x512xf32>
    %169 = vector.extract_strided_slice %160 {offsets = [0, 0], sizes = [16, 512], strides = [1, 1]} : vector<16x1024xf32> to vector<16x512xf32>
    %170 = vector.extract_strided_slice %160 {offsets = [0, 512], sizes = [16, 512], strides = [1, 1]} : vector<16x1024xf32> to vector<16x512xf32>
    %171 = vector.shape_cast %23 : vector<16x1xi1> to vector<16x1xi1>
    %172 = vector.broadcast %171 : vector<16x1xi1> to vector<16x512xi1>
    %173 = arith.select %172, %169, %170 : vector<16x512xi1>, vector<16x512xf32>
    %174 = arith.addf %168, %173 : vector<16x512xf32>
    %175 = vector.extract_strided_slice %174 {offsets = [0, 0], sizes = [16, 384], strides = [1, 1]} : vector<16x512xf32> to vector<16x384xf32>
    %176 = arith.negf %175 : vector<16x384xf32>
    %177 = math.exp %176 : vector<16x384xf32>
    %cst_68 = arith.constant 1.000000e+00 : f32
    %178 = vector.broadcast %cst_68 : f32 to vector<16x384xf32>
    %179 = arith.addf %178, %177 : vector<16x384xf32>
    %180 = arith.divf %178, %179 : vector<16x384xf32>
    %181 = vector.extract_strided_slice %174 {offsets = [0, 384], sizes = [16, 128], strides = [1, 1]} : vector<16x512xf32> to vector<16x128xf32>
    %182 = math.tanh %181 : vector<16x128xf32>
    %183 = vector.extract_strided_slice %180 {offsets = [0, 128], sizes = [16, 128], strides = [1, 1]} : vector<16x384xf32> to vector<16x128xf32>
    %184 = arith.mulf %183, %154 : vector<16x128xf32>
    %185 = vector.extract_strided_slice %180 {offsets = [0, 0], sizes = [16, 128], strides = [1, 1]} : vector<16x384xf32> to vector<16x128xf32>
    %186 = arith.mulf %185, %182 : vector<16x128xf32>
    %187 = arith.addf %184, %186 : vector<16x128xf32>
    %188 = vector.extract_strided_slice %180 {offsets = [0, 256], sizes = [16, 128], strides = [1, 1]} : vector<16x384xf32> to vector<16x128xf32>
    %189 = math.tanh %187 : vector<16x128xf32>
    %190 = arith.mulf %188, %189 : vector<16x128xf32>
    %c5_i32 = arith.constant 5 : i32
    %191 = arith.truncf %190 : vector<16x128xf32> to vector<16x128xbf16>
    %c0_69 = arith.constant 0 : index
    %c0_70 = arith.constant 0 : index
    %192 = vector.load %arg6[%c0_69, %c0_70] : memref<128x1024xbf16, #tpu.memory_space<vmem>>, vector<128x1024xbf16>
    %cst_71 = arith.constant dense<0.000000e+00> : vector<16x1024xf32>
    %193 = tpu.matmul %191, %192, %cst_71 {dimension_numbers = #tpu.dot_dimension_numbers<[1], [0], [0], [1], [0, 0, 1, 1], [], []>} : vector<16x128xbf16>, vector<128x1024xbf16>, vector<16x1024xf32> -> vector<16x1024xf32>
    %194 = arith.index_cast %c5_i32 : i32 to index
    %c0_72 = arith.constant 0 : index
    %c0_73 = arith.constant 0 : index
    %195 = vector.load %arg12[%194, %c0_72, %c0_73] : memref<8x8x512xf32, #tpu.memory_space<vmem>>, vector<1x8x512xf32>
    %196 = vector.shape_cast %195 : vector<1x8x512xf32> to vector<8x512xf32>
    %c7_i32_74 = arith.constant 7 : i32
    %197 = arith.subi %c7_i32_74, %c5_i32 : i32
    %198 = arith.index_cast %197 : i32 to index
    %c0_75 = arith.constant 0 : index
    %c0_76 = arith.constant 0 : index
    %199 = vector.load %arg13[%198, %c0_75, %c0_76] : memref<8x8x512xf32, #tpu.memory_space<vmem>>, vector<1x8x512xf32>
    %200 = vector.shape_cast %199 : vector<1x8x512xf32> to vector<8x512xf32>
    %201 = tpu.concatenate %196, %200 in 0 : vector<8x512xf32>, vector<8x512xf32> -> vector<16x512xf32>
    %202 = vector.extract_strided_slice %193 {offsets = [0, 0], sizes = [16, 512], strides = [1, 1]} : vector<16x1024xf32> to vector<16x512xf32>
    %203 = vector.extract_strided_slice %193 {offsets = [0, 512], sizes = [16, 512], strides = [1, 1]} : vector<16x1024xf32> to vector<16x512xf32>
    %204 = vector.shape_cast %23 : vector<16x1xi1> to vector<16x1xi1>
    %205 = vector.broadcast %204 : vector<16x1xi1> to vector<16x512xi1>
    %206 = arith.select %205, %202, %203 : vector<16x512xi1>, vector<16x512xf32>
    %207 = arith.addf %201, %206 : vector<16x512xf32>
    %208 = vector.extract_strided_slice %207 {offsets = [0, 0], sizes = [16, 384], strides = [1, 1]} : vector<16x512xf32> to vector<16x384xf32>
    %209 = arith.negf %208 : vector<16x384xf32>
    %210 = math.exp %209 : vector<16x384xf32>
    %cst_77 = arith.constant 1.000000e+00 : f32
    %211 = vector.broadcast %cst_77 : f32 to vector<16x384xf32>
    %212 = arith.addf %211, %210 : vector<16x384xf32>
    %213 = arith.divf %211, %212 : vector<16x384xf32>
    %214 = vector.extract_strided_slice %207 {offsets = [0, 384], sizes = [16, 128], strides = [1, 1]} : vector<16x512xf32> to vector<16x128xf32>
    %215 = math.tanh %214 : vector<16x128xf32>
    %216 = vector.extract_strided_slice %213 {offsets = [0, 128], sizes = [16, 128], strides = [1, 1]} : vector<16x384xf32> to vector<16x128xf32>
    %217 = arith.mulf %216, %187 : vector<16x128xf32>
    %218 = vector.extract_strided_slice %213 {offsets = [0, 0], sizes = [16, 128], strides = [1, 1]} : vector<16x384xf32> to vector<16x128xf32>
    %219 = arith.mulf %218, %215 : vector<16x128xf32>
    %220 = arith.addf %217, %219 : vector<16x128xf32>
    %221 = vector.extract_strided_slice %213 {offsets = [0, 256], sizes = [16, 128], strides = [1, 1]} : vector<16x384xf32> to vector<16x128xf32>
    %222 = math.tanh %220 : vector<16x128xf32>
    %223 = arith.mulf %221, %222 : vector<16x128xf32>
    %c6_i32 = arith.constant 6 : i32
    %224 = arith.truncf %223 : vector<16x128xf32> to vector<16x128xbf16>
    %c0_78 = arith.constant 0 : index
    %c0_79 = arith.constant 0 : index
    %225 = vector.load %arg6[%c0_78, %c0_79] : memref<128x1024xbf16, #tpu.memory_space<vmem>>, vector<128x1024xbf16>
    %cst_80 = arith.constant dense<0.000000e+00> : vector<16x1024xf32>
    %226 = tpu.matmul %224, %225, %cst_80 {dimension_numbers = #tpu.dot_dimension_numbers<[1], [0], [0], [1], [0, 0, 1, 1], [], []>} : vector<16x128xbf16>, vector<128x1024xbf16>, vector<16x1024xf32> -> vector<16x1024xf32>
    %227 = arith.index_cast %c6_i32 : i32 to index
    %c0_81 = arith.constant 0 : index
    %c0_82 = arith.constant 0 : index
    %228 = vector.load %arg12[%227, %c0_81, %c0_82] : memref<8x8x512xf32, #tpu.memory_space<vmem>>, vector<1x8x512xf32>
    %229 = vector.shape_cast %228 : vector<1x8x512xf32> to vector<8x512xf32>
    %c7_i32_83 = arith.constant 7 : i32
    %230 = arith.subi %c7_i32_83, %c6_i32 : i32
    %231 = arith.index_cast %230 : i32 to index
    %c0_84 = arith.constant 0 : index
    %c0_85 = arith.constant 0 : index
    %232 = vector.load %arg13[%231, %c0_84, %c0_85] : memref<8x8x512xf32, #tpu.memory_space<vmem>>, vector<1x8x512xf32>
    %233 = vector.shape_cast %232 : vector<1x8x512xf32> to vector<8x512xf32>
    %234 = tpu.concatenate %229, %233 in 0 : vector<8x512xf32>, vector<8x512xf32> -> vector<16x512xf32>
    %235 = vector.extract_strided_slice %226 {offsets = [0, 0], sizes = [16, 512], strides = [1, 1]} : vector<16x1024xf32> to vector<16x512xf32>
    %236 = vector.extract_strided_slice %226 {offsets = [0, 512], sizes = [16, 512], strides = [1, 1]} : vector<16x1024xf32> to vector<16x512xf32>
    %237 = vector.shape_cast %23 : vector<16x1xi1> to vector<16x1xi1>
    %238 = vector.broadcast %237 : vector<16x1xi1> to vector<16x512xi1>
    %239 = arith.select %238, %235, %236 : vector<16x512xi1>, vector<16x512xf32>
    %240 = arith.addf %234, %239 : vector<16x512xf32>
    %241 = vector.extract_strided_slice %240 {offsets = [0, 0], sizes = [16, 384], strides = [1, 1]} : vector<16x512xf32> to vector<16x384xf32>
    %242 = arith.negf %241 : vector<16x384xf32>
    %243 = math.exp %242 : vector<16x384xf32>
    %cst_86 = arith.constant 1.000000e+00 : f32
    %244 = vector.broadcast %cst_86 : f32 to vector<16x384xf32>
    %245 = arith.addf %244, %243 : vector<16x384xf32>
    %246 = arith.divf %244, %245 : vector<16x384xf32>
    %247 = vector.extract_strided_slice %240 {offsets = [0, 384], sizes = [16, 128], strides = [1, 1]} : vector<16x512xf32> to vector<16x128xf32>
    %248 = math.tanh %247 : vector<16x128xf32>
    %249 = vector.extract_strided_slice %246 {offsets = [0, 128], sizes = [16, 128], strides = [1, 1]} : vector<16x384xf32> to vector<16x128xf32>
    %250 = arith.mulf %249, %220 : vector<16x128xf32>
    %251 = vector.extract_strided_slice %246 {offsets = [0, 0], sizes = [16, 128], strides = [1, 1]} : vector<16x384xf32> to vector<16x128xf32>
    %252 = arith.mulf %251, %248 : vector<16x128xf32>
    %253 = arith.addf %250, %252 : vector<16x128xf32>
    %254 = vector.extract_strided_slice %246 {offsets = [0, 256], sizes = [16, 128], strides = [1, 1]} : vector<16x384xf32> to vector<16x128xf32>
    %255 = math.tanh %253 : vector<16x128xf32>
    %256 = arith.mulf %254, %255 : vector<16x128xf32>
    %c7_i32_87 = arith.constant 7 : i32
    %257 = arith.truncf %256 : vector<16x128xf32> to vector<16x128xbf16>
    %c0_88 = arith.constant 0 : index
    %c0_89 = arith.constant 0 : index
    %258 = vector.load %arg6[%c0_88, %c0_89] : memref<128x1024xbf16, #tpu.memory_space<vmem>>, vector<128x1024xbf16>
    %cst_90 = arith.constant dense<0.000000e+00> : vector<16x1024xf32>
    %259 = tpu.matmul %257, %258, %cst_90 {dimension_numbers = #tpu.dot_dimension_numbers<[1], [0], [0], [1], [0, 0, 1, 1], [], []>} : vector<16x128xbf16>, vector<128x1024xbf16>, vector<16x1024xf32> -> vector<16x1024xf32>
    %260 = arith.index_cast %c7_i32_87 : i32 to index
    %c0_91 = arith.constant 0 : index
    %c0_92 = arith.constant 0 : index
    %261 = vector.load %arg12[%260, %c0_91, %c0_92] : memref<8x8x512xf32, #tpu.memory_space<vmem>>, vector<1x8x512xf32>
    %262 = vector.shape_cast %261 : vector<1x8x512xf32> to vector<8x512xf32>
    %c7_i32_93 = arith.constant 7 : i32
    %263 = arith.subi %c7_i32_93, %c7_i32_87 : i32
    %264 = arith.index_cast %263 : i32 to index
    %c0_94 = arith.constant 0 : index
    %c0_95 = arith.constant 0 : index
    %265 = vector.load %arg13[%264, %c0_94, %c0_95] : memref<8x8x512xf32, #tpu.memory_space<vmem>>, vector<1x8x512xf32>
    %266 = vector.shape_cast %265 : vector<1x8x512xf32> to vector<8x512xf32>
    %267 = tpu.concatenate %262, %266 in 0 : vector<8x512xf32>, vector<8x512xf32> -> vector<16x512xf32>
    %268 = vector.extract_strided_slice %259 {offsets = [0, 0], sizes = [16, 512], strides = [1, 1]} : vector<16x1024xf32> to vector<16x512xf32>
    %269 = vector.extract_strided_slice %259 {offsets = [0, 512], sizes = [16, 512], strides = [1, 1]} : vector<16x1024xf32> to vector<16x512xf32>
    %270 = vector.shape_cast %23 : vector<16x1xi1> to vector<16x1xi1>
    %271 = vector.broadcast %270 : vector<16x1xi1> to vector<16x512xi1>
    %272 = arith.select %271, %268, %269 : vector<16x512xi1>, vector<16x512xf32>
    %273 = arith.addf %267, %272 : vector<16x512xf32>
    %274 = vector.extract_strided_slice %273 {offsets = [0, 0], sizes = [16, 384], strides = [1, 1]} : vector<16x512xf32> to vector<16x384xf32>
    %275 = arith.negf %274 : vector<16x384xf32>
    %276 = math.exp %275 : vector<16x384xf32>
    %cst_96 = arith.constant 1.000000e+00 : f32
    %277 = vector.broadcast %cst_96 : f32 to vector<16x384xf32>
    %278 = arith.addf %277, %276 : vector<16x384xf32>
    %279 = arith.divf %277, %278 : vector<16x384xf32>
    %280 = vector.extract_strided_slice %273 {offsets = [0, 384], sizes = [16, 128], strides = [1, 1]} : vector<16x512xf32> to vector<16x128xf32>
    %281 = math.tanh %280 : vector<16x128xf32>
    %282 = vector.extract_strided_slice %279 {offsets = [0, 128], sizes = [16, 128], strides = [1, 1]} : vector<16x384xf32> to vector<16x128xf32>
    %283 = arith.mulf %282, %253 : vector<16x128xf32>
    %284 = vector.extract_strided_slice %279 {offsets = [0, 0], sizes = [16, 128], strides = [1, 1]} : vector<16x384xf32> to vector<16x128xf32>
    %285 = arith.mulf %284, %281 : vector<16x128xf32>
    %286 = arith.addf %283, %285 : vector<16x128xf32>
    %287 = vector.extract_strided_slice %279 {offsets = [0, 256], sizes = [16, 128], strides = [1, 1]} : vector<16x384xf32> to vector<16x128xf32>
    %288 = math.tanh %286 : vector<16x128xf32>
    %289 = arith.mulf %287, %288 : vector<16x128xf32>
    %c8_i32_97 = arith.constant 8 : i32
    %c0_98 = arith.constant 0 : index
    %c0_99 = arith.constant 0 : index
    %290 = vector.load %arg14[%c0_98, %c0_99] : memref<16x128xf32, #tpu.memory_space<vmem>>, vector<16x128xf32>
    tpu.vector_store %arg14[%c0_98, %c0_99], %289 {strides = array<i32>} : memref<16x128xf32, #tpu.memory_space<vmem>>, vector<16x128xf32>,
    %c0_100 = arith.constant 0 : index
    %c0_101 = arith.constant 0 : index
    %291 = vector.load %arg15[%c0_100, %c0_101] : memref<16x128xf32, #tpu.memory_space<vmem>>, vector<16x128xf32>
    tpu.vector_store %arg15[%c0_100, %c0_101], %286 {strides = array<i32>} : memref<16x128xf32, #tpu.memory_space<vmem>>, vector<16x128xf32>,
    %c0_i32_102 = arith.constant 0 : i32
    %292 = arith.cmpi eq, %arg1, %c0_i32_102 : i32
    %293 = arith.extui %292 : i1 to i32
    %c0_i32_103 = arith.constant 0 : i32
    %294 = arith.cmpi ne, %293, %c0_i32_103 : i32
    scf.if %294 {
      %295 = vector.extract_strided_slice %289 {offsets = [0, 0], sizes = [8, 128], strides = [1, 1]} : vector<16x128xf32> to vector<8x128xf32>
      %296 = vector.extract_strided_slice %289 {offsets = [8, 0], sizes = [8, 128], strides = [1, 1]} : vector<16x128xf32> to vector<8x128xf32>
      %297 = tpu.concatenate %295, %296 in 1 : vector<8x128xf32>, vector<8x128xf32> -> vector<8x256xf32>
      %298 = arith.truncf %297 : vector<8x256xf32> to vector<8x256xbf16>
      %c0_104 = arith.constant 0 : index
      %c0_105 = arith.constant 0 : index
      %299 = vector.load %arg7[%c0_104, %c0_105] : memref<256x128xbf16, #tpu.memory_space<vmem>>, vector<256x128xbf16>
      %cst_106 = arith.constant dense<0.000000e+00> : vector<8x128xf32>
      %300 = tpu.matmul %298, %299, %cst_106 {dimension_numbers = #tpu.dot_dimension_numbers<[1], [0], [0], [1], [0, 0, 1, 1], [], []>} : vector<8x256xbf16>, vector<256x128xbf16>, vector<8x128xf32> -> vector<8x128xf32>
      %c0_107 = arith.constant 0 : index
      %c0_108 = arith.constant 0 : index
      %301 = vector.load %arg8[%c0_107, %c0_108] : memref<1x128xf32, #tpu.memory_space<vmem>>, vector<1x128xf32>
      %302 = vector.broadcast %301 : vector<1x128xf32> to vector<8x128xf32>
      %303 = arith.addf %300, %302 : vector<8x128xf32>
      %304 = math.tanh %303 : vector<8x128xf32>
      %305 = arith.truncf %304 : vector<8x128xf32> to vector<8x128xbf16>
      %c0_109 = arith.constant 0 : index
      %c0_110 = arith.constant 0 : index
      %306 = vector.load %arg9[%c0_109, %c0_110] : memref<128x128xbf16, #tpu.memory_space<vmem>>, vector<128x128xbf16>
      %cst_111 = arith.constant dense<0.000000e+00> : vector<8x128xf32>
      %307 = tpu.matmul %305, %306, %cst_111 {dimension_numbers = #tpu.dot_dimension_numbers<[1], [0], [0], [1], [0, 0, 1, 1], [], []>} : vector<8x128xbf16>, vector<128x128xbf16>, vector<8x128xf32> -> vector<8x128xf32>
      %c0_112 = arith.constant 0 : index
      %c0_113 = arith.constant 0 : index
      %308 = vector.load %arg10[%c0_112, %c0_113] : memref<1x128xf32, #tpu.memory_space<vmem>>, vector<1x128xf32>
      %309 = vector.broadcast %308 : vector<1x128xf32> to vector<8x128xf32>
      %310 = arith.addf %307, %309 : vector<8x128xf32>
      %c0_114 = arith.constant 0 : index
      %c0_115 = arith.constant 0 : index
      %311 = vector.load %arg11[%c0_114, %c0_115] : memref<8x128xf32, #tpu.memory_space<vmem>>, vector<8x128xf32>
      tpu.vector_store %arg11[%c0_114, %c0_115], %310 {strides = array<i32>} : memref<8x128xf32, #tpu.memory_space<vmem>>, vector<8x128xf32>,
    } else {
    }
    return
  }
  func.func @transform_0(%arg0: i32, %arg1: i32) -> (i32, i32, i32) {
    %c0_i32 = arith.constant 0 : i32
    %c0_i32_0 = arith.constant 0 : i32
    return %arg0, %arg1, %c0_i32 : i32, i32, i32
  }
  func.func @transform_1(%arg0: i32, %arg1: i32) -> (i32, i32, i32) {
    %c0_i32 = arith.constant 0 : i32
    %0 = arith.subi %c0_i32, %arg1 : i32
    %c0_i32_0 = arith.constant 0 : i32
    %c0_i32_1 = arith.constant 0 : i32
    return %arg0, %0, %c0_i32_0 : i32, i32, i32
  }
  func.func @transform_2(%arg0: i32, %arg1: i32) -> (i32, i32) {
    %c0_i32 = arith.constant 0 : i32
    %c0_i32_0 = arith.constant 0 : i32
    %c0_i32_1 = arith.constant 0 : i32
    return %c0_i32, %c0_i32_0 : i32, i32
  }
  func.func @transform_3(%arg0: i32, %arg1: i32) -> (i32, i32) {
    %c0_i32 = arith.constant 0 : i32
    %c0_i32_0 = arith.constant 0 : i32
    %c0_i32_1 = arith.constant 0 : i32
    return %c0_i32, %c0_i32_0 : i32, i32
  }
  func.func @transform_4(%arg0: i32, %arg1: i32) -> (i32, i32) {
    %c0_i32 = arith.constant 0 : i32
    %c0_i32_0 = arith.constant 0 : i32
    %c0_i32_1 = arith.constant 0 : i32
    return %c0_i32, %c0_i32_0 : i32, i32
  }
  func.func @transform_5(%arg0: i32, %arg1: i32) -> (i32, i32) {
    %c0_i32 = arith.constant 0 : i32
    %c0_i32_0 = arith.constant 0 : i32
    %c0_i32_1 = arith.constant 0 : i32
    return %c0_i32, %c0_i32_0 : i32, i32
  }
  func.func @transform_6(%arg0: i32, %arg1: i32) -> (i32, i32) {
    %c0_i32 = arith.constant 0 : i32
    %c0_i32_0 = arith.constant 0 : i32
    %c0_i32_1 = arith.constant 0 : i32
    return %c0_i32, %c0_i32_0 : i32, i32
  }
  func.func @transform_7(%arg0: i32, %arg1: i32) -> (i32, i32) {
    %c0_i32 = arith.constant 0 : i32
    %c0_i32_0 = arith.constant 0 : i32
    %c0_i32_1 = arith.constant 0 : i32
    return %c0_i32, %c0_i32_0 : i32, i32
  }
  func.func @transform_8(%arg0: i32, %arg1: i32) -> (i32, i32) {
    %c0_i32 = arith.constant 0 : i32
    %c0_i32_0 = arith.constant 0 : i32
    %c0_i32_1 = arith.constant 0 : i32
    return %c0_i32, %c0_i32_0 : i32, i32
  }
  func.func @transform_9(%arg0: i32, %arg1: i32) -> (i32, i32) {
    %c0_i32 = arith.constant 0 : i32
    %c0_i32_0 = arith.constant 0 : i32
    return %arg0, %c0_i32 : i32, i32
  }
}

module attributes {stable_mosaic.version = 11 : i64} {
  func.func @kernel(%arg0: i32, %arg1: i32, %arg2: memref<1x64x128xbf16, #tpu.memory_space<vmem>>, %arg3: memref<1x64x128xbf16, #tpu.memory_space<vmem>>, %arg4: memref<128x1024xbf16, #tpu.memory_space<vmem>>, %arg5: memref<1x1024xf32, #tpu.memory_space<vmem>>, %arg6: memref<128x1024xbf16, #tpu.memory_space<vmem>>, %arg7: memref<256x128xbf16, #tpu.memory_space<vmem>>, %arg8: memref<1x128xf32, #tpu.memory_space<vmem>>, %arg9: memref<128x128xbf16, #tpu.memory_space<vmem>>, %arg10: memref<1x128xf32, #tpu.memory_space<vmem>>, %arg11: memref<8x128xf32, #tpu.memory_space<vmem>>, %arg12: memref<8x8x512xf32, #tpu.memory_space<vmem>>, %arg13: memref<8x8x512xf32, #tpu.memory_space<vmem>>, %arg14: memref<16x128xf32, #tpu.memory_space<vmem>>, %arg15: memref<16x128xf32, #tpu.memory_space<vmem>>) attributes {dimension_semantics = [#tpu.dimension_semantics<parallel>, #tpu.dimension_semantics<arbitrary>], iteration_bounds = array<i64: 1, 1>, scalar_prefetch = 0 : i64, scratch_operands = 4 : i64, tpu.core_type = #tpu.core_type<tc>, window_params = [{transform_indices = @transform_0, window_bounds = array<i64: 1, 64, 128>}, {transform_indices = @transform_1, window_bounds = array<i64: 1, 64, 128>}, {pipeline_mode = #tpu.pipeline_mode<synchronous>, transform_indices = @transform_2, window_bounds = array<i64: 128, 1024>}, {pipeline_mode = #tpu.pipeline_mode<synchronous>, transform_indices = @transform_3, window_bounds = array<i64: 1, 1024>}, {pipeline_mode = #tpu.pipeline_mode<synchronous>, transform_indices = @transform_4, window_bounds = array<i64: 128, 1024>}, {pipeline_mode = #tpu.pipeline_mode<synchronous>, transform_indices = @transform_5, window_bounds = array<i64: 256, 128>}, {pipeline_mode = #tpu.pipeline_mode<synchronous>, transform_indices = @transform_6, window_bounds = array<i64: 1, 128>}, {pipeline_mode = #tpu.pipeline_mode<synchronous>, transform_indices = @transform_7, window_bounds = array<i64: 128, 128>}, {pipeline_mode = #tpu.pipeline_mode<synchronous>, transform_indices = @transform_8, window_bounds = array<i64: 1, 128>}, {transform_indices = @transform_9, window_bounds = array<i64: 8, 128>}]} {
    %c0_i32 = arith.constant 0 : i32
    %0 = arith.cmpi eq, %arg1, %c0_i32 : i32
    %1 = arith.extui %0 : i1 to i32
    %c0_i32_0 = arith.constant 0 : i32
    %2 = arith.cmpi ne, %1, %c0_i32_0 : i32
    scf.if %2 {
      %cst_104 = arith.constant 0.000000e+00 : f32
      %295 = vector.broadcast %cst_104 : f32 to vector<16x128xf32>
      %c0_105 = arith.constant 0 : index
      %c0_106 = arith.constant 0 : index
      %296 = vector.load %arg14[%c0_105, %c0_106] : memref<16x128xf32, #tpu.memory_space<vmem>>, vector<16x128xf32>
      tpu.vector_store %arg14[%c0_105, %c0_106], %295 {strides = array<i32>} : memref<16x128xf32, #tpu.memory_space<vmem>>, vector<16x128xf32>,
      %cst_107 = arith.constant 0.000000e+00 : f32
      %297 = vector.broadcast %cst_107 : f32 to vector<16x128xf32>
      %c0_108 = arith.constant 0 : index
      %c0_109 = arith.constant 0 : index
      %298 = vector.load %arg15[%c0_108, %c0_109] : memref<16x128xf32, #tpu.memory_space<vmem>>, vector<16x128xf32>
      tpu.vector_store %arg15[%c0_108, %c0_109], %297 {strides = array<i32>} : memref<16x128xf32, #tpu.memory_space<vmem>>, vector<16x128xf32>,
      %cst_110 = arith.constant 0.000000e+00 : f32
      %299 = vector.broadcast %cst_110 : f32 to vector<8x128xf32>
      %c0_111 = arith.constant 0 : index
      %c0_112 = arith.constant 0 : index
      %300 = vector.load %arg11[%c0_111, %c0_112] : memref<8x128xf32, #tpu.memory_space<vmem>>, vector<8x128xf32>
      tpu.vector_store %arg11[%c0_111, %c0_112], %299 {strides = array<i32>} : memref<8x128xf32, #tpu.memory_space<vmem>>, vector<8x128xf32>,
    } else {
    }
    %c0 = arith.constant 0 : index
    %c0_1 = arith.constant 0 : index
    %c0_2 = arith.constant 0 : index
    %3 = vector.load %arg2[%c0, %c0_1, %c0_2] : memref<1x64x128xbf16, #tpu.memory_space<vmem>>, vector<1x64x128xbf16>
    %4 = vector.shape_cast %3 : vector<1x64x128xbf16> to vector<64x128xbf16>
    %c0_3 = arith.constant 0 : index
    %c0_4 = arith.constant 0 : index
    %5 = vector.load %arg4[%c0_3, %c0_4] : memref<128x1024xbf16, #tpu.memory_space<vmem>>, vector<128x512xbf16>
    %cst = arith.constant dense<0.000000e+00> : vector<64x512xf32>
    %6 = tpu.matmul %4, %5, %cst {dimension_numbers = #tpu.dot_dimension_numbers<[1], [0], [0], [1], [0, 0, 1, 1], [], []>} : vector<64x128xbf16>, vector<128x512xbf16>, vector<64x512xf32> -> vector<64x512xf32>
    %c0_5 = arith.constant 0 : index
    %c0_6 = arith.constant 0 : index
    %7 = vector.load %arg5[%c0_5, %c0_6] : memref<1x1024xf32, #tpu.memory_space<vmem>>, vector<1x512xf32>
    %8 = vector.broadcast %7 : vector<1x512xf32> to vector<64x512xf32>
    %9 = arith.addf %6, %8 : vector<64x512xf32>
    %10 = vector.shape_cast %9 : vector<64x512xf32> to vector<8x8x512xf32>
    %c0_7 = arith.constant 0 : index
    %c0_8 = arith.constant 0 : index
    %c0_9 = arith.constant 0 : index
    %11 = vector.load %arg12[%c0_7, %c0_8, %c0_9] : memref<8x8x512xf32, #tpu.memory_space<vmem>>, vector<8x8x512xf32>
    tpu.vector_store %arg12[%c0_7, %c0_8, %c0_9], %10 {strides = array<i32>} : memref<8x8x512xf32, #tpu.memory_space<vmem>>, vector<8x8x512xf32>,
    %c0_10 = arith.constant 0 : index
    %c0_11 = arith.constant 0 : index
    %c0_12 = arith.constant 0 : index
    %12 = vector.load %arg3[%c0_10, %c0_11, %c0_12] : memref<1x64x128xbf16, #tpu.memory_space<vmem>>, vector<1x64x128xbf16>
    %13 = vector.shape_cast %12 : vector<1x64x128xbf16> to vector<64x128xbf16>
    %c0_13 = arith.constant 0 : index
    %c512 = arith.constant 512 : index
    %14 = vector.load %arg4[%c0_13, %c512] : memref<128x1024xbf16, #tpu.memory_space<vmem>>, vector<128x512xbf16>
    %cst_14 = arith.constant dense<0.000000e+00> : vector<64x512xf32>
    %15 = tpu.matmul %13, %14, %cst_14 {dimension_numbers = #tpu.dot_dimension_numbers<[1], [0], [0], [1], [0, 0, 1, 1], [], []>} : vector<64x128xbf16>, vector<128x512xbf16>, vector<64x512xf32> -> vector<64x512xf32>
    %c0_15 = arith.constant 0 : index
    %c512_16 = arith.constant 512 : index
    %16 = vector.load %arg5[%c0_15, %c512_16] : memref<1x1024xf32, #tpu.memory_space<vmem>>, vector<1x512xf32>
    %17 = vector.broadcast %16 : vector<1x512xf32> to vector<64x512xf32>
    %18 = arith.addf %15, %17 : vector<64x512xf32>
    %19 = vector.shape_cast %18 : vector<64x512xf32> to vector<8x8x512xf32>
    %c0_17 = arith.constant 0 : index
    %c0_18 = arith.constant 0 : index
    %c0_19 = arith.constant 0 : index
    %20 = vector.load %arg13[%c0_17, %c0_18, %c0_19] : memref<8x8x512xf32, #tpu.memory_space<vmem>>, vector<8x8x512xf32>
    tpu.vector_store %arg13[%c0_17, %c0_18, %c0_19], %19 {strides = array<i32>} : memref<8x8x512xf32, #tpu.memory_space<vmem>>, vector<8x8x512xf32>,
    %21 = tpu.iota {dimensions = array<i32: 0>} : vector<16x1xi32>
    %c8_i32 = arith.constant 8 : i32
    %22 = vector.broadcast %c8_i32 : i32 to vector<16x1xi32>
    %23 = arith.cmpi slt, %21, %22 : vector<16x1xi32>
    %c0_20 = arith.constant 0 : index
    %c0_21 = arith.constant 0 : index
    %24 = vector.load %arg14[%c0_20, %c0_21] : memref<16x128xf32, #tpu.memory_space<vmem>>, vector<16x128xf32>
    %c0_22 = arith.constant 0 : index
    %c0_23 = arith.constant 0 : index
    %25 = vector.load %arg15[%c0_22, %c0_23] : memref<16x128xf32, #tpu.memory_space<vmem>>, vector<16x128xf32>
    %c0_i32_24 = arith.constant 0 : i32
    %26 = arith.truncf %24 : vector<16x128xf32> to vector<16x128xbf16>
    %c0_25 = arith.constant 0 : index
    %c0_26 = arith.constant 0 : index
    %27 = vector.load %arg6[%c0_25, %c0_26] : memref<128x1024xbf16, #tpu.memory_space<vmem>>, vector<128x1024xbf16>
    %cst_27 = arith.constant dense<0.000000e+00> : vector<16x1024xf32>
    %28 = tpu.matmul %26, %27, %cst_27 {dimension_numbers = #tpu.dot_dimension_numbers<[1], [0], [0], [1], [0, 0, 1, 1], [], []>} : vector<16x128xbf16>, vector<128x1024xbf16>, vector<16x1024xf32> -> vector<16x1024xf32>
    %29 = arith.index_cast %c0_i32_24 : i32 to index
    %c0_28 = arith.constant 0 : index
    %c0_29 = arith.constant 0 : index
    %30 = vector.load %arg12[%29, %c0_28, %c0_29] : memref<8x8x512xf32, #tpu.memory_space<vmem>>, vector<1x8x512xf32>
    %31 = vector.shape_cast %30 : vector<1x8x512xf32> to vector<8x512xf32>
    %c7_i32 = arith.constant 7 : i32
    %32 = arith.subi %c7_i32, %c0_i32_24 : i32
    %33 = arith.index_cast %32 : i32 to index
    %c0_30 = arith.constant 0 : index
    %c0_31 = arith.constant 0 : index
    %34 = vector.load %arg13[%33, %c0_30, %c0_31] : memref<8x8x512xf32, #tpu.memory_space<vmem>>, vector<1x8x512xf32>
    %35 = vector.shape_cast %34 : vector<1x8x512xf32> to vector<8x512xf32>
    %36 = tpu.concatenate %31, %35 in 0 : vector<8x512xf32>, vector<8x512xf32> -> vector<16x512xf32>
    %37 = vector.extract_strided_slice %28 {offsets = [0, 0], sizes = [16, 512], strides = [1, 1]} : vector<16x1024xf32> to vector<16x512xf32>
    %38 = vector.extract_strided_slice %28 {offsets = [0, 512], sizes = [16, 512], strides = [1, 1]} : vector<16x1024xf32> to vector<16x512xf32>
    %39 = vector.shape_cast %23 : vector<16x1xi1> to vector<16x1xi1>
    %40 = vector.broadcast %39 : vector<16x1xi1> to vector<16x512xi1>
    %41 = arith.select %40, %37, %38 : vector<16x512xi1>, vector<16x512xf32>
    %42 = arith.addf %36, %41 : vector<16x512xf32>
    %43 = vector.extract_strided_slice %42 {offsets = [0, 0], sizes = [16, 384], strides = [1, 1]} : vector<16x512xf32> to vector<16x384xf32>
    %44 = arith.negf %43 : vector<16x384xf32>
    %45 = math.exp %44 : vector<16x384xf32>
    %cst_32 = arith.constant 1.000000e+00 : f32
    %46 = vector.broadcast %cst_32 : f32 to vector<16x384xf32>
    %47 = arith.addf %46, %45 : vector<16x384xf32>
    %48 = arith.divf %46, %47 : vector<16x384xf32>
    %49 = vector.extract_strided_slice %42 {offsets = [0, 384], sizes = [16, 128], strides = [1, 1]} : vector<16x512xf32> to vector<16x128xf32>
    %50 = math.tanh %49 : vector<16x128xf32>
    %51 = vector.extract_strided_slice %48 {offsets = [0, 128], sizes = [16, 128], strides = [1, 1]} : vector<16x384xf32> to vector<16x128xf32>
    %52 = arith.mulf %51, %25 : vector<16x128xf32>
    %53 = vector.extract_strided_slice %48 {offsets = [0, 0], sizes = [16, 128], strides = [1, 1]} : vector<16x384xf32> to vector<16x128xf32>
    %54 = arith.mulf %53, %50 : vector<16x128xf32>
    %55 = arith.addf %52, %54 : vector<16x128xf32>
    %56 = vector.extract_strided_slice %48 {offsets = [0, 256], sizes = [16, 128], strides = [1, 1]} : vector<16x384xf32> to vector<16x128xf32>
    %57 = math.tanh %55 : vector<16x128xf32>
    %58 = arith.mulf %56, %57 : vector<16x128xf32>
    %c1_i32 = arith.constant 1 : i32
    %59 = arith.truncf %58 : vector<16x128xf32> to vector<16x128xbf16>
    %c0_33 = arith.constant 0 : index
    %c0_34 = arith.constant 0 : index
    %60 = vector.load %arg6[%c0_33, %c0_34] : memref<128x1024xbf16, #tpu.memory_space<vmem>>, vector<128x1024xbf16>
    %cst_35 = arith.constant dense<0.000000e+00> : vector<16x1024xf32>
    %61 = tpu.matmul %59, %60, %cst_35 {dimension_numbers = #tpu.dot_dimension_numbers<[1], [0], [0], [1], [0, 0, 1, 1], [], []>} : vector<16x128xbf16>, vector<128x1024xbf16>, vector<16x1024xf32> -> vector<16x1024xf32>
    %62 = arith.index_cast %c1_i32 : i32 to index
    %c0_36 = arith.constant 0 : index
    %c0_37 = arith.constant 0 : index
    %63 = vector.load %arg12[%62, %c0_36, %c0_37] : memref<8x8x512xf32, #tpu.memory_space<vmem>>, vector<1x8x512xf32>
    %64 = vector.shape_cast %63 : vector<1x8x512xf32> to vector<8x512xf32>
    %c7_i32_38 = arith.constant 7 : i32
    %65 = arith.subi %c7_i32_38, %c1_i32 : i32
    %66 = arith.index_cast %65 : i32 to index
    %c0_39 = arith.constant 0 : index
    %c0_40 = arith.constant 0 : index
    %67 = vector.load %arg13[%66, %c0_39, %c0_40] : memref<8x8x512xf32, #tpu.memory_space<vmem>>, vector<1x8x512xf32>
    %68 = vector.shape_cast %67 : vector<1x8x512xf32> to vector<8x512xf32>
    %69 = tpu.concatenate %64, %68 in 0 : vector<8x512xf32>, vector<8x512xf32> -> vector<16x512xf32>
    %70 = vector.extract_strided_slice %61 {offsets = [0, 0], sizes = [16, 512], strides = [1, 1]} : vector<16x1024xf32> to vector<16x512xf32>
    %71 = vector.extract_strided_slice %61 {offsets = [0, 512], sizes = [16, 512], strides = [1, 1]} : vector<16x1024xf32> to vector<16x512xf32>
    %72 = vector.shape_cast %23 : vector<16x1xi1> to vector<16x1xi1>
    %73 = vector.broadcast %72 : vector<16x1xi1> to vector<16x512xi1>
    %74 = arith.select %73, %70, %71 : vector<16x512xi1>, vector<16x512xf32>
    %75 = arith.addf %69, %74 : vector<16x512xf32>
    %76 = vector.extract_strided_slice %75 {offsets = [0, 0], sizes = [16, 384], strides = [1, 1]} : vector<16x512xf32> to vector<16x384xf32>
    %77 = arith.negf %76 : vector<16x384xf32>
    %78 = math.exp %77 : vector<16x384xf32>
    %cst_41 = arith.constant 1.000000e+00 : f32
    %79 = vector.broadcast %cst_41 : f32 to vector<16x384xf32>
    %80 = arith.addf %79, %78 : vector<16x384xf32>
    %81 = arith.divf %79, %80 : vector<16x384xf32>
    %82 = vector.extract_strided_slice %75 {offsets = [0, 384], sizes = [16, 128], strides = [1, 1]} : vector<16x512xf32> to vector<16x128xf32>
    %83 = math.tanh %82 : vector<16x128xf32>
    %84 = vector.extract_strided_slice %81 {offsets = [0, 128], sizes = [16, 128], strides = [1, 1]} : vector<16x384xf32> to vector<16x128xf32>
    %85 = arith.mulf %84, %55 : vector<16x128xf32>
    %86 = vector.extract_strided_slice %81 {offsets = [0, 0], sizes = [16, 128], strides = [1, 1]} : vector<16x384xf32> to vector<16x128xf32>
    %87 = arith.mulf %86, %83 : vector<16x128xf32>
    %88 = arith.addf %85, %87 : vector<16x128xf32>
    %89 = vector.extract_strided_slice %81 {offsets = [0, 256], sizes = [16, 128], strides = [1, 1]} : vector<16x384xf32> to vector<16x128xf32>
    %90 = math.tanh %88 : vector<16x128xf32>
    %91 = arith.mulf %89, %90 : vector<16x128xf32>
    %c2_i32 = arith.constant 2 : i32
    %92 = arith.truncf %91 : vector<16x128xf32> to vector<16x128xbf16>
    %c0_42 = arith.constant 0 : index
    %c0_43 = arith.constant 0 : index
    %93 = vector.load %arg6[%c0_42, %c0_43] : memref<128x1024xbf16, #tpu.memory_space<vmem>>, vector<128x1024xbf16>
    %cst_44 = arith.constant dense<0.000000e+00> : vector<16x1024xf32>
    %94 = tpu.matmul %92, %93, %cst_44 {dimension_numbers = #tpu.dot_dimension_numbers<[1], [0], [0], [1], [0, 0, 1, 1], [], []>} : vector<16x128xbf16>, vector<128x1024xbf16>, vector<16x1024xf32> -> vector<16x1024xf32>
    %95 = arith.index_cast %c2_i32 : i32 to index
    %c0_45 = arith.constant 0 : index
    %c0_46 = arith.constant 0 : index
    %96 = vector.load %arg12[%95, %c0_45, %c0_46] : memref<8x8x512xf32, #tpu.memory_space<vmem>>, vector<1x8x512xf32>
    %97 = vector.shape_cast %96 : vector<1x8x512xf32> to vector<8x512xf32>
    %c7_i32_47 = arith.constant 7 : i32
    %98 = arith.subi %c7_i32_47, %c2_i32 : i32
    %99 = arith.index_cast %98 : i32 to index
    %c0_48 = arith.constant 0 : index
    %c0_49 = arith.constant 0 : index
    %100 = vector.load %arg13[%99, %c0_48, %c0_49] : memref<8x8x512xf32, #tpu.memory_space<vmem>>, vector<1x8x512xf32>
    %101 = vector.shape_cast %100 : vector<1x8x512xf32> to vector<8x512xf32>
    %102 = tpu.concatenate %97, %101 in 0 : vector<8x512xf32>, vector<8x512xf32> -> vector<16x512xf32>
    %103 = vector.extract_strided_slice %94 {offsets = [0, 0], sizes = [16, 512], strides = [1, 1]} : vector<16x1024xf32> to vector<16x512xf32>
    %104 = vector.extract_strided_slice %94 {offsets = [0, 512], sizes = [16, 512], strides = [1, 1]} : vector<16x1024xf32> to vector<16x512xf32>
    %105 = vector.shape_cast %23 : vector<16x1xi1> to vector<16x1xi1>
    %106 = vector.broadcast %105 : vector<16x1xi1> to vector<16x512xi1>
    %107 = arith.select %106, %103, %104 : vector<16x512xi1>, vector<16x512xf32>
    %108 = arith.addf %102, %107 : vector<16x512xf32>
    %109 = vector.extract_strided_slice %108 {offsets = [0, 0], sizes = [16, 384], strides = [1, 1]} : vector<16x512xf32> to vector<16x384xf32>
    %110 = arith.negf %109 : vector<16x384xf32>
    %111 = math.exp %110 : vector<16x384xf32>
    %cst_50 = arith.constant 1.000000e+00 : f32
    %112 = vector.broadcast %cst_50 : f32 to vector<16x384xf32>
    %113 = arith.addf %112, %111 : vector<16x384xf32>
    %114 = arith.divf %112, %113 : vector<16x384xf32>
    %115 = vector.extract_strided_slice %108 {offsets = [0, 384], sizes = [16, 128], strides = [1, 1]} : vector<16x512xf32> to vector<16x128xf32>
    %116 = math.tanh %115 : vector<16x128xf32>
    %117 = vector.extract_strided_slice %114 {offsets = [0, 128], sizes = [16, 128], strides = [1, 1]} : vector<16x384xf32> to vector<16x128xf32>
    %118 = arith.mulf %117, %88 : vector<16x128xf32>
    %119 = vector.extract_strided_slice %114 {offsets = [0, 0], sizes = [16, 128], strides = [1, 1]} : vector<16x384xf32> to vector<16x128xf32>
    %120 = arith.mulf %119, %116 : vector<16x128xf32>
    %121 = arith.addf %118, %120 : vector<16x128xf32>
    %122 = vector.extract_strided_slice %114 {offsets = [0, 256], sizes = [16, 128], strides = [1, 1]} : vector<16x384xf32> to vector<16x128xf32>
    %123 = math.tanh %121 : vector<16x128xf32>
    %124 = arith.mulf %122, %123 : vector<16x128xf32>
    %c3_i32 = arith.constant 3 : i32
    %125 = arith.truncf %124 : vector<16x128xf32> to vector<16x128xbf16>
    %c0_51 = arith.constant 0 : index
    %c0_52 = arith.constant 0 : index
    %126 = vector.load %arg6[%c0_51, %c0_52] : memref<128x1024xbf16, #tpu.memory_space<vmem>>, vector<128x1024xbf16>
    %cst_53 = arith.constant dense<0.000000e+00> : vector<16x1024xf32>
    %127 = tpu.matmul %125, %126, %cst_53 {dimension_numbers = #tpu.dot_dimension_numbers<[1], [0], [0], [1], [0, 0, 1, 1], [], []>} : vector<16x128xbf16>, vector<128x1024xbf16>, vector<16x1024xf32> -> vector<16x1024xf32>
    %128 = arith.index_cast %c3_i32 : i32 to index
    %c0_54 = arith.constant 0 : index
    %c0_55 = arith.constant 0 : index
    %129 = vector.load %arg12[%128, %c0_54, %c0_55] : memref<8x8x512xf32, #tpu.memory_space<vmem>>, vector<1x8x512xf32>
    %130 = vector.shape_cast %129 : vector<1x8x512xf32> to vector<8x512xf32>
    %c7_i32_56 = arith.constant 7 : i32
    %131 = arith.subi %c7_i32_56, %c3_i32 : i32
    %132 = arith.index_cast %131 : i32 to index
    %c0_57 = arith.constant 0 : index
    %c0_58 = arith.constant 0 : index
    %133 = vector.load %arg13[%132, %c0_57, %c0_58] : memref<8x8x512xf32, #tpu.memory_space<vmem>>, vector<1x8x512xf32>
    %134 = vector.shape_cast %133 : vector<1x8x512xf32> to vector<8x512xf32>
    %135 = tpu.concatenate %130, %134 in 0 : vector<8x512xf32>, vector<8x512xf32> -> vector<16x512xf32>
    %136 = vector.extract_strided_slice %127 {offsets = [0, 0], sizes = [16, 512], strides = [1, 1]} : vector<16x1024xf32> to vector<16x512xf32>
    %137 = vector.extract_strided_slice %127 {offsets = [0, 512], sizes = [16, 512], strides = [1, 1]} : vector<16x1024xf32> to vector<16x512xf32>
    %138 = vector.shape_cast %23 : vector<16x1xi1> to vector<16x1xi1>
    %139 = vector.broadcast %138 : vector<16x1xi1> to vector<16x512xi1>
    %140 = arith.select %139, %136, %137 : vector<16x512xi1>, vector<16x512xf32>
    %141 = arith.addf %135, %140 : vector<16x512xf32>
    %142 = vector.extract_strided_slice %141 {offsets = [0, 0], sizes = [16, 384], strides = [1, 1]} : vector<16x512xf32> to vector<16x384xf32>
    %143 = arith.negf %142 : vector<16x384xf32>
    %144 = math.exp %143 : vector<16x384xf32>
    %cst_59 = arith.constant 1.000000e+00 : f32
    %145 = vector.broadcast %cst_59 : f32 to vector<16x384xf32>
    %146 = arith.addf %145, %144 : vector<16x384xf32>
    %147 = arith.divf %145, %146 : vector<16x384xf32>
    %148 = vector.extract_strided_slice %141 {offsets = [0, 384], sizes = [16, 128], strides = [1, 1]} : vector<16x512xf32> to vector<16x128xf32>
    %149 = math.tanh %148 : vector<16x128xf32>
    %150 = vector.extract_strided_slice %147 {offsets = [0, 128], sizes = [16, 128], strides = [1, 1]} : vector<16x384xf32> to vector<16x128xf32>
    %151 = arith.mulf %150, %121 : vector<16x128xf32>
    %152 = vector.extract_strided_slice %147 {offsets = [0, 0], sizes = [16, 128], strides = [1, 1]} : vector<16x384xf32> to vector<16x128xf32>
    %153 = arith.mulf %152, %149 : vector<16x128xf32>
    %154 = arith.addf %151, %153 : vector<16x128xf32>
    %155 = vector.extract_strided_slice %147 {offsets = [0, 256], sizes = [16, 128], strides = [1, 1]} : vector<16x384xf32> to vector<16x128xf32>
    %156 = math.tanh %154 : vector<16x128xf32>
    %157 = arith.mulf %155, %156 : vector<16x128xf32>
    %c4_i32 = arith.constant 4 : i32
    %158 = arith.truncf %157 : vector<16x128xf32> to vector<16x128xbf16>
    %c0_60 = arith.constant 0 : index
    %c0_61 = arith.constant 0 : index
    %159 = vector.load %arg6[%c0_60, %c0_61] : memref<128x1024xbf16, #tpu.memory_space<vmem>>, vector<128x1024xbf16>
    %cst_62 = arith.constant dense<0.000000e+00> : vector<16x1024xf32>
    %160 = tpu.matmul %158, %159, %cst_62 {dimension_numbers = #tpu.dot_dimension_numbers<[1], [0], [0], [1], [0, 0, 1, 1], [], []>} : vector<16x128xbf16>, vector<128x1024xbf16>, vector<16x1024xf32> -> vector<16x1024xf32>
    %161 = arith.index_cast %c4_i32 : i32 to index
    %c0_63 = arith.constant 0 : index
    %c0_64 = arith.constant 0 : index
    %162 = vector.load %arg12[%161, %c0_63, %c0_64] : memref<8x8x512xf32, #tpu.memory_space<vmem>>, vector<1x8x512xf32>
    %163 = vector.shape_cast %162 : vector<1x8x512xf32> to vector<8x512xf32>
    %c7_i32_65 = arith.constant 7 : i32
    %164 = arith.subi %c7_i32_65, %c4_i32 : i32
    %165 = arith.index_cast %164 : i32 to index
    %c0_66 = arith.constant 0 : index
    %c0_67 = arith.constant 0 : index
    %166 = vector.load %arg13[%165, %c0_66, %c0_67] : memref<8x8x512xf32, #tpu.memory_space<vmem>>, vector<1x8x512xf32>
    %167 = vector.shape_cast %166 : vector<1x8x512xf32> to vector<8x512xf32>
    %168 = tpu.concatenate %163, %167 in 0 : vector<8x512xf32>, vector<8x512xf32> -> vector<16x512xf32>
    %169 = vector.extract_strided_slice %160 {offsets = [0, 0], sizes = [16, 512], strides = [1, 1]} : vector<16x1024xf32> to vector<16x512xf32>
    %170 = vector.extract_strided_slice %160 {offsets = [0, 512], sizes = [16, 512], strides = [1, 1]} : vector<16x1024xf32> to vector<16x512xf32>
    %171 = vector.shape_cast %23 : vector<16x1xi1> to vector<16x1xi1>
    %172 = vector.broadcast %171 : vector<16x1xi1> to vector<16x512xi1>
    %173 = arith.select %172, %169, %170 : vector<16x512xi1>, vector<16x512xf32>
    %174 = arith.addf %168, %173 : vector<16x512xf32>
    %175 = vector.extract_strided_slice %174 {offsets = [0, 0], sizes = [16, 384], strides = [1, 1]} : vector<16x512xf32> to vector<16x384xf32>
    %176 = arith.negf %175 : vector<16x384xf32>
    %177 = math.exp %176 : vector<16x384xf32>
    %cst_68 = arith.constant 1.000000e+00 : f32
    %178 = vector.broadcast %cst_68 : f32 to vector<16x384xf32>
    %179 = arith.addf %178, %177 : vector<16x384xf32>
    %180 = arith.divf %178, %179 : vector<16x384xf32>
    %181 = vector.extract_strided_slice %174 {offsets = [0, 384], sizes = [16, 128], strides = [1, 1]} : vector<16x512xf32> to vector<16x128xf32>
    %182 = math.tanh %181 : vector<16x128xf32>
    %183 = vector.extract_strided_slice %180 {offsets = [0, 128], sizes = [16, 128], strides = [1, 1]} : vector<16x384xf32> to vector<16x128xf32>
    %184 = arith.mulf %183, %154 : vector<16x128xf32>
    %185 = vector.extract_strided_slice %180 {offsets = [0, 0], sizes = [16, 128], strides = [1, 1]} : vector<16x384xf32> to vector<16x128xf32>
    %186 = arith.mulf %185, %182 : vector<16x128xf32>
    %187 = arith.addf %184, %186 : vector<16x128xf32>
    %188 = vector.extract_strided_slice %180 {offsets = [0, 256], sizes = [16, 128], strides = [1, 1]} : vector<16x384xf32> to vector<16x128xf32>
    %189 = math.tanh %187 : vector<16x128xf32>
    %190 = arith.mulf %188, %189 : vector<16x128xf32>
    %c5_i32 = arith.constant 5 : i32
    %191 = arith.truncf %190 : vector<16x128xf32> to vector<16x128xbf16>
    %c0_69 = arith.constant 0 : index
    %c0_70 = arith.constant 0 : index
    %192 = vector.load %arg6[%c0_69, %c0_70] : memref<128x1024xbf16, #tpu.memory_space<vmem>>, vector<128x1024xbf16>
    %cst_71 = arith.constant dense<0.000000e+00> : vector<16x1024xf32>
    %193 = tpu.matmul %191, %192, %cst_71 {dimension_numbers = #tpu.dot_dimension_numbers<[1], [0], [0], [1], [0, 0, 1, 1], [], []>} : vector<16x128xbf16>, vector<128x1024xbf16>, vector<16x1024xf32> -> vector<16x1024xf32>
    %194 = arith.index_cast %c5_i32 : i32 to index
    %c0_72 = arith.constant 0 : index
    %c0_73 = arith.constant 0 : index
    %195 = vector.load %arg12[%194, %c0_72, %c0_73] : memref<8x8x512xf32, #tpu.memory_space<vmem>>, vector<1x8x512xf32>
    %196 = vector.shape_cast %195 : vector<1x8x512xf32> to vector<8x512xf32>
    %c7_i32_74 = arith.constant 7 : i32
    %197 = arith.subi %c7_i32_74, %c5_i32 : i32
    %198 = arith.index_cast %197 : i32 to index
    %c0_75 = arith.constant 0 : index
    %c0_76 = arith.constant 0 : index
    %199 = vector.load %arg13[%198, %c0_75, %c0_76] : memref<8x8x512xf32, #tpu.memory_space<vmem>>, vector<1x8x512xf32>
    %200 = vector.shape_cast %199 : vector<1x8x512xf32> to vector<8x512xf32>
    %201 = tpu.concatenate %196, %200 in 0 : vector<8x512xf32>, vector<8x512xf32> -> vector<16x512xf32>
    %202 = vector.extract_strided_slice %193 {offsets = [0, 0], sizes = [16, 512], strides = [1, 1]} : vector<16x1024xf32> to vector<16x512xf32>
    %203 = vector.extract_strided_slice %193 {offsets = [0, 512], sizes = [16, 512], strides = [1, 1]} : vector<16x1024xf32> to vector<16x512xf32>
    %204 = vector.shape_cast %23 : vector<16x1xi1> to vector<16x1xi1>
    %205 = vector.broadcast %204 : vector<16x1xi1> to vector<16x512xi1>
    %206 = arith.select %205, %202, %203 : vector<16x512xi1>, vector<16x512xf32>
    %207 = arith.addf %201, %206 : vector<16x512xf32>
    %208 = vector.extract_strided_slice %207 {offsets = [0, 0], sizes = [16, 384], strides = [1, 1]} : vector<16x512xf32> to vector<16x384xf32>
    %209 = arith.negf %208 : vector<16x384xf32>
    %210 = math.exp %209 : vector<16x384xf32>
    %cst_77 = arith.constant 1.000000e+00 : f32
    %211 = vector.broadcast %cst_77 : f32 to vector<16x384xf32>
    %212 = arith.addf %211, %210 : vector<16x384xf32>
    %213 = arith.divf %211, %212 : vector<16x384xf32>
    %214 = vector.extract_strided_slice %207 {offsets = [0, 384], sizes = [16, 128], strides = [1, 1]} : vector<16x512xf32> to vector<16x128xf32>
    %215 = math.tanh %214 : vector<16x128xf32>
    %216 = vector.extract_strided_slice %213 {offsets = [0, 128], sizes = [16, 128], strides = [1, 1]} : vector<16x384xf32> to vector<16x128xf32>
    %217 = arith.mulf %216, %187 : vector<16x128xf32>
    %218 = vector.extract_strided_slice %213 {offsets = [0, 0], sizes = [16, 128], strides = [1, 1]} : vector<16x384xf32> to vector<16x128xf32>
    %219 = arith.mulf %218, %215 : vector<16x128xf32>
    %220 = arith.addf %217, %219 : vector<16x128xf32>
    %221 = vector.extract_strided_slice %213 {offsets = [0, 256], sizes = [16, 128], strides = [1, 1]} : vector<16x384xf32> to vector<16x128xf32>
    %222 = math.tanh %220 : vector<16x128xf32>
    %223 = arith.mulf %221, %222 : vector<16x128xf32>
    %c6_i32 = arith.constant 6 : i32
    %224 = arith.truncf %223 : vector<16x128xf32> to vector<16x128xbf16>
    %c0_78 = arith.constant 0 : index
    %c0_79 = arith.constant 0 : index
    %225 = vector.load %arg6[%c0_78, %c0_79] : memref<128x1024xbf16, #tpu.memory_space<vmem>>, vector<128x1024xbf16>
    %cst_80 = arith.constant dense<0.000000e+00> : vector<16x1024xf32>
    %226 = tpu.matmul %224, %225, %cst_80 {dimension_numbers = #tpu.dot_dimension_numbers<[1], [0], [0], [1], [0, 0, 1, 1], [], []>} : vector<16x128xbf16>, vector<128x1024xbf16>, vector<16x1024xf32> -> vector<16x1024xf32>
    %227 = arith.index_cast %c6_i32 : i32 to index
    %c0_81 = arith.constant 0 : index
    %c0_82 = arith.constant 0 : index
    %228 = vector.load %arg12[%227, %c0_81, %c0_82] : memref<8x8x512xf32, #tpu.memory_space<vmem>>, vector<1x8x512xf32>
    %229 = vector.shape_cast %228 : vector<1x8x512xf32> to vector<8x512xf32>
    %c7_i32_83 = arith.constant 7 : i32
    %230 = arith.subi %c7_i32_83, %c6_i32 : i32
    %231 = arith.index_cast %230 : i32 to index
    %c0_84 = arith.constant 0 : index
    %c0_85 = arith.constant 0 : index
    %232 = vector.load %arg13[%231, %c0_84, %c0_85] : memref<8x8x512xf32, #tpu.memory_space<vmem>>, vector<1x8x512xf32>
    %233 = vector.shape_cast %232 : vector<1x8x512xf32> to vector<8x512xf32>
    %234 = tpu.concatenate %229, %233 in 0 : vector<8x512xf32>, vector<8x512xf32> -> vector<16x512xf32>
    %235 = vector.extract_strided_slice %226 {offsets = [0, 0], sizes = [16, 512], strides = [1, 1]} : vector<16x1024xf32> to vector<16x512xf32>
    %236 = vector.extract_strided_slice %226 {offsets = [0, 512], sizes = [16, 512], strides = [1, 1]} : vector<16x1024xf32> to vector<16x512xf32>
    %237 = vector.shape_cast %23 : vector<16x1xi1> to vector<16x1xi1>
    %238 = vector.broadcast %237 : vector<16x1xi1> to vector<16x512xi1>
    %239 = arith.select %238, %235, %236 : vector<16x512xi1>, vector<16x512xf32>
    %240 = arith.addf %234, %239 : vector<16x512xf32>
    %241 = vector.extract_strided_slice %240 {offsets = [0, 0], sizes = [16, 384], strides = [1, 1]} : vector<16x512xf32> to vector<16x384xf32>
    %242 = arith.negf %241 : vector<16x384xf32>
    %243 = math.exp %242 : vector<16x384xf32>
    %cst_86 = arith.constant 1.000000e+00 : f32
    %244 = vector.broadcast %cst_86 : f32 to vector<16x384xf32>
    %245 = arith.addf %244, %243 : vector<16x384xf32>
    %246 = arith.divf %244, %245 : vector<16x384xf32>
    %247 = vector.extract_strided_slice %240 {offsets = [0, 384], sizes = [16, 128], strides = [1, 1]} : vector<16x512xf32> to vector<16x128xf32>
    %248 = math.tanh %247 : vector<16x128xf32>
    %249 = vector.extract_strided_slice %246 {offsets = [0, 128], sizes = [16, 128], strides = [1, 1]} : vector<16x384xf32> to vector<16x128xf32>
    %250 = arith.mulf %249, %220 : vector<16x128xf32>
    %251 = vector.extract_strided_slice %246 {offsets = [0, 0], sizes = [16, 128], strides = [1, 1]} : vector<16x384xf32> to vector<16x128xf32>
    %252 = arith.mulf %251, %248 : vector<16x128xf32>
    %253 = arith.addf %250, %252 : vector<16x128xf32>
    %254 = vector.extract_strided_slice %246 {offsets = [0, 256], sizes = [16, 128], strides = [1, 1]} : vector<16x384xf32> to vector<16x128xf32>
    %255 = math.tanh %253 : vector<16x128xf32>
    %256 = arith.mulf %254, %255 : vector<16x128xf32>
    %c7_i32_87 = arith.constant 7 : i32
    %257 = arith.truncf %256 : vector<16x128xf32> to vector<16x128xbf16>
    %c0_88 = arith.constant 0 : index
    %c0_89 = arith.constant 0 : index
    %258 = vector.load %arg6[%c0_88, %c0_89] : memref<128x1024xbf16, #tpu.memory_space<vmem>>, vector<128x1024xbf16>
    %cst_90 = arith.constant dense<0.000000e+00> : vector<16x1024xf32>
    %259 = tpu.matmul %257, %258, %cst_90 {dimension_numbers = #tpu.dot_dimension_numbers<[1], [0], [0], [1], [0, 0, 1, 1], [], []>} : vector<16x128xbf16>, vector<128x1024xbf16>, vector<16x1024xf32> -> vector<16x1024xf32>
    %260 = arith.index_cast %c7_i32_87 : i32 to index
    %c0_91 = arith.constant 0 : index
    %c0_92 = arith.constant 0 : index
    %261 = vector.load %arg12[%260, %c0_91, %c0_92] : memref<8x8x512xf32, #tpu.memory_space<vmem>>, vector<1x8x512xf32>
    %262 = vector.shape_cast %261 : vector<1x8x512xf32> to vector<8x512xf32>
    %c7_i32_93 = arith.constant 7 : i32
    %263 = arith.subi %c7_i32_93, %c7_i32_87 : i32
    %264 = arith.index_cast %263 : i32 to index
    %c0_94 = arith.constant 0 : index
    %c0_95 = arith.constant 0 : index
    %265 = vector.load %arg13[%264, %c0_94, %c0_95] : memref<8x8x512xf32, #tpu.memory_space<vmem>>, vector<1x8x512xf32>
    %266 = vector.shape_cast %265 : vector<1x8x512xf32> to vector<8x512xf32>
    %267 = tpu.concatenate %262, %266 in 0 : vector<8x512xf32>, vector<8x512xf32> -> vector<16x512xf32>
    %268 = vector.extract_strided_slice %259 {offsets = [0, 0], sizes = [16, 512], strides = [1, 1]} : vector<16x1024xf32> to vector<16x512xf32>
    %269 = vector.extract_strided_slice %259 {offsets = [0, 512], sizes = [16, 512], strides = [1, 1]} : vector<16x1024xf32> to vector<16x512xf32>
    %270 = vector.shape_cast %23 : vector<16x1xi1> to vector<16x1xi1>
    %271 = vector.broadcast %270 : vector<16x1xi1> to vector<16x512xi1>
    %272 = arith.select %271, %268, %269 : vector<16x512xi1>, vector<16x512xf32>
    %273 = arith.addf %267, %272 : vector<16x512xf32>
    %274 = vector.extract_strided_slice %273 {offsets = [0, 0], sizes = [16, 384], strides = [1, 1]} : vector<16x512xf32> to vector<16x384xf32>
    %275 = arith.negf %274 : vector<16x384xf32>
    %276 = math.exp %275 : vector<16x384xf32>
    %cst_96 = arith.constant 1.000000e+00 : f32
    %277 = vector.broadcast %cst_96 : f32 to vector<16x384xf32>
    %278 = arith.addf %277, %276 : vector<16x384xf32>
    %279 = arith.divf %277, %278 : vector<16x384xf32>
    %280 = vector.extract_strided_slice %273 {offsets = [0, 384], sizes = [16, 128], strides = [1, 1]} : vector<16x512xf32> to vector<16x128xf32>
    %281 = math.tanh %280 : vector<16x128xf32>
    %282 = vector.extract_strided_slice %279 {offsets = [0, 128], sizes = [16, 128], strides = [1, 1]} : vector<16x384xf32> to vector<16x128xf32>
    %283 = arith.mulf %282, %253 : vector<16x128xf32>
    %284 = vector.extract_strided_slice %279 {offsets = [0, 0], sizes = [16, 128], strides = [1, 1]} : vector<16x384xf32> to vector<16x128xf32>
    %285 = arith.mulf %284, %281 : vector<16x128xf32>
    %286 = arith.addf %283, %285 : vector<16x128xf32>
    %287 = vector.extract_strided_slice %279 {offsets = [0, 256], sizes = [16, 128], strides = [1, 1]} : vector<16x384xf32> to vector<16x128xf32>
    %288 = math.tanh %286 : vector<16x128xf32>
    %289 = arith.mulf %287, %288 : vector<16x128xf32>
    %c8_i32_97 = arith.constant 8 : i32
    %c0_98 = arith.constant 0 : index
    %c0_99 = arith.constant 0 : index
    %290 = vector.load %arg14[%c0_98, %c0_99] : memref<16x128xf32, #tpu.memory_space<vmem>>, vector<16x128xf32>
    tpu.vector_store %arg14[%c0_98, %c0_99], %289 {strides = array<i32>} : memref<16x128xf32, #tpu.memory_space<vmem>>, vector<16x128xf32>,
    %c0_100 = arith.constant 0 : index
    %c0_101 = arith.constant 0 : index
    %291 = vector.load %arg15[%c0_100, %c0_101] : memref<16x128xf32, #tpu.memory_space<vmem>>, vector<16x128xf32>
    tpu.vector_store %arg15[%c0_100, %c0_101], %286 {strides = array<i32>} : memref<16x128xf32, #tpu.memory_space<vmem>>, vector<16x128xf32>,
    %c0_i32_102 = arith.constant 0 : i32
    %292 = arith.cmpi eq, %arg1, %c0_i32_102 : i32
    %293 = arith.extui %292 : i1 to i32
    %c0_i32_103 = arith.constant 0 : i32
    %294 = arith.cmpi ne, %293, %c0_i32_103 : i32
    scf.if %294 {
      %295 = vector.extract_strided_slice %289 {offsets = [0, 0], sizes = [8, 128], strides = [1, 1]} : vector<16x128xf32> to vector<8x128xf32>
      %296 = vector.extract_strided_slice %289 {offsets = [8, 0], sizes = [8, 128], strides = [1, 1]} : vector<16x128xf32> to vector<8x128xf32>
      %297 = tpu.concatenate %295, %296 in 1 : vector<8x128xf32>, vector<8x128xf32> -> vector<8x256xf32>
      %298 = arith.truncf %297 : vector<8x256xf32> to vector<8x256xbf16>
      %c0_104 = arith.constant 0 : index
      %c0_105 = arith.constant 0 : index
      %299 = vector.load %arg7[%c0_104, %c0_105] : memref<256x128xbf16, #tpu.memory_space<vmem>>, vector<256x128xbf16>
      %cst_106 = arith.constant dense<0.000000e+00> : vector<8x128xf32>
      %300 = tpu.matmul %298, %299, %cst_106 {dimension_numbers = #tpu.dot_dimension_numbers<[1], [0], [0], [1], [0, 0, 1, 1], [], []>} : vector<8x256xbf16>, vector<256x128xbf16>, vector<8x128xf32> -> vector<8x128xf32>
      %c0_107 = arith.constant 0 : index
      %c0_108 = arith.constant 0 : index
      %301 = vector.load %arg8[%c0_107, %c0_108] : memref<1x128xf32, #tpu.memory_space<vmem>>, vector<1x128xf32>
      %302 = vector.broadcast %301 : vector<1x128xf32> to vector<8x128xf32>
      %303 = arith.addf %300, %302 : vector<8x128xf32>
      %304 = math.tanh %303 : vector<8x128xf32>
      %305 = arith.truncf %304 : vector<8x128xf32> to vector<8x128xbf16>
      %c0_109 = arith.constant 0 : index
      %c0_110 = arith.constant 0 : index
      %306 = vector.load %arg9[%c0_109, %c0_110] : memref<128x128xbf16, #tpu.memory_space<vmem>>, vector<128x128xbf16>
      %cst_111 = arith.constant dense<0.000000e+00> : vector<8x128xf32>
      %307 = tpu.matmul %305, %306, %cst_111 {dimension_numbers = #tpu.dot_dimension_numbers<[1], [0], [0], [1], [0, 0, 1, 1], [], []>} : vector<8x128xbf16>, vector<128x128xbf16>, vector<8x128xf32> -> vector<8x128xf32>
      %c0_112 = arith.constant 0 : index
      %c0_113 = arith.constant 0 : index
      %308 = vector.load %arg10[%c0_112, %c0_113] : memref<1x128xf32, #tpu.memory_space<vmem>>, vector<1x128xf32>
      %309 = vector.broadcast %308 : vector<1x128xf32> to vector<8x128xf32>
      %310 = arith.addf %307, %309 : vector<8x128xf32>
      %c0_114 = arith.constant 0 : index
      %c0_115 = arith.constant 0 : index
      %311 = vector.load %arg11[%c0_114, %c0_115] : memref<8x128xf32, #tpu.memory_space<vmem>>, vector<8x128xf32>
      tpu.vector_store %arg11[%c0_114, %c0_115], %310 {strides = array<i32>} : memref<8x128xf32, #tpu.memory_space<vmem>>, vector<8x128xf32>,
    } else {
    }
    return
  }
  func.func @transform_0(%arg0: i32, %arg1: i32) -> (i32, i32, i32) {
    %c0_i32 = arith.constant 0 : i32
    %c0_i32_0 = arith.constant 0 : i32
    return %arg0, %arg1, %c0_i32 : i32, i32, i32
  }
  func.func @transform_1(%arg0: i32, %arg1: i32) -> (i32, i32, i32) {
    %c0_i32 = arith.constant 0 : i32
    %0 = arith.subi %c0_i32, %arg1 : i32
    %c0_i32_0 = arith.constant 0 : i32
    %c0_i32_1 = arith.constant 0 : i32
    return %arg0, %0, %c0_i32_0 : i32, i32, i32
  }
  func.func @transform_2(%arg0: i32, %arg1: i32) -> (i32, i32) {
    %c0_i32 = arith.constant 0 : i32
    %c0_i32_0 = arith.constant 0 : i32
    %c0_i32_1 = arith.constant 0 : i32
    return %c0_i32, %c0_i32_0 : i32, i32
  }
  func.func @transform_3(%arg0: i32, %arg1: i32) -> (i32, i32) {
    %c0_i32 = arith.constant 0 : i32
    %c0_i32_0 = arith.constant 0 : i32
    %c0_i32_1 = arith.constant 0 : i32
    return %c0_i32, %c0_i32_0 : i32, i32
  }
  func.func @transform_4(%arg0: i32, %arg1: i32) -> (i32, i32) {
    %c0_i32 = arith.constant 0 : i32
    %c0_i32_0 = arith.constant 0 : i32
    %c0_i32_1 = arith.constant 0 : i32
    return %c0_i32, %c0_i32_0 : i32, i32
  }
  func.func @transform_5(%arg0: i32, %arg1: i32) -> (i32, i32) {
    %c0_i32 = arith.constant 0 : i32
    %c0_i32_0 = arith.constant 0 : i32
    %c0_i32_1 = arith.constant 0 : i32
    return %c0_i32, %c0_i32_0 : i32, i32
  }
  func.func @transform_6(%arg0: i32, %arg1: i32) -> (i32, i32) {
    %c0_i32 = arith.constant 0 : i32
    %c0_i32_0 = arith.constant 0 : i32
    %c0_i32_1 = arith.constant 0 : i32
    return %c0_i32, %c0_i32_0 : i32, i32
  }
  func.func @transform_7(%arg0: i32, %arg1: i32) -> (i32, i32) {
    %c0_i32 = arith.constant 0 : i32
    %c0_i32_0 = arith.constant 0 : i32
    %c0_i32_1 = arith.constant 0 : i32
    return %c0_i32, %c0_i32_0 : i32, i32
  }
  func.func @transform_8(%arg0: i32, %arg1: i32) -> (i32, i32) {
    %c0_i32 = arith.constant 0 : i32
    %c0_i32_0 = arith.constant 0 : i32
    %c0_i32_1 = arith.constant 0 : i32
    return %c0_i32, %c0_i32_0 : i32, i32
  }
  func.func @transform_9(%arg0: i32, %arg1: i32) -> (i32, i32) {
    %c0_i32 = arith.constant 0 : i32
    %c0_i32_0 = arith.constant 0 : i32
    return %arg0, %c0_i32 : i32, i32
  }
}

</mosaic_0001>

<llo_original>
// kernel: tpu_custom_call.1
$region0: #{tpu_custom_call.1}
  #allocation0 [shape = 'u32[]', space=smem, size = 0x4, offset = 0x4, fixed_abs, tag = 'smem constant byte address 0x4 - core index']
  #allocation1 [shape = 'u32[144,128]{1,0:T(1,128)}', space=vmem, size = 0x12000, scoped, tag = 'internal scratch']
  #allocation2 [shape = 'f32[8,8,512]{2,1,0:T(8,128)}', space=vmem, size = 0x20000, scoped, tag = 'scratch operand']
  #allocation3 [shape = 'f32[8,8,512]{2,1,0:T(8,128)}', space=vmem, size = 0x20000, scoped, tag = 'scratch operand']
  #allocation4 [shape = 'f32[16,128]{1,0:T(8,128)}', space=vmem, size = 0x2000, scoped, tag = 'scratch operand']
  #allocation5 [shape = 'f32[16,128]{1,0:T(8,128)}', space=vmem, size = 0x2000, scoped, tag = 'scratch operand']
  %s0 = inlined_call_operand.hbm [shape: bf16[1,64,128], index: 0, kind: input, shape index: {}]
  %s1 = inlined_call_operand.hbm [shape: bf16[1,64,128], index: 1, kind: input, shape index: {}]
  %s2 = inlined_call_operand.hbm [shape: bf16[128,1024], index: 2, kind: input, shape index: {}]
  %s3 = inlined_call_operand.hbm [shape: f32[1,1024], index: 3, kind: input, shape index: {}]
  %s4 = inlined_call_operand.hbm [shape: bf16[128,1024], index: 4, kind: input, shape index: {}]
  %s5 = inlined_call_operand.hbm [shape: bf16[256,128], index: 5, kind: input, shape index: {}]
  %s6 = inlined_call_operand.vmem [shape: f32[1,128], index: 6, kind: input, shape index: {}]
  %s7 = inlined_call_operand.hbm [shape: bf16[128,128], index: 7, kind: input, shape index: {}]
  %s8 = inlined_call_operand.vmem [shape: f32[1,128], index: 8, kind: input, shape index: {}]
  %s9 = inlined_call_operand.hbm [shape: f32[8,128], index: 9, kind: output, shape index: {}]
  %s10 = sld [smem:[#allocation0]]
  $region82: #{tpu_custom_call.1} parent=0
    _
  %s12 = ssub.s32 1, %s10
  %s13 = scalar_select 0, %s12, %s10
  $region1: #{tpu_custom_call.1} parent=0
    #allocation6 [shape = 'u8[16384]{0}', space=vmem, size = 0x4000, scoped, tag = 'input window, operand 0, single buffered']
    #allocation7 [shape = 's32[1]{0}', space=sflag, size = 0x4, scoped, tag = 'scoped memory for tpu_custom_call.1']
    #allocation8 [shape = 's32[1]{0}', space=sflag, size = 0x4, scoped, tag = 'scoped memory for tpu_custom_call.1']
    #allocation9 [shape = 'u8[16384]{0}', space=vmem, size = 0x4000, scoped, tag = 'input window, operand 1, single buffered']
    #allocation10 [shape = 's32[1]{0}', space=sflag, size = 0x4, scoped, tag = 'scoped memory for tpu_custom_call.1']
    #allocation11 [shape = 'u8[262144]{0}', space=vmem, size = 0x40000, scoped, tag = 'input window, operand 2, single buffered']
    #allocation12 [shape = 'u8[4096]{0}', space=vmem, size = 0x1000, scoped, tag = 'input window, operand 3, single buffered']
    #allocation13 [shape = 's32[1]{0}', space=sflag, size = 0x4, scoped, tag = 'scoped memory for tpu_custom_call.1']
    #allocation14 [shape = 'u8[262144]{0}', space=vmem, size = 0x40000, scoped, tag = 'input window, operand 4, single buffered']
    #allocation15 [shape = 'u8[65536]{0}', space=vmem, size = 0x10000, scoped, tag = 'input window, operand 5, single buffered']
    #allocation16 [shape = 's32[1]{0}', space=sflag, size = 0x4, scoped, tag = 'scoped memory for tpu_custom_call.1']
    #allocation17 [shape = 'u8[32768]{0}', space=vmem, size = 0x8000, scoped, tag = 'input window, operand 7, single buffered']
    #allocation18 [shape = 'u8[4096]{0}', space=vmem, size = 0x1000, scoped, tag = 'output window, operand 0, single buffered']
    %14 = vsyncpa [#allocation7], 0
    %15 = vsyncpa [#allocation10], 0
    %16 = vsyncpa [#allocation13], 0
    %17 = vsyncpa [#allocation16], 0
    %18 = vsyncpa [#allocation8], 0
    // Predicated region
    $region2: #{tpu_custom_call.1} parent=1 // pred_check
      _
    $region3: #{tpu_custom_call.1} parent=1 // pred_check_branch
      %20 = sbr.rel (0) target = $region5
    $region4: #{tpu_custom_call.1} parent=1 // pred_region
      %s22 = ssub.s32 512, 512
      %23 = vsyncadd [#allocation7], %s22
      %s24 = sshll.u32 [#allocation6], 4
      %s25 = int_to_ptr.vmem [resolvable:$true] %s24
      %30 = dma.hbm_to_vmem [thread:$0]  %s0, 512, %s25, [#allocation7], 64, 64, 4
    $region5: #{tpu_custom_call.1} parent=1 // pred_fallthru
      _
    // Predicated region
    $region6: #{tpu_custom_call.1} parent=1 // pred_check
      _
    $region7: #{tpu_custom_call.1} parent=1 // pred_check_branch
      %32 = sbr.rel (0) target = $region9
    $region8: #{tpu_custom_call.1} parent=1 // pred_region
      %s33 = ssub.s32 0, 0
      %s34 = smul.u32 8, %s33
      %s36 = ssub.s32 512, 512
      %37 = vsyncadd [#allocation10], %s36
      %s38 = smul.addr %s34, 64
      %s39 = scalar_lea.hbm %s1, %s38
      %s40 = sshll.u32 [#allocation9], 4
      %s41 = int_to_ptr.vmem [resolvable:$true] %s40
      %46 = dma.hbm_to_vmem [thread:$0]  %s39, 512, %s41, [#allocation10], 64, 64, 4
    $region9: #{tpu_custom_call.1} parent=1 // pred_fallthru
      _
    // Predicated region
    $region10: #{tpu_custom_call.1} parent=1 // pred_check
      _
    $region11: #{tpu_custom_call.1} parent=1 // pred_check_branch
      %48 = sbr.rel (0) target = $region13
    $region12: #{tpu_custom_call.1} parent=1 // pred_region
      %s50 = ssub.s32 8192, 8192
      %51 = vsyncadd [#allocation10], %s50
      %s52 = sshll.u32 [#allocation11], 4
      %s53 = int_to_ptr.vmem [resolvable:$true] %s52
      %58 = dma.hbm_to_vmem [thread:$0]  %s2, 8192, %s53, [#allocation10], 512, 512, 32
    $region13: #{tpu_custom_call.1} parent=1 // pred_fallthru
      _
    // Predicated region
    $region14: #{tpu_custom_call.1} parent=1 // pred_check
      _
    $region15: #{tpu_custom_call.1} parent=1 // pred_check_branch
      %60 = sbr.rel (0) target = $region17
    $region16: #{tpu_custom_call.1} parent=1 // pred_region
      %s62 = ssub.s32 128, 128
      %63 = vsyncadd [#allocation13], %s62
      %s65 = sshll.u32 [#allocation12], 4
      %s66 = int_to_ptr.vmem [resolvable:$true] %s65
      %68 = dma.hbm_to_vmem [thread:$0]  %s3, 128, %s66, [#allocation13]
    $region17: #{tpu_custom_call.1} parent=1 // pred_fallthru
      _
    // Predicated region
    $region18: #{tpu_custom_call.1} parent=1 // pred_check
      _
    $region19: #{tpu_custom_call.1} parent=1 // pred_check_branch
      %70 = sbr.rel (0) target = $region21
    $region20: #{tpu_custom_call.1} parent=1 // pred_region
      %s72 = ssub.s32 8192, 8192
      %73 = vsyncadd [#allocation13], %s72
      %s74 = sshll.u32 [#allocation14], 4
      %s75 = int_to_ptr.vmem [resolvable:$true] %s74
      %80 = dma.hbm_to_vmem [thread:$0]  %s4, 8192, %s75, [#allocation13], 512, 512, 32
    $region21: #{tpu_custom_call.1} parent=1 // pred_fallthru
      _
    // Predicated region
    $region22: #{tpu_custom_call.1} parent=1 // pred_check
      _
    $region23: #{tpu_custom_call.1} parent=1 // pred_check_branch
      %82 = sbr.rel (0) target = $region25
    $region24: #{tpu_custom_call.1} parent=1 // pred_region
      %s84 = ssub.s32 2048, 2048
      %85 = vsyncadd [#allocation16], %s84
      %s86 = sshll.u32 [#allocation15], 4
      %s87 = int_to_ptr.vmem [resolvable:$true] %s86
      %92 = dma.hbm_to_vmem [thread:$0]  %s5, 2048, %s87, [#allocation16], 64, 64, 4
    $region25: #{tpu_custom_call.1} parent=1 // pred_fallthru
      _
    // Predicated region
    $region26: #{tpu_custom_call.1} parent=1 // pred_check
      _
    $region27: #{tpu_custom_call.1} parent=1 // pred_check_branch
      %94 = sbr.rel (0) target = $region29
    $region28: #{tpu_custom_call.1} parent=1 // pred_region
      _
    $region29: #{tpu_custom_call.1} parent=1 // pred_fallthru
      _
    // Predicated region
    $region30: #{tpu_custom_call.1} parent=1 // pred_check
      _
    $region31: #{tpu_custom_call.1} parent=1 // pred_check_branch
      %96 = sbr.rel (0) target = $region33
    $region32: #{tpu_custom_call.1} parent=1 // pred_region
      %s98 = ssub.s32 1024, 1024
      %99 = vsyncadd [#allocation16], %s98
      %s100 = sshll.u32 [#allocation17], 4
      %s101 = int_to_ptr.vmem [resolvable:$true] %s100
      %106 = dma.hbm_to_vmem [thread:$0]  %s7, 1024, %s101, [#allocation16], 64, 64, 4
    $region33: #{tpu_custom_call.1} parent=1 // pred_fallthru
      _
    // Predicated region
    $region34: #{tpu_custom_call.1} parent=1 // pred_check
      _
    $region35: #{tpu_custom_call.1} parent=1 // pred_check_branch
      %108 = sbr.rel (0) target = $region37
    $region36: #{tpu_custom_call.1} parent=1 // pred_region
      _
    $region37: #{tpu_custom_call.1} parent=1 // pred_fallthru
      _
    // Predicated region
    $region38: #{tpu_custom_call.1} parent=1 // pred_check
      _
    $region39: #{tpu_custom_call.1} parent=1 // pred_check_branch
      %110 = sbr.rel (0) target = $region41
    $region40: #{tpu_custom_call.1} parent=1 // pred_region
      %111 = dma.done [#allocation7], 512
    $region41: #{tpu_custom_call.1} parent=1 // pred_fallthru
      _
    // Predicated region
    $region42: #{tpu_custom_call.1} parent=1 // pred_check
      _
    $region43: #{tpu_custom_call.1} parent=1 // pred_check_branch
      %113 = sbr.rel (0) target = $region45
    $region44: #{tpu_custom_call.1} parent=1 // pred_region
      %114 = dma.done [#allocation10], 512
    $region45: #{tpu_custom_call.1} parent=1 // pred_fallthru
      _
    // Predicated region
    $region46: #{tpu_custom_call.1} parent=1 // pred_check
      _
    $region47: #{tpu_custom_call.1} parent=1 // pred_check_branch
      %116 = sbr.rel (0) target = $region49
    $region48: #{tpu_custom_call.1} parent=1 // pred_region
      %117 = dma.done [#allocation10], 8192
    $region49: #{tpu_custom_call.1} parent=1 // pred_fallthru
      _
    // Predicated region
    $region50: #{tpu_custom_call.1} parent=1 // pred_check
      _
    $region51: #{tpu_custom_call.1} parent=1 // pred_check_branch
      %119 = sbr.rel (0) target = $region53
    $region52: #{tpu_custom_call.1} parent=1 // pred_region
      %120 = dma.done [#allocation13], 128
    $region53: #{tpu_custom_call.1} parent=1 // pred_fallthru
      _
    // Predicated region
    $region54: #{tpu_custom_call.1} parent=1 // pred_check
      _
    $region55: #{tpu_custom_call.1} parent=1 // pred_check_branch
      %122 = sbr.rel (0) target = $region57
    $region56: #{tpu_custom_call.1} parent=1 // pred_region
      %123 = dma.done [#allocation13], 8192
    $region57: #{tpu_custom_call.1} parent=1 // pred_fallthru
      _
    // Predicated region
    $region58: #{tpu_custom_call.1} parent=1 // pred_check
      _
    $region59: #{tpu_custom_call.1} parent=1 // pred_check_branch
      %125 = sbr.rel (0) target = $region61
    $region60: #{tpu_custom_call.1} parent=1 // pred_region
      %126 = dma.done [#allocation16], 2048
    $region61: #{tpu_custom_call.1} parent=1 // pred_fallthru
      _
    // Predicated region
    $region62: #{tpu_custom_call.1} parent=1 // pred_check
      _
    $region63: #{tpu_custom_call.1} parent=1 // pred_check_branch
      %128 = sbr.rel (0) target = $region65
    $region64: #{tpu_custom_call.1} parent=1 // pred_region
      %129 = dma.done [#allocation16], 1024
    $region65: #{tpu_custom_call.1} parent=1 // pred_fallthru
      _
    %s130 = ssub.s32 0, 0
    %s131 = smul.u32 8, %s130
    %p133 = scmp.eq.s32.totalorder 0, 0
    // Predicated region
    $region66: #{tpu_custom_call.1} parent=1 // pred_check
      %p134 = pneg %p133
    $region67: #{tpu_custom_call.1} parent=1 // pred_check_branch
      %136 = sbr.rel (%p134) target = $region69
    $region68: #{tpu_custom_call.1} parent=1 // pred_region
      %137 = vst [vmem:[#allocation4] sm:$0xff] 0.0
      %138 = vst [vmem:[#allocation4 + $0x8] sm:$0xff] 0.0
      %139 = vst [vmem:[#allocation5] sm:$0xff] 0.0
      %140 = vst [vmem:[#allocation5 + $0x8] sm:$0xff] 0.0
      %141 = vst [vmem:[#allocation18] sm:$0xff] 0.0
    $region69: #{tpu_custom_call.1} parent=1 // pred_fallthru
      _
    %v142 = vld [vmem:[#allocation6] sm:$0xf]
    %v143 = vld [vmem:[#allocation6 + $0x4] sm:$0xf]
    %v144 = vld [vmem:[#allocation6 + $0x8] sm:$0xf]
    %v145 = vld [vmem:[#allocation6 + $0xc] sm:$0xf]
    %v146 = vld [vmem:[#allocation6 + $0x10] sm:$0xf]
    %v147 = vld [vmem:[#allocation6 + $0x14] sm:$0xf]
    %v148 = vld [vmem:[#allocation6 + $0x18] sm:$0xf]
    %v149 = vld [vmem:[#allocation6 + $0x1c] sm:$0xf]
    %v150 = vld [vmem:[#allocation11] sm:$0xff]
    %v151 = vld [vmem:[#allocation11 + $0x8] sm:$0xff]
    %v152 = vld [vmem:[#allocation11 + $0x20] sm:$0xff]
    %v153 = vld [vmem:[#allocation11 + $0x28] sm:$0xff]
    %v154 = vld [vmem:[#allocation11 + $0x40] sm:$0xff]
    %v155 = vld [vmem:[#allocation11 + $0x48] sm:$0xff]
    %v156 = vld [vmem:[#allocation11 + $0x60] sm:$0xff]
    %v157 = vld [vmem:[#allocation11 + $0x68] sm:$0xff]
    %v158 = vld [vmem:[#allocation11 + $0x80] sm:$0xff]
    %v159 = vld [vmem:[#allocation11 + $0x88] sm:$0xff]
    %v160 = vld [vmem:[#allocation11 + $0xa0] sm:$0xff]
    %v161 = vld [vmem:[#allocation11 + $0xa8] sm:$0xff]
    %v162 = vld [vmem:[#allocation11 + $0xc0] sm:$0xff]
    %v163 = vld [vmem:[#allocation11 + $0xc8] sm:$0xff]
    %v164 = vld [vmem:[#allocation11 + $0xe0] sm:$0xff]
    %v165 = vld [vmem:[#allocation11 + $0xe8] sm:$0xff]
    %v166 = vld [vmem:[#allocation11 + $0x100] sm:$0xff]
    %v167 = vld [vmem:[#allocation11 + $0x108] sm:$0xff]
    %v168 = vld [vmem:[#allocation11 + $0x120] sm:$0xff]
    %v169 = vld [vmem:[#allocation11 + $0x128] sm:$0xff]
    %v170 = vld [vmem:[#allocation11 + $0x140] sm:$0xff]
    %v171 = vld [vmem:[#allocation11 + $0x148] sm:$0xff]
    %v172 = vld [vmem:[#allocation11 + $0x160] sm:$0xff]
    %v173 = vld [vmem:[#allocation11 + $0x168] sm:$0xff]
    %v174 = vld [vmem:[#allocation11 + $0x180] sm:$0xff]
    %v175 = vld [vmem:[#allocation11 + $0x188] sm:$0xff]
    %v176 = vld [vmem:[#allocation11 + $0x1a0] sm:$0xff]
    %v177 = vld [vmem:[#allocation11 + $0x1a8] sm:$0xff]
    %v178 = vld [vmem:[#allocation11 + $0x1c0] sm:$0xff]
    %v179 = vld [vmem:[#allocation11 + $0x1c8] sm:$0xff]
    %v180 = vld [vmem:[#allocation11 + $0x1e0] sm:$0xff]
    %v181 = vld [vmem:[#allocation11 + $0x1e8] sm:$0xff]
    %v182 = vld [vmem:[#allocation12] sm:$0xf]
    %v184 = vlaneseq
    %v185 = vshrl.u32 %v184, 7
    %v186 = vsub.s32 0, %v185
    %v187 = vrot.slane %v182, %v186
    %v188 = vlaneseq
    %v189 = vshrl.u32 %v188, 7
    %v190 = vsub.s32 1, %v189
    %v191 = vrot.slane %v182, %v190
    %v192 = vlaneseq
    %v193 = vshrl.u32 %v192, 7
    %v194 = vsub.s32 2, %v193
    %v195 = vrot.slane %v182, %v194
    %v196 = vlaneseq
    %v197 = vshrl.u32 %v196, 7
    %v198 = vsub.s32 3, %v197
    %v199 = vrot.slane %v182, %v198
    %v212 = vunpack.c.l.b16 %v142
    %v213 = vunpack.c.l.b16 %v143
    %v214 = vunpack.c.l.b16 %v144
    %v215 = vunpack.c.l.b16 %v145
    %v216 = vunpack.c.l.b16 %v146
    %v217 = vunpack.c.l.b16 %v147
    %v218 = vunpack.c.l.b16 %v148
    %v219 = vunpack.c.l.b16 %v149
    %v220 = vpack.c.b16 %v213, %v212
    %v221 = vpack.c.b16 %v215, %v214
    %v222 = vpack.c.b16 %v217, %v216
    %v223 = vpack.c.b16 %v219, %v218
    %v260 = vunpack.c.l.b16 %v150
    %v261 = vunpack.c.h.b16 %v150
    %v262 = vunpack.c.l.b16 %v151
    %v263 = vunpack.c.h.b16 %v151
    %v264 = vunpack.c.l.b16 %v152
    %v265 = vunpack.c.h.b16 %v152
    %v266 = vunpack.c.l.b16 %v153
    %v267 = vunpack.c.h.b16 %v153
    %v268 = vunpack.c.l.b16 %v154
    %v269 = vunpack.c.h.b16 %v154
    %v270 = vunpack.c.l.b16 %v155
    %v271 = vunpack.c.h.b16 %v155
    %v272 = vunpack.c.l.b16 %v156
    %v273 = vunpack.c.h.b16 %v156
    %v274 = vunpack.c.l.b16 %v157
    %v275 = vunpack.c.h.b16 %v157
    %v276 = vunpack.c.l.b16 %v158
    %v277 = vunpack.c.h.b16 %v158
    %v278 = vunpack.c.l.b16 %v159
    %v279 = vunpack.c.h.b16 %v159
    %v280 = vunpack.c.l.b16 %v160
    %v281 = vunpack.c.h.b16 %v160
    %v282 = vunpack.c.l.b16 %v161
    %v283 = vunpack.c.h.b16 %v161
    %v284 = vunpack.c.l.b16 %v162
    %v285 = vunpack.c.h.b16 %v162
    %v286 = vunpack.c.l.b16 %v163
    %v287 = vunpack.c.h.b16 %v163
    %v288 = vunpack.c.l.b16 %v164
    %v289 = vunpack.c.h.b16 %v164
    %v290 = vunpack.c.l.b16 %v165
    %v291 = vunpack.c.h.b16 %v165
    %v292 = vunpack.c.l.b16 %v166
    %v293 = vunpack.c.h.b16 %v166
    %v294 = vunpack.c.l.b16 %v167
    %v295 = vunpack.c.h.b16 %v167
    %v296 = vunpack.c.l.b16 %v168
    %v297 = vunpack.c.h.b16 %v168
    %v298 = vunpack.c.l.b16 %v169
    %v299 = vunpack.c.h.b16 %v169
    %v300 = vunpack.c.l.b16 %v170
    %v301 = vunpack.c.h.b16 %v170
    %v302 = vunpack.c.l.b16 %v171
    %v303 = vunpack.c.h.b16 %v171
    %v304 = vunpack.c.l.b16 %v172
    %v305 = vunpack.c.h.b16 %v172
    %v306 = vunpack.c.l.b16 %v173
    %v307 = vunpack.c.h.b16 %v173
    %v308 = vunpack.c.l.b16 %v174
    %v309 = vunpack.c.h.b16 %v174
    %v310 = vunpack.c.l.b16 %v175
    %v311 = vunpack.c.h.b16 %v175
    %v312 = vunpack.c.l.b16 %v176
    %v313 = vunpack.c.h.b16 %v176
    %v314 = vunpack.c.l.b16 %v177
    %v315 = vunpack.c.h.b16 %v177
    %v316 = vunpack.c.l.b16 %v178
    %v317 = vunpack.c.h.b16 %v178
    %v318 = vunpack.c.l.b16 %v179
    %v319 = vunpack.c.h.b16 %v179
    %v320 = vunpack.c.l.b16 %v180
    %v321 = vunpack.c.h.b16 %v180
    %v322 = vunpack.c.l.b16 %v181
    %v323 = vunpack.c.h.b16 %v181
    %v324 = vpack.c.b16 %v264, %v260
    %v325 = vpack.c.b16 %v265, %v261
    %v326 = vpack.c.b16 %v266, %v262
    %v327 = vpack.c.b16 %v267, %v263
    %v328 = vpack.c.b16 %v272, %v268
    %v329 = vpack.c.b16 %v273, %v269
    %v330 = vpack.c.b16 %v274, %v270
    %v331 = vpack.c.b16 %v275, %v271
    %v332 = vpack.c.b16 %v280, %v276
    %v333 = vpack.c.b16 %v281, %v277
    %v334 = vpack.c.b16 %v282, %v278
    %v335 = vpack.c.b16 %v283, %v279
    %v336 = vpack.c.b16 %v288, %v284
    %v337 = vpack.c.b16 %v289, %v285
    %v338 = vpack.c.b16 %v290, %v286
    %v339 = vpack.c.b16 %v291, %v287
    %v340 = vpack.c.b16 %v296, %v292
    %v341 = vpack.c.b16 %v297, %v293
    %v342 = vpack.c.b16 %v298, %v294
    %v343 = vpack.c.b16 %v299, %v295
    %v344 = vpack.c.b16 %v304, %v300
    %v345 = vpack.c.b16 %v305, %v301
    %v346 = vpack.c.b16 %v306, %v302
    %v347 = vpack.c.b16 %v307, %v303
    %v348 = vpack.c.b16 %v312, %v308
    %v349 = vpack.c.b16 %v313, %v309
    %v350 = vpack.c.b16 %v314, %v310
    %v351 = vpack.c.b16 %v315, %v311
    %v352 = vpack.c.b16 %v320, %v316
    %v353 = vpack.c.b16 %v321, %v317
    %v354 = vpack.c.b16 %v322, %v318
    %v355 = vpack.c.b16 %v323, %v319
    %388 = vmatprep.subr.bf16.mxu0 %v353
    %389 = vmatpush1.bf16.msra.mxu0 %v352
    %390 = vmatprep.subr.bf16.mxu0 %v349
    %391 = vmatpush1.bf16.msra.mxu0 %v348
    %392 = vmatprep.subr.bf16.mxu0 %v345
    %393 = vmatpush1.bf16.msra.mxu0 %v344
    %394 = vmatprep.subr.bf16.mxu0 %v341
    %395 = vmatpush1.bf16.msra.mxu0 %v340
    %396 = vmatprep.subr.bf16.mxu0 %v337
    %397 = vmatpush1.bf16.msra.mxu0 %v336
    %398 = vmatprep.subr.bf16.mxu0 %v333
    %399 = vmatpush1.bf16.msra.mxu0 %v332
    %400 = vmatprep.subr.bf16.mxu0 %v329
    %401 = vmatpush1.bf16.msra.mxu0 %v328
    %402 = vmatprep.subr.bf16.mxu0 %v325
    %403 = vmatpush1.bf16.msra.mxu0 %v324
    %404 = vmatprep.subr.bf16.mxu0 0
    %405 = vmatpush2.bf16.msra.mxu0 0
    %406 = vmatprep.subr.bf16.mxu0 0
    %407 = vmatpush2.bf16.msra.mxu0 0
    %408 = vmatprep.subr.bf16.mxu0 0
    %409 = vmatpush2.bf16.msra.mxu0 0
    %410 = vmatprep.subr.bf16.mxu0 0
    %411 = vmatpush2.bf16.msra.mxu0 0
    %412 = vmatprep.subr.bf16.mxu0 0
    %413 = vmatpush2.bf16.msra.mxu0 0
    %414 = vmatprep.subr.bf16.mxu0 0
    %415 = vmatpush2.bf16.msra.mxu0 0
    %416 = vmatprep.subr.bf16.mxu0 0
    %417 = vmatpush2.bf16.msra.mxu0 0
    %418 = vmatprep.subr.bf16.mxu0 0
    %419 = vmatpush2.bf16.msra.mxu0 0
    %420 = vmatprep.mubr.bf16.mxu0 0
    %421 = vmatmul.mubr.bf16.gmra.mxu0 %v220
    %v422 = vpop.f32.mrf.mxu0
    %v423 = vadd.f32 %v187, %v422
    %v424 = vpop.f32.mrf.mxu0
    %v425 = vadd.f32 %v191, %v424
    %v426 = vpop.f32.mrf.mxu0
    %v427 = vadd.f32 %v187, %v426
    %v428 = vpop.f32.mrf.mxu0
    %v429 = vadd.f32 %v191, %v428
    %430 = vmatprep.mubr.bf16.mxu0 0
    %431 = vmatmul.mubr.bf16.gmra.mxu0 %v221
    %v432 = vpop.f32.mrf.mxu0
    %v433 = vadd.f32 %v187, %v432
    %v434 = vpop.f32.mrf.mxu0
    %v435 = vadd.f32 %v191, %v434
    %v436 = vpop.f32.mrf.mxu0
    %v437 = vadd.f32 %v187, %v436
    %v438 = vpop.f32.mrf.mxu0
    %v439 = vadd.f32 %v191, %v438
    %440 = vmatprep.mubr.bf16.mxu0 0
    %441 = vmatmul.mubr.bf16.gmra.mxu0 %v222
    %v442 = vpop.f32.mrf.mxu0
    %v443 = vadd.f32 %v187, %v442
    %v444 = vpop.f32.mrf.mxu0
    %v445 = vadd.f32 %v191, %v444
    %v446 = vpop.f32.mrf.mxu0
    %v447 = vadd.f32 %v187, %v446
    %v448 = vpop.f32.mrf.mxu0
    %v449 = vadd.f32 %v191, %v448
    %450 = vmatprep.mubr.bf16.mxu0 0
    %451 = vmatmul.mubr.bf16.gmra.mxu0 %v223
    %v452 = vpop.f32.mrf.mxu0
    %v453 = vadd.f32 %v187, %v452
    %v454 = vpop.f32.mrf.mxu0
    %v455 = vadd.f32 %v191, %v454
    %v456 = vpop.f32.mrf.mxu0
    %v457 = vadd.f32 %v187, %v456
    %v458 = vpop.f32.mrf.mxu0
    %v459 = vadd.f32 %v191, %v458
    %460 = vdwg.mxu0
    %461 = vmatprep.subr.bf16.mxu0 %v355
    %462 = vmatpush1.bf16.msra.mxu0 %v354
    %463 = vmatprep.subr.bf16.mxu0 %v351
    %464 = vmatpush1.bf16.msra.mxu0 %v350
    %465 = vmatprep.subr.bf16.mxu0 %v347
    %466 = vmatpush1.bf16.msra.mxu0 %v346
    %467 = vmatprep.subr.bf16.mxu0 %v343
    %468 = vmatpush1.bf16.msra.mxu0 %v342
    %469 = vmatprep.subr.bf16.mxu0 %v339
    %470 = vmatpush1.bf16.msra.mxu0 %v338
    %471 = vmatprep.subr.bf16.mxu0 %v335
    %472 = vmatpush1.bf16.msra.mxu0 %v334
    %473 = vmatprep.subr.bf16.mxu0 %v331
    %474 = vmatpush1.bf16.msra.mxu0 %v330
    %475 = vmatprep.subr.bf16.mxu0 %v327
    %476 = vmatpush1.bf16.msra.mxu0 %v326
    %477 = vmatprep.subr.bf16.mxu0 0
    %478 = vmatpush2.bf16.msra.mxu0 0
    %479 = vmatprep.subr.bf16.mxu0 0
    %480 = vmatpush2.bf16.msra.mxu0 0
    %481 = vmatprep.subr.bf16.mxu0 0
    %482 = vmatpush2.bf16.msra.mxu0 0
    %483 = vmatprep.subr.bf16.mxu0 0
    %484 = vmatpush2.bf16.msra.mxu0 0
    %485 = vmatprep.subr.bf16.mxu0 0
    %486 = vmatpush2.bf16.msra.mxu0 0
    %487 = vmatprep.subr.bf16.mxu0 0
    %488 = vmatpush2.bf16.msra.mxu0 0
    %489 = vmatprep.subr.bf16.mxu0 0
    %490 = vmatpush2.bf16.msra.mxu0 0
    %491 = vmatprep.subr.bf16.mxu0 0
    %492 = vmatpush2.bf16.msra.mxu0 0
    %493 = vmatprep.mubr.bf16.mxu0 0
    %494 = vmatmul.mubr.bf16.gmra.mxu0 %v220
    %v495 = vpop.f32.mrf.mxu0
    %v496 = vadd.f32 %v195, %v495
    %v497 = vpop.f32.mrf.mxu0
    %v498 = vadd.f32 %v199, %v497
    %v499 = vpop.f32.mrf.mxu0
    %v500 = vadd.f32 %v195, %v499
    %v501 = vpop.f32.mrf.mxu0
    %v502 = vadd.f32 %v199, %v501
    %503 = vmatprep.mubr.bf16.mxu0 0
    %504 = vmatmul.mubr.bf16.gmra.mxu0 %v221
    %v505 = vpop.f32.mrf.mxu0
    %v506 = vadd.f32 %v195, %v505
    %v507 = vpop.f32.mrf.mxu0
    %v508 = vadd.f32 %v199, %v507
    %v509 = vpop.f32.mrf.mxu0
    %v510 = vadd.f32 %v195, %v509
    %v511 = vpop.f32.mrf.mxu0
    %v512 = vadd.f32 %v199, %v511
    %513 = vmatprep.mubr.bf16.mxu0 0
    %514 = vmatmul.mubr.bf16.gmra.mxu0 %v222
    %v515 = vpop.f32.mrf.mxu0
    %v516 = vadd.f32 %v195, %v515
    %v517 = vpop.f32.mrf.mxu0
    %v518 = vadd.f32 %v199, %v517
    %v519 = vpop.f32.mrf.mxu0
    %v520 = vadd.f32 %v195, %v519
    %v521 = vpop.f32.mrf.mxu0
    %v522 = vadd.f32 %v199, %v521
    %523 = vmatprep.mubr.bf16.mxu0 0
    %524 = vmatmul.mubr.bf16.gmra.mxu0 %v223
    %v525 = vpop.f32.mrf.mxu0
    %v526 = vadd.f32 %v195, %v525
    %v527 = vpop.f32.mrf.mxu0
    %v528 = vadd.f32 %v199, %v527
    %v529 = vpop.f32.mrf.mxu0
    %v530 = vadd.f32 %v195, %v529
    %v531 = vpop.f32.mrf.mxu0
    %v532 = vadd.f32 %v199, %v531
    %533 = vdwg.mxu0
    %534 = vst [vmem:[#allocation2] sm:$0xff] %v423
    %535 = vst [vmem:[#allocation2 + $0x8] sm:$0xff] %v425
    %536 = vst [vmem:[#allocation2 + $0x10] sm:$0xff] %v496
    %537 = vst [vmem:[#allocation2 + $0x18] sm:$0xff] %v498
    %538 = vst [vmem:[#allocation2 + $0x20] sm:$0xff] %v427
    %539 = vst [vmem:[#allocation2 + $0x28] sm:$0xff] %v429
    %540 = vst [vmem:[#allocation2 + $0x30] sm:$0xff] %v500
    %541 = vst [vmem:[#allocation2 + $0x38] sm:$0xff] %v502
    %542 = vst [vmem:[#allocation2 + $0x40] sm:$0xff] %v433
    %543 = vst [vmem:[#allocation2 + $0x48] sm:$0xff] %v435
    %544 = vst [vmem:[#allocation2 + $0x50] sm:$0xff] %v506
    %545 = vst [vmem:[#allocation2 + $0x58] sm:$0xff] %v508
    %546 = vst [vmem:[#allocation2 + $0x60] sm:$0xff] %v437
    %547 = vst [vmem:[#allocation2 + $0x68] sm:$0xff] %v439
    %548 = vst [vmem:[#allocation2 + $0x70] sm:$0xff] %v510
    %549 = vst [vmem:[#allocation2 + $0x78] sm:$0xff] %v512
    %550 = vst [vmem:[#allocation2 + $0x80] sm:$0xff] %v443
    %551 = vst [vmem:[#allocation2 + $0x88] sm:$0xff] %v445
    %552 = vst [vmem:[#allocation2 + $0x90] sm:$0xff] %v516
    %553 = vst [vmem:[#allocation2 + $0x98] sm:$0xff] %v518
    %554 = vst [vmem:[#allocation2 + $0xa0] sm:$0xff] %v447
    %555 = vst [vmem:[#allocation2 + $0xa8] sm:$0xff] %v449
    %556 = vst [vmem:[#allocation2 + $0xb0] sm:$0xff] %v520
    %557 = vst [vmem:[#allocation2 + $0xb8] sm:$0xff] %v522
    %558 = vst [vmem:[#allocation2 + $0xc0] sm:$0xff] %v453
    %559 = vst [vmem:[#allocation2 + $0xc8] sm:$0xff] %v455
    %560 = vst [vmem:[#allocation2 + $0xd0] sm:$0xff] %v526
    %561 = vst [vmem:[#allocation2 + $0xd8] sm:$0xff] %v528
    %562 = vst [vmem:[#allocation2 + $0xe0] sm:$0xff] %v457
    %563 = vst [vmem:[#allocation2 + $0xe8] sm:$0xff] %v459
    %564 = vst [vmem:[#allocation2 + $0xf0] sm:$0xff] %v530
    %565 = vst [vmem:[#allocation2 + $0xf8] sm:$0xff] %v532
    %v566 = vld [vmem:[#allocation9] sm:$0xf]
    %v567 = vld [vmem:[#allocation9 + $0x4] sm:$0xf]
    %v568 = vld [vmem:[#allocation9 + $0x8] sm:$0xf]
    %v569 = vld [vmem:[#allocation9 + $0xc] sm:$0xf]
    %v570 = vld [vmem:[#allocation9 + $0x10] sm:$0xf]
    %v571 = vld [vmem:[#allocation9 + $0x14] sm:$0xf]
    %v572 = vld [vmem:[#allocation9 + $0x18] sm:$0xf]
    %v573 = vld [vmem:[#allocation9 + $0x1c] sm:$0xf]
    %v574 = vld [vmem:[#allocation11 + $0x10] sm:$0xff]
    %v575 = vld [vmem:[#allocation11 + $0x18] sm:$0xff]
    %v576 = vld [vmem:[#allocation11 + $0x30] sm:$0xff]
    %v577 = vld [vmem:[#allocation11 + $0x38] sm:$0xff]
    %v578 = vld [vmem:[#allocation11 + $0x50] sm:$0xff]
    %v579 = vld [vmem:[#allocation11 + $0x58] sm:$0xff]
    %v580 = vld [vmem:[#allocation11 + $0x70] sm:$0xff]
    %v581 = vld [vmem:[#allocation11 + $0x78] sm:$0xff]
    %v582 = vld [vmem:[#allocation11 + $0x90] sm:$0xff]
    %v583 = vld [vmem:[#allocation11 + $0x98] sm:$0xff]
    %v584 = vld [vmem:[#allocation11 + $0xb0] sm:$0xff]
    %v585 = vld [vmem:[#allocation11 + $0xb8] sm:$0xff]
    %v586 = vld [vmem:[#allocation11 + $0xd0] sm:$0xff]
    %v587 = vld [vmem:[#allocation11 + $0xd8] sm:$0xff]
    %v588 = vld [vmem:[#allocation11 + $0xf0] sm:$0xff]
    %v589 = vld [vmem:[#allocation11 + $0xf8] sm:$0xff]
    %v590 = vld [vmem:[#allocation11 + $0x110] sm:$0xff]
    %v591 = vld [vmem:[#allocation11 + $0x118] sm:$0xff]
    %v592 = vld [vmem:[#allocation11 + $0x130] sm:$0xff]
    %v593 = vld [vmem:[#allocation11 + $0x138] sm:$0xff]
    %v594 = vld [vmem:[#allocation11 + $0x150] sm:$0xff]
    %v595 = vld [vmem:[#allocation11 + $0x158] sm:$0xff]
    %v596 = vld [vmem:[#allocation11 + $0x170] sm:$0xff]
    %v597 = vld [vmem:[#allocation11 + $0x178] sm:$0xff]
    %v598 = vld [vmem:[#allocation11 + $0x190] sm:$0xff]
    %v599 = vld [vmem:[#allocation11 + $0x198] sm:$0xff]
    %v600 = vld [vmem:[#allocation11 + $0x1b0] sm:$0xff]
    %v601 = vld [vmem:[#allocation11 + $0x1b8] sm:$0xff]
    %v602 = vld [vmem:[#allocation11 + $0x1d0] sm:$0xff]
    %v603 = vld [vmem:[#allocation11 + $0x1d8] sm:$0xff]
    %v604 = vld [vmem:[#allocation11 + $0x1f0] sm:$0xff]
    %v605 = vld [vmem:[#allocation11 + $0x1f8] sm:$0xff]
    %v606 = vld [vmem:[#allocation12 + $0x4] sm:$0xf]
    %v608 = vlaneseq
    %v609 = vshrl.u32 %v608, 7
    %v610 = vsub.s32 0, %v609
    %v611 = vrot.slane %v606, %v610
    %v612 = vlaneseq
    %v613 = vshrl.u32 %v612, 7
    %v614 = vsub.s32 1, %v613
    %v615 = vrot.slane %v606, %v614
    %v616 = vlaneseq
    %v617 = vshrl.u32 %v616, 7
    %v618 = vsub.s32 2, %v617
    %v619 = vrot.slane %v606, %v618
    %v620 = vlaneseq
    %v621 = vshrl.u32 %v620, 7
    %v622 = vsub.s32 3, %v621
    %v623 = vrot.slane %v606, %v622
    %v636 = vunpack.c.l.b16 %v566
    %v637 = vunpack.c.l.b16 %v567
    %v638 = vunpack.c.l.b16 %v568
    %v639 = vunpack.c.l.b16 %v569
    %v640 = vunpack.c.l.b16 %v570
    %v641 = vunpack.c.l.b16 %v571
    %v642 = vunpack.c.l.b16 %v572
    %v643 = vunpack.c.l.b16 %v573
    %v644 = vpack.c.b16 %v637, %v636
    %v645 = vpack.c.b16 %v639, %v638
    %v646 = vpack.c.b16 %v641, %v640
    %v647 = vpack.c.b16 %v643, %v642
    %v684 = vunpack.c.l.b16 %v574
    %v685 = vunpack.c.h.b16 %v574
    %v686 = vunpack.c.l.b16 %v575
    %v687 = vunpack.c.h.b16 %v575
    %v688 = vunpack.c.l.b16 %v576
    %v689 = vunpack.c.h.b16 %v576
    %v690 = vunpack.c.l.b16 %v577
    %v691 = vunpack.c.h.b16 %v577
    %v692 = vunpack.c.l.b16 %v578
    %v693 = vunpack.c.h.b16 %v578
    %v694 = vunpack.c.l.b16 %v579
    %v695 = vunpack.c.h.b16 %v579
    %v696 = vunpack.c.l.b16 %v580
    %v697 = vunpack.c.h.b16 %v580
    %v698 = vunpack.c.l.b16 %v581
    %v699 = vunpack.c.h.b16 %v581
    %v700 = vunpack.c.l.b16 %v582
    %v701 = vunpack.c.h.b16 %v582
    %v702 = vunpack.c.l.b16 %v583
    %v703 = vunpack.c.h.b16 %v583
    %v704 = vunpack.c.l.b16 %v584
    %v705 = vunpack.c.h.b16 %v584
    %v706 = vunpack.c.l.b16 %v585
    %v707 = vunpack.c.h.b16 %v585
    %v708 = vunpack.c.l.b16 %v586
    %v709 = vunpack.c.h.b16 %v586
    %v710 = vunpack.c.l.b16 %v587
    %v711 = vunpack.c.h.b16 %v587
    %v712 = vunpack.c.l.b16 %v588
    %v713 = vunpack.c.h.b16 %v588
    %v714 = vunpack.c.l.b16 %v589
    %v715 = vunpack.c.h.b16 %v589
    %v716 = vunpack.c.l.b16 %v590
    %v717 = vunpack.c.h.b16 %v590
    %v718 = vunpack.c.l.b16 %v591
    %v719 = vunpack.c.h.b16 %v591
    %v720 = vunpack.c.l.b16 %v592
    %v721 = vunpack.c.h.b16 %v592
    %v722 = vunpack.c.l.b16 %v593
    %v723 = vunpack.c.h.b16 %v593
    %v724 = vunpack.c.l.b16 %v594
    %v725 = vunpack.c.h.b16 %v594
    %v726 = vunpack.c.l.b16 %v595
    %v727 = vunpack.c.h.b16 %v595
    %v728 = vunpack.c.l.b16 %v596
    %v729 = vunpack.c.h.b16 %v596
    %v730 = vunpack.c.l.b16 %v597
    %v731 = vunpack.c.h.b16 %v597
    %v732 = vunpack.c.l.b16 %v598
    %v733 = vunpack.c.h.b16 %v598
    %v734 = vunpack.c.l.b16 %v599
    %v735 = vunpack.c.h.b16 %v599
    %v736 = vunpack.c.l.b16 %v600
    %v737 = vunpack.c.h.b16 %v600
    %v738 = vunpack.c.l.b16 %v601
    %v739 = vunpack.c.h.b16 %v601
    %v740 = vunpack.c.l.b16 %v602
    %v741 = vunpack.c.h.b16 %v602
    %v742 = vunpack.c.l.b16 %v603
    %v743 = vunpack.c.h.b16 %v603
    %v744 = vunpack.c.l.b16 %v604
    %v745 = vunpack.c.h.b16 %v604
    %v746 = vunpack.c.l.b16 %v605
    %v747 = vunpack.c.h.b16 %v605
    %v748 = vpack.c.b16 %v688, %v684
    %v749 = vpack.c.b16 %v689, %v685
    %v750 = vpack.c.b16 %v690, %v686
    %v751 = vpack.c.b16 %v691, %v687
    %v752 = vpack.c.b16 %v696, %v692
    %v753 = vpack.c.b16 %v697, %v693
    %v754 = vpack.c.b16 %v698, %v694
    %v755 = vpack.c.b16 %v699, %v695
    %v756 = vpack.c.b16 %v704, %v700
    %v757 = vpack.c.b16 %v705, %v701
    %v758 = vpack.c.b16 %v706, %v702
    %v759 = vpack.c.b16 %v707, %v703
    %v760 = vpack.c.b16 %v712, %v708
    %v761 = vpack.c.b16 %v713, %v709
    %v762 = vpack.c.b16 %v714, %v710
    %v763 = vpack.c.b16 %v715, %v711
    %v764 = vpack.c.b16 %v720, %v716
    %v765 = vpack.c.b16 %v721, %v717
    %v766 = vpack.c.b16 %v722, %v718
    %v767 = vpack.c.b16 %v723, %v719
    %v768 = vpack.c.b16 %v728, %v724
    %v769 = vpack.c.b16 %v729, %v725
    %v770 = vpack.c.b16 %v730, %v726
    %v771 = vpack.c.b16 %v731, %v727
    %v772 = vpack.c.b16 %v736, %v732
    %v773 = vpack.c.b16 %v737, %v733
    %v774 = vpack.c.b16 %v738, %v734
    %v775 = vpack.c.b16 %v739, %v735
    %v776 = vpack.c.b16 %v744, %v740
    %v777 = vpack.c.b16 %v745, %v741
    %v778 = vpack.c.b16 %v746, %v742
    %v779 = vpack.c.b16 %v747, %v743
    %812 = vmatprep.subr.bf16.mxu0 %v777
    %813 = vmatpush1.bf16.msra.mxu0 %v776
    %814 = vmatprep.subr.bf16.mxu0 %v773
    %815 = vmatpush1.bf16.msra.mxu0 %v772
    %816 = vmatprep.subr.bf16.mxu0 %v769
    %817 = vmatpush1.bf16.msra.mxu0 %v768
    %818 = vmatprep.subr.bf16.mxu0 %v765
    %819 = vmatpush1.bf16.msra.mxu0 %v764
    %820 = vmatprep.subr.bf16.mxu0 %v761
    %821 = vmatpush1.bf16.msra.mxu0 %v760
    %822 = vmatprep.subr.bf16.mxu0 %v757
    %823 = vmatpush1.bf16.msra.mxu0 %v756
    %824 = vmatprep.subr.bf16.mxu0 %v753
    %825 = vmatpush1.bf16.msra.mxu0 %v752
    %826 = vmatprep.subr.bf16.mxu0 %v749
    %827 = vmatpush1.bf16.msra.mxu0 %v748
    %828 = vmatprep.subr.bf16.mxu0 0
    %829 = vmatpush2.bf16.msra.mxu0 0
    %830 = vmatprep.subr.bf16.mxu0 0
    %831 = vmatpush2.bf16.msra.mxu0 0
    %832 = vmatprep.subr.bf16.mxu0 0
    %833 = vmatpush2.bf16.msra.mxu0 0
    %834 = vmatprep.subr.bf16.mxu0 0
    %835 = vmatpush2.bf16.msra.mxu0 0
    %836 = vmatprep.subr.bf16.mxu0 0
    %837 = vmatpush2.bf16.msra.mxu0 0
    %838 = vmatprep.subr.bf16.mxu0 0
    %839 = vmatpush2.bf16.msra.mxu0 0
    %840 = vmatprep.subr.bf16.mxu0 0
    %841 = vmatpush2.bf16.msra.mxu0 0
    %842 = vmatprep.subr.bf16.mxu0 0
    %843 = vmatpush2.bf16.msra.mxu0 0
    %844 = vmatprep.mubr.bf16.mxu0 0
    %845 = vmatmul.mubr.bf16.gmra.mxu0 %v644
    %v846 = vpop.f32.mrf.mxu0
    %v847 = vadd.f32 %v611, %v846
    %v848 = vpop.f32.mrf.mxu0
    %v849 = vadd.f32 %v615, %v848
    %v850 = vpop.f32.mrf.mxu0
    %v851 = vadd.f32 %v611, %v850
    %v852 = vpop.f32.mrf.mxu0
    %v853 = vadd.f32 %v615, %v852
    %854 = vmatprep.mubr.bf16.mxu0 0
    %855 = vmatmul.mubr.bf16.gmra.mxu0 %v645
    %v856 = vpop.f32.mrf.mxu0
    %v857 = vadd.f32 %v611, %v856
    %v858 = vpop.f32.mrf.mxu0
    %v859 = vadd.f32 %v615, %v858
    %v860 = vpop.f32.mrf.mxu0
    %v861 = vadd.f32 %v611, %v860
    %v862 = vpop.f32.mrf.mxu0
    %v863 = vadd.f32 %v615, %v862
    %864 = vmatprep.mubr.bf16.mxu0 0
    %865 = vmatmul.mubr.bf16.gmra.mxu0 %v646
    %v866 = vpop.f32.mrf.mxu0
    %v867 = vadd.f32 %v611, %v866
    %v868 = vpop.f32.mrf.mxu0
    %v869 = vadd.f32 %v615, %v868
    %v870 = vpop.f32.mrf.mxu0
    %v871 = vadd.f32 %v611, %v870
    %v872 = vpop.f32.mrf.mxu0
    %v873 = vadd.f32 %v615, %v872
    %874 = vmatprep.mubr.bf16.mxu0 0
    %875 = vmatmul.mubr.bf16.gmra.mxu0 %v647
    %v876 = vpop.f32.mrf.mxu0
    %v877 = vadd.f32 %v611, %v876
    %v878 = vpop.f32.mrf.mxu0
    %v879 = vadd.f32 %v615, %v878
    %v880 = vpop.f32.mrf.mxu0
    %v881 = vadd.f32 %v611, %v880
    %v882 = vpop.f32.mrf.mxu0
    %v883 = vadd.f32 %v615, %v882
    %884 = vdwg.mxu0
    %885 = vmatprep.subr.bf16.mxu0 %v779
    %886 = vmatpush1.bf16.msra.mxu0 %v778
    %887 = vmatprep.subr.bf16.mxu0 %v775
    %888 = vmatpush1.bf16.msra.mxu0 %v774
    %889 = vmatprep.subr.bf16.mxu0 %v771
    %890 = vmatpush1.bf16.msra.mxu0 %v770
    %891 = vmatprep.subr.bf16.mxu0 %v767
    %892 = vmatpush1.bf16.msra.mxu0 %v766
    %893 = vmatprep.subr.bf16.mxu0 %v763
    %894 = vmatpush1.bf16.msra.mxu0 %v762
    %895 = vmatprep.subr.bf16.mxu0 %v759
    %896 = vmatpush1.bf16.msra.mxu0 %v758
    %897 = vmatprep.subr.bf16.mxu0 %v755
    %898 = vmatpush1.bf16.msra.mxu0 %v754
    %899 = vmatprep.subr.bf16.mxu0 %v751
    %900 = vmatpush1.bf16.msra.mxu0 %v750
    %901 = vmatprep.subr.bf16.mxu0 0
    %902 = vmatpush2.bf16.msra.mxu0 0
    %903 = vmatprep.subr.bf16.mxu0 0
    %904 = vmatpush2.bf16.msra.mxu0 0
    %905 = vmatprep.subr.bf16.mxu0 0
    %906 = vmatpush2.bf16.msra.mxu0 0
    %907 = vmatprep.subr.bf16.mxu0 0
    %908 = vmatpush2.bf16.msra.mxu0 0
    %909 = vmatprep.subr.bf16.mxu0 0
    %910 = vmatpush2.bf16.msra.mxu0 0
    %911 = vmatprep.subr.bf16.mxu0 0
    %912 = vmatpush2.bf16.msra.mxu0 0
    %913 = vmatprep.subr.bf16.mxu0 0
    %914 = vmatpush2.bf16.msra.mxu0 0
    %915 = vmatprep.subr.bf16.mxu0 0
    %916 = vmatpush2.bf16.msra.mxu0 0
    %917 = vmatprep.mubr.bf16.mxu0 0
    %918 = vmatmul.mubr.bf16.gmra.mxu0 %v644
    %v919 = vpop.f32.mrf.mxu0
    %v920 = vadd.f32 %v619, %v919
    %v921 = vpop.f32.mrf.mxu0
    %v922 = vadd.f32 %v623, %v921
    %v923 = vpop.f32.mrf.mxu0
    %v924 = vadd.f32 %v619, %v923
    %v925 = vpop.f32.mrf.mxu0
    %v926 = vadd.f32 %v623, %v925
    %927 = vmatprep.mubr.bf16.mxu0 0
    %928 = vmatmul.mubr.bf16.gmra.mxu0 %v645
    %v929 = vpop.f32.mrf.mxu0
    %v930 = vadd.f32 %v619, %v929
    %v931 = vpop.f32.mrf.mxu0
    %v932 = vadd.f32 %v623, %v931
    %v933 = vpop.f32.mrf.mxu0
    %v934 = vadd.f32 %v619, %v933
    %v935 = vpop.f32.mrf.mxu0
    %v936 = vadd.f32 %v623, %v935
    %937 = vmatprep.mubr.bf16.mxu0 0
    %938 = vmatmul.mubr.bf16.gmra.mxu0 %v646
    %v939 = vpop.f32.mrf.mxu0
    %v940 = vadd.f32 %v619, %v939
    %v941 = vpop.f32.mrf.mxu0
    %v942 = vadd.f32 %v623, %v941
    %v943 = vpop.f32.mrf.mxu0
    %v944 = vadd.f32 %v619, %v943
    %v945 = vpop.f32.mrf.mxu0
    %v946 = vadd.f32 %v623, %v945
    %947 = vmatprep.mubr.bf16.mxu0 0
    %948 = vmatmul.mubr.bf16.gmra.mxu0 %v647
    %v949 = vpop.f32.mrf.mxu0
    %v950 = vadd.f32 %v619, %v949
    %v951 = vpop.f32.mrf.mxu0
    %v952 = vadd.f32 %v623, %v951
    %v953 = vpop.f32.mrf.mxu0
    %v954 = vadd.f32 %v619, %v953
    %v955 = vpop.f32.mrf.mxu0
    %v956 = vadd.f32 %v623, %v955
    %957 = vdwg.mxu0
    %958 = vst [vmem:[#allocation3] sm:$0xff] %v847
    %959 = vst [vmem:[#allocation3 + $0x8] sm:$0xff] %v849
    %960 = vst [vmem:[#allocation3 + $0x10] sm:$0xff] %v920
    %961 = vst [vmem:[#allocation3 + $0x18] sm:$0xff] %v922
    %962 = vst [vmem:[#allocation3 + $0x20] sm:$0xff] %v851
    %963 = vst [vmem:[#allocation3 + $0x28] sm:$0xff] %v853
    %964 = vst [vmem:[#allocation3 + $0x30] sm:$0xff] %v924
    %965 = vst [vmem:[#allocation3 + $0x38] sm:$0xff] %v926
    %966 = vst [vmem:[#allocation3 + $0x40] sm:$0xff] %v857
    %967 = vst [vmem:[#allocation3 + $0x48] sm:$0xff] %v859
    %968 = vst [vmem:[#allocation3 + $0x50] sm:$0xff] %v930
    %969 = vst [vmem:[#allocation3 + $0x58] sm:$0xff] %v932
    %970 = vst [vmem:[#allocation3 + $0x60] sm:$0xff] %v861
    %971 = vst [vmem:[#allocation3 + $0x68] sm:$0xff] %v863
    %972 = vst [vmem:[#allocation3 + $0x70] sm:$0xff] %v934
    %973 = vst [vmem:[#allocation3 + $0x78] sm:$0xff] %v936
    %974 = vst [vmem:[#allocation3 + $0x80] sm:$0xff] %v867
    %975 = vst [vmem:[#allocation3 + $0x88] sm:$0xff] %v869
    %976 = vst [vmem:[#allocation3 + $0x90] sm:$0xff] %v940
    %977 = vst [vmem:[#allocation3 + $0x98] sm:$0xff] %v942
    %978 = vst [vmem:[#allocation3 + $0xa0] sm:$0xff] %v871
    %979 = vst [vmem:[#allocation3 + $0xa8] sm:$0xff] %v873
    %980 = vst [vmem:[#allocation3 + $0xb0] sm:$0xff] %v944
    %981 = vst [vmem:[#allocation3 + $0xb8] sm:$0xff] %v946
    %982 = vst [vmem:[#allocation3 + $0xc0] sm:$0xff] %v877
    %983 = vst [vmem:[#allocation3 + $0xc8] sm:$0xff] %v879
    %984 = vst [vmem:[#allocation3 + $0xd0] sm:$0xff] %v950
    %985 = vst [vmem:[#allocation3 + $0xd8] sm:$0xff] %v952
    %986 = vst [vmem:[#allocation3 + $0xe0] sm:$0xff] %v881
    %987 = vst [vmem:[#allocation3 + $0xe8] sm:$0xff] %v883
    %988 = vst [vmem:[#allocation3 + $0xf0] sm:$0xff] %v954
    %989 = vst [vmem:[#allocation3 + $0xf8] sm:$0xff] %v956
    %v990 = vlaneseq
    %v991 = vshrl.u32 %v990, 7
    %v992 = vadd.s32 %v991, 8
    %vm993 = vcmp.lt.s32.totalorder %v991, 8
    %vm994 = vcmp.lt.s32.totalorder %v992, 8
    %v995 = vld [vmem:[#allocation4] sm:$0xff]
    %v996 = vld [vmem:[#allocation4 + $0x8] sm:$0xff]
    %v997 = vld [vmem:[#allocation5] sm:$0xff]
    %v998 = vld [vmem:[#allocation5 + $0x8] sm:$0xff]
    %v999 = vpack.c.bf16 %v996, %v995
    %v1000 = vld [vmem:[#allocation14] sm:$0xff]
    %v1001 = vld [vmem:[#allocation14 + $0x8] sm:$0xff]
    %v1002 = vld [vmem:[#allocation14 + $0x10] sm:$0xff]
    %v1003 = vld [vmem:[#allocation14 + $0x18] sm:$0xff]
    %v1004 = vld [vmem:[#allocation14 + $0x20] sm:$0xff]
    %v1005 = vld [vmem:[#allocation14 + $0x28] sm:$0xff]
    %v1006 = vld [vmem:[#allocation14 + $0x30] sm:$0xff]
    %v1007 = vld [vmem:[#allocation14 + $0x38] sm:$0xff]
    %v1008 = vld [vmem:[#allocation14 + $0x40] sm:$0xff]
    %v1009 = vld [vmem:[#allocation14 + $0x48] sm:$0xff]
    %v1010 = vld [vmem:[#allocation14 + $0x50] sm:$0xff]
    %v1011 = vld [vmem:[#allocation14 + $0x58] sm:$0xff]
    %v1012 = vld [vmem:[#allocation14 + $0x60] sm:$0xff]
    %v1013 = vld [vmem:[#allocation14 + $0x68] sm:$0xff]
    %v1014 = vld [vmem:[#allocation14 + $0x70] sm:$0xff]
    %v1015 = vld [vmem:[#allocation14 + $0x78] sm:$0xff]
    %v1016 = vld [vmem:[#allocation14 + $0x80] sm:$0xff]
    %v1017 = vld [vmem:[#allocation14 + $0x88] sm:$0xff]
    %v1018 = vld [vmem:[#allocation14 + $0x90] sm:$0xff]
    %v1019 = vld [vmem:[#allocation14 + $0x98] sm:$0xff]
    %v1020 = vld [vmem:[#allocation14 + $0xa0] sm:$0xff]
    %v1021 = vld [vmem:[#allocation14 + $0xa8] sm:$0xff]
    %v1022 = vld [vmem:[#allocation14 + $0xb0] sm:$0xff]
    %v1023 = vld [vmem:[#allocation14 + $0xb8] sm:$0xff]
    %v1024 = vld [vmem:[#allocation14 + $0xc0] sm:$0xff]
    %v1025 = vld [vmem:[#allocation14 + $0xc8] sm:$0xff]
    %v1026 = vld [vmem:[#allocation14 + $0xd0] sm:$0xff]
    %v1027 = vld [vmem:[#allocation14 + $0xd8] sm:$0xff]
    %v1028 = vld [vmem:[#allocation14 + $0xe0] sm:$0xff]
    %v1029 = vld [vmem:[#allocation14 + $0xe8] sm:$0xff]
    %v1030 = vld [vmem:[#allocation14 + $0xf0] sm:$0xff]
    %v1031 = vld [vmem:[#allocation14 + $0xf8] sm:$0xff]
    %v1032 = vld [vmem:[#allocation14 + $0x100] sm:$0xff]
    %v1033 = vld [vmem:[#allocation14 + $0x108] sm:$0xff]
    %v1034 = vld [vmem:[#allocation14 + $0x110] sm:$0xff]
    %v1035 = vld [vmem:[#allocation14 + $0x118] sm:$0xff]
    %v1036 = vld [vmem:[#allocation14 + $0x120] sm:$0xff]
    %v1037 = vld [vmem:[#allocation14 + $0x128] sm:$0xff]
    %v1038 = vld [vmem:[#allocation14 + $0x130] sm:$0xff]
    %v1039 = vld [vmem:[#allocation14 + $0x138] sm:$0xff]
    %v1040 = vld [vmem:[#allocation14 + $0x140] sm:$0xff]
    %v1041 = vld [vmem:[#allocation14 + $0x148] sm:$0xff]
    %v1042 = vld [vmem:[#allocation14 + $0x150] sm:$0xff]
    %v1043 = vld [vmem:[#allocation14 + $0x158] sm:$0xff]
    %v1044 = vld [vmem:[#allocation14 + $0x160] sm:$0xff]
    %v1045 = vld [vmem:[#allocation14 + $0x168] sm:$0xff]
    %v1046 = vld [vmem:[#allocation14 + $0x170] sm:$0xff]
    %v1047 = vld [vmem:[#allocation14 + $0x178] sm:$0xff]
    %v1048 = vld [vmem:[#allocation14 + $0x180] sm:$0xff]
    %v1049 = vld [vmem:[#allocation14 + $0x188] sm:$0xff]
    %v1050 = vld [vmem:[#allocation14 + $0x190] sm:$0xff]
    %v1051 = vld [vmem:[#allocation14 + $0x198] sm:$0xff]
    %v1052 = vld [vmem:[#allocation14 + $0x1a0] sm:$0xff]
    %v1053 = vld [vmem:[#allocation14 + $0x1a8] sm:$0xff]
    %v1054 = vld [vmem:[#allocation14 + $0x1b0] sm:$0xff]
    %v1055 = vld [vmem:[#allocation14 + $0x1b8] sm:$0xff]
    %v1056 = vld [vmem:[#allocation14 + $0x1c0] sm:$0xff]
    %v1057 = vld [vmem:[#allocation14 + $0x1c8] sm:$0xff]
    %v1058 = vld [vmem:[#allocation14 + $0x1d0] sm:$0xff]
    %v1059 = vld [vmem:[#allocation14 + $0x1d8] sm:$0xff]
    %v1060 = vld [vmem:[#allocation14 + $0x1e0] sm:$0xff]
    %v1061 = vld [vmem:[#allocation14 + $0x1e8] sm:$0xff]
    %v1062 = vld [vmem:[#allocation14 + $0x1f0] sm:$0xff]
    %v1063 = vld [vmem:[#allocation14 + $0x1f8] sm:$0xff]
    %v1128 = vunpack.c.l.b16 %v1000
    %v1129 = vunpack.c.h.b16 %v1000
    %v1130 = vunpack.c.l.b16 %v1001
    %v1131 = vunpack.c.h.b16 %v1001
    %v1132 = vunpack.c.l.b16 %v1002
    %v1133 = vunpack.c.h.b16 %v1002
    %v1134 = vunpack.c.l.b16 %v1003
    %v1135 = vunpack.c.h.b16 %v1003
    %v1136 = vunpack.c.l.b16 %v1004
    %v1137 = vunpack.c.h.b16 %v1004
    %v1138 = vunpack.c.l.b16 %v1005
    %v1139 = vunpack.c.h.b16 %v1005
    %v1140 = vunpack.c.l.b16 %v1006
    %v1141 = vunpack.c.h.b16 %v1006
    %v1142 = vunpack.c.l.b16 %v1007
    %v1143 = vunpack.c.h.b16 %v1007
    %v1144 = vunpack.c.l.b16 %v1008
    %v1145 = vunpack.c.h.b16 %v1008
    %v1146 = vunpack.c.l.b16 %v1009
    %v1147 = vunpack.c.h.b16 %v1009
    %v1148 = vunpack.c.l.b16 %v1010
    %v1149 = vunpack.c.h.b16 %v1010
    %v1150 = vunpack.c.l.b16 %v1011
    %v1151 = vunpack.c.h.b16 %v1011
    %v1152 = vunpack.c.l.b16 %v1012
    %v1153 = vunpack.c.h.b16 %v1012
    %v1154 = vunpack.c.l.b16 %v1013
    %v1155 = vunpack.c.h.b16 %v1013
    %v1156 = vunpack.c.l.b16 %v1014
    %v1157 = vunpack.c.h.b16 %v1014
    %v1158 = vunpack.c.l.b16 %v1015
    %v1159 = vunpack.c.h.b16 %v1015
    %v1160 = vunpack.c.l.b16 %v1016
    %v1161 = vunpack.c.h.b16 %v1016
    %v1162 = vunpack.c.l.b16 %v1017
    %v1163 = vunpack.c.h.b16 %v1017
    %v1164 = vunpack.c.l.b16 %v1018
    %v1165 = vunpack.c.h.b16 %v1018
    %v1166 = vunpack.c.l.b16 %v1019
    %v1167 = vunpack.c.h.b16 %v1019
    %v1168 = vunpack.c.l.b16 %v1020
    %v1169 = vunpack.c.h.b16 %v1020
    %v1170 = vunpack.c.l.b16 %v1021
    %v1171 = vunpack.c.h.b16 %v1021
    %v1172 = vunpack.c.l.b16 %v1022
    %v1173 = vunpack.c.h.b16 %v1022
    %v1174 = vunpack.c.l.b16 %v1023
    %v1175 = vunpack.c.h.b16 %v1023
    %v1176 = vunpack.c.l.b16 %v1024
    %v1177 = vunpack.c.h.b16 %v1024
    %v1178 = vunpack.c.l.b16 %v1025
    %v1179 = vunpack.c.h.b16 %v1025
    %v1180 = vunpack.c.l.b16 %v1026
    %v1181 = vunpack.c.h.b16 %v1026
    %v1182 = vunpack.c.l.b16 %v1027
    %v1183 = vunpack.c.h.b16 %v1027
    %v1184 = vunpack.c.l.b16 %v1028
    %v1185 = vunpack.c.h.b16 %v1028
    %v1186 = vunpack.c.l.b16 %v1029
    %v1187 = vunpack.c.h.b16 %v1029
    %v1188 = vunpack.c.l.b16 %v1030
    %v1189 = vunpack.c.h.b16 %v1030
    %v1190 = vunpack.c.l.b16 %v1031
    %v1191 = vunpack.c.h.b16 %v1031
    %v1192 = vunpack.c.l.b16 %v1032
    %v1193 = vunpack.c.h.b16 %v1032
    %v1194 = vunpack.c.l.b16 %v1033
    %v1195 = vunpack.c.h.b16 %v1033
    %v1196 = vunpack.c.l.b16 %v1034
    %v1197 = vunpack.c.h.b16 %v1034
    %v1198 = vunpack.c.l.b16 %v1035
    %v1199 = vunpack.c.h.b16 %v1035
    %v1200 = vunpack.c.l.b16 %v1036
    %v1201 = vunpack.c.h.b16 %v1036
    %v1202 = vunpack.c.l.b16 %v1037
    %v1203 = vunpack.c.h.b16 %v1037
    %v1204 = vunpack.c.l.b16 %v1038
    %v1205 = vunpack.c.h.b16 %v1038
    %v1206 = vunpack.c.l.b16 %v1039
    %v1207 = vunpack.c.h.b16 %v1039
    %v1208 = vunpack.c.l.b16 %v1040
    %v1209 = vunpack.c.h.b16 %v1040
    %v1210 = vunpack.c.l.b16 %v1041
    %v1211 = vunpack.c.h.b16 %v1041
    %v1212 = vunpack.c.l.b16 %v1042
    %v1213 = vunpack.c.h.b16 %v1042
    %v1214 = vunpack.c.l.b16 %v1043
    %v1215 = vunpack.c.h.b16 %v1043
    %v1216 = vunpack.c.l.b16 %v1044
    %v1217 = vunpack.c.h.b16 %v1044
    %v1218 = vunpack.c.l.b16 %v1045
    %v1219 = vunpack.c.h.b16 %v1045
    %v1220 = vunpack.c.l.b16 %v1046
    %v1221 = vunpack.c.h.b16 %v1046
    %v1222 = vunpack.c.l.b16 %v1047
    %v1223 = vunpack.c.h.b16 %v1047
    %v1224 = vunpack.c.l.b16 %v1048
    %v1225 = vunpack.c.h.b16 %v1048
    %v1226 = vunpack.c.l.b16 %v1049
    %v1227 = vunpack.c.h.b16 %v1049
    %v1228 = vunpack.c.l.b16 %v1050
    %v1229 = vunpack.c.h.b16 %v1050
    %v1230 = vunpack.c.l.b16 %v1051
    %v1231 = vunpack.c.h.b16 %v1051
    %v1232 = vunpack.c.l.b16 %v1052
    %v1233 = vunpack.c.h.b16 %v1052
    %v1234 = vunpack.c.l.b16 %v1053
    %v1235 = vunpack.c.h.b16 %v1053
    %v1236 = vunpack.c.l.b16 %v1054
    %v1237 = vunpack.c.h.b16 %v1054
    %v1238 = vunpack.c.l.b16 %v1055
    %v1239 = vunpack.c.h.b16 %v1055
    %v1240 = vunpack.c.l.b16 %v1056
    %v1241 = vunpack.c.h.b16 %v1056
    %v1242 = vunpack.c.l.b16 %v1057
    %v1243 = vunpack.c.h.b16 %v1057
    %v1244 = vunpack.c.l.b16 %v1058
    %v1245 = vunpack.c.h.b16 %v1058
    %v1246 = vunpack.c.l.b16 %v1059
    %v1247 = vunpack.c.h.b16 %v1059
    %v1248 = vunpack.c.l.b16 %v1060
    %v1249 = vunpack.c.h.b16 %v1060
    %v1250 = vunpack.c.l.b16 %v1061
    %v1251 = vunpack.c.h.b16 %v1061
    %v1252 = vunpack.c.l.b16 %v1062
    %v1253 = vunpack.c.h.b16 %v1062
    %v1254 = vunpack.c.l.b16 %v1063
    %v1255 = vunpack.c.h.b16 %v1063
    %v1256 = vpack.c.b16 %v1136, %v1128
    %v1257 = vpack.c.b16 %v1137, %v1129
    %v1258 = vpack.c.b16 %v1138, %v1130
    %v1259 = vpack.c.b16 %v1139, %v1131
    %v1260 = vpack.c.b16 %v1140, %v1132
    %v1261 = vpack.c.b16 %v1141, %v1133
    %v1262 = vpack.c.b16 %v1142, %v1134
    %v1263 = vpack.c.b16 %v1143, %v1135
    %v1264 = vpack.c.b16 %v1152, %v1144
    %v1265 = vpack.c.b16 %v1153, %v1145
    %v1266 = vpack.c.b16 %v1154, %v1146
    %v1267 = vpack.c.b16 %v1155, %v1147
    %v1268 = vpack.c.b16 %v1156, %v1148
    %v1269 = vpack.c.b16 %v1157, %v1149
    %v1270 = vpack.c.b16 %v1158, %v1150
    %v1271 = vpack.c.b16 %v1159, %v1151
    %v1272 = vpack.c.b16 %v1168, %v1160
    %v1273 = vpack.c.b16 %v1169, %v1161
    %v1274 = vpack.c.b16 %v1170, %v1162
    %v1275 = vpack.c.b16 %v1171, %v1163
    %v1276 = vpack.c.b16 %v1172, %v1164
    %v1277 = vpack.c.b16 %v1173, %v1165
    %v1278 = vpack.c.b16 %v1174, %v1166
    %v1279 = vpack.c.b16 %v1175, %v1167
    %v1280 = vpack.c.b16 %v1184, %v1176
    %v1281 = vpack.c.b16 %v1185, %v1177
    %v1282 = vpack.c.b16 %v1186, %v1178
    %v1283 = vpack.c.b16 %v1187, %v1179
    %v1284 = vpack.c.b16 %v1188, %v1180
    %v1285 = vpack.c.b16 %v1189, %v1181
    %v1286 = vpack.c.b16 %v1190, %v1182
    %v1287 = vpack.c.b16 %v1191, %v1183
    %v1288 = vpack.c.b16 %v1200, %v1192
    %v1289 = vpack.c.b16 %v1201, %v1193
    %v1290 = vpack.c.b16 %v1202, %v1194
    %v1291 = vpack.c.b16 %v1203, %v1195
    %v1292 = vpack.c.b16 %v1204, %v1196
    %v1293 = vpack.c.b16 %v1205, %v1197
    %v1294 = vpack.c.b16 %v1206, %v1198
    %v1295 = vpack.c.b16 %v1207, %v1199
    %v1296 = vpack.c.b16 %v1216, %v1208
    %v1297 = vpack.c.b16 %v1217, %v1209
    %v1298 = vpack.c.b16 %v1218, %v1210
    %v1299 = vpack.c.b16 %v1219, %v1211
    %v1300 = vpack.c.b16 %v1220, %v1212
    %v1301 = vpack.c.b16 %v1221, %v1213
    %v1302 = vpack.c.b16 %v1222, %v1214
    %v1303 = vpack.c.b16 %v1223, %v1215
    %v1304 = vpack.c.b16 %v1232, %v1224
    %v1305 = vpack.c.b16 %v1233, %v1225
    %v1306 = vpack.c.b16 %v1234, %v1226
    %v1307 = vpack.c.b16 %v1235, %v1227
    %v1308 = vpack.c.b16 %v1236, %v1228
    %v1309 = vpack.c.b16 %v1237, %v1229
    %v1310 = vpack.c.b16 %v1238, %v1230
    %v1311 = vpack.c.b16 %v1239, %v1231
    %v1312 = vpack.c.b16 %v1248, %v1240
    %v1313 = vpack.c.b16 %v1249, %v1241
    %v1314 = vpack.c.b16 %v1250, %v1242
    %v1315 = vpack.c.b16 %v1251, %v1243
    %v1316 = vpack.c.b16 %v1252, %v1244
    %v1317 = vpack.c.b16 %v1253, %v1245
    %v1318 = vpack.c.b16 %v1254, %v1246
    %v1319 = vpack.c.b16 %v1255, %v1247
    %1384 = vmatprep.subr.bf16.mxu0 %v1313
    %1385 = vmatpush1.bf16.msra.mxu0 %v1312
    %1386 = vmatprep.subr.bf16.mxu0 %v1305
    %1387 = vmatpush1.bf16.msra.mxu0 %v1304
    %1388 = vmatprep.subr.bf16.mxu0 %v1297
    %1389 = vmatpush1.bf16.msra.mxu0 %v1296
    %1390 = vmatprep.subr.bf16.mxu0 %v1289
    %1391 = vmatpush1.bf16.msra.mxu0 %v1288
    %1392 = vmatprep.subr.bf16.mxu0 %v1281
    %1393 = vmatpush1.bf16.msra.mxu0 %v1280
    %1394 = vmatprep.subr.bf16.mxu0 %v1273
    %1395 = vmatpush1.bf16.msra.mxu0 %v1272
    %1396 = vmatprep.subr.bf16.mxu0 %v1265
    %1397 = vmatpush1.bf16.msra.mxu0 %v1264
    %1398 = vmatprep.subr.bf16.mxu0 %v1257
    %1399 = vmatpush1.bf16.msra.mxu0 %v1256
    %1400 = vmatprep.subr.bf16.mxu0 0
    %1401 = vmatpush2.bf16.msra.mxu0 0
    %1402 = vmatprep.subr.bf16.mxu0 0
    %1403 = vmatpush2.bf16.msra.mxu0 0
    %1404 = vmatprep.subr.bf16.mxu0 0
    %1405 = vmatpush2.bf16.msra.mxu0 0
    %1406 = vmatprep.subr.bf16.mxu0 0
    %1407 = vmatpush2.bf16.msra.mxu0 0
    %1408 = vmatprep.subr.bf16.mxu0 0
    %1409 = vmatpush2.bf16.msra.mxu0 0
    %1410 = vmatprep.subr.bf16.mxu0 0
    %1411 = vmatpush2.bf16.msra.mxu0 0
    %1412 = vmatprep.subr.bf16.mxu0 0
    %1413 = vmatpush2.bf16.msra.mxu0 0
    %1414 = vmatprep.subr.bf16.mxu0 0
    %1415 = vmatpush2.bf16.msra.mxu0 0
    %1416 = vmatprep.mubr.bf16.mxu0 0
    %1417 = vmatmul.mubr.bf16.gmra.mxu0 %v999
    %v1418 = vpop.f32.mrf.mxu0
    %v1419 = vadd.f32 0.0, %v1418
    %v1420 = vpop.f32.mrf.mxu0
    %v1421 = vadd.f32 0.0, %v1420
    %v1422 = vpop.f32.mrf.mxu0
    %v1423 = vadd.f32 0.0, %v1422
    %v1424 = vpop.f32.mrf.mxu0
    %v1425 = vadd.f32 0.0, %v1424
    %1426 = vdwg.mxu0
    %1427 = vmatprep.subr.bf16.mxu0 %v1315
    %1428 = vmatpush1.bf16.msra.mxu0 %v1314
    %1429 = vmatprep.subr.bf16.mxu0 %v1307
    %1430 = vmatpush1.bf16.msra.mxu0 %v1306
    %1431 = vmatprep.subr.bf16.mxu0 %v1299
    %1432 = vmatpush1.bf16.msra.mxu0 %v1298
    %1433 = vmatprep.subr.bf16.mxu0 %v1291
    %1434 = vmatpush1.bf16.msra.mxu0 %v1290
    %1435 = vmatprep.subr.bf16.mxu0 %v1283
    %1436 = vmatpush1.bf16.msra.mxu0 %v1282
    %1437 = vmatprep.subr.bf16.mxu0 %v1275
    %1438 = vmatpush1.bf16.msra.mxu0 %v1274
    %1439 = vmatprep.subr.bf16.mxu0 %v1267
    %1440 = vmatpush1.bf16.msra.mxu0 %v1266
    %1441 = vmatprep.subr.bf16.mxu0 %v1259
    %1442 = vmatpush1.bf16.msra.mxu0 %v1258
    %1443 = vmatprep.subr.bf16.mxu0 0
    %1444 = vmatpush2.bf16.msra.mxu0 0
    %1445 = vmatprep.subr.bf16.mxu0 0
    %1446 = vmatpush2.bf16.msra.mxu0 0
    %1447 = vmatprep.subr.bf16.mxu0 0
    %1448 = vmatpush2.bf16.msra.mxu0 0
    %1449 = vmatprep.subr.bf16.mxu0 0
    %1450 = vmatpush2.bf16.msra.mxu0 0
    %1451 = vmatprep.subr.bf16.mxu0 0
    %1452 = vmatpush2.bf16.msra.mxu0 0
    %1453 = vmatprep.subr.bf16.mxu0 0
    %1454 = vmatpush2.bf16.msra.mxu0 0
    %1455 = vmatprep.subr.bf16.mxu0 0
    %1456 = vmatpush2.bf16.msra.mxu0 0
    %1457 = vmatprep.subr.bf16.mxu0 0
    %1458 = vmatpush2.bf16.msra.mxu0 0
    %1459 = vmatprep.mubr.bf16.mxu0 0
    %1460 = vmatmul.mubr.bf16.gmra.mxu0 %v999
    %v1461 = vpop.f32.mrf.mxu0
    %v1462 = vadd.f32 0.0, %v1461
    %v1463 = vpop.f32.mrf.mxu0
    %v1464 = vadd.f32 0.0, %v1463
    %v1465 = vpop.f32.mrf.mxu0
    %v1466 = vadd.f32 0.0, %v1465
    %v1467 = vpop.f32.mrf.mxu0
    %v1468 = vadd.f32 0.0, %v1467
    %1469 = vdwg.mxu0
    %1470 = vmatprep.subr.bf16.mxu0 %v1317
    %1471 = vmatpush1.bf16.msra.mxu0 %v1316
    %1472 = vmatprep.subr.bf16.mxu0 %v1309
    %1473 = vmatpush1.bf16.msra.mxu0 %v1308
    %1474 = vmatprep.subr.bf16.mxu0 %v1301
    %1475 = vmatpush1.bf16.msra.mxu0 %v1300
    %1476 = vmatprep.subr.bf16.mxu0 %v1293
    %1477 = vmatpush1.bf16.msra.mxu0 %v1292
    %1478 = vmatprep.subr.bf16.mxu0 %v1285
    %1479 = vmatpush1.bf16.msra.mxu0 %v1284
    %1480 = vmatprep.subr.bf16.mxu0 %v1277
    %1481 = vmatpush1.bf16.msra.mxu0 %v1276
    %1482 = vmatprep.subr.bf16.mxu0 %v1269
    %1483 = vmatpush1.bf16.msra.mxu0 %v1268
    %1484 = vmatprep.subr.bf16.mxu0 %v1261
    %1485 = vmatpush1.bf16.msra.mxu0 %v1260
    %1486 = vmatprep.subr.bf16.mxu0 0
    %1487 = vmatpush2.bf16.msra.mxu0 0
    %1488 = vmatprep.subr.bf16.mxu0 0
    %1489 = vmatpush2.bf16.msra.mxu0 0
    %1490 = vmatprep.subr.bf16.mxu0 0
    %1491 = vmatpush2.bf16.msra.mxu0 0
    %1492 = vmatprep.subr.bf16.mxu0 0
    %1493 = vmatpush2.bf16.msra.mxu0 0
    %1494 = vmatprep.subr.bf16.mxu0 0
    %1495 = vmatpush2.bf16.msra.mxu0 0
    %1496 = vmatprep.subr.bf16.mxu0 0
    %1497 = vmatpush2.bf16.msra.mxu0 0
    %1498 = vmatprep.subr.bf16.mxu0 0
    %1499 = vmatpush2.bf16.msra.mxu0 0
    %1500 = vmatprep.subr.bf16.mxu0 0
    %1501 = vmatpush2.bf16.msra.mxu0 0
    %1502 = vmatprep.mubr.bf16.mxu0 0
    %1503 = vmatmul.mubr.bf16.gmra.mxu0 %v999
    %v1504 = vpop.f32.mrf.mxu0
    %v1505 = vadd.f32 0.0, %v1504
    %v1506 = vpop.f32.mrf.mxu0
    %v1507 = vadd.f32 0.0, %v1506
    %v1508 = vpop.f32.mrf.mxu0
    %v1509 = vadd.f32 0.0, %v1508
    %v1510 = vpop.f32.mrf.mxu0
    %v1511 = vadd.f32 0.0, %v1510
    %1512 = vdwg.mxu0
    %1513 = vmatprep.subr.bf16.mxu0 %v1319
    %1514 = vmatpush1.bf16.msra.mxu0 %v1318
    %1515 = vmatprep.subr.bf16.mxu0 %v1311
    %1516 = vmatpush1.bf16.msra.mxu0 %v1310
    %1517 = vmatprep.subr.bf16.mxu0 %v1303
    %1518 = vmatpush1.bf16.msra.mxu0 %v1302
    %1519 = vmatprep.subr.bf16.mxu0 %v1295
    %1520 = vmatpush1.bf16.msra.mxu0 %v1294
    %1521 = vmatprep.subr.bf16.mxu0 %v1287
    %1522 = vmatpush1.bf16.msra.mxu0 %v1286
    %1523 = vmatprep.subr.bf16.mxu0 %v1279
    %1524 = vmatpush1.bf16.msra.mxu0 %v1278
    %1525 = vmatprep.subr.bf16.mxu0 %v1271
    %1526 = vmatpush1.bf16.msra.mxu0 %v1270
    %1527 = vmatprep.subr.bf16.mxu0 %v1263
    %1528 = vmatpush1.bf16.msra.mxu0 %v1262
    %1529 = vmatprep.subr.bf16.mxu0 0
    %1530 = vmatpush2.bf16.msra.mxu0 0
    %1531 = vmatprep.subr.bf16.mxu0 0
    %1532 = vmatpush2.bf16.msra.mxu0 0
    %1533 = vmatprep.subr.bf16.mxu0 0
    %1534 = vmatpush2.bf16.msra.mxu0 0
    %1535 = vmatprep.subr.bf16.mxu0 0
    %1536 = vmatpush2.bf16.msra.mxu0 0
    %1537 = vmatprep.subr.bf16.mxu0 0
    %1538 = vmatpush2.bf16.msra.mxu0 0
    %1539 = vmatprep.subr.bf16.mxu0 0
    %1540 = vmatpush2.bf16.msra.mxu0 0
    %1541 = vmatprep.subr.bf16.mxu0 0
    %1542 = vmatpush2.bf16.msra.mxu0 0
    %1543 = vmatprep.subr.bf16.mxu0 0
    %1544 = vmatpush2.bf16.msra.mxu0 0
    %1545 = vmatprep.mubr.bf16.mxu0 0
    %1546 = vmatmul.mubr.bf16.gmra.mxu0 %v999
    %v1547 = vpop.f32.mrf.mxu0
    %v1548 = vadd.f32 0.0, %v1547
    %v1549 = vpop.f32.mrf.mxu0
    %v1550 = vadd.f32 0.0, %v1549
    %v1551 = vpop.f32.mrf.mxu0
    %v1552 = vadd.f32 0.0, %v1551
    %v1553 = vpop.f32.mrf.mxu0
    %v1554 = vadd.f32 0.0, %v1553
    %1555 = vdwg.mxu0
    %v1556 = vld [vmem:[#allocation2] sm:$0xff]
    %v1557 = vld [vmem:[#allocation2 + $0x8] sm:$0xff]
    %v1558 = vld [vmem:[#allocation2 + $0x10] sm:$0xff]
    %v1559 = vld [vmem:[#allocation2 + $0x18] sm:$0xff]
    %s1560 = scalar_lea.vmem [#allocation3], 224
    %v1561 = vld [vmem:[%s1560] sm:$0xff]
    %v1562 = vld [vmem:[%s1560 + $0x8] sm:$0xff]
    %v1563 = vld [vmem:[%s1560 + $0x10] sm:$0xff]
    %v1564 = vld [vmem:[%s1560 + $0x18] sm:$0xff]
    %v1565 = vsel %vm993, 1, 0
    %v1566 = vsel %vm994, 1, 0
    %vm1567 = vcmp.eq.s32.totalorder %v1565, 1
    %vm1568 = vcmp.eq.s32.totalorder %v1566, 1
    %v1569 = vsel %vm1567, %v1419, %v1505
    %v1570 = vsel %vm1567, %v1421, %v1507
    %v1571 = vsel %vm1567, %v1462, %v1548
    %v1572 = vsel %vm1567, %v1464, %v1550
    %v1573 = vsel %vm1568, %v1423, %v1509
    %v1574 = vsel %vm1568, %v1425, %v1511
    %v1575 = vsel %vm1568, %v1466, %v1552
    %v1576 = vsel %vm1568, %v1468, %v1554
    %v1577 = vadd.f32 %v1556, %v1569
    %v1578 = vadd.f32 %v1557, %v1570
    %v1579 = vadd.f32 %v1558, %v1571
    %v1580 = vadd.f32 %v1559, %v1572
    %v1581 = vadd.f32 %v1561, %v1573
    %v1582 = vadd.f32 %v1562, %v1574
    %v1583 = vadd.f32 %v1563, %v1575
    %v1584 = vadd.f32 %v1564, %v1576
    %v1585 = vxor.u32 %v1577, 2147483648
    %v1586 = vxor.u32 %v1578, 2147483648
    %v1587 = vxor.u32 %v1579, 2147483648
    %v1588 = vxor.u32 %v1581, 2147483648
    %v1589 = vxor.u32 %v1582, 2147483648
    %v1590 = vxor.u32 %v1583, 2147483648
    %v1591 = vmul.f32 %v1585, 1.442695
    %v1592 = vpow.pop %v1591
    %v1593 = vmul.f32 %v1586, 1.442695
    %v1594 = vpow.pop %v1593
    %v1595 = vmul.f32 %v1587, 1.442695
    %v1596 = vpow.pop %v1595
    %v1597 = vmul.f32 %v1588, 1.442695
    %v1598 = vpow.pop %v1597
    %v1599 = vmul.f32 %v1589, 1.442695
    %v1600 = vpow.pop %v1599
    %v1601 = vmul.f32 %v1590, 1.442695
    %v1602 = vpow.pop %v1601
    %v1603 = vadd.f32 %v1592, 1.0
    %v1604 = vadd.f32 %v1594, 1.0
    %v1605 = vadd.f32 %v1596, 1.0
    %v1606 = vadd.f32 %v1598, 1.0
    %v1607 = vadd.f32 %v1600, 1.0
    %v1608 = vadd.f32 %v1602, 1.0
    %v1609 = vrcp.pop %v1603
    %v1610 = vmul.f32 1.0, %v1609
    %v1611 = vrcp.pop %v1604
    %v1612 = vmul.f32 1.0, %v1611
    %v1613 = vrcp.pop %v1605
    %v1614 = vmul.f32 1.0, %v1613
    %v1615 = vrcp.pop %v1606
    %v1616 = vmul.f32 1.0, %v1615
    %v1617 = vrcp.pop %v1607
    %v1618 = vmul.f32 1.0, %v1617
    %v1619 = vrcp.pop %v1608
    %v1620 = vmul.f32 1.0, %v1619
    %v1621 = vtanh.pop %v1580
    %v1622 = vtanh.pop %v1584
    %v1623 = vmul.f32 %v1612, %v997
    %v1624 = vmul.f32 %v1618, %v998
    %v1625 = vmul.f32 %v1610, %v1621
    %v1626 = vmul.f32 %v1616, %v1622
    %v1627 = vadd.f32 %v1623, %v1625
    %v1628 = vadd.f32 %v1624, %v1626
    %v1629 = vtanh.pop %v1627
    %v1630 = vtanh.pop %v1628
    %v1631 = vmul.f32 %v1614, %v1629
    %v1632 = vmul.f32 %v1620, %v1630
    %v1633 = vpack.c.bf16 %v1632, %v1631
    %1634 = vmatprep.subr.bf16.mxu0 %v1313
    %1635 = vmatpush1.bf16.msra.mxu0 %v1312
    %1636 = vmatprep.subr.bf16.mxu0 %v1305
    %1637 = vmatpush1.bf16.msra.mxu0 %v1304
    %1638 = vmatprep.subr.bf16.mxu0 %v1297
    %1639 = vmatpush1.bf16.msra.mxu0 %v1296
    %1640 = vmatprep.subr.bf16.mxu0 %v1289
    %1641 = vmatpush1.bf16.msra.mxu0 %v1288
    %1642 = vmatprep.subr.bf16.mxu0 %v1281
    %1643 = vmatpush1.bf16.msra.mxu0 %v1280
    %1644 = vmatprep.subr.bf16.mxu0 %v1273
    %1645 = vmatpush1.bf16.msra.mxu0 %v1272
    %1646 = vmatprep.subr.bf16.mxu0 %v1265
    %1647 = vmatpush1.bf16.msra.mxu0 %v1264
    %1648 = vmatprep.subr.bf16.mxu0 %v1257
    %1649 = vmatpush1.bf16.msra.mxu0 %v1256
    %1650 = vmatprep.subr.bf16.mxu0 0
    %1651 = vmatpush2.bf16.msra.mxu0 0
    %1652 = vmatprep.subr.bf16.mxu0 0
    %1653 = vmatpush2.bf16.msra.mxu0 0
    %1654 = vmatprep.subr.bf16.mxu0 0
    %1655 = vmatpush2.bf16.msra.mxu0 0
    %1656 = vmatprep.subr.bf16.mxu0 0
    %1657 = vmatpush2.bf16.msra.mxu0 0
    %1658 = vmatprep.subr.bf16.mxu0 0
    %1659 = vmatpush2.bf16.msra.mxu0 0
    %1660 = vmatprep.subr.bf16.mxu0 0
    %1661 = vmatpush2.bf16.msra.mxu0 0
    %1662 = vmatprep.subr.bf16.mxu0 0
    %1663 = vmatpush2.bf16.msra.mxu0 0
    %1664 = vmatprep.subr.bf16.mxu0 0
    %1665 = vmatpush2.bf16.msra.mxu0 0
    %1666 = vmatprep.mubr.bf16.mxu0 0
    %1667 = vmatmul.mubr.bf16.gmra.mxu0 %v1633
    %v1668 = vpop.f32.mrf.mxu0
    %v1669 = vadd.f32 0.0, %v1668
    %v1670 = vpop.f32.mrf.mxu0
    %v1671 = vadd.f32 0.0, %v1670
    %v1672 = vpop.f32.mrf.mxu0
    %v1673 = vadd.f32 0.0, %v1672
    %v1674 = vpop.f32.mrf.mxu0
    %v1675 = vadd.f32 0.0, %v1674
    %1676 = vdwg.mxu0
    %1677 = vmatprep.subr.bf16.mxu0 %v1315
    %1678 = vmatpush1.bf16.msra.mxu0 %v1314
    %1679 = vmatprep.subr.bf16.mxu0 %v1307
    %1680 = vmatpush1.bf16.msra.mxu0 %v1306
    %1681 = vmatprep.subr.bf16.mxu0 %v1299
    %1682 = vmatpush1.bf16.msra.mxu0 %v1298
    %1683 = vmatprep.subr.bf16.mxu0 %v1291
    %1684 = vmatpush1.bf16.msra.mxu0 %v1290
    %1685 = vmatprep.subr.bf16.mxu0 %v1283
    %1686 = vmatpush1.bf16.msra.mxu0 %v1282
    %1687 = vmatprep.subr.bf16.mxu0 %v1275
    %1688 = vmatpush1.bf16.msra.mxu0 %v1274
    %1689 = vmatprep.subr.bf16.mxu0 %v1267
    %1690 = vmatpush1.bf16.msra.mxu0 %v1266
    %1691 = vmatprep.subr.bf16.mxu0 %v1259
    %1692 = vmatpush1.bf16.msra.mxu0 %v1258
    %1693 = vmatprep.subr.bf16.mxu0 0
    %1694 = vmatpush2.bf16.msra.mxu0 0
    %1695 = vmatprep.subr.bf16.mxu0 0
    %1696 = vmatpush2.bf16.msra.mxu0 0
    %1697 = vmatprep.subr.bf16.mxu0 0
    %1698 = vmatpush2.bf16.msra.mxu0 0
    %1699 = vmatprep.subr.bf16.mxu0 0
    %1700 = vmatpush2.bf16.msra.mxu0 0
    %1701 = vmatprep.subr.bf16.mxu0 0
    %1702 = vmatpush2.bf16.msra.mxu0 0
    %1703 = vmatprep.subr.bf16.mxu0 0
    %1704 = vmatpush2.bf16.msra.mxu0 0
    %1705 = vmatprep.subr.bf16.mxu0 0
    %1706 = vmatpush2.bf16.msra.mxu0 0
    %1707 = vmatprep.subr.bf16.mxu0 0
    %1708 = vmatpush2.bf16.msra.mxu0 0
    %1709 = vmatprep.mubr.bf16.mxu0 0
    %1710 = vmatmul.mubr.bf16.gmra.mxu0 %v1633
    %v1711 = vpop.f32.mrf.mxu0
    %v1712 = vadd.f32 0.0, %v1711
    %v1713 = vpop.f32.mrf.mxu0
    %v1714 = vadd.f32 0.0, %v1713
    %v1715 = vpop.f32.mrf.mxu0
    %v1716 = vadd.f32 0.0, %v1715
    %v1717 = vpop.f32.mrf.mxu0
    %v1718 = vadd.f32 0.0, %v1717
    %1719 = vdwg.mxu0
    %1720 = vmatprep.subr.bf16.mxu0 %v1317
    %1721 = vmatpush1.bf16.msra.mxu0 %v1316
    %1722 = vmatprep.subr.bf16.mxu0 %v1309
    %1723 = vmatpush1.bf16.msra.mxu0 %v1308
    %1724 = vmatprep.subr.bf16.mxu0 %v1301
    %1725 = vmatpush1.bf16.msra.mxu0 %v1300
    %1726 = vmatprep.subr.bf16.mxu0 %v1293
    %1727 = vmatpush1.bf16.msra.mxu0 %v1292
    %1728 = vmatprep.subr.bf16.mxu0 %v1285
    %1729 = vmatpush1.bf16.msra.mxu0 %v1284
    %1730 = vmatprep.subr.bf16.mxu0 %v1277
    %1731 = vmatpush1.bf16.msra.mxu0 %v1276
    %1732 = vmatprep.subr.bf16.mxu0 %v1269
    %1733 = vmatpush1.bf16.msra.mxu0 %v1268
    %1734 = vmatprep.subr.bf16.mxu0 %v1261
    %1735 = vmatpush1.bf16.msra.mxu0 %v1260
    %1736 = vmatprep.subr.bf16.mxu0 0
    %1737 = vmatpush2.bf16.msra.mxu0 0
    %1738 = vmatprep.subr.bf16.mxu0 0
    %1739 = vmatpush2.bf16.msra.mxu0 0
    %1740 = vmatprep.subr.bf16.mxu0 0
    %1741 = vmatpush2.bf16.msra.mxu0 0
    %1742 = vmatprep.subr.bf16.mxu0 0
    %1743 = vmatpush2.bf16.msra.mxu0 0
    %1744 = vmatprep.subr.bf16.mxu0 0
    %1745 = vmatpush2.bf16.msra.mxu0 0
    %1746 = vmatprep.subr.bf16.mxu0 0
    %1747 = vmatpush2.bf16.msra.mxu0 0
    %1748 = vmatprep.subr.bf16.mxu0 0
    %1749 = vmatpush2.bf16.msra.mxu0 0
    %1750 = vmatprep.subr.bf16.mxu0 0
    %1751 = vmatpush2.bf16.msra.mxu0 0
    %1752 = vmatprep.mubr.bf16.mxu0 0
    %1753 = vmatmul.mubr.bf16.gmra.mxu0 %v1633
    %v1754 = vpop.f32.mrf.mxu0
    %v1755 = vadd.f32 0.0, %v1754
    %v1756 = vpop.f32.mrf.mxu0
    %v1757 = vadd.f32 0.0, %v1756
    %v1758 = vpop.f32.mrf.mxu0
    %v1759 = vadd.f32 0.0, %v1758
    %v1760 = vpop.f32.mrf.mxu0
    %v1761 = vadd.f32 0.0, %v1760
    %1762 = vdwg.mxu0
    %1763 = vmatprep.subr.bf16.mxu0 %v1319
    %1764 = vmatpush1.bf16.msra.mxu0 %v1318
    %1765 = vmatprep.subr.bf16.mxu0 %v1311
    %1766 = vmatpush1.bf16.msra.mxu0 %v1310
    %1767 = vmatprep.subr.bf16.mxu0 %v1303
    %1768 = vmatpush1.bf16.msra.mxu0 %v1302
    %1769 = vmatprep.subr.bf16.mxu0 %v1295
    %1770 = vmatpush1.bf16.msra.mxu0 %v1294
    %1771 = vmatprep.subr.bf16.mxu0 %v1287
    %1772 = vmatpush1.bf16.msra.mxu0 %v1286
    %1773 = vmatprep.subr.bf16.mxu0 %v1279
    %1774 = vmatpush1.bf16.msra.mxu0 %v1278
    %1775 = vmatprep.subr.bf16.mxu0 %v1271
    %1776 = vmatpush1.bf16.msra.mxu0 %v1270
    %1777 = vmatprep.subr.bf16.mxu0 %v1263
    %1778 = vmatpush1.bf16.msra.mxu0 %v1262
    %1779 = vmatprep.subr.bf16.mxu0 0
    %1780 = vmatpush2.bf16.msra.mxu0 0
    %1781 = vmatprep.subr.bf16.mxu0 0
    %1782 = vmatpush2.bf16.msra.mxu0 0
    %1783 = vmatprep.subr.bf16.mxu0 0
    %1784 = vmatpush2.bf16.msra.mxu0 0
    %1785 = vmatprep.subr.bf16.mxu0 0
    %1786 = vmatpush2.bf16.msra.mxu0 0
    %1787 = vmatprep.subr.bf16.mxu0 0
    %1788 = vmatpush2.bf16.msra.mxu0 0
    %1789 = vmatprep.subr.bf16.mxu0 0
    %1790 = vmatpush2.bf16.msra.mxu0 0
    %1791 = vmatprep.subr.bf16.mxu0 0
    %1792 = vmatpush2.bf16.msra.mxu0 0
    %1793 = vmatprep.subr.bf16.mxu0 0
    %1794 = vmatpush2.bf16.msra.mxu0 0
    %1795 = vmatprep.mubr.bf16.mxu0 0
    %1796 = vmatmul.mubr.bf16.gmra.mxu0 %v1633
    %v1797 = vpop.f32.mrf.mxu0
    %v1798 = vadd.f32 0.0, %v1797
    %v1799 = vpop.f32.mrf.mxu0
    %v1800 = vadd.f32 0.0, %v1799
    %v1801 = vpop.f32.mrf.mxu0
    %v1802 = vadd.f32 0.0, %v1801
    %v1803 = vpop.f32.mrf.mxu0
    %v1804 = vadd.f32 0.0, %v1803
    %1805 = vdwg.mxu0
    %s1806 = scalar_lea.vmem [#allocation2], 32
    %v1807 = vld [vmem:[%s1806] sm:$0xff]
    %v1808 = vld [vmem:[%s1806 + $0x8] sm:$0xff]
    %v1809 = vld [vmem:[%s1806 + $0x10] sm:$0xff]
    %v1810 = vld [vmem:[%s1806 + $0x18] sm:$0xff]
    %s1811 = scalar_lea.vmem [#allocation3], 192
    %v1812 = vld [vmem:[%s1811] sm:$0xff]
    %v1813 = vld [vmem:[%s1811 + $0x8] sm:$0xff]
    %v1814 = vld [vmem:[%s1811 + $0x10] sm:$0xff]
    %v1815 = vld [vmem:[%s1811 + $0x18] sm:$0xff]
    %v1816 = vsel %vm1567, %v1669, %v1755
    %v1817 = vsel %vm1567, %v1671, %v1757
    %v1818 = vsel %vm1567, %v1712, %v1798
    %v1819 = vsel %vm1567, %v1714, %v1800
    %v1820 = vsel %vm1568, %v1673, %v1759
    %v1821 = vsel %vm1568, %v1675, %v1761
    %v1822 = vsel %vm1568, %v1716, %v1802
    %v1823 = vsel %vm1568, %v1718, %v1804
    %v1824 = vadd.f32 %v1807, %v1816
    %v1825 = vadd.f32 %v1808, %v1817
    %v1826 = vadd.f32 %v1809, %v1818
    %v1827 = vadd.f32 %v1810, %v1819
    %v1828 = vadd.f32 %v1812, %v1820
    %v1829 = vadd.f32 %v1813, %v1821
    %v1830 = vadd.f32 %v1814, %v1822
    %v1831 = vadd.f32 %v1815, %v1823
    %v1832 = vxor.u32 %v1824, 2147483648
    %v1833 = vxor.u32 %v1825, 2147483648
    %v1834 = vxor.u32 %v1826, 2147483648
    %v1835 = vxor.u32 %v1828, 2147483648
    %v1836 = vxor.u32 %v1829, 2147483648
    %v1837 = vxor.u32 %v1830, 2147483648
    %v1838 = vmul.f32 %v1832, 1.442695
    %v1839 = vpow.pop %v1838
    %v1840 = vmul.f32 %v1833, 1.442695
    %v1841 = vpow.pop %v1840
    %v1842 = vmul.f32 %v1834, 1.442695
    %v1843 = vpow.pop %v1842
    %v1844 = vmul.f32 %v1835, 1.442695
    %v1845 = vpow.pop %v1844
    %v1846 = vmul.f32 %v1836, 1.442695
    %v1847 = vpow.pop %v1846
    %v1848 = vmul.f32 %v1837, 1.442695
    %v1849 = vpow.pop %v1848
    %v1850 = vadd.f32 %v1839, 1.0
    %v1851 = vadd.f32 %v1841, 1.0
    %v1852 = vadd.f32 %v1843, 1.0
    %v1853 = vadd.f32 %v1845, 1.0
    %v1854 = vadd.f32 %v1847, 1.0
    %v1855 = vadd.f32 %v1849, 1.0
    %v1856 = vrcp.pop %v1850
    %v1857 = vmul.f32 1.0, %v1856
    %v1858 = vrcp.pop %v1851
    %v1859 = vmul.f32 1.0, %v1858
    %v1860 = vrcp.pop %v1852
    %v1861 = vmul.f32 1.0, %v1860
    %v1862 = vrcp.pop %v1853
    %v1863 = vmul.f32 1.0, %v1862
    %v1864 = vrcp.pop %v1854
    %v1865 = vmul.f32 1.0, %v1864
    %v1866 = vrcp.pop %v1855
    %v1867 = vmul.f32 1.0, %v1866
    %v1868 = vtanh.pop %v1827
    %v1869 = vtanh.pop %v1831
    %v1870 = vmul.f32 %v1859, %v1627
    %v1871 = vmul.f32 %v1865, %v1628
    %v1872 = vmul.f32 %v1857, %v1868
    %v1873 = vmul.f32 %v1863, %v1869
    %v1874 = vadd.f32 %v1870, %v1872
    %v1875 = vadd.f32 %v1871, %v1873
    %v1876 = vtanh.pop %v1874
    %v1877 = vtanh.pop %v1875
    %v1878 = vmul.f32 %v1861, %v1876
    %v1879 = vmul.f32 %v1867, %v1877
    %v1880 = vpack.c.bf16 %v1879, %v1878
    %1881 = vmatprep.subr.bf16.mxu0 %v1313
    %1882 = vmatpush1.bf16.msra.mxu0 %v1312
    %1883 = vmatprep.subr.bf16.mxu0 %v1305
    %1884 = vmatpush1.bf16.msra.mxu0 %v1304
    %1885 = vmatprep.subr.bf16.mxu0 %v1297
    %1886 = vmatpush1.bf16.msra.mxu0 %v1296
    %1887 = vmatprep.subr.bf16.mxu0 %v1289
    %1888 = vmatpush1.bf16.msra.mxu0 %v1288
    %1889 = vmatprep.subr.bf16.mxu0 %v1281
    %1890 = vmatpush1.bf16.msra.mxu0 %v1280
    %1891 = vmatprep.subr.bf16.mxu0 %v1273
    %1892 = vmatpush1.bf16.msra.mxu0 %v1272
    %1893 = vmatprep.subr.bf16.mxu0 %v1265
    %1894 = vmatpush1.bf16.msra.mxu0 %v1264
    %1895 = vmatprep.subr.bf16.mxu0 %v1257
    %1896 = vmatpush1.bf16.msra.mxu0 %v1256
    %1897 = vmatprep.subr.bf16.mxu0 0
    %1898 = vmatpush2.bf16.msra.mxu0 0
    %1899 = vmatprep.subr.bf16.mxu0 0
    %1900 = vmatpush2.bf16.msra.mxu0 0
    %1901 = vmatprep.subr.bf16.mxu0 0
    %1902 = vmatpush2.bf16.msra.mxu0 0
    %1903 = vmatprep.subr.bf16.mxu0 0
    %1904 = vmatpush2.bf16.msra.mxu0 0
    %1905 = vmatprep.subr.bf16.mxu0 0
    %1906 = vmatpush2.bf16.msra.mxu0 0
    %1907 = vmatprep.subr.bf16.mxu0 0
    %1908 = vmatpush2.bf16.msra.mxu0 0
    %1909 = vmatprep.subr.bf16.mxu0 0
    %1910 = vmatpush2.bf16.msra.mxu0 0
    %1911 = vmatprep.subr.bf16.mxu0 0
    %1912 = vmatpush2.bf16.msra.mxu0 0
    %1913 = vmatprep.mubr.bf16.mxu0 0
    %1914 = vmatmul.mubr.bf16.gmra.mxu0 %v1880
    %v1915 = vpop.f32.mrf.mxu0
    %v1916 = vadd.f32 0.0, %v1915
    %v1917 = vpop.f32.mrf.mxu0
    %v1918 = vadd.f32 0.0, %v1917
    %v1919 = vpop.f32.mrf.mxu0
    %v1920 = vadd.f32 0.0, %v1919
    %v1921 = vpop.f32.mrf.mxu0
    %v1922 = vadd.f32 0.0, %v1921
    %1923 = vdwg.mxu0
    %1924 = vmatprep.subr.bf16.mxu0 %v1315
    %1925 = vmatpush1.bf16.msra.mxu0 %v1314
    %1926 = vmatprep.subr.bf16.mxu0 %v1307
    %1927 = vmatpush1.bf16.msra.mxu0 %v1306
    %1928 = vmatprep.subr.bf16.mxu0 %v1299
    %1929 = vmatpush1.bf16.msra.mxu0 %v1298
    %1930 = vmatprep.subr.bf16.mxu0 %v1291
    %1931 = vmatpush1.bf16.msra.mxu0 %v1290
    %1932 = vmatprep.subr.bf16.mxu0 %v1283
    %1933 = vmatpush1.bf16.msra.mxu0 %v1282
    %1934 = vmatprep.subr.bf16.mxu0 %v1275
    %1935 = vmatpush1.bf16.msra.mxu0 %v1274
    %1936 = vmatprep.subr.bf16.mxu0 %v1267
    %1937 = vmatpush1.bf16.msra.mxu0 %v1266
    %1938 = vmatprep.subr.bf16.mxu0 %v1259
    %1939 = vmatpush1.bf16.msra.mxu0 %v1258
    %1940 = vmatprep.subr.bf16.mxu0 0
    %1941 = vmatpush2.bf16.msra.mxu0 0
    %1942 = vmatprep.subr.bf16.mxu0 0
    %1943 = vmatpush2.bf16.msra.mxu0 0
    %1944 = vmatprep.subr.bf16.mxu0 0
    %1945 = vmatpush2.bf16.msra.mxu0 0
    %1946 = vmatprep.subr.bf16.mxu0 0
    %1947 = vmatpush2.bf16.msra.mxu0 0
    %1948 = vmatprep.subr.bf16.mxu0 0
    %1949 = vmatpush2.bf16.msra.mxu0 0
    %1950 = vmatprep.subr.bf16.mxu0 0
    %1951 = vmatpush2.bf16.msra.mxu0 0
    %1952 = vmatprep.subr.bf16.mxu0 0
    %1953 = vmatpush2.bf16.msra.mxu0 0
    %1954 = vmatprep.subr.bf16.mxu0 0
    %1955 = vmatpush2.bf16.msra.mxu0 0
    %1956 = vmatprep.mubr.bf16.mxu0 0
    %1957 = vmatmul.mubr.bf16.gmra.mxu0 %v1880
    %v1958 = vpop.f32.mrf.mxu0
    %v1959 = vadd.f32 0.0, %v1958
    %v1960 = vpop.f32.mrf.mxu0
    %v1961 = vadd.f32 0.0, %v1960
    %v1962 = vpop.f32.mrf.mxu0
    %v1963 = vadd.f32 0.0, %v1962
    %v1964 = vpop.f32.mrf.mxu0
    %v1965 = vadd.f32 0.0, %v1964
    %1966 = vdwg.mxu0
    %1967 = vmatprep.subr.bf16.mxu0 %v1317
    %1968 = vmatpush1.bf16.msra.mxu0 %v1316
    %1969 = vmatprep.subr.bf16.mxu0 %v1309
    %1970 = vmatpush1.bf16.msra.mxu0 %v1308
    %1971 = vmatprep.subr.bf16.mxu0 %v1301
    %1972 = vmatpush1.bf16.msra.mxu0 %v1300
    %1973 = vmatprep.subr.bf16.mxu0 %v1293
    %1974 = vmatpush1.bf16.msra.mxu0 %v1292
    %1975 = vmatprep.subr.bf16.mxu0 %v1285
    %1976 = vmatpush1.bf16.msra.mxu0 %v1284
    %1977 = vmatprep.subr.bf16.mxu0 %v1277
    %1978 = vmatpush1.bf16.msra.mxu0 %v1276
    %1979 = vmatprep.subr.bf16.mxu0 %v1269
    %1980 = vmatpush1.bf16.msra.mxu0 %v1268
    %1981 = vmatprep.subr.bf16.mxu0 %v1261
    %1982 = vmatpush1.bf16.msra.mxu0 %v1260
    %1983 = vmatprep.subr.bf16.mxu0 0
    %1984 = vmatpush2.bf16.msra.mxu0 0
    %1985 = vmatprep.subr.bf16.mxu0 0
    %1986 = vmatpush2.bf16.msra.mxu0 0
    %1987 = vmatprep.subr.bf16.mxu0 0
    %1988 = vmatpush2.bf16.msra.mxu0 0
    %1989 = vmatprep.subr.bf16.mxu0 0
    %1990 = vmatpush2.bf16.msra.mxu0 0
    %1991 = vmatprep.subr.bf16.mxu0 0
    %1992 = vmatpush2.bf16.msra.mxu0 0
    %1993 = vmatprep.subr.bf16.mxu0 0
    %1994 = vmatpush2.bf16.msra.mxu0 0
    %1995 = vmatprep.subr.bf16.mxu0 0
    %1996 = vmatpush2.bf16.msra.mxu0 0
    %1997 = vmatprep.subr.bf16.mxu0 0
    %1998 = vmatpush2.bf16.msra.mxu0 0
    %1999 = vmatprep.mubr.bf16.mxu0 0
    %2000 = vmatmul.mubr.bf16.gmra.mxu0 %v1880
    %v2001 = vpop.f32.mrf.mxu0
    %v2002 = vadd.f32 0.0, %v2001
    %v2003 = vpop.f32.mrf.mxu0
    %v2004 = vadd.f32 0.0, %v2003
    %v2005 = vpop.f32.mrf.mxu0
    %v2006 = vadd.f32 0.0, %v2005
    %v2007 = vpop.f32.mrf.mxu0
    %v2008 = vadd.f32 0.0, %v2007
    %2009 = vdwg.mxu0
    %2010 = vmatprep.subr.bf16.mxu0 %v1319
    %2011 = vmatpush1.bf16.msra.mxu0 %v1318
    %2012 = vmatprep.subr.bf16.mxu0 %v1311
    %2013 = vmatpush1.bf16.msra.mxu0 %v1310
    %2014 = vmatprep.subr.bf16.mxu0 %v1303
    %2015 = vmatpush1.bf16.msra.mxu0 %v1302
    %2016 = vmatprep.subr.bf16.mxu0 %v1295
    %2017 = vmatpush1.bf16.msra.mxu0 %v1294
    %2018 = vmatprep.subr.bf16.mxu0 %v1287
    %2019 = vmatpush1.bf16.msra.mxu0 %v1286
    %2020 = vmatprep.subr.bf16.mxu0 %v1279
    %2021 = vmatpush1.bf16.msra.mxu0 %v1278
    %2022 = vmatprep.subr.bf16.mxu0 %v1271
    %2023 = vmatpush1.bf16.msra.mxu0 %v1270
    %2024 = vmatprep.subr.bf16.mxu0 %v1263
    %2025 = vmatpush1.bf16.msra.mxu0 %v1262
    %2026 = vmatprep.subr.bf16.mxu0 0
    %2027 = vmatpush2.bf16.msra.mxu0 0
    %2028 = vmatprep.subr.bf16.mxu0 0
    %2029 = vmatpush2.bf16.msra.mxu0 0
    %2030 = vmatprep.subr.bf16.mxu0 0
    %2031 = vmatpush2.bf16.msra.mxu0 0
    %2032 = vmatprep.subr.bf16.mxu0 0
    %2033 = vmatpush2.bf16.msra.mxu0 0
    %2034 = vmatprep.subr.bf16.mxu0 0
    %2035 = vmatpush2.bf16.msra.mxu0 0
    %2036 = vmatprep.subr.bf16.mxu0 0
    %2037 = vmatpush2.bf16.msra.mxu0 0
    %2038 = vmatprep.subr.bf16.mxu0 0
    %2039 = vmatpush2.bf16.msra.mxu0 0
    %2040 = vmatprep.subr.bf16.mxu0 0
    %2041 = vmatpush2.bf16.msra.mxu0 0
    %2042 = vmatprep.mubr.bf16.mxu0 0
    %2043 = vmatmul.mubr.bf16.gmra.mxu0 %v1880
    %v2044 = vpop.f32.mrf.mxu0
    %v2045 = vadd.f32 0.0, %v2044
    %v2046 = vpop.f32.mrf.mxu0
    %v2047 = vadd.f32 0.0, %v2046
    %v2048 = vpop.f32.mrf.mxu0
    %v2049 = vadd.f32 0.0, %v2048
    %v2050 = vpop.f32.mrf.mxu0
    %v2051 = vadd.f32 0.0, %v2050
    %2052 = vdwg.mxu0
    %s2053 = scalar_lea.vmem [#allocation2], 64
    %v2054 = vld [vmem:[%s2053] sm:$0xff]
    %v2055 = vld [vmem:[%s2053 + $0x8] sm:$0xff]
    %v2056 = vld [vmem:[%s2053 + $0x10] sm:$0xff]
    %v2057 = vld [vmem:[%s2053 + $0x18] sm:$0xff]
    %s2058 = scalar_lea.vmem [#allocation3], 160
    %v2059 = vld [vmem:[%s2058] sm:$0xff]
    %v2060 = vld [vmem:[%s2058 + $0x8] sm:$0xff]
    %v2061 = vld [vmem:[%s2058 + $0x10] sm:$0xff]
    %v2062 = vld [vmem:[%s2058 + $0x18] sm:$0xff]
    %v2063 = vsel %vm1567, %v1916, %v2002
    %v2064 = vsel %vm1567, %v1918, %v2004
    %v2065 = vsel %vm1567, %v1959, %v2045
    %v2066 = vsel %vm1567, %v1961, %v2047
    %v2067 = vsel %vm1568, %v1920, %v2006
    %v2068 = vsel %vm1568, %v1922, %v2008
    %v2069 = vsel %vm1568, %v1963, %v2049
    %v2070 = vsel %vm1568, %v1965, %v2051
    %v2071 = vadd.f32 %v2054, %v2063
    %v2072 = vadd.f32 %v2055, %v2064
    %v2073 = vadd.f32 %v2056, %v2065
    %v2074 = vadd.f32 %v2057, %v2066
    %v2075 = vadd.f32 %v2059, %v2067
    %v2076 = vadd.f32 %v2060, %v2068
    %v2077 = vadd.f32 %v2061, %v2069
    %v2078 = vadd.f32 %v2062, %v2070
    %v2079 = vxor.u32 %v2071, 2147483648
    %v2080 = vxor.u32 %v2072, 2147483648
    %v2081 = vxor.u32 %v2073, 2147483648
    %v2082 = vxor.u32 %v2075, 2147483648
    %v2083 = vxor.u32 %v2076, 2147483648
    %v2084 = vxor.u32 %v2077, 2147483648
    %v2085 = vmul.f32 %v2079, 1.442695
    %v2086 = vpow.pop %v2085
    %v2087 = vmul.f32 %v2080, 1.442695
    %v2088 = vpow.pop %v2087
    %v2089 = vmul.f32 %v2081, 1.442695
    %v2090 = vpow.pop %v2089
    %v2091 = vmul.f32 %v2082, 1.442695
    %v2092 = vpow.pop %v2091
    %v2093 = vmul.f32 %v2083, 1.442695
    %v2094 = vpow.pop %v2093
    %v2095 = vmul.f32 %v2084, 1.442695
    %v2096 = vpow.pop %v2095
    %v2097 = vadd.f32 %v2086, 1.0
    %v2098 = vadd.f32 %v2088, 1.0
    %v2099 = vadd.f32 %v2090, 1.0
    %v2100 = vadd.f32 %v2092, 1.0
    %v2101 = vadd.f32 %v2094, 1.0
    %v2102 = vadd.f32 %v2096, 1.0
    %v2103 = vrcp.pop %v2097
    %v2104 = vmul.f32 1.0, %v2103
    %v2105 = vrcp.pop %v2098
    %v2106 = vmul.f32 1.0, %v2105
    %v2107 = vrcp.pop %v2099
    %v2108 = vmul.f32 1.0, %v2107
    %v2109 = vrcp.pop %v2100
    %v2110 = vmul.f32 1.0, %v2109
    %v2111 = vrcp.pop %v2101
    %v2112 = vmul.f32 1.0, %v2111
    %v2113 = vrcp.pop %v2102
    %v2114 = vmul.f32 1.0, %v2113
    %v2115 = vtanh.pop %v2074
    %v2116 = vtanh.pop %v2078
    %v2117 = vmul.f32 %v2106, %v1874
    %v2118 = vmul.f32 %v2112, %v1875
    %v2119 = vmul.f32 %v2104, %v2115
    %v2120 = vmul.f32 %v2110, %v2116
    %v2121 = vadd.f32 %v2117, %v2119
    %v2122 = vadd.f32 %v2118, %v2120
    %v2123 = vtanh.pop %v2121
    %v2124 = vtanh.pop %v2122
    %v2125 = vmul.f32 %v2108, %v2123
    %v2126 = vmul.f32 %v2114, %v2124
    %v2127 = vpack.c.bf16 %v2126, %v2125
    %2128 = vmatprep.subr.bf16.mxu0 %v1313
    %2129 = vmatpush1.bf16.msra.mxu0 %v1312
    %2130 = vmatprep.subr.bf16.mxu0 %v1305
    %2131 = vmatpush1.bf16.msra.mxu0 %v1304
    %2132 = vmatprep.subr.bf16.mxu0 %v1297
    %2133 = vmatpush1.bf16.msra.mxu0 %v1296
    %2134 = vmatprep.subr.bf16.mxu0 %v1289
    %2135 = vmatpush1.bf16.msra.mxu0 %v1288
    %2136 = vmatprep.subr.bf16.mxu0 %v1281
    %2137 = vmatpush1.bf16.msra.mxu0 %v1280
    %2138 = vmatprep.subr.bf16.mxu0 %v1273
    %2139 = vmatpush1.bf16.msra.mxu0 %v1272
    %2140 = vmatprep.subr.bf16.mxu0 %v1265
    %2141 = vmatpush1.bf16.msra.mxu0 %v1264
    %2142 = vmatprep.subr.bf16.mxu0 %v1257
    %2143 = vmatpush1.bf16.msra.mxu0 %v1256
    %2144 = vmatprep.subr.bf16.mxu0 0
    %2145 = vmatpush2.bf16.msra.mxu0 0
    %2146 = vmatprep.subr.bf16.mxu0 0
    %2147 = vmatpush2.bf16.msra.mxu0 0
    %2148 = vmatprep.subr.bf16.mxu0 0
    %2149 = vmatpush2.bf16.msra.mxu0 0
    %2150 = vmatprep.subr.bf16.mxu0 0
    %2151 = vmatpush2.bf16.msra.mxu0 0
    %2152 = vmatprep.subr.bf16.mxu0 0
    %2153 = vmatpush2.bf16.msra.mxu0 0
    %2154 = vmatprep.subr.bf16.mxu0 0
    %2155 = vmatpush2.bf16.msra.mxu0 0
    %2156 = vmatprep.subr.bf16.mxu0 0
    %2157 = vmatpush2.bf16.msra.mxu0 0
    %2158 = vmatprep.subr.bf16.mxu0 0
    %2159 = vmatpush2.bf16.msra.mxu0 0
    %2160 = vmatprep.mubr.bf16.mxu0 0
    %2161 = vmatmul.mubr.bf16.gmra.mxu0 %v2127
    %v2162 = vpop.f32.mrf.mxu0
    %v2163 = vadd.f32 0.0, %v2162
    %v2164 = vpop.f32.mrf.mxu0
    %v2165 = vadd.f32 0.0, %v2164
    %v2166 = vpop.f32.mrf.mxu0
    %v2167 = vadd.f32 0.0, %v2166
    %v2168 = vpop.f32.mrf.mxu0
    %v2169 = vadd.f32 0.0, %v2168
    %2170 = vdwg.mxu0
    %2171 = vmatprep.subr.bf16.mxu0 %v1315
    %2172 = vmatpush1.bf16.msra.mxu0 %v1314
    %2173 = vmatprep.subr.bf16.mxu0 %v1307
    %2174 = vmatpush1.bf16.msra.mxu0 %v1306
    %2175 = vmatprep.subr.bf16.mxu0 %v1299
    %2176 = vmatpush1.bf16.msra.mxu0 %v1298
    %2177 = vmatprep.subr.bf16.mxu0 %v1291
    %2178 = vmatpush1.bf16.msra.mxu0 %v1290
    %2179 = vmatprep.subr.bf16.mxu0 %v1283
    %2180 = vmatpush1.bf16.msra.mxu0 %v1282
    %2181 = vmatprep.subr.bf16.mxu0 %v1275
    %2182 = vmatpush1.bf16.msra.mxu0 %v1274
    %2183 = vmatprep.subr.bf16.mxu0 %v1267
    %2184 = vmatpush1.bf16.msra.mxu0 %v1266
    %2185 = vmatprep.subr.bf16.mxu0 %v1259
    %2186 = vmatpush1.bf16.msra.mxu0 %v1258
    %2187 = vmatprep.subr.bf16.mxu0 0
    %2188 = vmatpush2.bf16.msra.mxu0 0
    %2189 = vmatprep.subr.bf16.mxu0 0
    %2190 = vmatpush2.bf16.msra.mxu0 0
    %2191 = vmatprep.subr.bf16.mxu0 0
    %2192 = vmatpush2.bf16.msra.mxu0 0
    %2193 = vmatprep.subr.bf16.mxu0 0
    %2194 = vmatpush2.bf16.msra.mxu0 0
    %2195 = vmatprep.subr.bf16.mxu0 0
    %2196 = vmatpush2.bf16.msra.mxu0 0
    %2197 = vmatprep.subr.bf16.mxu0 0
    %2198 = vmatpush2.bf16.msra.mxu0 0
    %2199 = vmatprep.subr.bf16.mxu0 0
    %2200 = vmatpush2.bf16.msra.mxu0 0
    %2201 = vmatprep.subr.bf16.mxu0 0
    %2202 = vmatpush2.bf16.msra.mxu0 0
    %2203 = vmatprep.mubr.bf16.mxu0 0
    %2204 = vmatmul.mubr.bf16.gmra.mxu0 %v2127
    %v2205 = vpop.f32.mrf.mxu0
    %v2206 = vadd.f32 0.0, %v2205
    %v2207 = vpop.f32.mrf.mxu0
    %v2208 = vadd.f32 0.0, %v2207
    %v2209 = vpop.f32.mrf.mxu0
    %v2210 = vadd.f32 0.0, %v2209
    %v2211 = vpop.f32.mrf.mxu0
    %v2212 = vadd.f32 0.0, %v2211
    %2213 = vdwg.mxu0
    %2214 = vmatprep.subr.bf16.mxu0 %v1317
    %2215 = vmatpush1.bf16.msra.mxu0 %v1316
    %2216 = vmatprep.subr.bf16.mxu0 %v1309
    %2217 = vmatpush1.bf16.msra.mxu0 %v1308
    %2218 = vmatprep.subr.bf16.mxu0 %v1301
    %2219 = vmatpush1.bf16.msra.mxu0 %v1300
    %2220 = vmatprep.subr.bf16.mxu0 %v1293
    %2221 = vmatpush1.bf16.msra.mxu0 %v1292
    %2222 = vmatprep.subr.bf16.mxu0 %v1285
    %2223 = vmatpush1.bf16.msra.mxu0 %v1284
    %2224 = vmatprep.subr.bf16.mxu0 %v1277
    %2225 = vmatpush1.bf16.msra.mxu0 %v1276
    %2226 = vmatprep.subr.bf16.mxu0 %v1269
    %2227 = vmatpush1.bf16.msra.mxu0 %v1268
    %2228 = vmatprep.subr.bf16.mxu0 %v1261
    %2229 = vmatpush1.bf16.msra.mxu0 %v1260
    %2230 = vmatprep.subr.bf16.mxu0 0
    %2231 = vmatpush2.bf16.msra.mxu0 0
    %2232 = vmatprep.subr.bf16.mxu0 0
    %2233 = vmatpush2.bf16.msra.mxu0 0
    %2234 = vmatprep.subr.bf16.mxu0 0
    %2235 = vmatpush2.bf16.msra.mxu0 0
    %2236 = vmatprep.subr.bf16.mxu0 0
    %2237 = vmatpush2.bf16.msra.mxu0 0
    %2238 = vmatprep.subr.bf16.mxu0 0
    %2239 = vmatpush2.bf16.msra.mxu0 0
    %2240 = vmatprep.subr.bf16.mxu0 0
    %2241 = vmatpush2.bf16.msra.mxu0 0
    %2242 = vmatprep.subr.bf16.mxu0 0
    %2243 = vmatpush2.bf16.msra.mxu0 0
    %2244 = vmatprep.subr.bf16.mxu0 0
    %2245 = vmatpush2.bf16.msra.mxu0 0
    %2246 = vmatprep.mubr.bf16.mxu0 0
    %2247 = vmatmul.mubr.bf16.gmra.mxu0 %v2127
    %v2248 = vpop.f32.mrf.mxu0
    %v2249 = vadd.f32 0.0, %v2248
    %v2250 = vpop.f32.mrf.mxu0
    %v2251 = vadd.f32 0.0, %v2250
    %v2252 = vpop.f32.mrf.mxu0
    %v2253 = vadd.f32 0.0, %v2252
    %v2254 = vpop.f32.mrf.mxu0
    %v2255 = vadd.f32 0.0, %v2254
    %2256 = vdwg.mxu0
    %2257 = vmatprep.subr.bf16.mxu0 %v1319
    %2258 = vmatpush1.bf16.msra.mxu0 %v1318
    %2259 = vmatprep.subr.bf16.mxu0 %v1311
    %2260 = vmatpush1.bf16.msra.mxu0 %v1310
    %2261 = vmatprep.subr.bf16.mxu0 %v1303
    %2262 = vmatpush1.bf16.msra.mxu0 %v1302
    %2263 = vmatprep.subr.bf16.mxu0 %v1295
    %2264 = vmatpush1.bf16.msra.mxu0 %v1294
    %2265 = vmatprep.subr.bf16.mxu0 %v1287
    %2266 = vmatpush1.bf16.msra.mxu0 %v1286
    %2267 = vmatprep.subr.bf16.mxu0 %v1279
    %2268 = vmatpush1.bf16.msra.mxu0 %v1278
    %2269 = vmatprep.subr.bf16.mxu0 %v1271
    %2270 = vmatpush1.bf16.msra.mxu0 %v1270
    %2271 = vmatprep.subr.bf16.mxu0 %v1263
    %2272 = vmatpush1.bf16.msra.mxu0 %v1262
    %2273 = vmatprep.subr.bf16.mxu0 0
    %2274 = vmatpush2.bf16.msra.mxu0 0
    %2275 = vmatprep.subr.bf16.mxu0 0
    %2276 = vmatpush2.bf16.msra.mxu0 0
    %2277 = vmatprep.subr.bf16.mxu0 0
    %2278 = vmatpush2.bf16.msra.mxu0 0
    %2279 = vmatprep.subr.bf16.mxu0 0
    %2280 = vmatpush2.bf16.msra.mxu0 0
    %2281 = vmatprep.subr.bf16.mxu0 0
    %2282 = vmatpush2.bf16.msra.mxu0 0
    %2283 = vmatprep.subr.bf16.mxu0 0
    %2284 = vmatpush2.bf16.msra.mxu0 0
    %2285 = vmatprep.subr.bf16.mxu0 0
    %2286 = vmatpush2.bf16.msra.mxu0 0
    %2287 = vmatprep.subr.bf16.mxu0 0
    %2288 = vmatpush2.bf16.msra.mxu0 0
    %2289 = vmatprep.mubr.bf16.mxu0 0
    %2290 = vmatmul.mubr.bf16.gmra.mxu0 %v2127
    %v2291 = vpop.f32.mrf.mxu0
    %v2292 = vadd.f32 0.0, %v2291
    %v2293 = vpop.f32.mrf.mxu0
    %v2294 = vadd.f32 0.0, %v2293
    %v2295 = vpop.f32.mrf.mxu0
    %v2296 = vadd.f32 0.0, %v2295
    %v2297 = vpop.f32.mrf.mxu0
    %v2298 = vadd.f32 0.0, %v2297
    %2299 = vdwg.mxu0
    %s2300 = scalar_lea.vmem [#allocation2], 96
    %v2301 = vld [vmem:[%s2300] sm:$0xff]
    %v2302 = vld [vmem:[%s2300 + $0x8] sm:$0xff]
    %v2303 = vld [vmem:[%s2300 + $0x10] sm:$0xff]
    %v2304 = vld [vmem:[%s2300 + $0x18] sm:$0xff]
    %s2305 = scalar_lea.vmem [#allocation3], 128
    %v2306 = vld [vmem:[%s2305] sm:$0xff]
    %v2307 = vld [vmem:[%s2305 + $0x8] sm:$0xff]
    %v2308 = vld [vmem:[%s2305 + $0x10] sm:$0xff]
    %v2309 = vld [vmem:[%s2305 + $0x18] sm:$0xff]
    %v2310 = vsel %vm1567, %v2163, %v2249
    %v2311 = vsel %vm1567, %v2165, %v2251
    %v2312 = vsel %vm1567, %v2206, %v2292
    %v2313 = vsel %vm1567, %v2208, %v2294
    %v2314 = vsel %vm1568, %v2167, %v2253
    %v2315 = vsel %vm1568, %v2169, %v2255
    %v2316 = vsel %vm1568, %v2210, %v2296
    %v2317 = vsel %vm1568, %v2212, %v2298
    %v2318 = vadd.f32 %v2301, %v2310
    %v2319 = vadd.f32 %v2302, %v2311
    %v2320 = vadd.f32 %v2303, %v2312
    %v2321 = vadd.f32 %v2304, %v2313
    %v2322 = vadd.f32 %v2306, %v2314
    %v2323 = vadd.f32 %v2307, %v2315
    %v2324 = vadd.f32 %v2308, %v2316
    %v2325 = vadd.f32 %v2309, %v2317
    %v2326 = vxor.u32 %v2318, 2147483648
    %v2327 = vxor.u32 %v2319, 2147483648
    %v2328 = vxor.u32 %v2320, 2147483648
    %v2329 = vxor.u32 %v2322, 2147483648
    %v2330 = vxor.u32 %v2323, 2147483648
    %v2331 = vxor.u32 %v2324, 2147483648
    %v2332 = vmul.f32 %v2326, 1.442695
    %v2333 = vpow.pop %v2332
    %v2334 = vmul.f32 %v2327, 1.442695
    %v2335 = vpow.pop %v2334
    %v2336 = vmul.f32 %v2328, 1.442695
    %v2337 = vpow.pop %v2336
    %v2338 = vmul.f32 %v2329, 1.442695
    %v2339 = vpow.pop %v2338
    %v2340 = vmul.f32 %v2330, 1.442695
    %v2341 = vpow.pop %v2340
    %v2342 = vmul.f32 %v2331, 1.442695
    %v2343 = vpow.pop %v2342
    %v2344 = vadd.f32 %v2333, 1.0
    %v2345 = vadd.f32 %v2335, 1.0
    %v2346 = vadd.f32 %v2337, 1.0
    %v2347 = vadd.f32 %v2339, 1.0
    %v2348 = vadd.f32 %v2341, 1.0
    %v2349 = vadd.f32 %v2343, 1.0
    %v2350 = vrcp.pop %v2344
    %v2351 = vmul.f32 1.0, %v2350
    %v2352 = vrcp.pop %v2345
    %v2353 = vmul.f32 1.0, %v2352
    %v2354 = vrcp.pop %v2346
    %v2355 = vmul.f32 1.0, %v2354
    %v2356 = vrcp.pop %v2347
    %v2357 = vmul.f32 1.0, %v2356
    %v2358 = vrcp.pop %v2348
    %v2359 = vmul.f32 1.0, %v2358
    %v2360 = vrcp.pop %v2349
    %v2361 = vmul.f32 1.0, %v2360
    %v2362 = vtanh.pop %v2321
    %v2363 = vtanh.pop %v2325
    %v2364 = vmul.f32 %v2353, %v2121
    %v2365 = vmul.f32 %v2359, %v2122
    %v2366 = vmul.f32 %v2351, %v2362
    %v2367 = vmul.f32 %v2357, %v2363
    %v2368 = vadd.f32 %v2364, %v2366
    %v2369 = vadd.f32 %v2365, %v2367
    %v2370 = vtanh.pop %v2368
    %v2371 = vtanh.pop %v2369
    %v2372 = vmul.f32 %v2355, %v2370
    %v2373 = vmul.f32 %v2361, %v2371
    %v2374 = vpack.c.bf16 %v2373, %v2372
    %2375 = vmatprep.subr.bf16.mxu0 %v1313
    %2376 = vmatpush1.bf16.msra.mxu0 %v1312
    %2377 = vmatprep.subr.bf16.mxu0 %v1305
    %2378 = vmatpush1.bf16.msra.mxu0 %v1304
    %2379 = vmatprep.subr.bf16.mxu0 %v1297
    %2380 = vmatpush1.bf16.msra.mxu0 %v1296
    %2381 = vmatprep.subr.bf16.mxu0 %v1289
    %2382 = vmatpush1.bf16.msra.mxu0 %v1288
    %2383 = vmatprep.subr.bf16.mxu0 %v1281
    %2384 = vmatpush1.bf16.msra.mxu0 %v1280
    %2385 = vmatprep.subr.bf16.mxu0 %v1273
    %2386 = vmatpush1.bf16.msra.mxu0 %v1272
    %2387 = vmatprep.subr.bf16.mxu0 %v1265
    %2388 = vmatpush1.bf16.msra.mxu0 %v1264
    %2389 = vmatprep.subr.bf16.mxu0 %v1257
    %2390 = vmatpush1.bf16.msra.mxu0 %v1256
    %2391 = vmatprep.subr.bf16.mxu0 0
    %2392 = vmatpush2.bf16.msra.mxu0 0
    %2393 = vmatprep.subr.bf16.mxu0 0
    %2394 = vmatpush2.bf16.msra.mxu0 0
    %2395 = vmatprep.subr.bf16.mxu0 0
    %2396 = vmatpush2.bf16.msra.mxu0 0
    %2397 = vmatprep.subr.bf16.mxu0 0
    %2398 = vmatpush2.bf16.msra.mxu0 0
    %2399 = vmatprep.subr.bf16.mxu0 0
    %2400 = vmatpush2.bf16.msra.mxu0 0
    %2401 = vmatprep.subr.bf16.mxu0 0
    %2402 = vmatpush2.bf16.msra.mxu0 0
    %2403 = vmatprep.subr.bf16.mxu0 0
    %2404 = vmatpush2.bf16.msra.mxu0 0
    %2405 = vmatprep.subr.bf16.mxu0 0
    %2406 = vmatpush2.bf16.msra.mxu0 0
    %2407 = vmatprep.mubr.bf16.mxu0 0
    %2408 = vmatmul.mubr.bf16.gmra.mxu0 %v2374
    %v2409 = vpop.f32.mrf.mxu0
    %v2410 = vadd.f32 0.0, %v2409
    %v2411 = vpop.f32.mrf.mxu0
    %v2412 = vadd.f32 0.0, %v2411
    %v2413 = vpop.f32.mrf.mxu0
    %v2414 = vadd.f32 0.0, %v2413
    %v2415 = vpop.f32.mrf.mxu0
    %v2416 = vadd.f32 0.0, %v2415
    %2417 = vdwg.mxu0
    %2418 = vmatprep.subr.bf16.mxu0 %v1315
    %2419 = vmatpush1.bf16.msra.mxu0 %v1314
    %2420 = vmatprep.subr.bf16.mxu0 %v1307
    %2421 = vmatpush1.bf16.msra.mxu0 %v1306
    %2422 = vmatprep.subr.bf16.mxu0 %v1299
    %2423 = vmatpush1.bf16.msra.mxu0 %v1298
    %2424 = vmatprep.subr.bf16.mxu0 %v1291
    %2425 = vmatpush1.bf16.msra.mxu0 %v1290
    %2426 = vmatprep.subr.bf16.mxu0 %v1283
    %2427 = vmatpush1.bf16.msra.mxu0 %v1282
    %2428 = vmatprep.subr.bf16.mxu0 %v1275
    %2429 = vmatpush1.bf16.msra.mxu0 %v1274
    %2430 = vmatprep.subr.bf16.mxu0 %v1267
    %2431 = vmatpush1.bf16.msra.mxu0 %v1266
    %2432 = vmatprep.subr.bf16.mxu0 %v1259
    %2433 = vmatpush1.bf16.msra.mxu0 %v1258
    %2434 = vmatprep.subr.bf16.mxu0 0
    %2435 = vmatpush2.bf16.msra.mxu0 0
    %2436 = vmatprep.subr.bf16.mxu0 0
    %2437 = vmatpush2.bf16.msra.mxu0 0
    %2438 = vmatprep.subr.bf16.mxu0 0
    %2439 = vmatpush2.bf16.msra.mxu0 0
    %2440 = vmatprep.subr.bf16.mxu0 0
    %2441 = vmatpush2.bf16.msra.mxu0 0
    %2442 = vmatprep.subr.bf16.mxu0 0
    %2443 = vmatpush2.bf16.msra.mxu0 0
    %2444 = vmatprep.subr.bf16.mxu0 0
    %2445 = vmatpush2.bf16.msra.mxu0 0
    %2446 = vmatprep.subr.bf16.mxu0 0
    %2447 = vmatpush2.bf16.msra.mxu0 0
    %2448 = vmatprep.subr.bf16.mxu0 0
    %2449 = vmatpush2.bf16.msra.mxu0 0
    %2450 = vmatprep.mubr.bf16.mxu0 0
    %2451 = vmatmul.mubr.bf16.gmra.mxu0 %v2374
    %v2452 = vpop.f32.mrf.mxu0
    %v2453 = vadd.f32 0.0, %v2452
    %v2454 = vpop.f32.mrf.mxu0
    %v2455 = vadd.f32 0.0, %v2454
    %v2456 = vpop.f32.mrf.mxu0
    %v2457 = vadd.f32 0.0, %v2456
    %v2458 = vpop.f32.mrf.mxu0
    %v2459 = vadd.f32 0.0, %v2458
    %2460 = vdwg.mxu0
    %2461 = vmatprep.subr.bf16.mxu0 %v1317
    %2462 = vmatpush1.bf16.msra.mxu0 %v1316
    %2463 = vmatprep.subr.bf16.mxu0 %v1309
    %2464 = vmatpush1.bf16.msra.mxu0 %v1308
    %2465 = vmatprep.subr.bf16.mxu0 %v1301
    %2466 = vmatpush1.bf16.msra.mxu0 %v1300
    %2467 = vmatprep.subr.bf16.mxu0 %v1293
    %2468 = vmatpush1.bf16.msra.mxu0 %v1292
    %2469 = vmatprep.subr.bf16.mxu0 %v1285
    %2470 = vmatpush1.bf16.msra.mxu0 %v1284
    %2471 = vmatprep.subr.bf16.mxu0 %v1277
    %2472 = vmatpush1.bf16.msra.mxu0 %v1276
    %2473 = vmatprep.subr.bf16.mxu0 %v1269
    %2474 = vmatpush1.bf16.msra.mxu0 %v1268
    %2475 = vmatprep.subr.bf16.mxu0 %v1261
    %2476 = vmatpush1.bf16.msra.mxu0 %v1260
    %2477 = vmatprep.subr.bf16.mxu0 0
    %2478 = vmatpush2.bf16.msra.mxu0 0
    %2479 = vmatprep.subr.bf16.mxu0 0
    %2480 = vmatpush2.bf16.msra.mxu0 0
    %2481 = vmatprep.subr.bf16.mxu0 0
    %2482 = vmatpush2.bf16.msra.mxu0 0
    %2483 = vmatprep.subr.bf16.mxu0 0
    %2484 = vmatpush2.bf16.msra.mxu0 0
    %2485 = vmatprep.subr.bf16.mxu0 0
    %2486 = vmatpush2.bf16.msra.mxu0 0
    %2487 = vmatprep.subr.bf16.mxu0 0
    %2488 = vmatpush2.bf16.msra.mxu0 0
    %2489 = vmatprep.subr.bf16.mxu0 0
    %2490 = vmatpush2.bf16.msra.mxu0 0
    %2491 = vmatprep.subr.bf16.mxu0 0
    %2492 = vmatpush2.bf16.msra.mxu0 0
    %2493 = vmatprep.mubr.bf16.mxu0 0
    %2494 = vmatmul.mubr.bf16.gmra.mxu0 %v2374
    %v2495 = vpop.f32.mrf.mxu0
    %v2496 = vadd.f32 0.0, %v2495
    %v2497 = vpop.f32.mrf.mxu0
    %v2498 = vadd.f32 0.0, %v2497
    %v2499 = vpop.f32.mrf.mxu0
    %v2500 = vadd.f32 0.0, %v2499
    %v2501 = vpop.f32.mrf.mxu0
    %v2502 = vadd.f32 0.0, %v2501
    %2503 = vdwg.mxu0
    %2504 = vmatprep.subr.bf16.mxu0 %v1319
    %2505 = vmatpush1.bf16.msra.mxu0 %v1318
    %2506 = vmatprep.subr.bf16.mxu0 %v1311
    %2507 = vmatpush1.bf16.msra.mxu0 %v1310
    %2508 = vmatprep.subr.bf16.mxu0 %v1303
    %2509 = vmatpush1.bf16.msra.mxu0 %v1302
    %2510 = vmatprep.subr.bf16.mxu0 %v1295
    %2511 = vmatpush1.bf16.msra.mxu0 %v1294
    %2512 = vmatprep.subr.bf16.mxu0 %v1287
    %2513 = vmatpush1.bf16.msra.mxu0 %v1286
    %2514 = vmatprep.subr.bf16.mxu0 %v1279
    %2515 = vmatpush1.bf16.msra.mxu0 %v1278
    %2516 = vmatprep.subr.bf16.mxu0 %v1271
    %2517 = vmatpush1.bf16.msra.mxu0 %v1270
    %2518 = vmatprep.subr.bf16.mxu0 %v1263
    %2519 = vmatpush1.bf16.msra.mxu0 %v1262
    %2520 = vmatprep.subr.bf16.mxu0 0
    %2521 = vmatpush2.bf16.msra.mxu0 0
    %2522 = vmatprep.subr.bf16.mxu0 0
    %2523 = vmatpush2.bf16.msra.mxu0 0
    %2524 = vmatprep.subr.bf16.mxu0 0
    %2525 = vmatpush2.bf16.msra.mxu0 0
    %2526 = vmatprep.subr.bf16.mxu0 0
    %2527 = vmatpush2.bf16.msra.mxu0 0
    %2528 = vmatprep.subr.bf16.mxu0 0
    %2529 = vmatpush2.bf16.msra.mxu0 0
    %2530 = vmatprep.subr.bf16.mxu0 0
    %2531 = vmatpush2.bf16.msra.mxu0 0
    %2532 = vmatprep.subr.bf16.mxu0 0
    %2533 = vmatpush2.bf16.msra.mxu0 0
    %2534 = vmatprep.subr.bf16.mxu0 0
    %2535 = vmatpush2.bf16.msra.mxu0 0
    %2536 = vmatprep.mubr.bf16.mxu0 0
    %2537 = vmatmul.mubr.bf16.gmra.mxu0 %v2374
    %v2538 = vpop.f32.mrf.mxu0
    %v2539 = vadd.f32 0.0, %v2538
    %v2540 = vpop.f32.mrf.mxu0
    %v2541 = vadd.f32 0.0, %v2540
    %v2542 = vpop.f32.mrf.mxu0
    %v2543 = vadd.f32 0.0, %v2542
    %v2544 = vpop.f32.mrf.mxu0
    %v2545 = vadd.f32 0.0, %v2544
    %2546 = vdwg.mxu0
    %s2547 = scalar_lea.vmem [#allocation2], 128
    %v2548 = vld [vmem:[%s2547] sm:$0xff]
    %v2549 = vld [vmem:[%s2547 + $0x8] sm:$0xff]
    %v2550 = vld [vmem:[%s2547 + $0x10] sm:$0xff]
    %v2551 = vld [vmem:[%s2547 + $0x18] sm:$0xff]
    %s2552 = scalar_lea.vmem [#allocation3], 96
    %v2553 = vld [vmem:[%s2552] sm:$0xff]
    %v2554 = vld [vmem:[%s2552 + $0x8] sm:$0xff]
    %v2555 = vld [vmem:[%s2552 + $0x10] sm:$0xff]
    %v2556 = vld [vmem:[%s2552 + $0x18] sm:$0xff]
    %v2557 = vsel %vm1567, %v2410, %v2496
    %v2558 = vsel %vm1567, %v2412, %v2498
    %v2559 = vsel %vm1567, %v2453, %v2539
    %v2560 = vsel %vm1567, %v2455, %v2541
    %v2561 = vsel %vm1568, %v2414, %v2500
    %v2562 = vsel %vm1568, %v2416, %v2502
    %v2563 = vsel %vm1568, %v2457, %v2543
    %v2564 = vsel %vm1568, %v2459, %v2545
    %v2565 = vadd.f32 %v2548, %v2557
    %v2566 = vadd.f32 %v2549, %v2558
    %v2567 = vadd.f32 %v2550, %v2559
    %v2568 = vadd.f32 %v2551, %v2560
    %v2569 = vadd.f32 %v2553, %v2561
    %v2570 = vadd.f32 %v2554, %v2562
    %v2571 = vadd.f32 %v2555, %v2563
    %v2572 = vadd.f32 %v2556, %v2564
    %v2573 = vxor.u32 %v2565, 2147483648
    %v2574 = vxor.u32 %v2566, 2147483648
    %v2575 = vxor.u32 %v2567, 2147483648
    %v2576 = vxor.u32 %v2569, 2147483648
    %v2577 = vxor.u32 %v2570, 2147483648
    %v2578 = vxor.u32 %v2571, 2147483648
    %v2579 = vmul.f32 %v2573, 1.442695
    %v2580 = vpow.pop %v2579
    %v2581 = vmul.f32 %v2574, 1.442695
    %v2582 = vpow.pop %v2581
    %v2583 = vmul.f32 %v2575, 1.442695
    %v2584 = vpow.pop %v2583
    %v2585 = vmul.f32 %v2576, 1.442695
    %v2586 = vpow.pop %v2585
    %v2587 = vmul.f32 %v2577, 1.442695
    %v2588 = vpow.pop %v2587
    %v2589 = vmul.f32 %v2578, 1.442695
    %v2590 = vpow.pop %v2589
    %v2591 = vadd.f32 %v2580, 1.0
    %v2592 = vadd.f32 %v2582, 1.0
    %v2593 = vadd.f32 %v2584, 1.0
    %v2594 = vadd.f32 %v2586, 1.0
    %v2595 = vadd.f32 %v2588, 1.0
    %v2596 = vadd.f32 %v2590, 1.0
    %v2597 = vrcp.pop %v2591
    %v2598 = vmul.f32 1.0, %v2597
    %v2599 = vrcp.pop %v2592
    %v2600 = vmul.f32 1.0, %v2599
    %v2601 = vrcp.pop %v2593
    %v2602 = vmul.f32 1.0, %v2601
    %v2603 = vrcp.pop %v2594
    %v2604 = vmul.f32 1.0, %v2603
    %v2605 = vrcp.pop %v2595
    %v2606 = vmul.f32 1.0, %v2605
    %v2607 = vrcp.pop %v2596
    %v2608 = vmul.f32 1.0, %v2607
    %v2609 = vtanh.pop %v2568
    %v2610 = vtanh.pop %v2572
    %v2611 = vmul.f32 %v2600, %v2368
    %v2612 = vmul.f32 %v2606, %v2369
    %v2613 = vmul.f32 %v2598, %v2609
    %v2614 = vmul.f32 %v2604, %v2610
    %v2615 = vadd.f32 %v2611, %v2613
    %v2616 = vadd.f32 %v2612, %v2614
    %v2617 = vtanh.pop %v2615
    %v2618 = vtanh.pop %v2616
    %v2619 = vmul.f32 %v2602, %v2617
    %v2620 = vmul.f32 %v2608, %v2618
    %v2621 = vpack.c.bf16 %v2620, %v2619
    %2622 = vmatprep.subr.bf16.mxu0 %v1313
    %2623 = vmatpush1.bf16.msra.mxu0 %v1312
    %2624 = vmatprep.subr.bf16.mxu0 %v1305
    %2625 = vmatpush1.bf16.msra.mxu0 %v1304
    %2626 = vmatprep.subr.bf16.mxu0 %v1297
    %2627 = vmatpush1.bf16.msra.mxu0 %v1296
    %2628 = vmatprep.subr.bf16.mxu0 %v1289
    %2629 = vmatpush1.bf16.msra.mxu0 %v1288
    %2630 = vmatprep.subr.bf16.mxu0 %v1281
    %2631 = vmatpush1.bf16.msra.mxu0 %v1280
    %2632 = vmatprep.subr.bf16.mxu0 %v1273
    %2633 = vmatpush1.bf16.msra.mxu0 %v1272
    %2634 = vmatprep.subr.bf16.mxu0 %v1265
    %2635 = vmatpush1.bf16.msra.mxu0 %v1264
    %2636 = vmatprep.subr.bf16.mxu0 %v1257
    %2637 = vmatpush1.bf16.msra.mxu0 %v1256
    %2638 = vmatprep.subr.bf16.mxu0 0
    %2639 = vmatpush2.bf16.msra.mxu0 0
    %2640 = vmatprep.subr.bf16.mxu0 0
    %2641 = vmatpush2.bf16.msra.mxu0 0
    %2642 = vmatprep.subr.bf16.mxu0 0
    %2643 = vmatpush2.bf16.msra.mxu0 0
    %2644 = vmatprep.subr.bf16.mxu0 0
    %2645 = vmatpush2.bf16.msra.mxu0 0
    %2646 = vmatprep.subr.bf16.mxu0 0
    %2647 = vmatpush2.bf16.msra.mxu0 0
    %2648 = vmatprep.subr.bf16.mxu0 0
    %2649 = vmatpush2.bf16.msra.mxu0 0
    %2650 = vmatprep.subr.bf16.mxu0 0
    %2651 = vmatpush2.bf16.msra.mxu0 0
    %2652 = vmatprep.subr.bf16.mxu0 0
    %2653 = vmatpush2.bf16.msra.mxu0 0
    %2654 = vmatprep.mubr.bf16.mxu0 0
    %2655 = vmatmul.mubr.bf16.gmra.mxu0 %v2621
    %v2656 = vpop.f32.mrf.mxu0
    %v2657 = vadd.f32 0.0, %v2656
    %v2658 = vpop.f32.mrf.mxu0
    %v2659 = vadd.f32 0.0, %v2658
    %v2660 = vpop.f32.mrf.mxu0
    %v2661 = vadd.f32 0.0, %v2660
    %v2662 = vpop.f32.mrf.mxu0
    %v2663 = vadd.f32 0.0, %v2662
    %2664 = vdwg.mxu0
    %2665 = vmatprep.subr.bf16.mxu0 %v1315
    %2666 = vmatpush1.bf16.msra.mxu0 %v1314
    %2667 = vmatprep.subr.bf16.mxu0 %v1307
    %2668 = vmatpush1.bf16.msra.mxu0 %v1306
    %2669 = vmatprep.subr.bf16.mxu0 %v1299
    %2670 = vmatpush1.bf16.msra.mxu0 %v1298
    %2671 = vmatprep.subr.bf16.mxu0 %v1291
    %2672 = vmatpush1.bf16.msra.mxu0 %v1290
    %2673 = vmatprep.subr.bf16.mxu0 %v1283
    %2674 = vmatpush1.bf16.msra.mxu0 %v1282
    %2675 = vmatprep.subr.bf16.mxu0 %v1275
    %2676 = vmatpush1.bf16.msra.mxu0 %v1274
    %2677 = vmatprep.subr.bf16.mxu0 %v1267
    %2678 = vmatpush1.bf16.msra.mxu0 %v1266
    %2679 = vmatprep.subr.bf16.mxu0 %v1259
    %2680 = vmatpush1.bf16.msra.mxu0 %v1258
    %2681 = vmatprep.subr.bf16.mxu0 0
    %2682 = vmatpush2.bf16.msra.mxu0 0
    %2683 = vmatprep.subr.bf16.mxu0 0
    %2684 = vmatpush2.bf16.msra.mxu0 0
    %2685 = vmatprep.subr.bf16.mxu0 0
    %2686 = vmatpush2.bf16.msra.mxu0 0
    %2687 = vmatprep.subr.bf16.mxu0 0
    %2688 = vmatpush2.bf16.msra.mxu0 0
    %2689 = vmatprep.subr.bf16.mxu0 0
    %2690 = vmatpush2.bf16.msra.mxu0 0
    %2691 = vmatprep.subr.bf16.mxu0 0
    %2692 = vmatpush2.bf16.msra.mxu0 0
    %2693 = vmatprep.subr.bf16.mxu0 0
    %2694 = vmatpush2.bf16.msra.mxu0 0
    %2695 = vmatprep.subr.bf16.mxu0 0
    %2696 = vmatpush2.bf16.msra.mxu0 0
    %2697 = vmatprep.mubr.bf16.mxu0 0
    %2698 = vmatmul.mubr.bf16.gmra.mxu0 %v2621
    %v2699 = vpop.f32.mrf.mxu0
    %v2700 = vadd.f32 0.0, %v2699
    %v2701 = vpop.f32.mrf.mxu0
    %v2702 = vadd.f32 0.0, %v2701
    %v2703 = vpop.f32.mrf.mxu0
    %v2704 = vadd.f32 0.0, %v2703
    %v2705 = vpop.f32.mrf.mxu0
    %v2706 = vadd.f32 0.0, %v2705
    %2707 = vdwg.mxu0
    %2708 = vmatprep.subr.bf16.mxu0 %v1317
    %2709 = vmatpush1.bf16.msra.mxu0 %v1316
    %2710 = vmatprep.subr.bf16.mxu0 %v1309
    %2711 = vmatpush1.bf16.msra.mxu0 %v1308
    %2712 = vmatprep.subr.bf16.mxu0 %v1301
    %2713 = vmatpush1.bf16.msra.mxu0 %v1300
    %2714 = vmatprep.subr.bf16.mxu0 %v1293
    %2715 = vmatpush1.bf16.msra.mxu0 %v1292
    %2716 = vmatprep.subr.bf16.mxu0 %v1285
    %2717 = vmatpush1.bf16.msra.mxu0 %v1284
    %2718 = vmatprep.subr.bf16.mxu0 %v1277
    %2719 = vmatpush1.bf16.msra.mxu0 %v1276
    %2720 = vmatprep.subr.bf16.mxu0 %v1269
    %2721 = vmatpush1.bf16.msra.mxu0 %v1268
    %2722 = vmatprep.subr.bf16.mxu0 %v1261
    %2723 = vmatpush1.bf16.msra.mxu0 %v1260
    %2724 = vmatprep.subr.bf16.mxu0 0
    %2725 = vmatpush2.bf16.msra.mxu0 0
    %2726 = vmatprep.subr.bf16.mxu0 0
    %2727 = vmatpush2.bf16.msra.mxu0 0
    %2728 = vmatprep.subr.bf16.mxu0 0
    %2729 = vmatpush2.bf16.msra.mxu0 0
    %2730 = vmatprep.subr.bf16.mxu0 0
    %2731 = vmatpush2.bf16.msra.mxu0 0
    %2732 = vmatprep.subr.bf16.mxu0 0
    %2733 = vmatpush2.bf16.msra.mxu0 0
    %2734 = vmatprep.subr.bf16.mxu0 0
    %2735 = vmatpush2.bf16.msra.mxu0 0
    %2736 = vmatprep.subr.bf16.mxu0 0
    %2737 = vmatpush2.bf16.msra.mxu0 0
    %2738 = vmatprep.subr.bf16.mxu0 0
    %2739 = vmatpush2.bf16.msra.mxu0 0
    %2740 = vmatprep.mubr.bf16.mxu0 0
    %2741 = vmatmul.mubr.bf16.gmra.mxu0 %v2621
    %v2742 = vpop.f32.mrf.mxu0
    %v2743 = vadd.f32 0.0, %v2742
    %v2744 = vpop.f32.mrf.mxu0
    %v2745 = vadd.f32 0.0, %v2744
    %v2746 = vpop.f32.mrf.mxu0
    %v2747 = vadd.f32 0.0, %v2746
    %v2748 = vpop.f32.mrf.mxu0
    %v2749 = vadd.f32 0.0, %v2748
    %2750 = vdwg.mxu0
    %2751 = vmatprep.subr.bf16.mxu0 %v1319
    %2752 = vmatpush1.bf16.msra.mxu0 %v1318
    %2753 = vmatprep.subr.bf16.mxu0 %v1311
    %2754 = vmatpush1.bf16.msra.mxu0 %v1310
    %2755 = vmatprep.subr.bf16.mxu0 %v1303
    %2756 = vmatpush1.bf16.msra.mxu0 %v1302
    %2757 = vmatprep.subr.bf16.mxu0 %v1295
    %2758 = vmatpush1.bf16.msra.mxu0 %v1294
    %2759 = vmatprep.subr.bf16.mxu0 %v1287
    %2760 = vmatpush1.bf16.msra.mxu0 %v1286
    %2761 = vmatprep.subr.bf16.mxu0 %v1279
    %2762 = vmatpush1.bf16.msra.mxu0 %v1278
    %2763 = vmatprep.subr.bf16.mxu0 %v1271
    %2764 = vmatpush1.bf16.msra.mxu0 %v1270
    %2765 = vmatprep.subr.bf16.mxu0 %v1263
    %2766 = vmatpush1.bf16.msra.mxu0 %v1262
    %2767 = vmatprep.subr.bf16.mxu0 0
    %2768 = vmatpush2.bf16.msra.mxu0 0
    %2769 = vmatprep.subr.bf16.mxu0 0
    %2770 = vmatpush2.bf16.msra.mxu0 0
    %2771 = vmatprep.subr.bf16.mxu0 0
    %2772 = vmatpush2.bf16.msra.mxu0 0
    %2773 = vmatprep.subr.bf16.mxu0 0
    %2774 = vmatpush2.bf16.msra.mxu0 0
    %2775 = vmatprep.subr.bf16.mxu0 0
    %2776 = vmatpush2.bf16.msra.mxu0 0
    %2777 = vmatprep.subr.bf16.mxu0 0
    %2778 = vmatpush2.bf16.msra.mxu0 0
    %2779 = vmatprep.subr.bf16.mxu0 0
    %2780 = vmatpush2.bf16.msra.mxu0 0
    %2781 = vmatprep.subr.bf16.mxu0 0
    %2782 = vmatpush2.bf16.msra.mxu0 0
    %2783 = vmatprep.mubr.bf16.mxu0 0
    %2784 = vmatmul.mubr.bf16.gmra.mxu0 %v2621
    %v2785 = vpop.f32.mrf.mxu0
    %v2786 = vadd.f32 0.0, %v2785
    %v2787 = vpop.f32.mrf.mxu0
    %v2788 = vadd.f32 0.0, %v2787
    %v2789 = vpop.f32.mrf.mxu0
    %v2790 = vadd.f32 0.0, %v2789
    %v2791 = vpop.f32.mrf.mxu0
    %v2792 = vadd.f32 0.0, %v2791
    %2793 = vdwg.mxu0
    %s2794 = scalar_lea.vmem [#allocation2], 160
    %v2795 = vld [vmem:[%s2794] sm:$0xff]
    %v2796 = vld [vmem:[%s2794 + $0x8] sm:$0xff]
    %v2797 = vld [vmem:[%s2794 + $0x10] sm:$0xff]
    %v2798 = vld [vmem:[%s2794 + $0x18] sm:$0xff]
    %s2799 = scalar_lea.vmem [#allocation3], 64
    %v2800 = vld [vmem:[%s2799] sm:$0xff]
    %v2801 = vld [vmem:[%s2799 + $0x8] sm:$0xff]
    %v2802 = vld [vmem:[%s2799 + $0x10] sm:$0xff]
    %v2803 = vld [vmem:[%s2799 + $0x18] sm:$0xff]
    %v2804 = vsel %vm1567, %v2657, %v2743
    %v2805 = vsel %vm1567, %v2659, %v2745
    %v2806 = vsel %vm1567, %v2700, %v2786
    %v2807 = vsel %vm1567, %v2702, %v2788
    %v2808 = vsel %vm1568, %v2661, %v2747
    %v2809 = vsel %vm1568, %v2663, %v2749
    %v2810 = vsel %vm1568, %v2704, %v2790
    %v2811 = vsel %vm1568, %v2706, %v2792
    %v2812 = vadd.f32 %v2795, %v2804
    %v2813 = vadd.f32 %v2796, %v2805
    %v2814 = vadd.f32 %v2797, %v2806
    %v2815 = vadd.f32 %v2798, %v2807
    %v2816 = vadd.f32 %v2800, %v2808
    %v2817 = vadd.f32 %v2801, %v2809
    %v2818 = vadd.f32 %v2802, %v2810
    %v2819 = vadd.f32 %v2803, %v2811
    %v2820 = vxor.u32 %v2812, 2147483648
    %v2821 = vxor.u32 %v2813, 2147483648
    %v2822 = vxor.u32 %v2814, 2147483648
    %v2823 = vxor.u32 %v2816, 2147483648
    %v2824 = vxor.u32 %v2817, 2147483648
    %v2825 = vxor.u32 %v2818, 2147483648
    %v2826 = vmul.f32 %v2820, 1.442695
    %v2827 = vpow.pop %v2826
    %v2828 = vmul.f32 %v2821, 1.442695
    %v2829 = vpow.pop %v2828
    %v2830 = vmul.f32 %v2822, 1.442695
    %v2831 = vpow.pop %v2830
    %v2832 = vmul.f32 %v2823, 1.442695
    %v2833 = vpow.pop %v2832
    %v2834 = vmul.f32 %v2824, 1.442695
    %v2835 = vpow.pop %v2834
    %v2836 = vmul.f32 %v2825, 1.442695
    %v2837 = vpow.pop %v2836
    %v2838 = vadd.f32 %v2827, 1.0
    %v2839 = vadd.f32 %v2829, 1.0
    %v2840 = vadd.f32 %v2831, 1.0
    %v2841 = vadd.f32 %v2833, 1.0
    %v2842 = vadd.f32 %v2835, 1.0
    %v2843 = vadd.f32 %v2837, 1.0
    %v2844 = vrcp.pop %v2838
    %v2845 = vmul.f32 1.0, %v2844
    %v2846 = vrcp.pop %v2839
    %v2847 = vmul.f32 1.0, %v2846
    %v2848 = vrcp.pop %v2840
    %v2849 = vmul.f32 1.0, %v2848
    %v2850 = vrcp.pop %v2841
    %v2851 = vmul.f32 1.0, %v2850
    %v2852 = vrcp.pop %v2842
    %v2853 = vmul.f32 1.0, %v2852
    %v2854 = vrcp.pop %v2843
    %v2855 = vmul.f32 1.0, %v2854
    %v2856 = vtanh.pop %v2815
    %v2857 = vtanh.pop %v2819
    %v2858 = vmul.f32 %v2847, %v2615
    %v2859 = vmul.f32 %v2853, %v2616
    %v2860 = vmul.f32 %v2845, %v2856
    %v2861 = vmul.f32 %v2851, %v2857
    %v2862 = vadd.f32 %v2858, %v2860
    %v2863 = vadd.f32 %v2859, %v2861
    %v2864 = vtanh.pop %v2862
    %v2865 = vtanh.pop %v2863
    %v2866 = vmul.f32 %v2849, %v2864
    %v2867 = vmul.f32 %v2855, %v2865
    %v2868 = vpack.c.bf16 %v2867, %v2866
    %2869 = vmatprep.subr.bf16.mxu0 %v1313
    %2870 = vmatpush1.bf16.msra.mxu0 %v1312
    %2871 = vmatprep.subr.bf16.mxu0 %v1305
    %2872 = vmatpush1.bf16.msra.mxu0 %v1304
    %2873 = vmatprep.subr.bf16.mxu0 %v1297
    %2874 = vmatpush1.bf16.msra.mxu0 %v1296
    %2875 = vmatprep.subr.bf16.mxu0 %v1289
    %2876 = vmatpush1.bf16.msra.mxu0 %v1288
    %2877 = vmatprep.subr.bf16.mxu0 %v1281
    %2878 = vmatpush1.bf16.msra.mxu0 %v1280
    %2879 = vmatprep.subr.bf16.mxu0 %v1273
    %2880 = vmatpush1.bf16.msra.mxu0 %v1272
    %2881 = vmatprep.subr.bf16.mxu0 %v1265
    %2882 = vmatpush1.bf16.msra.mxu0 %v1264
    %2883 = vmatprep.subr.bf16.mxu0 %v1257
    %2884 = vmatpush1.bf16.msra.mxu0 %v1256
    %2885 = vmatprep.subr.bf16.mxu0 0
    %2886 = vmatpush2.bf16.msra.mxu0 0
    %2887 = vmatprep.subr.bf16.mxu0 0
    %2888 = vmatpush2.bf16.msra.mxu0 0
    %2889 = vmatprep.subr.bf16.mxu0 0
    %2890 = vmatpush2.bf16.msra.mxu0 0
    %2891 = vmatprep.subr.bf16.mxu0 0
    %2892 = vmatpush2.bf16.msra.mxu0 0
    %2893 = vmatprep.subr.bf16.mxu0 0
    %2894 = vmatpush2.bf16.msra.mxu0 0
    %2895 = vmatprep.subr.bf16.mxu0 0
    %2896 = vmatpush2.bf16.msra.mxu0 0
    %2897 = vmatprep.subr.bf16.mxu0 0
    %2898 = vmatpush2.bf16.msra.mxu0 0
    %2899 = vmatprep.subr.bf16.mxu0 0
    %2900 = vmatpush2.bf16.msra.mxu0 0
    %2901 = vmatprep.mubr.bf16.mxu0 0
    %2902 = vmatmul.mubr.bf16.gmra.mxu0 %v2868
    %v2903 = vpop.f32.mrf.mxu0
    %v2904 = vadd.f32 0.0, %v2903
    %v2905 = vpop.f32.mrf.mxu0
    %v2906 = vadd.f32 0.0, %v2905
    %v2907 = vpop.f32.mrf.mxu0
    %v2908 = vadd.f32 0.0, %v2907
    %v2909 = vpop.f32.mrf.mxu0
    %v2910 = vadd.f32 0.0, %v2909
    %2911 = vdwg.mxu0
    %2912 = vmatprep.subr.bf16.mxu0 %v1315
    %2913 = vmatpush1.bf16.msra.mxu0 %v1314
    %2914 = vmatprep.subr.bf16.mxu0 %v1307
    %2915 = vmatpush1.bf16.msra.mxu0 %v1306
    %2916 = vmatprep.subr.bf16.mxu0 %v1299
    %2917 = vmatpush1.bf16.msra.mxu0 %v1298
    %2918 = vmatprep.subr.bf16.mxu0 %v1291
    %2919 = vmatpush1.bf16.msra.mxu0 %v1290
    %2920 = vmatprep.subr.bf16.mxu0 %v1283
    %2921 = vmatpush1.bf16.msra.mxu0 %v1282
    %2922 = vmatprep.subr.bf16.mxu0 %v1275
    %2923 = vmatpush1.bf16.msra.mxu0 %v1274
    %2924 = vmatprep.subr.bf16.mxu0 %v1267
    %2925 = vmatpush1.bf16.msra.mxu0 %v1266
    %2926 = vmatprep.subr.bf16.mxu0 %v1259
    %2927 = vmatpush1.bf16.msra.mxu0 %v1258
    %2928 = vmatprep.subr.bf16.mxu0 0
    %2929 = vmatpush2.bf16.msra.mxu0 0
    %2930 = vmatprep.subr.bf16.mxu0 0
    %2931 = vmatpush2.bf16.msra.mxu0 0
    %2932 = vmatprep.subr.bf16.mxu0 0
    %2933 = vmatpush2.bf16.msra.mxu0 0
    %2934 = vmatprep.subr.bf16.mxu0 0
    %2935 = vmatpush2.bf16.msra.mxu0 0
    %2936 = vmatprep.subr.bf16.mxu0 0
    %2937 = vmatpush2.bf16.msra.mxu0 0
    %2938 = vmatprep.subr.bf16.mxu0 0
    %2939 = vmatpush2.bf16.msra.mxu0 0
    %2940 = vmatprep.subr.bf16.mxu0 0
    %2941 = vmatpush2.bf16.msra.mxu0 0
    %2942 = vmatprep.subr.bf16.mxu0 0
    %2943 = vmatpush2.bf16.msra.mxu0 0
    %2944 = vmatprep.mubr.bf16.mxu0 0
    %2945 = vmatmul.mubr.bf16.gmra.mxu0 %v2868
    %v2946 = vpop.f32.mrf.mxu0
    %v2947 = vadd.f32 0.0, %v2946
    %v2948 = vpop.f32.mrf.mxu0
    %v2949 = vadd.f32 0.0, %v2948
    %v2950 = vpop.f32.mrf.mxu0
    %v2951 = vadd.f32 0.0, %v2950
    %v2952 = vpop.f32.mrf.mxu0
    %v2953 = vadd.f32 0.0, %v2952
    %2954 = vdwg.mxu0
    %2955 = vmatprep.subr.bf16.mxu0 %v1317
    %2956 = vmatpush1.bf16.msra.mxu0 %v1316
    %2957 = vmatprep.subr.bf16.mxu0 %v1309
    %2958 = vmatpush1.bf16.msra.mxu0 %v1308
    %2959 = vmatprep.subr.bf16.mxu0 %v1301
    %2960 = vmatpush1.bf16.msra.mxu0 %v1300
    %2961 = vmatprep.subr.bf16.mxu0 %v1293
    %2962 = vmatpush1.bf16.msra.mxu0 %v1292
    %2963 = vmatprep.subr.bf16.mxu0 %v1285
    %2964 = vmatpush1.bf16.msra.mxu0 %v1284
    %2965 = vmatprep.subr.bf16.mxu0 %v1277
    %2966 = vmatpush1.bf16.msra.mxu0 %v1276
    %2967 = vmatprep.subr.bf16.mxu0 %v1269
    %2968 = vmatpush1.bf16.msra.mxu0 %v1268
    %2969 = vmatprep.subr.bf16.mxu0 %v1261
    %2970 = vmatpush1.bf16.msra.mxu0 %v1260
    %2971 = vmatprep.subr.bf16.mxu0 0
    %2972 = vmatpush2.bf16.msra.mxu0 0
    %2973 = vmatprep.subr.bf16.mxu0 0
    %2974 = vmatpush2.bf16.msra.mxu0 0
    %2975 = vmatprep.subr.bf16.mxu0 0
    %2976 = vmatpush2.bf16.msra.mxu0 0
    %2977 = vmatprep.subr.bf16.mxu0 0
    %2978 = vmatpush2.bf16.msra.mxu0 0
    %2979 = vmatprep.subr.bf16.mxu0 0
    %2980 = vmatpush2.bf16.msra.mxu0 0
    %2981 = vmatprep.subr.bf16.mxu0 0
    %2982 = vmatpush2.bf16.msra.mxu0 0
    %2983 = vmatprep.subr.bf16.mxu0 0
    %2984 = vmatpush2.bf16.msra.mxu0 0
    %2985 = vmatprep.subr.bf16.mxu0 0
    %2986 = vmatpush2.bf16.msra.mxu0 0
    %2987 = vmatprep.mubr.bf16.mxu0 0
    %2988 = vmatmul.mubr.bf16.gmra.mxu0 %v2868
    %v2989 = vpop.f32.mrf.mxu0
    %v2990 = vadd.f32 0.0, %v2989
    %v2991 = vpop.f32.mrf.mxu0
    %v2992 = vadd.f32 0.0, %v2991
    %v2993 = vpop.f32.mrf.mxu0
    %v2994 = vadd.f32 0.0, %v2993
    %v2995 = vpop.f32.mrf.mxu0
    %v2996 = vadd.f32 0.0, %v2995
    %2997 = vdwg.mxu0
    %2998 = vmatprep.subr.bf16.mxu0 %v1319
    %2999 = vmatpush1.bf16.msra.mxu0 %v1318
    %3000 = vmatprep.subr.bf16.mxu0 %v1311
    %3001 = vmatpush1.bf16.msra.mxu0 %v1310
    %3002 = vmatprep.subr.bf16.mxu0 %v1303
    %3003 = vmatpush1.bf16.msra.mxu0 %v1302
    %3004 = vmatprep.subr.bf16.mxu0 %v1295
    %3005 = vmatpush1.bf16.msra.mxu0 %v1294
    %3006 = vmatprep.subr.bf16.mxu0 %v1287
    %3007 = vmatpush1.bf16.msra.mxu0 %v1286
    %3008 = vmatprep.subr.bf16.mxu0 %v1279
    %3009 = vmatpush1.bf16.msra.mxu0 %v1278
    %3010 = vmatprep.subr.bf16.mxu0 %v1271
    %3011 = vmatpush1.bf16.msra.mxu0 %v1270
    %3012 = vmatprep.subr.bf16.mxu0 %v1263
    %3013 = vmatpush1.bf16.msra.mxu0 %v1262
    %3014 = vmatprep.subr.bf16.mxu0 0
    %3015 = vmatpush2.bf16.msra.mxu0 0
    %3016 = vmatprep.subr.bf16.mxu0 0
    %3017 = vmatpush2.bf16.msra.mxu0 0
    %3018 = vmatprep.subr.bf16.mxu0 0
    %3019 = vmatpush2.bf16.msra.mxu0 0
    %3020 = vmatprep.subr.bf16.mxu0 0
    %3021 = vmatpush2.bf16.msra.mxu0 0
    %3022 = vmatprep.subr.bf16.mxu0 0
    %3023 = vmatpush2.bf16.msra.mxu0 0
    %3024 = vmatprep.subr.bf16.mxu0 0
    %3025 = vmatpush2.bf16.msra.mxu0 0
    %3026 = vmatprep.subr.bf16.mxu0 0
    %3027 = vmatpush2.bf16.msra.mxu0 0
    %3028 = vmatprep.subr.bf16.mxu0 0
    %3029 = vmatpush2.bf16.msra.mxu0 0
    %3030 = vmatprep.mubr.bf16.mxu0 0
    %3031 = vmatmul.mubr.bf16.gmra.mxu0 %v2868
    %v3032 = vpop.f32.mrf.mxu0
    %v3033 = vadd.f32 0.0, %v3032
    %v3034 = vpop.f32.mrf.mxu0
    %v3035 = vadd.f32 0.0, %v3034
    %v3036 = vpop.f32.mrf.mxu0
    %v3037 = vadd.f32 0.0, %v3036
    %v3038 = vpop.f32.mrf.mxu0
    %v3039 = vadd.f32 0.0, %v3038
    %3040 = vdwg.mxu0
    %s3041 = scalar_lea.vmem [#allocation2], 192
    %v3042 = vld [vmem:[%s3041] sm:$0xff]
    %v3043 = vld [vmem:[%s3041 + $0x8] sm:$0xff]
    %v3044 = vld [vmem:[%s3041 + $0x10] sm:$0xff]
    %v3045 = vld [vmem:[%s3041 + $0x18] sm:$0xff]
    %s3046 = scalar_lea.vmem [#allocation3], 32
    %v3047 = vld [vmem:[%s3046] sm:$0xff]
    %v3048 = vld [vmem:[%s3046 + $0x8] sm:$0xff]
    %v3049 = vld [vmem:[%s3046 + $0x10] sm:$0xff]
    %v3050 = vld [vmem:[%s3046 + $0x18] sm:$0xff]
    %v3051 = vsel %vm1567, %v2904, %v2990
    %v3052 = vsel %vm1567, %v2906, %v2992
    %v3053 = vsel %vm1567, %v2947, %v3033
    %v3054 = vsel %vm1567, %v2949, %v3035
    %v3055 = vsel %vm1568, %v2908, %v2994
    %v3056 = vsel %vm1568, %v2910, %v2996
    %v3057 = vsel %vm1568, %v2951, %v3037
    %v3058 = vsel %vm1568, %v2953, %v3039
    %v3059 = vadd.f32 %v3042, %v3051
    %v3060 = vadd.f32 %v3043, %v3052
    %v3061 = vadd.f32 %v3044, %v3053
    %v3062 = vadd.f32 %v3045, %v3054
    %v3063 = vadd.f32 %v3047, %v3055
    %v3064 = vadd.f32 %v3048, %v3056
    %v3065 = vadd.f32 %v3049, %v3057
    %v3066 = vadd.f32 %v3050, %v3058
    %v3067 = vxor.u32 %v3059, 2147483648
    %v3068 = vxor.u32 %v3060, 2147483648
    %v3069 = vxor.u32 %v3061, 2147483648
    %v3070 = vxor.u32 %v3063, 2147483648
    %v3071 = vxor.u32 %v3064, 2147483648
    %v3072 = vxor.u32 %v3065, 2147483648
    %v3073 = vmul.f32 %v3067, 1.442695
    %v3074 = vpow.pop %v3073
    %v3075 = vmul.f32 %v3068, 1.442695
    %v3076 = vpow.pop %v3075
    %v3077 = vmul.f32 %v3069, 1.442695
    %v3078 = vpow.pop %v3077
    %v3079 = vmul.f32 %v3070, 1.442695
    %v3080 = vpow.pop %v3079
    %v3081 = vmul.f32 %v3071, 1.442695
    %v3082 = vpow.pop %v3081
    %v3083 = vmul.f32 %v3072, 1.442695
    %v3084 = vpow.pop %v3083
    %v3085 = vadd.f32 %v3074, 1.0
    %v3086 = vadd.f32 %v3076, 1.0
    %v3087 = vadd.f32 %v3078, 1.0
    %v3088 = vadd.f32 %v3080, 1.0
    %v3089 = vadd.f32 %v3082, 1.0
    %v3090 = vadd.f32 %v3084, 1.0
    %v3091 = vrcp.pop %v3085
    %v3092 = vmul.f32 1.0, %v3091
    %v3093 = vrcp.pop %v3086
    %v3094 = vmul.f32 1.0, %v3093
    %v3095 = vrcp.pop %v3087
    %v3096 = vmul.f32 1.0, %v3095
    %v3097 = vrcp.pop %v3088
    %v3098 = vmul.f32 1.0, %v3097
    %v3099 = vrcp.pop %v3089
    %v3100 = vmul.f32 1.0, %v3099
    %v3101 = vrcp.pop %v3090
    %v3102 = vmul.f32 1.0, %v3101
    %v3103 = vtanh.pop %v3062
    %v3104 = vtanh.pop %v3066
    %v3105 = vmul.f32 %v3094, %v2862
    %v3106 = vmul.f32 %v3100, %v2863
    %v3107 = vmul.f32 %v3092, %v3103
    %v3108 = vmul.f32 %v3098, %v3104
    %v3109 = vadd.f32 %v3105, %v3107
    %v3110 = vadd.f32 %v3106, %v3108
    %v3111 = vtanh.pop %v3109
    %v3112 = vtanh.pop %v3110
    %v3113 = vmul.f32 %v3096, %v3111
    %v3114 = vmul.f32 %v3102, %v3112
    %v3115 = vpack.c.bf16 %v3114, %v3113
    %3116 = vmatprep.subr.bf16.mxu0 %v1313
    %3117 = vmatpush1.bf16.msra.mxu0 %v1312
    %3118 = vmatprep.subr.bf16.mxu0 %v1305
    %3119 = vmatpush1.bf16.msra.mxu0 %v1304
    %3120 = vmatprep.subr.bf16.mxu0 %v1297
    %3121 = vmatpush1.bf16.msra.mxu0 %v1296
    %3122 = vmatprep.subr.bf16.mxu0 %v1289
    %3123 = vmatpush1.bf16.msra.mxu0 %v1288
    %3124 = vmatprep.subr.bf16.mxu0 %v1281
    %3125 = vmatpush1.bf16.msra.mxu0 %v1280
    %3126 = vmatprep.subr.bf16.mxu0 %v1273
    %3127 = vmatpush1.bf16.msra.mxu0 %v1272
    %3128 = vmatprep.subr.bf16.mxu0 %v1265
    %3129 = vmatpush1.bf16.msra.mxu0 %v1264
    %3130 = vmatprep.subr.bf16.mxu0 %v1257
    %3131 = vmatpush1.bf16.msra.mxu0 %v1256
    %3132 = vmatprep.subr.bf16.mxu0 0
    %3133 = vmatpush2.bf16.msra.mxu0 0
    %3134 = vmatprep.subr.bf16.mxu0 0
    %3135 = vmatpush2.bf16.msra.mxu0 0
    %3136 = vmatprep.subr.bf16.mxu0 0
    %3137 = vmatpush2.bf16.msra.mxu0 0
    %3138 = vmatprep.subr.bf16.mxu0 0
    %3139 = vmatpush2.bf16.msra.mxu0 0
    %3140 = vmatprep.subr.bf16.mxu0 0
    %3141 = vmatpush2.bf16.msra.mxu0 0
    %3142 = vmatprep.subr.bf16.mxu0 0
    %3143 = vmatpush2.bf16.msra.mxu0 0
    %3144 = vmatprep.subr.bf16.mxu0 0
    %3145 = vmatpush2.bf16.msra.mxu0 0
    %3146 = vmatprep.subr.bf16.mxu0 0
    %3147 = vmatpush2.bf16.msra.mxu0 0
    %3148 = vmatprep.mubr.bf16.mxu0 0
    %3149 = vmatmul.mubr.bf16.gmra.mxu0 %v3115
    %v3150 = vpop.f32.mrf.mxu0
    %v3151 = vadd.f32 0.0, %v3150
    %v3152 = vpop.f32.mrf.mxu0
    %v3153 = vadd.f32 0.0, %v3152
    %v3154 = vpop.f32.mrf.mxu0
    %v3155 = vadd.f32 0.0, %v3154
    %v3156 = vpop.f32.mrf.mxu0
    %v3157 = vadd.f32 0.0, %v3156
    %3158 = vdwg.mxu0
    %3159 = vmatprep.subr.bf16.mxu0 %v1315
    %3160 = vmatpush1.bf16.msra.mxu0 %v1314
    %3161 = vmatprep.subr.bf16.mxu0 %v1307
    %3162 = vmatpush1.bf16.msra.mxu0 %v1306
    %3163 = vmatprep.subr.bf16.mxu0 %v1299
    %3164 = vmatpush1.bf16.msra.mxu0 %v1298
    %3165 = vmatprep.subr.bf16.mxu0 %v1291
    %3166 = vmatpush1.bf16.msra.mxu0 %v1290
    %3167 = vmatprep.subr.bf16.mxu0 %v1283
    %3168 = vmatpush1.bf16.msra.mxu0 %v1282
    %3169 = vmatprep.subr.bf16.mxu0 %v1275
    %3170 = vmatpush1.bf16.msra.mxu0 %v1274
    %3171 = vmatprep.subr.bf16.mxu0 %v1267
    %3172 = vmatpush1.bf16.msra.mxu0 %v1266
    %3173 = vmatprep.subr.bf16.mxu0 %v1259
    %3174 = vmatpush1.bf16.msra.mxu0 %v1258
    %3175 = vmatprep.subr.bf16.mxu0 0
    %3176 = vmatpush2.bf16.msra.mxu0 0
    %3177 = vmatprep.subr.bf16.mxu0 0
    %3178 = vmatpush2.bf16.msra.mxu0 0
    %3179 = vmatprep.subr.bf16.mxu0 0
    %3180 = vmatpush2.bf16.msra.mxu0 0
    %3181 = vmatprep.subr.bf16.mxu0 0
    %3182 = vmatpush2.bf16.msra.mxu0 0
    %3183 = vmatprep.subr.bf16.mxu0 0
    %3184 = vmatpush2.bf16.msra.mxu0 0
    %3185 = vmatprep.subr.bf16.mxu0 0
    %3186 = vmatpush2.bf16.msra.mxu0 0
    %3187 = vmatprep.subr.bf16.mxu0 0
    %3188 = vmatpush2.bf16.msra.mxu0 0
    %3189 = vmatprep.subr.bf16.mxu0 0
    %3190 = vmatpush2.bf16.msra.mxu0 0
    %3191 = vmatprep.mubr.bf16.mxu0 0
    %3192 = vmatmul.mubr.bf16.gmra.mxu0 %v3115
    %v3193 = vpop.f32.mrf.mxu0
    %v3194 = vadd.f32 0.0, %v3193
    %v3195 = vpop.f32.mrf.mxu0
    %v3196 = vadd.f32 0.0, %v3195
    %v3197 = vpop.f32.mrf.mxu0
    %v3198 = vadd.f32 0.0, %v3197
    %v3199 = vpop.f32.mrf.mxu0
    %v3200 = vadd.f32 0.0, %v3199
    %3201 = vdwg.mxu0
    %3202 = vmatprep.subr.bf16.mxu0 %v1317
    %3203 = vmatpush1.bf16.msra.mxu0 %v1316
    %3204 = vmatprep.subr.bf16.mxu0 %v1309
    %3205 = vmatpush1.bf16.msra.mxu0 %v1308
    %3206 = vmatprep.subr.bf16.mxu0 %v1301
    %3207 = vmatpush1.bf16.msra.mxu0 %v1300
    %3208 = vmatprep.subr.bf16.mxu0 %v1293
    %3209 = vmatpush1.bf16.msra.mxu0 %v1292
    %3210 = vmatprep.subr.bf16.mxu0 %v1285
    %3211 = vmatpush1.bf16.msra.mxu0 %v1284
    %3212 = vmatprep.subr.bf16.mxu0 %v1277
    %3213 = vmatpush1.bf16.msra.mxu0 %v1276
    %3214 = vmatprep.subr.bf16.mxu0 %v1269
    %3215 = vmatpush1.bf16.msra.mxu0 %v1268
    %3216 = vmatprep.subr.bf16.mxu0 %v1261
    %3217 = vmatpush1.bf16.msra.mxu0 %v1260
    %3218 = vmatprep.subr.bf16.mxu0 0
    %3219 = vmatpush2.bf16.msra.mxu0 0
    %3220 = vmatprep.subr.bf16.mxu0 0
    %3221 = vmatpush2.bf16.msra.mxu0 0
    %3222 = vmatprep.subr.bf16.mxu0 0
    %3223 = vmatpush2.bf16.msra.mxu0 0
    %3224 = vmatprep.subr.bf16.mxu0 0
    %3225 = vmatpush2.bf16.msra.mxu0 0
    %3226 = vmatprep.subr.bf16.mxu0 0
    %3227 = vmatpush2.bf16.msra.mxu0 0
    %3228 = vmatprep.subr.bf16.mxu0 0
    %3229 = vmatpush2.bf16.msra.mxu0 0
    %3230 = vmatprep.subr.bf16.mxu0 0
    %3231 = vmatpush2.bf16.msra.mxu0 0
    %3232 = vmatprep.subr.bf16.mxu0 0
    %3233 = vmatpush2.bf16.msra.mxu0 0
    %3234 = vmatprep.mubr.bf16.mxu0 0
    %3235 = vmatmul.mubr.bf16.gmra.mxu0 %v3115
    %v3236 = vpop.f32.mrf.mxu0
    %v3237 = vadd.f32 0.0, %v3236
    %v3238 = vpop.f32.mrf.mxu0
    %v3239 = vadd.f32 0.0, %v3238
    %v3240 = vpop.f32.mrf.mxu0
    %v3241 = vadd.f32 0.0, %v3240
    %v3242 = vpop.f32.mrf.mxu0
    %v3243 = vadd.f32 0.0, %v3242
    %3244 = vdwg.mxu0
    %3245 = vmatprep.subr.bf16.mxu0 %v1319
    %3246 = vmatpush1.bf16.msra.mxu0 %v1318
    %3247 = vmatprep.subr.bf16.mxu0 %v1311
    %3248 = vmatpush1.bf16.msra.mxu0 %v1310
    %3249 = vmatprep.subr.bf16.mxu0 %v1303
    %3250 = vmatpush1.bf16.msra.mxu0 %v1302
    %3251 = vmatprep.subr.bf16.mxu0 %v1295
    %3252 = vmatpush1.bf16.msra.mxu0 %v1294
    %3253 = vmatprep.subr.bf16.mxu0 %v1287
    %3254 = vmatpush1.bf16.msra.mxu0 %v1286
    %3255 = vmatprep.subr.bf16.mxu0 %v1279
    %3256 = vmatpush1.bf16.msra.mxu0 %v1278
    %3257 = vmatprep.subr.bf16.mxu0 %v1271
    %3258 = vmatpush1.bf16.msra.mxu0 %v1270
    %3259 = vmatprep.subr.bf16.mxu0 %v1263
    %3260 = vmatpush1.bf16.msra.mxu0 %v1262
    %3261 = vmatprep.subr.bf16.mxu0 0
    %3262 = vmatpush2.bf16.msra.mxu0 0
    %3263 = vmatprep.subr.bf16.mxu0 0
    %3264 = vmatpush2.bf16.msra.mxu0 0
    %3265 = vmatprep.subr.bf16.mxu0 0
    %3266 = vmatpush2.bf16.msra.mxu0 0
    %3267 = vmatprep.subr.bf16.mxu0 0
    %3268 = vmatpush2.bf16.msra.mxu0 0
    %3269 = vmatprep.subr.bf16.mxu0 0
    %3270 = vmatpush2.bf16.msra.mxu0 0
    %3271 = vmatprep.subr.bf16.mxu0 0
    %3272 = vmatpush2.bf16.msra.mxu0 0
    %3273 = vmatprep.subr.bf16.mxu0 0
    %3274 = vmatpush2.bf16.msra.mxu0 0
    %3275 = vmatprep.subr.bf16.mxu0 0
    %3276 = vmatpush2.bf16.msra.mxu0 0
    %3277 = vmatprep.mubr.bf16.mxu0 0
    %3278 = vmatmul.mubr.bf16.gmra.mxu0 %v3115
    %v3279 = vpop.f32.mrf.mxu0
    %v3280 = vadd.f32 0.0, %v3279
    %v3281 = vpop.f32.mrf.mxu0
    %v3282 = vadd.f32 0.0, %v3281
    %v3283 = vpop.f32.mrf.mxu0
    %v3284 = vadd.f32 0.0, %v3283
    %v3285 = vpop.f32.mrf.mxu0
    %v3286 = vadd.f32 0.0, %v3285
    %3287 = vdwg.mxu0
    %s3288 = scalar_lea.vmem [#allocation2], 224
    %v3289 = vld [vmem:[%s3288] sm:$0xff]
    %v3290 = vld [vmem:[%s3288 + $0x8] sm:$0xff]
    %v3291 = vld [vmem:[%s3288 + $0x10] sm:$0xff]
    %v3292 = vld [vmem:[%s3288 + $0x18] sm:$0xff]
    %v3293 = vld [vmem:[#allocation3] sm:$0xff]
    %v3294 = vld [vmem:[#allocation3 + $0x8] sm:$0xff]
    %v3295 = vld [vmem:[#allocation3 + $0x10] sm:$0xff]
    %v3296 = vld [vmem:[#allocation3 + $0x18] sm:$0xff]
    %v3297 = vsel %vm1567, %v3151, %v3237
    %v3298 = vsel %vm1567, %v3153, %v3239
    %v3299 = vsel %vm1567, %v3194, %v3280
    %v3300 = vsel %vm1567, %v3196, %v3282
    %v3301 = vsel %vm1568, %v3155, %v3241
    %v3302 = vsel %vm1568, %v3157, %v3243
    %v3303 = vsel %vm1568, %v3198, %v3284
    %v3304 = vsel %vm1568, %v3200, %v3286
    %v3305 = vadd.f32 %v3289, %v3297
    %v3306 = vadd.f32 %v3290, %v3298
    %v3307 = vadd.f32 %v3291, %v3299
    %v3308 = vadd.f32 %v3292, %v3300
    %v3309 = vadd.f32 %v3293, %v3301
    %v3310 = vadd.f32 %v3294, %v3302
    %v3311 = vadd.f32 %v3295, %v3303
    %v3312 = vadd.f32 %v3296, %v3304
    %v3313 = vxor.u32 %v3305, 2147483648
    %v3314 = vxor.u32 %v3306, 2147483648
    %v3315 = vxor.u32 %v3307, 2147483648
    %v3316 = vxor.u32 %v3309, 2147483648
    %v3317 = vxor.u32 %v3310, 2147483648
    %v3318 = vxor.u32 %v3311, 2147483648
    %v3319 = vmul.f32 %v3313, 1.442695
    %v3320 = vpow.pop %v3319
    %v3321 = vmul.f32 %v3314, 1.442695
    %v3322 = vpow.pop %v3321
    %v3323 = vmul.f32 %v3315, 1.442695
    %v3324 = vpow.pop %v3323
    %v3325 = vmul.f32 %v3316, 1.442695
    %v3326 = vpow.pop %v3325
    %v3327 = vmul.f32 %v3317, 1.442695
    %v3328 = vpow.pop %v3327
    %v3329 = vmul.f32 %v3318, 1.442695
    %v3330 = vpow.pop %v3329
    %v3331 = vadd.f32 %v3320, 1.0
    %v3332 = vadd.f32 %v3322, 1.0
    %v3333 = vadd.f32 %v3324, 1.0
    %v3334 = vadd.f32 %v3326, 1.0
    %v3335 = vadd.f32 %v3328, 1.0
    %v3336 = vadd.f32 %v3330, 1.0
    %v3337 = vrcp.pop %v3331
    %v3338 = vmul.f32 1.0, %v3337
    %v3339 = vrcp.pop %v3332
    %v3340 = vmul.f32 1.0, %v3339
    %v3341 = vrcp.pop %v3333
    %v3342 = vmul.f32 1.0, %v3341
    %v3343 = vrcp.pop %v3334
    %v3344 = vmul.f32 1.0, %v3343
    %v3345 = vrcp.pop %v3335
    %v3346 = vmul.f32 1.0, %v3345
    %v3347 = vrcp.pop %v3336
    %v3348 = vmul.f32 1.0, %v3347
    %v3349 = vtanh.pop %v3308
    %v3350 = vtanh.pop %v3312
    %v3351 = vmul.f32 %v3340, %v3109
    %v3352 = vmul.f32 %v3346, %v3110
    %v3353 = vmul.f32 %v3338, %v3349
    %v3354 = vmul.f32 %v3344, %v3350
    %v3355 = vadd.f32 %v3351, %v3353
    %v3356 = vadd.f32 %v3352, %v3354
    %v3357 = vtanh.pop %v3355
    %v3358 = vtanh.pop %v3356
    %v3359 = vmul.f32 %v3342, %v3357
    %v3360 = vmul.f32 %v3348, %v3358
    %3361 = vst [vmem:[#allocation4] sm:$0xff] %v3359
    %3362 = vst [vmem:[#allocation4 + $0x8] sm:$0xff] %v3360
    %3363 = vst [vmem:[#allocation5] sm:$0xff] %v3355
    %3364 = vst [vmem:[#allocation5 + $0x8] sm:$0xff] %v3356
    // Predicated region
    $region70: #{tpu_custom_call.1} parent=1 // pred_check
      %p3365 = pneg %p133
    $region71: #{tpu_custom_call.1} parent=1 // pred_check_branch
      %3367 = sbr.rel (%p3365) target = $region73
    $region72: #{tpu_custom_call.1} parent=1 // pred_region
      %v3368 = vpack.c.bf16 %v3359, %v3359
      %v3369 = vpack.c.bf16 %v3360, %v3360
      %v3370 = vld [vmem:[#allocation15] sm:$0xf]
      %v3371 = vld [vmem:[#allocation15 + $0x4] sm:$0xf]
      %v3372 = vld [vmem:[#allocation15 + $0x8] sm:$0xf]
      %v3373 = vld [vmem:[#allocation15 + $0xc] sm:$0xf]
      %v3374 = vld [vmem:[#allocation15 + $0x10] sm:$0xf]
      %v3375 = vld [vmem:[#allocation15 + $0x14] sm:$0xf]
      %v3376 = vld [vmem:[#allocation15 + $0x18] sm:$0xf]
      %v3377 = vld [vmem:[#allocation15 + $0x1c] sm:$0xf]
      %v3378 = vld [vmem:[#allocation15 + $0x20] sm:$0xf]
      %v3379 = vld [vmem:[#allocation15 + $0x24] sm:$0xf]
      %v3380 = vld [vmem:[#allocation15 + $0x28] sm:$0xf]
      %v3381 = vld [vmem:[#allocation15 + $0x2c] sm:$0xf]
      %v3382 = vld [vmem:[#allocation15 + $0x30] sm:$0xf]
      %v3383 = vld [vmem:[#allocation15 + $0x34] sm:$0xf]
      %v3384 = vld [vmem:[#allocation15 + $0x38] sm:$0xf]
      %v3385 = vld [vmem:[#allocation15 + $0x3c] sm:$0xf]
      %v3386 = vld [vmem:[#allocation15 + $0x40] sm:$0xf]
      %v3387 = vld [vmem:[#allocation15 + $0x44] sm:$0xf]
      %v3388 = vld [vmem:[#allocation15 + $0x48] sm:$0xf]
      %v3389 = vld [vmem:[#allocation15 + $0x4c] sm:$0xf]
      %v3390 = vld [vmem:[#allocation15 + $0x50] sm:$0xf]
      %v3391 = vld [vmem:[#allocation15 + $0x54] sm:$0xf]
      %v3392 = vld [vmem:[#allocation15 + $0x58] sm:$0xf]
      %v3393 = vld [vmem:[#allocation15 + $0x5c] sm:$0xf]
      %v3394 = vld [vmem:[#allocation15 + $0x60] sm:$0xf]
      %v3395 = vld [vmem:[#allocation15 + $0x64] sm:$0xf]
      %v3396 = vld [vmem:[#allocation15 + $0x68] sm:$0xf]
      %v3397 = vld [vmem:[#allocation15 + $0x6c] sm:$0xf]
      %v3398 = vld [vmem:[#allocation15 + $0x70] sm:$0xf]
      %v3399 = vld [vmem:[#allocation15 + $0x74] sm:$0xf]
      %v3400 = vld [vmem:[#allocation15 + $0x78] sm:$0xf]
      %v3401 = vld [vmem:[#allocation15 + $0x7c] sm:$0xf]
      %v3402 = vld [vmem:[%s6] sm:$0x1]
      %v3404 = vlaneseq
      %v3405 = vshrl.u32 %v3404, 7
      %v3406 = vsub.s32 0, %v3405
      %v3407 = vrot.slane %v3402, %v3406
      %v3441 = vunpack.c.l.b16 %v3370
      %v3442 = vunpack.c.l.b16 %v3371
      %v3443 = vunpack.c.l.b16 %v3372
      %v3444 = vunpack.c.l.b16 %v3373
      %v3445 = vunpack.c.l.b16 %v3374
      %v3446 = vunpack.c.l.b16 %v3375
      %v3447 = vunpack.c.l.b16 %v3376
      %v3448 = vunpack.c.l.b16 %v3377
      %v3449 = vunpack.c.l.b16 %v3378
      %v3450 = vunpack.c.l.b16 %v3379
      %v3451 = vunpack.c.l.b16 %v3380
      %v3452 = vunpack.c.l.b16 %v3381
      %v3453 = vunpack.c.l.b16 %v3382
      %v3454 = vunpack.c.l.b16 %v3383
      %v3455 = vunpack.c.l.b16 %v3384
      %v3456 = vunpack.c.l.b16 %v3385
      %v3457 = vunpack.c.l.b16 %v3386
      %v3458 = vunpack.c.l.b16 %v3387
      %v3459 = vunpack.c.l.b16 %v3388
      %v3460 = vunpack.c.l.b16 %v3389
      %v3461 = vunpack.c.l.b16 %v3390
      %v3462 = vunpack.c.l.b16 %v3391
      %v3463 = vunpack.c.l.b16 %v3392
      %v3464 = vunpack.c.l.b16 %v3393
      %v3465 = vunpack.c.l.b16 %v3394
      %v3466 = vunpack.c.l.b16 %v3395
      %v3467 = vunpack.c.l.b16 %v3396
      %v3468 = vunpack.c.l.b16 %v3397
      %v3469 = vunpack.c.l.b16 %v3398
      %v3470 = vunpack.c.l.b16 %v3399
      %v3471 = vunpack.c.l.b16 %v3400
      %v3472 = vunpack.c.l.b16 %v3401
      %v3473 = vpack.c.b16 %v3442, %v3441
      %v3474 = vpack.c.b16 %v3444, %v3443
      %v3475 = vpack.c.b16 %v3446, %v3445
      %v3476 = vpack.c.b16 %v3448, %v3447
      %v3477 = vpack.c.b16 %v3450, %v3449
      %v3478 = vpack.c.b16 %v3452, %v3451
      %v3479 = vpack.c.b16 %v3454, %v3453
      %v3480 = vpack.c.b16 %v3456, %v3455
      %v3481 = vpack.c.b16 %v3458, %v3457
      %v3482 = vpack.c.b16 %v3460, %v3459
      %v3483 = vpack.c.b16 %v3462, %v3461
      %v3484 = vpack.c.b16 %v3464, %v3463
      %v3485 = vpack.c.b16 %v3466, %v3465
      %v3486 = vpack.c.b16 %v3468, %v3467
      %v3487 = vpack.c.b16 %v3470, %v3469
      %v3488 = vpack.c.b16 %v3472, %v3471
      %3505 = vmatprep.subr.bf16.mxu0 0
      %3506 = vmatpush1.bf16.msra.mxu0 %v3480
      %3507 = vmatprep.subr.bf16.mxu0 0
      %3508 = vmatpush1.bf16.msra.mxu0 %v3479
      %3509 = vmatprep.subr.bf16.mxu0 0
      %3510 = vmatpush1.bf16.msra.mxu0 %v3478
      %3511 = vmatprep.subr.bf16.mxu0 0
      %3512 = vmatpush1.bf16.msra.mxu0 %v3477
      %3513 = vmatprep.subr.bf16.mxu0 0
      %3514 = vmatpush1.bf16.msra.mxu0 %v3476
      %3515 = vmatprep.subr.bf16.mxu0 0
      %3516 = vmatpush1.bf16.msra.mxu0 %v3475
      %3517 = vmatprep.subr.bf16.mxu0 0
      %3518 = vmatpush1.bf16.msra.mxu0 %v3474
      %3519 = vmatprep.subr.bf16.mxu0 0
      %3520 = vmatpush1.bf16.msra.mxu0 %v3473
      %3521 = vmatprep.subr.bf16.mxu0 0
      %3522 = vmatpush2.bf16.msra.mxu0 %v3488
      %3523 = vmatprep.subr.bf16.mxu0 0
      %3524 = vmatpush2.bf16.msra.mxu0 %v3487
      %3525 = vmatprep.subr.bf16.mxu0 0
      %3526 = vmatpush2.bf16.msra.mxu0 %v3486
      %3527 = vmatprep.subr.bf16.mxu0 0
      %3528 = vmatpush2.bf16.msra.mxu0 %v3485
      %3529 = vmatprep.subr.bf16.mxu0 0
      %3530 = vmatpush2.bf16.msra.mxu0 %v3484
      %3531 = vmatprep.subr.bf16.mxu0 0
      %3532 = vmatpush2.bf16.msra.mxu0 %v3483
      %3533 = vmatprep.subr.bf16.mxu0 0
      %3534 = vmatpush2.bf16.msra.mxu0 %v3482
      %3535 = vmatprep.subr.bf16.mxu0 0
      %3536 = vmatpush2.bf16.msra.mxu0 %v3481
      %3537 = vmatprep.mubr.bf16.mxu0 %v3369
      %3538 = vmatmul.mubr.bf16.gmra.mxu0 %v3368
      %v3539 = vpop.f32.mrf.mxu0
      %v3540 = vadd.f32 %v3407, %v3539
      %v3541 = vpop.f32.mrf.mxu0
      %v3542 = vpop.f32.mrf.mxu0
      %v3543 = vpop.f32.mrf.mxu0
      %3544 = vdwg.mxu0
      %v3545 = vtanh.pop %v3540
      %v3546 = vpack.c.bf16 %v3545, %v3545
      %v3547 = vld [vmem:[#allocation17] sm:$0xf]
      %v3548 = vld [vmem:[#allocation17 + $0x4] sm:$0xf]
      %v3549 = vld [vmem:[#allocation17 + $0x8] sm:$0xf]
      %v3550 = vld [vmem:[#allocation17 + $0xc] sm:$0xf]
      %v3551 = vld [vmem:[#allocation17 + $0x10] sm:$0xf]
      %v3552 = vld [vmem:[#allocation17 + $0x14] sm:$0xf]
      %v3553 = vld [vmem:[#allocation17 + $0x18] sm:$0xf]
      %v3554 = vld [vmem:[#allocation17 + $0x1c] sm:$0xf]
      %v3555 = vld [vmem:[#allocation17 + $0x20] sm:$0xf]
      %v3556 = vld [vmem:[#allocation17 + $0x24] sm:$0xf]
      %v3557 = vld [vmem:[#allocation17 + $0x28] sm:$0xf]
      %v3558 = vld [vmem:[#allocation17 + $0x2c] sm:$0xf]
      %v3559 = vld [vmem:[#allocation17 + $0x30] sm:$0xf]
      %v3560 = vld [vmem:[#allocation17 + $0x34] sm:$0xf]
      %v3561 = vld [vmem:[#allocation17 + $0x38] sm:$0xf]
      %v3562 = vld [vmem:[#allocation17 + $0x3c] sm:$0xf]
      %v3563 = vld [vmem:[%s8] sm:$0x1]
      %v3565 = vlaneseq
      %v3566 = vshrl.u32 %v3565, 7
      %v3567 = vsub.s32 0, %v3566
      %v3568 = vrot.slane %v3563, %v3567
      %v3586 = vunpack.c.l.b16 %v3547
      %v3587 = vunpack.c.l.b16 %v3548
      %v3588 = vunpack.c.l.b16 %v3549
      %v3589 = vunpack.c.l.b16 %v3550
      %v3590 = vunpack.c.l.b16 %v3551
      %v3591 = vunpack.c.l.b16 %v3552
      %v3592 = vunpack.c.l.b16 %v3553
      %v3593 = vunpack.c.l.b16 %v3554
      %v3594 = vunpack.c.l.b16 %v3555
      %v3595 = vunpack.c.l.b16 %v3556
      %v3596 = vunpack.c.l.b16 %v3557
      %v3597 = vunpack.c.l.b16 %v3558
      %v3598 = vunpack.c.l.b16 %v3559
      %v3599 = vunpack.c.l.b16 %v3560
      %v3600 = vunpack.c.l.b16 %v3561
      %v3601 = vunpack.c.l.b16 %v3562
      %v3602 = vpack.c.b16 %v3587, %v3586
      %v3603 = vpack.c.b16 %v3589, %v3588
      %v3604 = vpack.c.b16 %v3591, %v3590
      %v3605 = vpack.c.b16 %v3593, %v3592
      %v3606 = vpack.c.b16 %v3595, %v3594
      %v3607 = vpack.c.b16 %v3597, %v3596
      %v3608 = vpack.c.b16 %v3599, %v3598
      %v3609 = vpack.c.b16 %v3601, %v3600
      %3618 = vmatprep.subr.bf16.mxu0 0
      %3619 = vmatpush1.bf16.msra.mxu0 %v3609
      %3620 = vmatprep.subr.bf16.mxu0 0
      %3621 = vmatpush1.bf16.msra.mxu0 %v3608
      %3622 = vmatprep.subr.bf16.mxu0 0
      %3623 = vmatpush1.bf16.msra.mxu0 %v3607
      %3624 = vmatprep.subr.bf16.mxu0 0
      %3625 = vmatpush1.bf16.msra.mxu0 %v3606
      %3626 = vmatprep.subr.bf16.mxu0 0
      %3627 = vmatpush1.bf16.msra.mxu0 %v3605
      %3628 = vmatprep.subr.bf16.mxu0 0
      %3629 = vmatpush1.bf16.msra.mxu0 %v3604
      %3630 = vmatprep.subr.bf16.mxu0 0
      %3631 = vmatpush1.bf16.msra.mxu0 %v3603
      %3632 = vmatprep.subr.bf16.mxu0 0
      %3633 = vmatpush1.bf16.msra.mxu0 %v3602
      %3634 = vmatprep.subr.bf16.mxu0 0
      %3635 = vmatpush2.bf16.msra.mxu0 0
      %3636 = vmatprep.subr.bf16.mxu0 0
      %3637 = vmatpush2.bf16.msra.mxu0 0
      %3638 = vmatprep.subr.bf16.mxu0 0
      %3639 = vmatpush2.bf16.msra.mxu0 0
      %3640 = vmatprep.subr.bf16.mxu0 0
      %3641 = vmatpush2.bf16.msra.mxu0 0
      %3642 = vmatprep.subr.bf16.mxu0 0
      %3643 = vmatpush2.bf16.msra.mxu0 0
      %3644 = vmatprep.subr.bf16.mxu0 0
      %3645 = vmatpush2.bf16.msra.mxu0 0
      %3646 = vmatprep.subr.bf16.mxu0 0
      %3647 = vmatpush2.bf16.msra.mxu0 0
      %3648 = vmatprep.subr.bf16.mxu0 0
      %3649 = vmatpush2.bf16.msra.mxu0 0
      %3650 = vmatprep.mubr.bf16.mxu0 0
      %3651 = vmatmul.mubr.bf16.gmra.mxu0 %v3546
      %v3652 = vpop.f32.mrf.mxu0
      %v3653 = vadd.f32 %v3568, %v3652
      %v3654 = vpop.f32.mrf.mxu0
      %v3655 = vpop.f32.mrf.mxu0
      %v3656 = vpop.f32.mrf.mxu0
      %3657 = vdwg.mxu0
      %3658 = vst [vmem:[#allocation18] sm:$0xff] %v3653
    $region73: #{tpu_custom_call.1} parent=1 // pred_fallthru
      _
    // Predicated region
    $region74: #{tpu_custom_call.1} parent=1 // pred_check
      _
    $region75: #{tpu_custom_call.1} parent=1 // pred_check_branch
      %3660 = sbr.rel (0) target = $region77
    $region76: #{tpu_custom_call.1} parent=1 // pred_region
      %s3662 = ssub.s32 128, 128
      %3663 = vsyncadd [#allocation8], %s3662
      %s3665 = sshll.u32 [#allocation18], 4
      %s3666 = int_to_ptr.vmem [resolvable:$true] %s3665
      %3668 = dma.vmem_to_hbm [thread:$0]  %s3666, 128, %s9, [#allocation8]
    $region77: #{tpu_custom_call.1} parent=1 // pred_fallthru
      _
    // Predicated region
    $region78: #{tpu_custom_call.1} parent=1 // pred_check
      _
    $region79: #{tpu_custom_call.1} parent=1 // pred_check_branch
      %3670 = sbr.rel (0) target = $region81
    $region80: #{tpu_custom_call.1} parent=1 // pred_region
      %3671 = dma.done [#allocation8], 128
    $region81: #{tpu_custom_call.1} parent=1 // pred_fallthru
      _
    %3672 = vsyncpa [#allocation7], 1
    %3673 = vsyncpa [#allocation10], 1
    %3674 = vsyncpa [#allocation13], 1
    %3675 = vsyncpa [#allocation16], 1
    %3676 = vsyncpa [#allocation8], 1

// kernel: tpu_custom_call.1
$region0: #{tpu_custom_call.1}
  #allocation0 [shape = 'u32[]', space=smem, size = 0x4, offset = 0x4, fixed_abs, tag = 'smem constant byte address 0x4 - core index']
  #allocation1 [shape = 'u32[144,128]{1,0:T(1,128)}', space=vmem, size = 0x12000, scoped, tag = 'internal scratch']
  #allocation2 [shape = 'f32[8,8,512]{2,1,0:T(8,128)}', space=vmem, size = 0x20000, scoped, tag = 'scratch operand']
  #allocation3 [shape = 'f32[8,8,512]{2,1,0:T(8,128)}', space=vmem, size = 0x20000, scoped, tag = 'scratch operand']
  #allocation4 [shape = 'f32[16,128]{1,0:T(8,128)}', space=vmem, size = 0x2000, scoped, tag = 'scratch operand']
  #allocation5 [shape = 'f32[16,128]{1,0:T(8,128)}', space=vmem, size = 0x2000, scoped, tag = 'scratch operand']
  %s0 = inlined_call_operand.hbm [shape: bf16[1,64,128], index: 0, kind: input, shape index: {}]
  %s1 = inlined_call_operand.hbm [shape: bf16[1,64,128], index: 1, kind: input, shape index: {}]
  %s2 = inlined_call_operand.hbm [shape: bf16[128,1024], index: 2, kind: input, shape index: {}]
  %s3 = inlined_call_operand.hbm [shape: f32[1,1024], index: 3, kind: input, shape index: {}]
  %s4 = inlined_call_operand.hbm [shape: bf16[128,1024], index: 4, kind: input, shape index: {}]
  %s5 = inlined_call_operand.hbm [shape: bf16[256,128], index: 5, kind: input, shape index: {}]
  %s6 = inlined_call_operand.vmem [shape: f32[1,128], index: 6, kind: input, shape index: {}]
  %s7 = inlined_call_operand.hbm [shape: bf16[128,128], index: 7, kind: input, shape index: {}]
  %s8 = inlined_call_operand.vmem [shape: f32[1,128], index: 8, kind: input, shape index: {}]
  %s9 = inlined_call_operand.hbm [shape: f32[8,128], index: 9, kind: output, shape index: {}]
  %s10 = sld [smem:[#allocation0]]
  $region82: #{tpu_custom_call.1} parent=0
    _
  %s12 = ssub.s32 1, %s10
  %s13 = scalar_select 0, %s12, %s10
  $region1: #{tpu_custom_call.1} parent=0
    #allocation6 [shape = 'u8[16384]{0}', space=vmem, size = 0x4000, scoped, tag = 'input window, operand 0, single buffered']
    #allocation7 [shape = 's32[1]{0}', space=sflag, size = 0x4, scoped, tag = 'scoped memory for tpu_custom_call.1']
    #allocation8 [shape = 's32[1]{0}', space=sflag, size = 0x4, scoped, tag = 'scoped memory for tpu_custom_call.1']
    #allocation9 [shape = 'u8[16384]{0}', space=vmem, size = 0x4000, scoped, tag = 'input window, operand 1, single buffered']
    #allocation10 [shape = 's32[1]{0}', space=sflag, size = 0x4, scoped, tag = 'scoped memory for tpu_custom_call.1']
    #allocation11 [shape = 'u8[262144]{0}', space=vmem, size = 0x40000, scoped, tag = 'input window, operand 2, single buffered']
    #allocation12 [shape = 'u8[4096]{0}', space=vmem, size = 0x1000, scoped, tag = 'input window, operand 3, single buffered']
    #allocation13 [shape = 's32[1]{0}', space=sflag, size = 0x4, scoped, tag = 'scoped memory for tpu_custom_call.1']
    #allocation14 [shape = 'u8[262144]{0}', space=vmem, size = 0x40000, scoped, tag = 'input window, operand 4, single buffered']
    #allocation15 [shape = 'u8[65536]{0}', space=vmem, size = 0x10000, scoped, tag = 'input window, operand 5, single buffered']
    #allocation16 [shape = 's32[1]{0}', space=sflag, size = 0x4, scoped, tag = 'scoped memory for tpu_custom_call.1']
    #allocation17 [shape = 'u8[32768]{0}', space=vmem, size = 0x8000, scoped, tag = 'input window, operand 7, single buffered']
    #allocation18 [shape = 'u8[4096]{0}', space=vmem, size = 0x1000, scoped, tag = 'output window, operand 0, single buffered']
    %14 = vsyncpa [#allocation7], 0
    %15 = vsyncpa [#allocation10], 0
    %16 = vsyncpa [#allocation13], 0
    %17 = vsyncpa [#allocation16], 0
    %18 = vsyncpa [#allocation8], 0
    // Predicated region
    $region2: #{tpu_custom_call.1} parent=1 // pred_check
      _
    $region3: #{tpu_custom_call.1} parent=1 // pred_check_branch
      %20 = sbr.rel (0) target = $region5
    $region4: #{tpu_custom_call.1} parent=1 // pred_region
      %s22 = ssub.s32 512, 512
      %23 = vsyncadd [#allocation7], %s22
      %s24 = sshll.u32 [#allocation6], 4
      %s25 = int_to_ptr.vmem [resolvable:$true] %s24
      %30 = dma.hbm_to_vmem [thread:$0]  %s0, 512, %s25, [#allocation7], 64, 64, 4
    $region5: #{tpu_custom_call.1} parent=1 // pred_fallthru
      _
    // Predicated region
    $region6: #{tpu_custom_call.1} parent=1 // pred_check
      _
    $region7: #{tpu_custom_call.1} parent=1 // pred_check_branch
      %32 = sbr.rel (0) target = $region9
    $region8: #{tpu_custom_call.1} parent=1 // pred_region
      %s33 = ssub.s32 0, 0
      %s34 = smul.u32 8, %s33
      %s36 = ssub.s32 512, 512
      %37 = vsyncadd [#allocation10], %s36
      %s38 = smul.addr %s34, 64
      %s39 = scalar_lea.hbm %s1, %s38
      %s40 = sshll.u32 [#allocation9], 4
      %s41 = int_to_ptr.vmem [resolvable:$true] %s40
      %46 = dma.hbm_to_vmem [thread:$0]  %s39, 512, %s41, [#allocation10], 64, 64, 4
    $region9: #{tpu_custom_call.1} parent=1 // pred_fallthru
      _
    // Predicated region
    $region10: #{tpu_custom_call.1} parent=1 // pred_check
      _
    $region11: #{tpu_custom_call.1} parent=1 // pred_check_branch
      %48 = sbr.rel (0) target = $region13
    $region12: #{tpu_custom_call.1} parent=1 // pred_region
      %s50 = ssub.s32 8192, 8192
      %51 = vsyncadd [#allocation10], %s50
      %s52 = sshll.u32 [#allocation11], 4
      %s53 = int_to_ptr.vmem [resolvable:$true] %s52
      %58 = dma.hbm_to_vmem [thread:$0]  %s2, 8192, %s53, [#allocation10], 512, 512, 32
    $region13: #{tpu_custom_call.1} parent=1 // pred_fallthru
      _
    // Predicated region
    $region14: #{tpu_custom_call.1} parent=1 // pred_check
      _
    $region15: #{tpu_custom_call.1} parent=1 // pred_check_branch
      %60 = sbr.rel (0) target = $region17
    $region16: #{tpu_custom_call.1} parent=1 // pred_region
      %s62 = ssub.s32 128, 128
      %63 = vsyncadd [#allocation13], %s62
      %s65 = sshll.u32 [#allocation12], 4
      %s66 = int_to_ptr.vmem [resolvable:$true] %s65
      %68 = dma.hbm_to_vmem [thread:$0]  %s3, 128, %s66, [#allocation13]
    $region17: #{tpu_custom_call.1} parent=1 // pred_fallthru
      _
    // Predicated region
    $region18: #{tpu_custom_call.1} parent=1 // pred_check
      _
    $region19: #{tpu_custom_call.1} parent=1 // pred_check_branch
      %70 = sbr.rel (0) target = $region21
    $region20: #{tpu_custom_call.1} parent=1 // pred_region
      %s72 = ssub.s32 8192, 8192
      %73 = vsyncadd [#allocation13], %s72
      %s74 = sshll.u32 [#allocation14], 4
      %s75 = int_to_ptr.vmem [resolvable:$true] %s74
      %80 = dma.hbm_to_vmem [thread:$0]  %s4, 8192, %s75, [#allocation13], 512, 512, 32
    $region21: #{tpu_custom_call.1} parent=1 // pred_fallthru
      _
    // Predicated region
    $region22: #{tpu_custom_call.1} parent=1 // pred_check
      _
    $region23: #{tpu_custom_call.1} parent=1 // pred_check_branch
      %82 = sbr.rel (0) target = $region25
    $region24: #{tpu_custom_call.1} parent=1 // pred_region
      %s84 = ssub.s32 2048, 2048
      %85 = vsyncadd [#allocation16], %s84
      %s86 = sshll.u32 [#allocation15], 4
      %s87 = int_to_ptr.vmem [resolvable:$true] %s86
      %92 = dma.hbm_to_vmem [thread:$0]  %s5, 2048, %s87, [#allocation16], 64, 64, 4
    $region25: #{tpu_custom_call.1} parent=1 // pred_fallthru
      _
    // Predicated region
    $region26: #{tpu_custom_call.1} parent=1 // pred_check
      _
    $region27: #{tpu_custom_call.1} parent=1 // pred_check_branch
      %94 = sbr.rel (0) target = $region29
    $region28: #{tpu_custom_call.1} parent=1 // pred_region
      _
    $region29: #{tpu_custom_call.1} parent=1 // pred_fallthru
      _
    // Predicated region
    $region30: #{tpu_custom_call.1} parent=1 // pred_check
      _
    $region31: #{tpu_custom_call.1} parent=1 // pred_check_branch
      %96 = sbr.rel (0) target = $region33
    $region32: #{tpu_custom_call.1} parent=1 // pred_region
      %s98 = ssub.s32 1024, 1024
      %99 = vsyncadd [#allocation16], %s98
      %s100 = sshll.u32 [#allocation17], 4
      %s101 = int_to_ptr.vmem [resolvable:$true] %s100
      %106 = dma.hbm_to_vmem [thread:$0]  %s7, 1024, %s101, [#allocation16], 64, 64, 4
    $region33: #{tpu_custom_call.1} parent=1 // pred_fallthru
      _
    // Predicated region
    $region34: #{tpu_custom_call.1} parent=1 // pred_check
      _
    $region35: #{tpu_custom_call.1} parent=1 // pred_check_branch
      %108 = sbr.rel (0) target = $region37
    $region36: #{tpu_custom_call.1} parent=1 // pred_region
      _
    $region37: #{tpu_custom_call.1} parent=1 // pred_fallthru
      _
    // Predicated region
    $region38: #{tpu_custom_call.1} parent=1 // pred_check
      _
    $region39: #{tpu_custom_call.1} parent=1 // pred_check_branch
      %110 = sbr.rel (0) target = $region41
    $region40: #{tpu_custom_call.1} parent=1 // pred_region
      %111 = dma.done [#allocation7], 512
    $region41: #{tpu_custom_call.1} parent=1 // pred_fallthru
      _
    // Predicated region
    $region42: #{tpu_custom_call.1} parent=1 // pred_check
      _
    $region43: #{tpu_custom_call.1} parent=1 // pred_check_branch
      %113 = sbr.rel (0) target = $region45
    $region44: #{tpu_custom_call.1} parent=1 // pred_region
      %114 = dma.done [#allocation10], 512
    $region45: #{tpu_custom_call.1} parent=1 // pred_fallthru
      _
    // Predicated region
    $region46: #{tpu_custom_call.1} parent=1 // pred_check
      _
    $region47: #{tpu_custom_call.1} parent=1 // pred_check_branch
      %116 = sbr.rel (0) target = $region49
    $region48: #{tpu_custom_call.1} parent=1 // pred_region
      %117 = dma.done [#allocation10], 8192
    $region49: #{tpu_custom_call.1} parent=1 // pred_fallthru
      _
    // Predicated region
    $region50: #{tpu_custom_call.1} parent=1 // pred_check
      _
    $region51: #{tpu_custom_call.1} parent=1 // pred_check_branch
      %119 = sbr.rel (0) target = $region53
    $region52: #{tpu_custom_call.1} parent=1 // pred_region
      %120 = dma.done [#allocation13], 128
    $region53: #{tpu_custom_call.1} parent=1 // pred_fallthru
      _
    // Predicated region
    $region54: #{tpu_custom_call.1} parent=1 // pred_check
      _
    $region55: #{tpu_custom_call.1} parent=1 // pred_check_branch
      %122 = sbr.rel (0) target = $region57
    $region56: #{tpu_custom_call.1} parent=1 // pred_region
      %123 = dma.done [#allocation13], 8192
    $region57: #{tpu_custom_call.1} parent=1 // pred_fallthru
      _
    // Predicated region
    $region58: #{tpu_custom_call.1} parent=1 // pred_check
      _
    $region59: #{tpu_custom_call.1} parent=1 // pred_check_branch
      %125 = sbr.rel (0) target = $region61
    $region60: #{tpu_custom_call.1} parent=1 // pred_region
      %126 = dma.done [#allocation16], 2048
    $region61: #{tpu_custom_call.1} parent=1 // pred_fallthru
      _
    // Predicated region
    $region62: #{tpu_custom_call.1} parent=1 // pred_check
      _
    $region63: #{tpu_custom_call.1} parent=1 // pred_check_branch
      %128 = sbr.rel (0) target = $region65
    $region64: #{tpu_custom_call.1} parent=1 // pred_region
      %129 = dma.done [#allocation16], 1024
    $region65: #{tpu_custom_call.1} parent=1 // pred_fallthru
      _
    %s130 = ssub.s32 0, 0
    %s131 = smul.u32 8, %s130
    %p133 = scmp.eq.s32.totalorder 0, 0
    // Predicated region
    $region66: #{tpu_custom_call.1} parent=1 // pred_check
      %p134 = pneg %p133
    $region67: #{tpu_custom_call.1} parent=1 // pred_check_branch
      %136 = sbr.rel (%p134) target = $region69
    $region68: #{tpu_custom_call.1} parent=1 // pred_region
      %137 = vst [vmem:[#allocation4] sm:$0xff] 0.0
      %138 = vst [vmem:[#allocation4 + $0x8] sm:$0xff] 0.0
      %139 = vst [vmem:[#allocation5] sm:$0xff] 0.0
      %140 = vst [vmem:[#allocation5 + $0x8] sm:$0xff] 0.0
      %141 = vst [vmem:[#allocation18] sm:$0xff] 0.0
    $region69: #{tpu_custom_call.1} parent=1 // pred_fallthru
      _
    %v142 = vld [vmem:[#allocation6] sm:$0xf]
    %v143 = vld [vmem:[#allocation6 + $0x4] sm:$0xf]
    %v144 = vld [vmem:[#allocation6 + $0x8] sm:$0xf]
    %v145 = vld [vmem:[#allocation6 + $0xc] sm:$0xf]
    %v146 = vld [vmem:[#allocation6 + $0x10] sm:$0xf]
    %v147 = vld [vmem:[#allocation6 + $0x14] sm:$0xf]
    %v148 = vld [vmem:[#allocation6 + $0x18] sm:$0xf]
    %v149 = vld [vmem:[#allocation6 + $0x1c] sm:$0xf]
    %v150 = vld [vmem:[#allocation11] sm:$0xff]
    %v151 = vld [vmem:[#allocation11 + $0x8] sm:$0xff]
    %v152 = vld [vmem:[#allocation11 + $0x20] sm:$0xff]
    %v153 = vld [vmem:[#allocation11 + $0x28] sm:$0xff]
    %v154 = vld [vmem:[#allocation11 + $0x40] sm:$0xff]
    %v155 = vld [vmem:[#allocation11 + $0x48] sm:$0xff]
    %v156 = vld [vmem:[#allocation11 + $0x60] sm:$0xff]
    %v157 = vld [vmem:[#allocation11 + $0x68] sm:$0xff]
    %v158 = vld [vmem:[#allocation11 + $0x80] sm:$0xff]
    %v159 = vld [vmem:[#allocation11 + $0x88] sm:$0xff]
    %v160 = vld [vmem:[#allocation11 + $0xa0] sm:$0xff]
    %v161 = vld [vmem:[#allocation11 + $0xa8] sm:$0xff]
    %v162 = vld [vmem:[#allocation11 + $0xc0] sm:$0xff]
    %v163 = vld [vmem:[#allocation11 + $0xc8] sm:$0xff]
    %v164 = vld [vmem:[#allocation11 + $0xe0] sm:$0xff]
    %v165 = vld [vmem:[#allocation11 + $0xe8] sm:$0xff]
    %v166 = vld [vmem:[#allocation11 + $0x100] sm:$0xff]
    %v167 = vld [vmem:[#allocation11 + $0x108] sm:$0xff]
    %v168 = vld [vmem:[#allocation11 + $0x120] sm:$0xff]
    %v169 = vld [vmem:[#allocation11 + $0x128] sm:$0xff]
    %v170 = vld [vmem:[#allocation11 + $0x140] sm:$0xff]
    %v171 = vld [vmem:[#allocation11 + $0x148] sm:$0xff]
    %v172 = vld [vmem:[#allocation11 + $0x160] sm:$0xff]
    %v173 = vld [vmem:[#allocation11 + $0x168] sm:$0xff]
    %v174 = vld [vmem:[#allocation11 + $0x180] sm:$0xff]
    %v175 = vld [vmem:[#allocation11 + $0x188] sm:$0xff]
    %v176 = vld [vmem:[#allocation11 + $0x1a0] sm:$0xff]
    %v177 = vld [vmem:[#allocation11 + $0x1a8] sm:$0xff]
    %v178 = vld [vmem:[#allocation11 + $0x1c0] sm:$0xff]
    %v179 = vld [vmem:[#allocation11 + $0x1c8] sm:$0xff]
    %v180 = vld [vmem:[#allocation11 + $0x1e0] sm:$0xff]
    %v181 = vld [vmem:[#allocation11 + $0x1e8] sm:$0xff]
    %v182 = vld [vmem:[#allocation12] sm:$0xf]
    %v184 = vlaneseq
    %v185 = vshrl.u32 %v184, 7
    %v186 = vsub.s32 0, %v185
    %v187 = vrot.slane %v182, %v186
    %v188 = vlaneseq
    %v189 = vshrl.u32 %v188, 7
    %v190 = vsub.s32 1, %v189
    %v191 = vrot.slane %v182, %v190
    %v192 = vlaneseq
    %v193 = vshrl.u32 %v192, 7
    %v194 = vsub.s32 2, %v193
    %v195 = vrot.slane %v182, %v194
    %v196 = vlaneseq
    %v197 = vshrl.u32 %v196, 7
    %v198 = vsub.s32 3, %v197
    %v199 = vrot.slane %v182, %v198
    %v212 = vunpack.c.l.b16 %v142
    %v213 = vunpack.c.l.b16 %v143
    %v214 = vunpack.c.l.b16 %v144
    %v215 = vunpack.c.l.b16 %v145
    %v216 = vunpack.c.l.b16 %v146
    %v217 = vunpack.c.l.b16 %v147
    %v218 = vunpack.c.l.b16 %v148
    %v219 = vunpack.c.l.b16 %v149
    %v220 = vpack.c.b16 %v213, %v212
    %v221 = vpack.c.b16 %v215, %v214
    %v222 = vpack.c.b16 %v217, %v216
    %v223 = vpack.c.b16 %v219, %v218
    %v260 = vunpack.c.l.b16 %v150
    %v261 = vunpack.c.h.b16 %v150
    %v262 = vunpack.c.l.b16 %v151
    %v263 = vunpack.c.h.b16 %v151
    %v264 = vunpack.c.l.b16 %v152
    %v265 = vunpack.c.h.b16 %v152
    %v266 = vunpack.c.l.b16 %v153
    %v267 = vunpack.c.h.b16 %v153
    %v268 = vunpack.c.l.b16 %v154
    %v269 = vunpack.c.h.b16 %v154
    %v270 = vunpack.c.l.b16 %v155
    %v271 = vunpack.c.h.b16 %v155
    %v272 = vunpack.c.l.b16 %v156
    %v273 = vunpack.c.h.b16 %v156
    %v274 = vunpack.c.l.b16 %v157
    %v275 = vunpack.c.h.b16 %v157
    %v276 = vunpack.c.l.b16 %v158
    %v277 = vunpack.c.h.b16 %v158
    %v278 = vunpack.c.l.b16 %v159
    %v279 = vunpack.c.h.b16 %v159
    %v280 = vunpack.c.l.b16 %v160
    %v281 = vunpack.c.h.b16 %v160
    %v282 = vunpack.c.l.b16 %v161
    %v283 = vunpack.c.h.b16 %v161
    %v284 = vunpack.c.l.b16 %v162
    %v285 = vunpack.c.h.b16 %v162
    %v286 = vunpack.c.l.b16 %v163
    %v287 = vunpack.c.h.b16 %v163
    %v288 = vunpack.c.l.b16 %v164
    %v289 = vunpack.c.h.b16 %v164
    %v290 = vunpack.c.l.b16 %v165
    %v291 = vunpack.c.h.b16 %v165
    %v292 = vunpack.c.l.b16 %v166
    %v293 = vunpack.c.h.b16 %v166
    %v294 = vunpack.c.l.b16 %v167
    %v295 = vunpack.c.h.b16 %v167
    %v296 = vunpack.c.l.b16 %v168
    %v297 = vunpack.c.h.b16 %v168
    %v298 = vunpack.c.l.b16 %v169
    %v299 = vunpack.c.h.b16 %v169
    %v300 = vunpack.c.l.b16 %v170
    %v301 = vunpack.c.h.b16 %v170
    %v302 = vunpack.c.l.b16 %v171
    %v303 = vunpack.c.h.b16 %v171
    %v304 = vunpack.c.l.b16 %v172
    %v305 = vunpack.c.h.b16 %v172
    %v306 = vunpack.c.l.b16 %v173
    %v307 = vunpack.c.h.b16 %v173
    %v308 = vunpack.c.l.b16 %v174
    %v309 = vunpack.c.h.b16 %v174
    %v310 = vunpack.c.l.b16 %v175
    %v311 = vunpack.c.h.b16 %v175
    %v312 = vunpack.c.l.b16 %v176
    %v313 = vunpack.c.h.b16 %v176
    %v314 = vunpack.c.l.b16 %v177
    %v315 = vunpack.c.h.b16 %v177
    %v316 = vunpack.c.l.b16 %v178
    %v317 = vunpack.c.h.b16 %v178
    %v318 = vunpack.c.l.b16 %v179
    %v319 = vunpack.c.h.b16 %v179
    %v320 = vunpack.c.l.b16 %v180
    %v321 = vunpack.c.h.b16 %v180
    %v322 = vunpack.c.l.b16 %v181
    %v323 = vunpack.c.h.b16 %v181
    %v324 = vpack.c.b16 %v264, %v260
    %v325 = vpack.c.b16 %v265, %v261
    %v326 = vpack.c.b16 %v266, %v262
    %v327 = vpack.c.b16 %v267, %v263
    %v328 = vpack.c.b16 %v272, %v268
    %v329 = vpack.c.b16 %v273, %v269
    %v330 = vpack.c.b16 %v274, %v270
    %v331 = vpack.c.b16 %v275, %v271
    %v332 = vpack.c.b16 %v280, %v276
    %v333 = vpack.c.b16 %v281, %v277
    %v334 = vpack.c.b16 %v282, %v278
    %v335 = vpack.c.b16 %v283, %v279
    %v336 = vpack.c.b16 %v288, %v284
    %v337 = vpack.c.b16 %v289, %v285
    %v338 = vpack.c.b16 %v290, %v286
    %v339 = vpack.c.b16 %v291, %v287
    %v340 = vpack.c.b16 %v296, %v292
    %v341 = vpack.c.b16 %v297, %v293
    %v342 = vpack.c.b16 %v298, %v294
    %v343 = vpack.c.b16 %v299, %v295
    %v344 = vpack.c.b16 %v304, %v300
    %v345 = vpack.c.b16 %v305, %v301
    %v346 = vpack.c.b16 %v306, %v302
    %v347 = vpack.c.b16 %v307, %v303
    %v348 = vpack.c.b16 %v312, %v308
    %v349 = vpack.c.b16 %v313, %v309
    %v350 = vpack.c.b16 %v314, %v310
    %v351 = vpack.c.b16 %v315, %v311
    %v352 = vpack.c.b16 %v320, %v316
    %v353 = vpack.c.b16 %v321, %v317
    %v354 = vpack.c.b16 %v322, %v318
    %v355 = vpack.c.b16 %v323, %v319
    %388 = vmatprep.subr.bf16.mxu0 %v353
    %389 = vmatpush1.bf16.msra.mxu0 %v352
    %390 = vmatprep.subr.bf16.mxu0 %v349
    %391 = vmatpush1.bf16.msra.mxu0 %v348
    %392 = vmatprep.subr.bf16.mxu0 %v345
    %393 = vmatpush1.bf16.msra.mxu0 %v344
    %394 = vmatprep.subr.bf16.mxu0 %v341
    %395 = vmatpush1.bf16.msra.mxu0 %v340
    %396 = vmatprep.subr.bf16.mxu0 %v337
    %397 = vmatpush1.bf16.msra.mxu0 %v336
    %398 = vmatprep.subr.bf16.mxu0 %v333
    %399 = vmatpush1.bf16.msra.mxu0 %v332
    %400 = vmatprep.subr.bf16.mxu0 %v329
    %401 = vmatpush1.bf16.msra.mxu0 %v328
    %402 = vmatprep.subr.bf16.mxu0 %v325
    %403 = vmatpush1.bf16.msra.mxu0 %v324
    %404 = vmatprep.subr.bf16.mxu0 0
    %405 = vmatpush2.bf16.msra.mxu0 0
    %406 = vmatprep.subr.bf16.mxu0 0
    %407 = vmatpush2.bf16.msra.mxu0 0
    %408 = vmatprep.subr.bf16.mxu0 0
    %409 = vmatpush2.bf16.msra.mxu0 0
    %410 = vmatprep.subr.bf16.mxu0 0
    %411 = vmatpush2.bf16.msra.mxu0 0
    %412 = vmatprep.subr.bf16.mxu0 0
    %413 = vmatpush2.bf16.msra.mxu0 0
    %414 = vmatprep.subr.bf16.mxu0 0
    %415 = vmatpush2.bf16.msra.mxu0 0
    %416 = vmatprep.subr.bf16.mxu0 0
    %417 = vmatpush2.bf16.msra.mxu0 0
    %418 = vmatprep.subr.bf16.mxu0 0
    %419 = vmatpush2.bf16.msra.mxu0 0
    %420 = vmatprep.mubr.bf16.mxu0 0
    %421 = vmatmul.mubr.bf16.gmra.mxu0 %v220
    %v422 = vpop.f32.mrf.mxu0
    %v423 = vadd.f32 %v187, %v422
    %v424 = vpop.f32.mrf.mxu0
    %v425 = vadd.f32 %v191, %v424
    %v426 = vpop.f32.mrf.mxu0
    %v427 = vadd.f32 %v187, %v426
    %v428 = vpop.f32.mrf.mxu0
    %v429 = vadd.f32 %v191, %v428
    %430 = vmatprep.mubr.bf16.mxu0 0
    %431 = vmatmul.mubr.bf16.gmra.mxu0 %v221
    %v432 = vpop.f32.mrf.mxu0
    %v433 = vadd.f32 %v187, %v432
    %v434 = vpop.f32.mrf.mxu0
    %v435 = vadd.f32 %v191, %v434
    %v436 = vpop.f32.mrf.mxu0
    %v437 = vadd.f32 %v187, %v436
    %v438 = vpop.f32.mrf.mxu0
    %v439 = vadd.f32 %v191, %v438
    %440 = vmatprep.mubr.bf16.mxu0 0
    %441 = vmatmul.mubr.bf16.gmra.mxu0 %v222
    %v442 = vpop.f32.mrf.mxu0
    %v443 = vadd.f32 %v187, %v442
    %v444 = vpop.f32.mrf.mxu0
    %v445 = vadd.f32 %v191, %v444
    %v446 = vpop.f32.mrf.mxu0
    %v447 = vadd.f32 %v187, %v446
    %v448 = vpop.f32.mrf.mxu0
    %v449 = vadd.f32 %v191, %v448
    %450 = vmatprep.mubr.bf16.mxu0 0
    %451 = vmatmul.mubr.bf16.gmra.mxu0 %v223
    %v452 = vpop.f32.mrf.mxu0
    %v453 = vadd.f32 %v187, %v452
    %v454 = vpop.f32.mrf.mxu0
    %v455 = vadd.f32 %v191, %v454
    %v456 = vpop.f32.mrf.mxu0
    %v457 = vadd.f32 %v187, %v456
    %v458 = vpop.f32.mrf.mxu0
    %v459 = vadd.f32 %v191, %v458
    %460 = vdwg.mxu0
    %461 = vmatprep.subr.bf16.mxu0 %v355
    %462 = vmatpush1.bf16.msra.mxu0 %v354
    %463 = vmatprep.subr.bf16.mxu0 %v351
    %464 = vmatpush1.bf16.msra.mxu0 %v350
    %465 = vmatprep.subr.bf16.mxu0 %v347
    %466 = vmatpush1.bf16.msra.mxu0 %v346
    %467 = vmatprep.subr.bf16.mxu0 %v343
    %468 = vmatpush1.bf16.msra.mxu0 %v342
    %469 = vmatprep.subr.bf16.mxu0 %v339
    %470 = vmatpush1.bf16.msra.mxu0 %v338
    %471 = vmatprep.subr.bf16.mxu0 %v335
    %472 = vmatpush1.bf16.msra.mxu0 %v334
    %473 = vmatprep.subr.bf16.mxu0 %v331
    %474 = vmatpush1.bf16.msra.mxu0 %v330
    %475 = vmatprep.subr.bf16.mxu0 %v327
    %476 = vmatpush1.bf16.msra.mxu0 %v326
    %477 = vmatprep.subr.bf16.mxu0 0
    %478 = vmatpush2.bf16.msra.mxu0 0
    %479 = vmatprep.subr.bf16.mxu0 0
    %480 = vmatpush2.bf16.msra.mxu0 0
    %481 = vmatprep.subr.bf16.mxu0 0
    %482 = vmatpush2.bf16.msra.mxu0 0
    %483 = vmatprep.subr.bf16.mxu0 0
    %484 = vmatpush2.bf16.msra.mxu0 0
    %485 = vmatprep.subr.bf16.mxu0 0
    %486 = vmatpush2.bf16.msra.mxu0 0
    %487 = vmatprep.subr.bf16.mxu0 0
    %488 = vmatpush2.bf16.msra.mxu0 0
    %489 = vmatprep.subr.bf16.mxu0 0
    %490 = vmatpush2.bf16.msra.mxu0 0
    %491 = vmatprep.subr.bf16.mxu0 0
    %492 = vmatpush2.bf16.msra.mxu0 0
    %493 = vmatprep.mubr.bf16.mxu0 0
    %494 = vmatmul.mubr.bf16.gmra.mxu0 %v220
    %v495 = vpop.f32.mrf.mxu0
    %v496 = vadd.f32 %v195, %v495
    %v497 = vpop.f32.mrf.mxu0
    %v498 = vadd.f32 %v199, %v497
    %v499 = vpop.f32.mrf.mxu0
    %v500 = vadd.f32 %v195, %v499
    %v501 = vpop.f32.mrf.mxu0
    %v502 = vadd.f32 %v199, %v501
    %503 = vmatprep.mubr.bf16.mxu0 0
    %504 = vmatmul.mubr.bf16.gmra.mxu0 %v221
    %v505 = vpop.f32.mrf.mxu0
    %v506 = vadd.f32 %v195, %v505
    %v507 = vpop.f32.mrf.mxu0
    %v508 = vadd.f32 %v199, %v507
    %v509 = vpop.f32.mrf.mxu0
    %v510 = vadd.f32 %v195, %v509
    %v511 = vpop.f32.mrf.mxu0
    %v512 = vadd.f32 %v199, %v511
    %513 = vmatprep.mubr.bf16.mxu0 0
    %514 = vmatmul.mubr.bf16.gmra.mxu0 %v222
    %v515 = vpop.f32.mrf.mxu0
    %v516 = vadd.f32 %v195, %v515
    %v517 = vpop.f32.mrf.mxu0
    %v518 = vadd.f32 %v199, %v517
    %v519 = vpop.f32.mrf.mxu0
    %v520 = vadd.f32 %v195, %v519
    %v521 = vpop.f32.mrf.mxu0
    %v522 = vadd.f32 %v199, %v521
    %523 = vmatprep.mubr.bf16.mxu0 0
    %524 = vmatmul.mubr.bf16.gmra.mxu0 %v223
    %v525 = vpop.f32.mrf.mxu0
    %v526 = vadd.f32 %v195, %v525
    %v527 = vpop.f32.mrf.mxu0
    %v528 = vadd.f32 %v199, %v527
    %v529 = vpop.f32.mrf.mxu0
    %v530 = vadd.f32 %v195, %v529
    %v531 = vpop.f32.mrf.mxu0
    %v532 = vadd.f32 %v199, %v531
    %533 = vdwg.mxu0
    %534 = vst [vmem:[#allocation2] sm:$0xff] %v423
    %535 = vst [vmem:[#allocation2 + $0x8] sm:$0xff] %v425
    %536 = vst [vmem:[#allocation2 + $0x10] sm:$0xff] %v496
    %537 = vst [vmem:[#allocation2 + $0x18] sm:$0xff] %v498
    %538 = vst [vmem:[#allocation2 + $0x20] sm:$0xff] %v427
    %539 = vst [vmem:[#allocation2 + $0x28] sm:$0xff] %v429
    %540 = vst [vmem:[#allocation2 + $0x30] sm:$0xff] %v500
    %541 = vst [vmem:[#allocation2 + $0x38] sm:$0xff] %v502
    %542 = vst [vmem:[#allocation2 + $0x40] sm:$0xff] %v433
    %543 = vst [vmem:[#allocation2 + $0x48] sm:$0xff] %v435
    %544 = vst [vmem:[#allocation2 + $0x50] sm:$0xff] %v506
    %545 = vst [vmem:[#allocation2 + $0x58] sm:$0xff] %v508
    %546 = vst [vmem:[#allocation2 + $0x60] sm:$0xff] %v437
    %547 = vst [vmem:[#allocation2 + $0x68] sm:$0xff] %v439
    %548 = vst [vmem:[#allocation2 + $0x70] sm:$0xff] %v510
    %549 = vst [vmem:[#allocation2 + $0x78] sm:$0xff] %v512
    %550 = vst [vmem:[#allocation2 + $0x80] sm:$0xff] %v443
    %551 = vst [vmem:[#allocation2 + $0x88] sm:$0xff] %v445
    %552 = vst [vmem:[#allocation2 + $0x90] sm:$0xff] %v516
    %553 = vst [vmem:[#allocation2 + $0x98] sm:$0xff] %v518
    %554 = vst [vmem:[#allocation2 + $0xa0] sm:$0xff] %v447
    %555 = vst [vmem:[#allocation2 + $0xa8] sm:$0xff] %v449
    %556 = vst [vmem:[#allocation2 + $0xb0] sm:$0xff] %v520
    %557 = vst [vmem:[#allocation2 + $0xb8] sm:$0xff] %v522
    %558 = vst [vmem:[#allocation2 + $0xc0] sm:$0xff] %v453
    %559 = vst [vmem:[#allocation2 + $0xc8] sm:$0xff] %v455
    %560 = vst [vmem:[#allocation2 + $0xd0] sm:$0xff] %v526
    %561 = vst [vmem:[#allocation2 + $0xd8] sm:$0xff] %v528
    %562 = vst [vmem:[#allocation2 + $0xe0] sm:$0xff] %v457
    %563 = vst [vmem:[#allocation2 + $0xe8] sm:$0xff] %v459
    %564 = vst [vmem:[#allocation2 + $0xf0] sm:$0xff] %v530
    %565 = vst [vmem:[#allocation2 + $0xf8] sm:$0xff] %v532
    %v566 = vld [vmem:[#allocation9] sm:$0xf]
    %v567 = vld [vmem:[#allocation9 + $0x4] sm:$0xf]
    %v568 = vld [vmem:[#allocation9 + $0x8] sm:$0xf]
    %v569 = vld [vmem:[#allocation9 + $0xc] sm:$0xf]
    %v570 = vld [vmem:[#allocation9 + $0x10] sm:$0xf]
    %v571 = vld [vmem:[#allocation9 + $0x14] sm:$0xf]
    %v572 = vld [vmem:[#allocation9 + $0x18] sm:$0xf]
    %v573 = vld [vmem:[#allocation9 + $0x1c] sm:$0xf]
    %v574 = vld [vmem:[#allocation11 + $0x10] sm:$0xff]
    %v575 = vld [vmem:[#allocation11 + $0x18] sm:$0xff]
    %v576 = vld [vmem:[#allocation11 + $0x30] sm:$0xff]
    %v577 = vld [vmem:[#allocation11 + $0x38] sm:$0xff]
    %v578 = vld [vmem:[#allocation11 + $0x50] sm:$0xff]
    %v579 = vld [vmem:[#allocation11 + $0x58] sm:$0xff]
    %v580 = vld [vmem:[#allocation11 + $0x70] sm:$0xff]
    %v581 = vld [vmem:[#allocation11 + $0x78] sm:$0xff]
    %v582 = vld [vmem:[#allocation11 + $0x90] sm:$0xff]
    %v583 = vld [vmem:[#allocation11 + $0x98] sm:$0xff]
    %v584 = vld [vmem:[#allocation11 + $0xb0] sm:$0xff]
    %v585 = vld [vmem:[#allocation11 + $0xb8] sm:$0xff]
    %v586 = vld [vmem:[#allocation11 + $0xd0] sm:$0xff]
    %v587 = vld [vmem:[#allocation11 + $0xd8] sm:$0xff]
    %v588 = vld [vmem:[#allocation11 + $0xf0] sm:$0xff]
    %v589 = vld [vmem:[#allocation11 + $0xf8] sm:$0xff]
    %v590 = vld [vmem:[#allocation11 + $0x110] sm:$0xff]
    %v591 = vld [vmem:[#allocation11 + $0x118] sm:$0xff]
    %v592 = vld [vmem:[#allocation11 + $0x130] sm:$0xff]
    %v593 = vld [vmem:[#allocation11 + $0x138] sm:$0xff]
    %v594 = vld [vmem:[#allocation11 + $0x150] sm:$0xff]
    %v595 = vld [vmem:[#allocation11 + $0x158] sm:$0xff]
    %v596 = vld [vmem:[#allocation11 + $0x170] sm:$0xff]
    %v597 = vld [vmem:[#allocation11 + $0x178] sm:$0xff]
    %v598 = vld [vmem:[#allocation11 + $0x190] sm:$0xff]
    %v599 = vld [vmem:[#allocation11 + $0x198] sm:$0xff]
    %v600 = vld [vmem:[#allocation11 + $0x1b0] sm:$0xff]
    %v601 = vld [vmem:[#allocation11 + $0x1b8] sm:$0xff]
    %v602 = vld [vmem:[#allocation11 + $0x1d0] sm:$0xff]
    %v603 = vld [vmem:[#allocation11 + $0x1d8] sm:$0xff]
    %v604 = vld [vmem:[#allocation11 + $0x1f0] sm:$0xff]
    %v605 = vld [vmem:[#allocation11 + $0x1f8] sm:$0xff]
    %v606 = vld [vmem:[#allocation12 + $0x4] sm:$0xf]
    %v608 = vlaneseq
    %v609 = vshrl.u32 %v608, 7
    %v610 = vsub.s32 0, %v609
    %v611 = vrot.slane %v606, %v610
    %v612 = vlaneseq
    %v613 = vshrl.u32 %v612, 7
    %v614 = vsub.s32 1, %v613
    %v615 = vrot.slane %v606, %v614
    %v616 = vlaneseq
    %v617 = vshrl.u32 %v616, 7
    %v618 = vsub.s32 2, %v617
    %v619 = vrot.slane %v606, %v618
    %v620 = vlaneseq
    %v621 = vshrl.u32 %v620, 7
    %v622 = vsub.s32 3, %v621
    %v623 = vrot.slane %v606, %v622
    %v636 = vunpack.c.l.b16 %v566
    %v637 = vunpack.c.l.b16 %v567
    %v638 = vunpack.c.l.b16 %v568
    %v639 = vunpack.c.l.b16 %v569
    %v640 = vunpack.c.l.b16 %v570
    %v641 = vunpack.c.l.b16 %v571
    %v642 = vunpack.c.l.b16 %v572
    %v643 = vunpack.c.l.b16 %v573
    %v644 = vpack.c.b16 %v637, %v636
    %v645 = vpack.c.b16 %v639, %v638
    %v646 = vpack.c.b16 %v641, %v640
    %v647 = vpack.c.b16 %v643, %v642
    %v684 = vunpack.c.l.b16 %v574
    %v685 = vunpack.c.h.b16 %v574
    %v686 = vunpack.c.l.b16 %v575
    %v687 = vunpack.c.h.b16 %v575
    %v688 = vunpack.c.l.b16 %v576
    %v689 = vunpack.c.h.b16 %v576
    %v690 = vunpack.c.l.b16 %v577
    %v691 = vunpack.c.h.b16 %v577
    %v692 = vunpack.c.l.b16 %v578
    %v693 = vunpack.c.h.b16 %v578
    %v694 = vunpack.c.l.b16 %v579
    %v695 = vunpack.c.h.b16 %v579
    %v696 = vunpack.c.l.b16 %v580
    %v697 = vunpack.c.h.b16 %v580
    %v698 = vunpack.c.l.b16 %v581
    %v699 = vunpack.c.h.b16 %v581
    %v700 = vunpack.c.l.b16 %v582
    %v701 = vunpack.c.h.b16 %v582
    %v702 = vunpack.c.l.b16 %v583
    %v703 = vunpack.c.h.b16 %v583
    %v704 = vunpack.c.l.b16 %v584
    %v705 = vunpack.c.h.b16 %v584
    %v706 = vunpack.c.l.b16 %v585
    %v707 = vunpack.c.h.b16 %v585
    %v708 = vunpack.c.l.b16 %v586
    %v709 = vunpack.c.h.b16 %v586
    %v710 = vunpack.c.l.b16 %v587
    %v711 = vunpack.c.h.b16 %v587
    %v712 = vunpack.c.l.b16 %v588
    %v713 = vunpack.c.h.b16 %v588
    %v714 = vunpack.c.l.b16 %v589
    %v715 = vunpack.c.h.b16 %v589
    %v716 = vunpack.c.l.b16 %v590
    %v717 = vunpack.c.h.b16 %v590
    %v718 = vunpack.c.l.b16 %v591
    %v719 = vunpack.c.h.b16 %v591
    %v720 = vunpack.c.l.b16 %v592
    %v721 = vunpack.c.h.b16 %v592
    %v722 = vunpack.c.l.b16 %v593
    %v723 = vunpack.c.h.b16 %v593
    %v724 = vunpack.c.l.b16 %v594
    %v725 = vunpack.c.h.b16 %v594
    %v726 = vunpack.c.l.b16 %v595
    %v727 = vunpack.c.h.b16 %v595
    %v728 = vunpack.c.l.b16 %v596
    %v729 = vunpack.c.h.b16 %v596
    %v730 = vunpack.c.l.b16 %v597
    %v731 = vunpack.c.h.b16 %v597
    %v732 = vunpack.c.l.b16 %v598
    %v733 = vunpack.c.h.b16 %v598
    %v734 = vunpack.c.l.b16 %v599
    %v735 = vunpack.c.h.b16 %v599
    %v736 = vunpack.c.l.b16 %v600
    %v737 = vunpack.c.h.b16 %v600
    %v738 = vunpack.c.l.b16 %v601
    %v739 = vunpack.c.h.b16 %v601
    %v740 = vunpack.c.l.b16 %v602
    %v741 = vunpack.c.h.b16 %v602
    %v742 = vunpack.c.l.b16 %v603
    %v743 = vunpack.c.h.b16 %v603
    %v744 = vunpack.c.l.b16 %v604
    %v745 = vunpack.c.h.b16 %v604
    %v746 = vunpack.c.l.b16 %v605
    %v747 = vunpack.c.h.b16 %v605
    %v748 = vpack.c.b16 %v688, %v684
    %v749 = vpack.c.b16 %v689, %v685
    %v750 = vpack.c.b16 %v690, %v686
    %v751 = vpack.c.b16 %v691, %v687
    %v752 = vpack.c.b16 %v696, %v692
    %v753 = vpack.c.b16 %v697, %v693
    %v754 = vpack.c.b16 %v698, %v694
    %v755 = vpack.c.b16 %v699, %v695
    %v756 = vpack.c.b16 %v704, %v700
    %v757 = vpack.c.b16 %v705, %v701
    %v758 = vpack.c.b16 %v706, %v702
    %v759 = vpack.c.b16 %v707, %v703
    %v760 = vpack.c.b16 %v712, %v708
    %v761 = vpack.c.b16 %v713, %v709
    %v762 = vpack.c.b16 %v714, %v710
    %v763 = vpack.c.b16 %v715, %v711
    %v764 = vpack.c.b16 %v720, %v716
    %v765 = vpack.c.b16 %v721, %v717
    %v766 = vpack.c.b16 %v722, %v718
    %v767 = vpack.c.b16 %v723, %v719
    %v768 = vpack.c.b16 %v728, %v724
    %v769 = vpack.c.b16 %v729, %v725
    %v770 = vpack.c.b16 %v730, %v726
    %v771 = vpack.c.b16 %v731, %v727
    %v772 = vpack.c.b16 %v736, %v732
    %v773 = vpack.c.b16 %v737, %v733
    %v774 = vpack.c.b16 %v738, %v734
    %v775 = vpack.c.b16 %v739, %v735
    %v776 = vpack.c.b16 %v744, %v740
    %v777 = vpack.c.b16 %v745, %v741
    %v778 = vpack.c.b16 %v746, %v742
    %v779 = vpack.c.b16 %v747, %v743
    %812 = vmatprep.subr.bf16.mxu0 %v777
    %813 = vmatpush1.bf16.msra.mxu0 %v776
    %814 = vmatprep.subr.bf16.mxu0 %v773
    %815 = vmatpush1.bf16.msra.mxu0 %v772
    %816 = vmatprep.subr.bf16.mxu0 %v769
    %817 = vmatpush1.bf16.msra.mxu0 %v768
    %818 = vmatprep.subr.bf16.mxu0 %v765
    %819 = vmatpush1.bf16.msra.mxu0 %v764
    %820 = vmatprep.subr.bf16.mxu0 %v761
    %821 = vmatpush1.bf16.msra.mxu0 %v760
    %822 = vmatprep.subr.bf16.mxu0 %v757
    %823 = vmatpush1.bf16.msra.mxu0 %v756
    %824 = vmatprep.subr.bf16.mxu0 %v753
    %825 = vmatpush1.bf16.msra.mxu0 %v752
    %826 = vmatprep.subr.bf16.mxu0 %v749
    %827 = vmatpush1.bf16.msra.mxu0 %v748
    %828 = vmatprep.subr.bf16.mxu0 0
    %829 = vmatpush2.bf16.msra.mxu0 0
    %830 = vmatprep.subr.bf16.mxu0 0
    %831 = vmatpush2.bf16.msra.mxu0 0
    %832 = vmatprep.subr.bf16.mxu0 0
    %833 = vmatpush2.bf16.msra.mxu0 0
    %834 = vmatprep.subr.bf16.mxu0 0
    %835 = vmatpush2.bf16.msra.mxu0 0
    %836 = vmatprep.subr.bf16.mxu0 0
    %837 = vmatpush2.bf16.msra.mxu0 0
    %838 = vmatprep.subr.bf16.mxu0 0
    %839 = vmatpush2.bf16.msra.mxu0 0
    %840 = vmatprep.subr.bf16.mxu0 0
    %841 = vmatpush2.bf16.msra.mxu0 0
    %842 = vmatprep.subr.bf16.mxu0 0
    %843 = vmatpush2.bf16.msra.mxu0 0
    %844 = vmatprep.mubr.bf16.mxu0 0
    %845 = vmatmul.mubr.bf16.gmra.mxu0 %v644
    %v846 = vpop.f32.mrf.mxu0
    %v847 = vadd.f32 %v611, %v846
    %v848 = vpop.f32.mrf.mxu0
    %v849 = vadd.f32 %v615, %v848
    %v850 = vpop.f32.mrf.mxu0
    %v851 = vadd.f32 %v611, %v850
    %v852 = vpop.f32.mrf.mxu0
    %v853 = vadd.f32 %v615, %v852
    %854 = vmatprep.mubr.bf16.mxu0 0
    %855 = vmatmul.mubr.bf16.gmra.mxu0 %v645
    %v856 = vpop.f32.mrf.mxu0
    %v857 = vadd.f32 %v611, %v856
    %v858 = vpop.f32.mrf.mxu0
    %v859 = vadd.f32 %v615, %v858
    %v860 = vpop.f32.mrf.mxu0
    %v861 = vadd.f32 %v611, %v860
    %v862 = vpop.f32.mrf.mxu0
    %v863 = vadd.f32 %v615, %v862
    %864 = vmatprep.mubr.bf16.mxu0 0
    %865 = vmatmul.mubr.bf16.gmra.mxu0 %v646
    %v866 = vpop.f32.mrf.mxu0
    %v867 = vadd.f32 %v611, %v866
    %v868 = vpop.f32.mrf.mxu0
    %v869 = vadd.f32 %v615, %v868
    %v870 = vpop.f32.mrf.mxu0
    %v871 = vadd.f32 %v611, %v870
    %v872 = vpop.f32.mrf.mxu0
    %v873 = vadd.f32 %v615, %v872
    %874 = vmatprep.mubr.bf16.mxu0 0
    %875 = vmatmul.mubr.bf16.gmra.mxu0 %v647
    %v876 = vpop.f32.mrf.mxu0
    %v877 = vadd.f32 %v611, %v876
    %v878 = vpop.f32.mrf.mxu0
    %v879 = vadd.f32 %v615, %v878
    %v880 = vpop.f32.mrf.mxu0
    %v881 = vadd.f32 %v611, %v880
    %v882 = vpop.f32.mrf.mxu0
    %v883 = vadd.f32 %v615, %v882
    %884 = vdwg.mxu0
    %885 = vmatprep.subr.bf16.mxu0 %v779
    %886 = vmatpush1.bf16.msra.mxu0 %v778
    %887 = vmatprep.subr.bf16.mxu0 %v775
    %888 = vmatpush1.bf16.msra.mxu0 %v774
    %889 = vmatprep.subr.bf16.mxu0 %v771
    %890 = vmatpush1.bf16.msra.mxu0 %v770
    %891 = vmatprep.subr.bf16.mxu0 %v767
    %892 = vmatpush1.bf16.msra.mxu0 %v766
    %893 = vmatprep.subr.bf16.mxu0 %v763
    %894 = vmatpush1.bf16.msra.mxu0 %v762
    %895 = vmatprep.subr.bf16.mxu0 %v759
    %896 = vmatpush1.bf16.msra.mxu0 %v758
    %897 = vmatprep.subr.bf16.mxu0 %v755
    %898 = vmatpush1.bf16.msra.mxu0 %v754
    %899 = vmatprep.subr.bf16.mxu0 %v751
    %900 = vmatpush1.bf16.msra.mxu0 %v750
    %901 = vmatprep.subr.bf16.mxu0 0
    %902 = vmatpush2.bf16.msra.mxu0 0
    %903 = vmatprep.subr.bf16.mxu0 0
    %904 = vmatpush2.bf16.msra.mxu0 0
    %905 = vmatprep.subr.bf16.mxu0 0
    %906 = vmatpush2.bf16.msra.mxu0 0
    %907 = vmatprep.subr.bf16.mxu0 0
    %908 = vmatpush2.bf16.msra.mxu0 0
    %909 = vmatprep.subr.bf16.mxu0 0
    %910 = vmatpush2.bf16.msra.mxu0 0
    %911 = vmatprep.subr.bf16.mxu0 0
    %912 = vmatpush2.bf16.msra.mxu0 0
    %913 = vmatprep.subr.bf16.mxu0 0
    %914 = vmatpush2.bf16.msra.mxu0 0
    %915 = vmatprep.subr.bf16.mxu0 0
    %916 = vmatpush2.bf16.msra.mxu0 0
    %917 = vmatprep.mubr.bf16.mxu0 0
    %918 = vmatmul.mubr.bf16.gmra.mxu0 %v644
    %v919 = vpop.f32.mrf.mxu0
    %v920 = vadd.f32 %v619, %v919
    %v921 = vpop.f32.mrf.mxu0
    %v922 = vadd.f32 %v623, %v921
    %v923 = vpop.f32.mrf.mxu0
    %v924 = vadd.f32 %v619, %v923
    %v925 = vpop.f32.mrf.mxu0
    %v926 = vadd.f32 %v623, %v925
    %927 = vmatprep.mubr.bf16.mxu0 0
    %928 = vmatmul.mubr.bf16.gmra.mxu0 %v645
    %v929 = vpop.f32.mrf.mxu0
    %v930 = vadd.f32 %v619, %v929
    %v931 = vpop.f32.mrf.mxu0
    %v932 = vadd.f32 %v623, %v931
    %v933 = vpop.f32.mrf.mxu0
    %v934 = vadd.f32 %v619, %v933
    %v935 = vpop.f32.mrf.mxu0
    %v936 = vadd.f32 %v623, %v935
    %937 = vmatprep.mubr.bf16.mxu0 0
    %938 = vmatmul.mubr.bf16.gmra.mxu0 %v646
    %v939 = vpop.f32.mrf.mxu0
    %v940 = vadd.f32 %v619, %v939
    %v941 = vpop.f32.mrf.mxu0
    %v942 = vadd.f32 %v623, %v941
    %v943 = vpop.f32.mrf.mxu0
    %v944 = vadd.f32 %v619, %v943
    %v945 = vpop.f32.mrf.mxu0
    %v946 = vadd.f32 %v623, %v945
    %947 = vmatprep.mubr.bf16.mxu0 0
    %948 = vmatmul.mubr.bf16.gmra.mxu0 %v647
    %v949 = vpop.f32.mrf.mxu0
    %v950 = vadd.f32 %v619, %v949
    %v951 = vpop.f32.mrf.mxu0
    %v952 = vadd.f32 %v623, %v951
    %v953 = vpop.f32.mrf.mxu0
    %v954 = vadd.f32 %v619, %v953
    %v955 = vpop.f32.mrf.mxu0
    %v956 = vadd.f32 %v623, %v955
    %957 = vdwg.mxu0
    %958 = vst [vmem:[#allocation3] sm:$0xff] %v847
    %959 = vst [vmem:[#allocation3 + $0x8] sm:$0xff] %v849
    %960 = vst [vmem:[#allocation3 + $0x10] sm:$0xff] %v920
    %961 = vst [vmem:[#allocation3 + $0x18] sm:$0xff] %v922
    %962 = vst [vmem:[#allocation3 + $0x20] sm:$0xff] %v851
    %963 = vst [vmem:[#allocation3 + $0x28] sm:$0xff] %v853
    %964 = vst [vmem:[#allocation3 + $0x30] sm:$0xff] %v924
    %965 = vst [vmem:[#allocation3 + $0x38] sm:$0xff] %v926
    %966 = vst [vmem:[#allocation3 + $0x40] sm:$0xff] %v857
    %967 = vst [vmem:[#allocation3 + $0x48] sm:$0xff] %v859
    %968 = vst [vmem:[#allocation3 + $0x50] sm:$0xff] %v930
    %969 = vst [vmem:[#allocation3 + $0x58] sm:$0xff] %v932
    %970 = vst [vmem:[#allocation3 + $0x60] sm:$0xff] %v861
    %971 = vst [vmem:[#allocation3 + $0x68] sm:$0xff] %v863
    %972 = vst [vmem:[#allocation3 + $0x70] sm:$0xff] %v934
    %973 = vst [vmem:[#allocation3 + $0x78] sm:$0xff] %v936
    %974 = vst [vmem:[#allocation3 + $0x80] sm:$0xff] %v867
    %975 = vst [vmem:[#allocation3 + $0x88] sm:$0xff] %v869
    %976 = vst [vmem:[#allocation3 + $0x90] sm:$0xff] %v940
    %977 = vst [vmem:[#allocation3 + $0x98] sm:$0xff] %v942
    %978 = vst [vmem:[#allocation3 + $0xa0] sm:$0xff] %v871
    %979 = vst [vmem:[#allocation3 + $0xa8] sm:$0xff] %v873
    %980 = vst [vmem:[#allocation3 + $0xb0] sm:$0xff] %v944
    %981 = vst [vmem:[#allocation3 + $0xb8] sm:$0xff] %v946
    %982 = vst [vmem:[#allocation3 + $0xc0] sm:$0xff] %v877
    %983 = vst [vmem:[#allocation3 + $0xc8] sm:$0xff] %v879
    %984 = vst [vmem:[#allocation3 + $0xd0] sm:$0xff] %v950
    %985 = vst [vmem:[#allocation3 + $0xd8] sm:$0xff] %v952
    %986 = vst [vmem:[#allocation3 + $0xe0] sm:$0xff] %v881
    %987 = vst [vmem:[#allocation3 + $0xe8] sm:$0xff] %v883
    %988 = vst [vmem:[#allocation3 + $0xf0] sm:$0xff] %v954
    %989 = vst [vmem:[#allocation3 + $0xf8] sm:$0xff] %v956
    %v990 = vlaneseq
    %v991 = vshrl.u32 %v990, 7
    %v992 = vadd.s32 %v991, 8
    %vm993 = vcmp.lt.s32.totalorder %v991, 8
    %vm994 = vcmp.lt.s32.totalorder %v992, 8
    %v995 = vld [vmem:[#allocation4] sm:$0xff]
    %v996 = vld [vmem:[#allocation4 + $0x8] sm:$0xff]
    %v997 = vld [vmem:[#allocation5] sm:$0xff]
    %v998 = vld [vmem:[#allocation5 + $0x8] sm:$0xff]
    %v999 = vpack.c.bf16 %v996, %v995
    %v1000 = vld [vmem:[#allocation14] sm:$0xff]
    %v1001 = vld [vmem:[#allocation14 + $0x8] sm:$0xff]
    %v1002 = vld [vmem:[#allocation14 + $0x10] sm:$0xff]
    %v1003 = vld [vmem:[#allocation14 + $0x18] sm:$0xff]
    %v1004 = vld [vmem:[#allocation14 + $0x20] sm:$0xff]
    %v1005 = vld [vmem:[#allocation14 + $0x28] sm:$0xff]
    %v1006 = vld [vmem:[#allocation14 + $0x30] sm:$0xff]
    %v1007 = vld [vmem:[#allocation14 + $0x38] sm:$0xff]
    %v1008 = vld [vmem:[#allocation14 + $0x40] sm:$0xff]
    %v1009 = vld [vmem:[#allocation14 + $0x48] sm:$0xff]
    %v1010 = vld [vmem:[#allocation14 + $0x50] sm:$0xff]
    %v1011 = vld [vmem:[#allocation14 + $0x58] sm:$0xff]
    %v1012 = vld [vmem:[#allocation14 + $0x60] sm:$0xff]
    %v1013 = vld [vmem:[#allocation14 + $0x68] sm:$0xff]
    %v1014 = vld [vmem:[#allocation14 + $0x70] sm:$0xff]
    %v1015 = vld [vmem:[#allocation14 + $0x78] sm:$0xff]
    %v1016 = vld [vmem:[#allocation14 + $0x80] sm:$0xff]
    %v1017 = vld [vmem:[#allocation14 + $0x88] sm:$0xff]
    %v1018 = vld [vmem:[#allocation14 + $0x90] sm:$0xff]
    %v1019 = vld [vmem:[#allocation14 + $0x98] sm:$0xff]
    %v1020 = vld [vmem:[#allocation14 + $0xa0] sm:$0xff]
    %v1021 = vld [vmem:[#allocation14 + $0xa8] sm:$0xff]
    %v1022 = vld [vmem:[#allocation14 + $0xb0] sm:$0xff]
    %v1023 = vld [vmem:[#allocation14 + $0xb8] sm:$0xff]
    %v1024 = vld [vmem:[#allocation14 + $0xc0] sm:$0xff]
    %v1025 = vld [vmem:[#allocation14 + $0xc8] sm:$0xff]
    %v1026 = vld [vmem:[#allocation14 + $0xd0] sm:$0xff]
    %v1027 = vld [vmem:[#allocation14 + $0xd8] sm:$0xff]
    %v1028 = vld [vmem:[#allocation14 + $0xe0] sm:$0xff]
    %v1029 = vld [vmem:[#allocation14 + $0xe8] sm:$0xff]
    %v1030 = vld [vmem:[#allocation14 + $0xf0] sm:$0xff]
    %v1031 = vld [vmem:[#allocation14 + $0xf8] sm:$0xff]
    %v1032 = vld [vmem:[#allocation14 + $0x100] sm:$0xff]
    %v1033 = vld [vmem:[#allocation14 + $0x108] sm:$0xff]
    %v1034 = vld [vmem:[#allocation14 + $0x110] sm:$0xff]
    %v1035 = vld [vmem:[#allocation14 + $0x118] sm:$0xff]
    %v1036 = vld [vmem:[#allocation14 + $0x120] sm:$0xff]
    %v1037 = vld [vmem:[#allocation14 + $0x128] sm:$0xff]
    %v1038 = vld [vmem:[#allocation14 + $0x130] sm:$0xff]
    %v1039 = vld [vmem:[#allocation14 + $0x138] sm:$0xff]
    %v1040 = vld [vmem:[#allocation14 + $0x140] sm:$0xff]
    %v1041 = vld [vmem:[#allocation14 + $0x148] sm:$0xff]
    %v1042 = vld [vmem:[#allocation14 + $0x150] sm:$0xff]
    %v1043 = vld [vmem:[#allocation14 + $0x158] sm:$0xff]
    %v1044 = vld [vmem:[#allocation14 + $0x160] sm:$0xff]
    %v1045 = vld [vmem:[#allocation14 + $0x168] sm:$0xff]
    %v1046 = vld [vmem:[#allocation14 + $0x170] sm:$0xff]
    %v1047 = vld [vmem:[#allocation14 + $0x178] sm:$0xff]
    %v1048 = vld [vmem:[#allocation14 + $0x180] sm:$0xff]
    %v1049 = vld [vmem:[#allocation14 + $0x188] sm:$0xff]
    %v1050 = vld [vmem:[#allocation14 + $0x190] sm:$0xff]
    %v1051 = vld [vmem:[#allocation14 + $0x198] sm:$0xff]
    %v1052 = vld [vmem:[#allocation14 + $0x1a0] sm:$0xff]
    %v1053 = vld [vmem:[#allocation14 + $0x1a8] sm:$0xff]
    %v1054 = vld [vmem:[#allocation14 + $0x1b0] sm:$0xff]
    %v1055 = vld [vmem:[#allocation14 + $0x1b8] sm:$0xff]
    %v1056 = vld [vmem:[#allocation14 + $0x1c0] sm:$0xff]
    %v1057 = vld [vmem:[#allocation14 + $0x1c8] sm:$0xff]
    %v1058 = vld [vmem:[#allocation14 + $0x1d0] sm:$0xff]
    %v1059 = vld [vmem:[#allocation14 + $0x1d8] sm:$0xff]
    %v1060 = vld [vmem:[#allocation14 + $0x1e0] sm:$0xff]
    %v1061 = vld [vmem:[#allocation14 + $0x1e8] sm:$0xff]
    %v1062 = vld [vmem:[#allocation14 + $0x1f0] sm:$0xff]
    %v1063 = vld [vmem:[#allocation14 + $0x1f8] sm:$0xff]
    %v1128 = vunpack.c.l.b16 %v1000
    %v1129 = vunpack.c.h.b16 %v1000
    %v1130 = vunpack.c.l.b16 %v1001
    %v1131 = vunpack.c.h.b16 %v1001
    %v1132 = vunpack.c.l.b16 %v1002
    %v1133 = vunpack.c.h.b16 %v1002
    %v1134 = vunpack.c.l.b16 %v1003
    %v1135 = vunpack.c.h.b16 %v1003
    %v1136 = vunpack.c.l.b16 %v1004
    %v1137 = vunpack.c.h.b16 %v1004
    %v1138 = vunpack.c.l.b16 %v1005
    %v1139 = vunpack.c.h.b16 %v1005
    %v1140 = vunpack.c.l.b16 %v1006
    %v1141 = vunpack.c.h.b16 %v1006
    %v1142 = vunpack.c.l.b16 %v1007
    %v1143 = vunpack.c.h.b16 %v1007
    %v1144 = vunpack.c.l.b16 %v1008
    %v1145 = vunpack.c.h.b16 %v1008
    %v1146 = vunpack.c.l.b16 %v1009
    %v1147 = vunpack.c.h.b16 %v1009
    %v1148 = vunpack.c.l.b16 %v1010
    %v1149 = vunpack.c.h.b16 %v1010
    %v1150 = vunpack.c.l.b16 %v1011
    %v1151 = vunpack.c.h.b16 %v1011
    %v1152 = vunpack.c.l.b16 %v1012
    %v1153 = vunpack.c.h.b16 %v1012
    %v1154 = vunpack.c.l.b16 %v1013
    %v1155 = vunpack.c.h.b16 %v1013
    %v1156 = vunpack.c.l.b16 %v1014
    %v1157 = vunpack.c.h.b16 %v1014
    %v1158 = vunpack.c.l.b16 %v1015
    %v1159 = vunpack.c.h.b16 %v1015
    %v1160 = vunpack.c.l.b16 %v1016
    %v1161 = vunpack.c.h.b16 %v1016
    %v1162 = vunpack.c.l.b16 %v1017
    %v1163 = vunpack.c.h.b16 %v1017
    %v1164 = vunpack.c.l.b16 %v1018
    %v1165 = vunpack.c.h.b16 %v1018
    %v1166 = vunpack.c.l.b16 %v1019
    %v1167 = vunpack.c.h.b16 %v1019
    %v1168 = vunpack.c.l.b16 %v1020
    %v1169 = vunpack.c.h.b16 %v1020
    %v1170 = vunpack.c.l.b16 %v1021
    %v1171 = vunpack.c.h.b16 %v1021
    %v1172 = vunpack.c.l.b16 %v1022
    %v1173 = vunpack.c.h.b16 %v1022
    %v1174 = vunpack.c.l.b16 %v1023
    %v1175 = vunpack.c.h.b16 %v1023
    %v1176 = vunpack.c.l.b16 %v1024
    %v1177 = vunpack.c.h.b16 %v1024
    %v1178 = vunpack.c.l.b16 %v1025
    %v1179 = vunpack.c.h.b16 %v1025
    %v1180 = vunpack.c.l.b16 %v1026
    %v1181 = vunpack.c.h.b16 %v1026
    %v1182 = vunpack.c.l.b16 %v1027
    %v1183 = vunpack.c.h.b16 %v1027
    %v1184 = vunpack.c.l.b16 %v1028
    %v1185 = vunpack.c.h.b16 %v1028
    %v1186 = vunpack.c.l.b16 %v1029
    %v1187 = vunpack.c.h.b16 %v1029
    %v1188 = vunpack.c.l.b16 %v1030
    %v1189 = vunpack.c.h.b16 %v1030
    %v1190 = vunpack.c.l.b16 %v1031
    %v1191 = vunpack.c.h.b16 %v1031
    %v1192 = vunpack.c.l.b16 %v1032
    %v1193 = vunpack.c.h.b16 %v1032
    %v1194 = vunpack.c.l.b16 %v1033
    %v1195 = vunpack.c.h.b16 %v1033
    %v1196 = vunpack.c.l.b16 %v1034
    %v1197 = vunpack.c.h.b16 %v1034
    %v1198 = vunpack.c.l.b16 %v1035
    %v1199 = vunpack.c.h.b16 %v1035
    %v1200 = vunpack.c.l.b16 %v1036
    %v1201 = vunpack.c.h.b16 %v1036
    %v1202 = vunpack.c.l.b16 %v1037
    %v1203 = vunpack.c.h.b16 %v1037
    %v1204 = vunpack.c.l.b16 %v1038
    %v1205 = vunpack.c.h.b16 %v1038
    %v1206 = vunpack.c.l.b16 %v1039
    %v1207 = vunpack.c.h.b16 %v1039
    %v1208 = vunpack.c.l.b16 %v1040
    %v1209 = vunpack.c.h.b16 %v1040
    %v1210 = vunpack.c.l.b16 %v1041
    %v1211 = vunpack.c.h.b16 %v1041
    %v1212 = vunpack.c.l.b16 %v1042
    %v1213 = vunpack.c.h.b16 %v1042
    %v1214 = vunpack.c.l.b16 %v1043
    %v1215 = vunpack.c.h.b16 %v1043
    %v1216 = vunpack.c.l.b16 %v1044
    %v1217 = vunpack.c.h.b16 %v1044
    %v1218 = vunpack.c.l.b16 %v1045
    %v1219 = vunpack.c.h.b16 %v1045
    %v1220 = vunpack.c.l.b16 %v1046
    %v1221 = vunpack.c.h.b16 %v1046
    %v1222 = vunpack.c.l.b16 %v1047
    %v1223 = vunpack.c.h.b16 %v1047
    %v1224 = vunpack.c.l.b16 %v1048
    %v1225 = vunpack.c.h.b16 %v1048
    %v1226 = vunpack.c.l.b16 %v1049
    %v1227 = vunpack.c.h.b16 %v1049
    %v1228 = vunpack.c.l.b16 %v1050
    %v1229 = vunpack.c.h.b16 %v1050
    %v1230 = vunpack.c.l.b16 %v1051
    %v1231 = vunpack.c.h.b16 %v1051
    %v1232 = vunpack.c.l.b16 %v1052
    %v1233 = vunpack.c.h.b16 %v1052
    %v1234 = vunpack.c.l.b16 %v1053
    %v1235 = vunpack.c.h.b16 %v1053
    %v1236 = vunpack.c.l.b16 %v1054
    %v1237 = vunpack.c.h.b16 %v1054
    %v1238 = vunpack.c.l.b16 %v1055
    %v1239 = vunpack.c.h.b16 %v1055
    %v1240 = vunpack.c.l.b16 %v1056
    %v1241 = vunpack.c.h.b16 %v1056
    %v1242 = vunpack.c.l.b16 %v1057
    %v1243 = vunpack.c.h.b16 %v1057
    %v1244 = vunpack.c.l.b16 %v1058
    %v1245 = vunpack.c.h.b16 %v1058
    %v1246 = vunpack.c.l.b16 %v1059
    %v1247 = vunpack.c.h.b16 %v1059
    %v1248 = vunpack.c.l.b16 %v1060
    %v1249 = vunpack.c.h.b16 %v1060
    %v1250 = vunpack.c.l.b16 %v1061
    %v1251 = vunpack.c.h.b16 %v1061
    %v1252 = vunpack.c.l.b16 %v1062
    %v1253 = vunpack.c.h.b16 %v1062
    %v1254 = vunpack.c.l.b16 %v1063
    %v1255 = vunpack.c.h.b16 %v1063
    %v1256 = vpack.c.b16 %v1136, %v1128
    %v1257 = vpack.c.b16 %v1137, %v1129
    %v1258 = vpack.c.b16 %v1138, %v1130
    %v1259 = vpack.c.b16 %v1139, %v1131
    %v1260 = vpack.c.b16 %v1140, %v1132
    %v1261 = vpack.c.b16 %v1141, %v1133
    %v1262 = vpack.c.b16 %v1142, %v1134
    %v1263 = vpack.c.b16 %v1143, %v1135
    %v1264 = vpack.c.b16 %v1152, %v1144
    %v1265 = vpack.c.b16 %v1153, %v1145
    %v1266 = vpack.c.b16 %v1154, %v1146
    %v1267 = vpack.c.b16 %v1155, %v1147
    %v1268 = vpack.c.b16 %v1156, %v1148
    %v1269 = vpack.c.b16 %v1157, %v1149
    %v1270 = vpack.c.b16 %v1158, %v1150
    %v1271 = vpack.c.b16 %v1159, %v1151
    %v1272 = vpack.c.b16 %v1168, %v1160
    %v1273 = vpack.c.b16 %v1169, %v1161
    %v1274 = vpack.c.b16 %v1170, %v1162
    %v1275 = vpack.c.b16 %v1171, %v1163
    %v1276 = vpack.c.b16 %v1172, %v1164
    %v1277 = vpack.c.b16 %v1173, %v1165
    %v1278 = vpack.c.b16 %v1174, %v1166
    %v1279 = vpack.c.b16 %v1175, %v1167
    %v1280 = vpack.c.b16 %v1184, %v1176
    %v1281 = vpack.c.b16 %v1185, %v1177
    %v1282 = vpack.c.b16 %v1186, %v1178
    %v1283 = vpack.c.b16 %v1187, %v1179
    %v1284 = vpack.c.b16 %v1188, %v1180
    %v1285 = vpack.c.b16 %v1189, %v1181
    %v1286 = vpack.c.b16 %v1190, %v1182
    %v1287 = vpack.c.b16 %v1191, %v1183
    %v1288 = vpack.c.b16 %v1200, %v1192
    %v1289 = vpack.c.b16 %v1201, %v1193
    %v1290 = vpack.c.b16 %v1202, %v1194
    %v1291 = vpack.c.b16 %v1203, %v1195
    %v1292 = vpack.c.b16 %v1204, %v1196
    %v1293 = vpack.c.b16 %v1205, %v1197
    %v1294 = vpack.c.b16 %v1206, %v1198
    %v1295 = vpack.c.b16 %v1207, %v1199
    %v1296 = vpack.c.b16 %v1216, %v1208
    %v1297 = vpack.c.b16 %v1217, %v1209
    %v1298 = vpack.c.b16 %v1218, %v1210
    %v1299 = vpack.c.b16 %v1219, %v1211
    %v1300 = vpack.c.b16 %v1220, %v1212
    %v1301 = vpack.c.b16 %v1221, %v1213
    %v1302 = vpack.c.b16 %v1222, %v1214
    %v1303 = vpack.c.b16 %v1223, %v1215
    %v1304 = vpack.c.b16 %v1232, %v1224
    %v1305 = vpack.c.b16 %v1233, %v1225
    %v1306 = vpack.c.b16 %v1234, %v1226
    %v1307 = vpack.c.b16 %v1235, %v1227
    %v1308 = vpack.c.b16 %v1236, %v1228
    %v1309 = vpack.c.b16 %v1237, %v1229
    %v1310 = vpack.c.b16 %v1238, %v1230
    %v1311 = vpack.c.b16 %v1239, %v1231
    %v1312 = vpack.c.b16 %v1248, %v1240
    %v1313 = vpack.c.b16 %v1249, %v1241
    %v1314 = vpack.c.b16 %v1250, %v1242
    %v1315 = vpack.c.b16 %v1251, %v1243
    %v1316 = vpack.c.b16 %v1252, %v1244
    %v1317 = vpack.c.b16 %v1253, %v1245
    %v1318 = vpack.c.b16 %v1254, %v1246
    %v1319 = vpack.c.b16 %v1255, %v1247
    %1384 = vmatprep.subr.bf16.mxu0 %v1313
    %1385 = vmatpush1.bf16.msra.mxu0 %v1312
    %1386 = vmatprep.subr.bf16.mxu0 %v1305
    %1387 = vmatpush1.bf16.msra.mxu0 %v1304
    %1388 = vmatprep.subr.bf16.mxu0 %v1297
    %1389 = vmatpush1.bf16.msra.mxu0 %v1296
    %1390 = vmatprep.subr.bf16.mxu0 %v1289
    %1391 = vmatpush1.bf16.msra.mxu0 %v1288
    %1392 = vmatprep.subr.bf16.mxu0 %v1281
    %1393 = vmatpush1.bf16.msra.mxu0 %v1280
    %1394 = vmatprep.subr.bf16.mxu0 %v1273
    %1395 = vmatpush1.bf16.msra.mxu0 %v1272
    %1396 = vmatprep.subr.bf16.mxu0 %v1265
    %1397 = vmatpush1.bf16.msra.mxu0 %v1264
    %1398 = vmatprep.subr.bf16.mxu0 %v1257
    %1399 = vmatpush1.bf16.msra.mxu0 %v1256
    %1400 = vmatprep.subr.bf16.mxu0 0
    %1401 = vmatpush2.bf16.msra.mxu0 0
    %1402 = vmatprep.subr.bf16.mxu0 0
    %1403 = vmatpush2.bf16.msra.mxu0 0
    %1404 = vmatprep.subr.bf16.mxu0 0
    %1405 = vmatpush2.bf16.msra.mxu0 0
    %1406 = vmatprep.subr.bf16.mxu0 0
    %1407 = vmatpush2.bf16.msra.mxu0 0
    %1408 = vmatprep.subr.bf16.mxu0 0
    %1409 = vmatpush2.bf16.msra.mxu0 0
    %1410 = vmatprep.subr.bf16.mxu0 0
    %1411 = vmatpush2.bf16.msra.mxu0 0
    %1412 = vmatprep.subr.bf16.mxu0 0
    %1413 = vmatpush2.bf16.msra.mxu0 0
    %1414 = vmatprep.subr.bf16.mxu0 0
    %1415 = vmatpush2.bf16.msra.mxu0 0
    %1416 = vmatprep.mubr.bf16.mxu0 0
    %1417 = vmatmul.mubr.bf16.gmra.mxu0 %v999
    %v1418 = vpop.f32.mrf.mxu0
    %v1419 = vadd.f32 0.0, %v1418
    %v1420 = vpop.f32.mrf.mxu0
    %v1421 = vadd.f32 0.0, %v1420
    %v1422 = vpop.f32.mrf.mxu0
    %v1423 = vadd.f32 0.0, %v1422
    %v1424 = vpop.f32.mrf.mxu0
    %v1425 = vadd.f32 0.0, %v1424
    %1426 = vdwg.mxu0
    %1427 = vmatprep.subr.bf16.mxu0 %v1315
    %1428 = vmatpush1.bf16.msra.mxu0 %v1314
    %1429 = vmatprep.subr.bf16.mxu0 %v1307
    %1430 = vmatpush1.bf16.msra.mxu0 %v1306
    %1431 = vmatprep.subr.bf16.mxu0 %v1299
    %1432 = vmatpush1.bf16.msra.mxu0 %v1298
    %1433 = vmatprep.subr.bf16.mxu0 %v1291
    %1434 = vmatpush1.bf16.msra.mxu0 %v1290
    %1435 = vmatprep.subr.bf16.mxu0 %v1283
    %1436 = vmatpush1.bf16.msra.mxu0 %v1282
    %1437 = vmatprep.subr.bf16.mxu0 %v1275
    %1438 = vmatpush1.bf16.msra.mxu0 %v1274
    %1439 = vmatprep.subr.bf16.mxu0 %v1267
    %1440 = vmatpush1.bf16.msra.mxu0 %v1266
    %1441 = vmatprep.subr.bf16.mxu0 %v1259
    %1442 = vmatpush1.bf16.msra.mxu0 %v1258
    %1443 = vmatprep.subr.bf16.mxu0 0
    %1444 = vmatpush2.bf16.msra.mxu0 0
    %1445 = vmatprep.subr.bf16.mxu0 0
    %1446 = vmatpush2.bf16.msra.mxu0 0
    %1447 = vmatprep.subr.bf16.mxu0 0
    %1448 = vmatpush2.bf16.msra.mxu0 0
    %1449 = vmatprep.subr.bf16.mxu0 0
    %1450 = vmatpush2.bf16.msra.mxu0 0
    %1451 = vmatprep.subr.bf16.mxu0 0
    %1452 = vmatpush2.bf16.msra.mxu0 0
    %1453 = vmatprep.subr.bf16.mxu0 0
    %1454 = vmatpush2.bf16.msra.mxu0 0
    %1455 = vmatprep.subr.bf16.mxu0 0
    %1456 = vmatpush2.bf16.msra.mxu0 0
    %1457 = vmatprep.subr.bf16.mxu0 0
    %1458 = vmatpush2.bf16.msra.mxu0 0
    %1459 = vmatprep.mubr.bf16.mxu0 0
    %1460 = vmatmul.mubr.bf16.gmra.mxu0 %v999
    %v1461 = vpop.f32.mrf.mxu0
    %v1462 = vadd.f32 0.0, %v1461
    %v1463 = vpop.f32.mrf.mxu0
    %v1464 = vadd.f32 0.0, %v1463
    %v1465 = vpop.f32.mrf.mxu0
    %v1466 = vadd.f32 0.0, %v1465
    %v1467 = vpop.f32.mrf.mxu0
    %v1468 = vadd.f32 0.0, %v1467
    %1469 = vdwg.mxu0
    %1470 = vmatprep.subr.bf16.mxu0 %v1317
    %1471 = vmatpush1.bf16.msra.mxu0 %v1316
    %1472 = vmatprep.subr.bf16.mxu0 %v1309
    %1473 = vmatpush1.bf16.msra.mxu0 %v1308
    %1474 = vmatprep.subr.bf16.mxu0 %v1301
    %1475 = vmatpush1.bf16.msra.mxu0 %v1300
    %1476 = vmatprep.subr.bf16.mxu0 %v1293
    %1477 = vmatpush1.bf16.msra.mxu0 %v1292
    %1478 = vmatprep.subr.bf16.mxu0 %v1285
    %1479 = vmatpush1.bf16.msra.mxu0 %v1284
    %1480 = vmatprep.subr.bf16.mxu0 %v1277
    %1481 = vmatpush1.bf16.msra.mxu0 %v1276
    %1482 = vmatprep.subr.bf16.mxu0 %v1269
    %1483 = vmatpush1.bf16.msra.mxu0 %v1268
    %1484 = vmatprep.subr.bf16.mxu0 %v1261
    %1485 = vmatpush1.bf16.msra.mxu0 %v1260
    %1486 = vmatprep.subr.bf16.mxu0 0
    %1487 = vmatpush2.bf16.msra.mxu0 0
    %1488 = vmatprep.subr.bf16.mxu0 0
    %1489 = vmatpush2.bf16.msra.mxu0 0
    %1490 = vmatprep.subr.bf16.mxu0 0
    %1491 = vmatpush2.bf16.msra.mxu0 0
    %1492 = vmatprep.subr.bf16.mxu0 0
    %1493 = vmatpush2.bf16.msra.mxu0 0
    %1494 = vmatprep.subr.bf16.mxu0 0
    %1495 = vmatpush2.bf16.msra.mxu0 0
    %1496 = vmatprep.subr.bf16.mxu0 0
    %1497 = vmatpush2.bf16.msra.mxu0 0
    %1498 = vmatprep.subr.bf16.mxu0 0
    %1499 = vmatpush2.bf16.msra.mxu0 0
    %1500 = vmatprep.subr.bf16.mxu0 0
    %1501 = vmatpush2.bf16.msra.mxu0 0
    %1502 = vmatprep.mubr.bf16.mxu0 0
    %1503 = vmatmul.mubr.bf16.gmra.mxu0 %v999
    %v1504 = vpop.f32.mrf.mxu0
    %v1505 = vadd.f32 0.0, %v1504
    %v1506 = vpop.f32.mrf.mxu0
    %v1507 = vadd.f32 0.0, %v1506
    %v1508 = vpop.f32.mrf.mxu0
    %v1509 = vadd.f32 0.0, %v1508
    %v1510 = vpop.f32.mrf.mxu0
    %v1511 = vadd.f32 0.0, %v1510
    %1512 = vdwg.mxu0
    %1513 = vmatprep.subr.bf16.mxu0 %v1319
    %1514 = vmatpush1.bf16.msra.mxu0 %v1318
    %1515 = vmatprep.subr.bf16.mxu0 %v1311
    %1516 = vmatpush1.bf16.msra.mxu0 %v1310
    %1517 = vmatprep.subr.bf16.mxu0 %v1303
    %1518 = vmatpush1.bf16.msra.mxu0 %v1302
    %1519 = vmatprep.subr.bf16.mxu0 %v1295
    %1520 = vmatpush1.bf16.msra.mxu0 %v1294
    %1521 = vmatprep.subr.bf16.mxu0 %v1287
    %1522 = vmatpush1.bf16.msra.mxu0 %v1286
    %1523 = vmatprep.subr.bf16.mxu0 %v1279
    %1524 = vmatpush1.bf16.msra.mxu0 %v1278
    %1525 = vmatprep.subr.bf16.mxu0 %v1271
    %1526 = vmatpush1.bf16.msra.mxu0 %v1270
    %1527 = vmatprep.subr.bf16.mxu0 %v1263
    %1528 = vmatpush1.bf16.msra.mxu0 %v1262
    %1529 = vmatprep.subr.bf16.mxu0 0
    %1530 = vmatpush2.bf16.msra.mxu0 0
    %1531 = vmatprep.subr.bf16.mxu0 0
    %1532 = vmatpush2.bf16.msra.mxu0 0
    %1533 = vmatprep.subr.bf16.mxu0 0
    %1534 = vmatpush2.bf16.msra.mxu0 0
    %1535 = vmatprep.subr.bf16.mxu0 0
    %1536 = vmatpush2.bf16.msra.mxu0 0
    %1537 = vmatprep.subr.bf16.mxu0 0
    %1538 = vmatpush2.bf16.msra.mxu0 0
    %1539 = vmatprep.subr.bf16.mxu0 0
    %1540 = vmatpush2.bf16.msra.mxu0 0
    %1541 = vmatprep.subr.bf16.mxu0 0
    %1542 = vmatpush2.bf16.msra.mxu0 0
    %1543 = vmatprep.subr.bf16.mxu0 0
    %1544 = vmatpush2.bf16.msra.mxu0 0
    %1545 = vmatprep.mubr.bf16.mxu0 0
    %1546 = vmatmul.mubr.bf16.gmra.mxu0 %v999
    %v1547 = vpop.f32.mrf.mxu0
    %v1548 = vadd.f32 0.0, %v1547
    %v1549 = vpop.f32.mrf.mxu0
    %v1550 = vadd.f32 0.0, %v1549
    %v1551 = vpop.f32.mrf.mxu0
    %v1552 = vadd.f32 0.0, %v1551
    %v1553 = vpop.f32.mrf.mxu0
    %v1554 = vadd.f32 0.0, %v1553
    %1555 = vdwg.mxu0
    %v1556 = vld [vmem:[#allocation2] sm:$0xff]
    %v1557 = vld [vmem:[#allocation2 + $0x8] sm:$0xff]
    %v1558 = vld [vmem:[#allocation2 + $0x10] sm:$0xff]
    %v1559 = vld [vmem:[#allocation2 + $0x18] sm:$0xff]
    %s1560 = scalar_lea.vmem [#allocation3], 224
    %v1561 = vld [vmem:[%s1560] sm:$0xff]
    %v1562 = vld [vmem:[%s1560 + $0x8] sm:$0xff]
    %v1563 = vld [vmem:[%s1560 + $0x10] sm:$0xff]
    %v1564 = vld [vmem:[%s1560 + $0x18] sm:$0xff]
    %v1565 = vsel %vm993, 1, 0
    %v1566 = vsel %vm994, 1, 0
    %vm1567 = vcmp.eq.s32.totalorder %v1565, 1
    %vm1568 = vcmp.eq.s32.totalorder %v1566, 1
    %v1569 = vsel %vm1567, %v1419, %v1505
    %v1570 = vsel %vm1567, %v1421, %v1507
    %v1571 = vsel %vm1567, %v1462, %v1548
    %v1572 = vsel %vm1567, %v1464, %v1550
    %v1573 = vsel %vm1568, %v1423, %v1509
    %v1574 = vsel %vm1568, %v1425, %v1511
    %v1575 = vsel %vm1568, %v1466, %v1552
    %v1576 = vsel %vm1568, %v1468, %v1554
    %v1577 = vadd.f32 %v1556, %v1569
    %v1578 = vadd.f32 %v1557, %v1570
    %v1579 = vadd.f32 %v1558, %v1571
    %v1580 = vadd.f32 %v1559, %v1572
    %v1581 = vadd.f32 %v1561, %v1573
    %v1582 = vadd.f32 %v1562, %v1574
    %v1583 = vadd.f32 %v1563, %v1575
    %v1584 = vadd.f32 %v1564, %v1576
    %v1585 = vxor.u32 %v1577, 2147483648
    %v1586 = vxor.u32 %v1578, 2147483648
    %v1587 = vxor.u32 %v1579, 2147483648
    %v1588 = vxor.u32 %v1581, 2147483648
    %v1589 = vxor.u32 %v1582, 2147483648
    %v1590 = vxor.u32 %v1583, 2147483648
    %v1591 = vmul.f32 %v1585, 1.442695
    %v1592 = vpow.pop %v1591
    %v1593 = vmul.f32 %v1586, 1.442695
    %v1594 = vpow.pop %v1593
    %v1595 = vmul.f32 %v1587, 1.442695
    %v1596 = vpow.pop %v1595
    %v1597 = vmul.f32 %v1588, 1.442695
    %v1598 = vpow.pop %v1597
    %v1599 = vmul.f32 %v1589, 1.442695
    %v1600 = vpow.pop %v1599
    %v1601 = vmul.f32 %v1590, 1.442695
    %v1602 = vpow.pop %v1601
    %v1603 = vadd.f32 %v1592, 1.0
    %v1604 = vadd.f32 %v1594, 1.0
    %v1605 = vadd.f32 %v1596, 1.0
    %v1606 = vadd.f32 %v1598, 1.0
    %v1607 = vadd.f32 %v1600, 1.0
    %v1608 = vadd.f32 %v1602, 1.0
    %v1609 = vrcp.pop %v1603
    %v1610 = vmul.f32 1.0, %v1609
    %v1611 = vrcp.pop %v1604
    %v1612 = vmul.f32 1.0, %v1611
    %v1613 = vrcp.pop %v1605
    %v1614 = vmul.f32 1.0, %v1613
    %v1615 = vrcp.pop %v1606
    %v1616 = vmul.f32 1.0, %v1615
    %v1617 = vrcp.pop %v1607
    %v1618 = vmul.f32 1.0, %v1617
    %v1619 = vrcp.pop %v1608
    %v1620 = vmul.f32 1.0, %v1619
    %v1621 = vtanh.pop %v1580
    %v1622 = vtanh.pop %v1584
    %v1623 = vmul.f32 %v1612, %v997
    %v1624 = vmul.f32 %v1618, %v998
    %v1625 = vmul.f32 %v1610, %v1621
    %v1626 = vmul.f32 %v1616, %v1622
    %v1627 = vadd.f32 %v1623, %v1625
    %v1628 = vadd.f32 %v1624, %v1626
    %v1629 = vtanh.pop %v1627
    %v1630 = vtanh.pop %v1628
    %v1631 = vmul.f32 %v1614, %v1629
    %v1632 = vmul.f32 %v1620, %v1630
    %v1633 = vpack.c.bf16 %v1632, %v1631
    %1634 = vmatprep.subr.bf16.mxu0 %v1313
    %1635 = vmatpush1.bf16.msra.mxu0 %v1312
    %1636 = vmatprep.subr.bf16.mxu0 %v1305
    %1637 = vmatpush1.bf16.msra.mxu0 %v1304
    %1638 = vmatprep.subr.bf16.mxu0 %v1297
    %1639 = vmatpush1.bf16.msra.mxu0 %v1296
    %1640 = vmatprep.subr.bf16.mxu0 %v1289
    %1641 = vmatpush1.bf16.msra.mxu0 %v1288
    %1642 = vmatprep.subr.bf16.mxu0 %v1281
    %1643 = vmatpush1.bf16.msra.mxu0 %v1280
    %1644 = vmatprep.subr.bf16.mxu0 %v1273
    %1645 = vmatpush1.bf16.msra.mxu0 %v1272
    %1646 = vmatprep.subr.bf16.mxu0 %v1265
    %1647 = vmatpush1.bf16.msra.mxu0 %v1264
    %1648 = vmatprep.subr.bf16.mxu0 %v1257
    %1649 = vmatpush1.bf16.msra.mxu0 %v1256
    %1650 = vmatprep.subr.bf16.mxu0 0
    %1651 = vmatpush2.bf16.msra.mxu0 0
    %1652 = vmatprep.subr.bf16.mxu0 0
    %1653 = vmatpush2.bf16.msra.mxu0 0
    %1654 = vmatprep.subr.bf16.mxu0 0
    %1655 = vmatpush2.bf16.msra.mxu0 0
    %1656 = vmatprep.subr.bf16.mxu0 0
    %1657 = vmatpush2.bf16.msra.mxu0 0
    %1658 = vmatprep.subr.bf16.mxu0 0
    %1659 = vmatpush2.bf16.msra.mxu0 0
    %1660 = vmatprep.subr.bf16.mxu0 0
    %1661 = vmatpush2.bf16.msra.mxu0 0
    %1662 = vmatprep.subr.bf16.mxu0 0
    %1663 = vmatpush2.bf16.msra.mxu0 0
    %1664 = vmatprep.subr.bf16.mxu0 0
    %1665 = vmatpush2.bf16.msra.mxu0 0
    %1666 = vmatprep.mubr.bf16.mxu0 0
    %1667 = vmatmul.mubr.bf16.gmra.mxu0 %v1633
    %v1668 = vpop.f32.mrf.mxu0
    %v1669 = vadd.f32 0.0, %v1668
    %v1670 = vpop.f32.mrf.mxu0
    %v1671 = vadd.f32 0.0, %v1670
    %v1672 = vpop.f32.mrf.mxu0
    %v1673 = vadd.f32 0.0, %v1672
    %v1674 = vpop.f32.mrf.mxu0
    %v1675 = vadd.f32 0.0, %v1674
    %1676 = vdwg.mxu0
    %1677 = vmatprep.subr.bf16.mxu0 %v1315
    %1678 = vmatpush1.bf16.msra.mxu0 %v1314
    %1679 = vmatprep.subr.bf16.mxu0 %v1307
    %1680 = vmatpush1.bf16.msra.mxu0 %v1306
    %1681 = vmatprep.subr.bf16.mxu0 %v1299
    %1682 = vmatpush1.bf16.msra.mxu0 %v1298
    %1683 = vmatprep.subr.bf16.mxu0 %v1291
    %1684 = vmatpush1.bf16.msra.mxu0 %v1290
    %1685 = vmatprep.subr.bf16.mxu0 %v1283
    %1686 = vmatpush1.bf16.msra.mxu0 %v1282
    %1687 = vmatprep.subr.bf16.mxu0 %v1275
    %1688 = vmatpush1.bf16.msra.mxu0 %v1274
    %1689 = vmatprep.subr.bf16.mxu0 %v1267
    %1690 = vmatpush1.bf16.msra.mxu0 %v1266
    %1691 = vmatprep.subr.bf16.mxu0 %v1259
    %1692 = vmatpush1.bf16.msra.mxu0 %v1258
    %1693 = vmatprep.subr.bf16.mxu0 0
    %1694 = vmatpush2.bf16.msra.mxu0 0
    %1695 = vmatprep.subr.bf16.mxu0 0
    %1696 = vmatpush2.bf16.msra.mxu0 0
    %1697 = vmatprep.subr.bf16.mxu0 0
    %1698 = vmatpush2.bf16.msra.mxu0 0
    %1699 = vmatprep.subr.bf16.mxu0 0
    %1700 = vmatpush2.bf16.msra.mxu0 0
    %1701 = vmatprep.subr.bf16.mxu0 0
    %1702 = vmatpush2.bf16.msra.mxu0 0
    %1703 = vmatprep.subr.bf16.mxu0 0
    %1704 = vmatpush2.bf16.msra.mxu0 0
    %1705 = vmatprep.subr.bf16.mxu0 0
    %1706 = vmatpush2.bf16.msra.mxu0 0
    %1707 = vmatprep.subr.bf16.mxu0 0
    %1708 = vmatpush2.bf16.msra.mxu0 0
    %1709 = vmatprep.mubr.bf16.mxu0 0
    %1710 = vmatmul.mubr.bf16.gmra.mxu0 %v1633
    %v1711 = vpop.f32.mrf.mxu0
    %v1712 = vadd.f32 0.0, %v1711
    %v1713 = vpop.f32.mrf.mxu0
    %v1714 = vadd.f32 0.0, %v1713
    %v1715 = vpop.f32.mrf.mxu0
    %v1716 = vadd.f32 0.0, %v1715
    %v1717 = vpop.f32.mrf.mxu0
    %v1718 = vadd.f32 0.0, %v1717
    %1719 = vdwg.mxu0
    %1720 = vmatprep.subr.bf16.mxu0 %v1317
    %1721 = vmatpush1.bf16.msra.mxu0 %v1316
    %1722 = vmatprep.subr.bf16.mxu0 %v1309
    %1723 = vmatpush1.bf16.msra.mxu0 %v1308
    %1724 = vmatprep.subr.bf16.mxu0 %v1301
    %1725 = vmatpush1.bf16.msra.mxu0 %v1300
    %1726 = vmatprep.subr.bf16.mxu0 %v1293
    %1727 = vmatpush1.bf16.msra.mxu0 %v1292
    %1728 = vmatprep.subr.bf16.mxu0 %v1285
    %1729 = vmatpush1.bf16.msra.mxu0 %v1284
    %1730 = vmatprep.subr.bf16.mxu0 %v1277
    %1731 = vmatpush1.bf16.msra.mxu0 %v1276
    %1732 = vmatprep.subr.bf16.mxu0 %v1269
    %1733 = vmatpush1.bf16.msra.mxu0 %v1268
    %1734 = vmatprep.subr.bf16.mxu0 %v1261
    %1735 = vmatpush1.bf16.msra.mxu0 %v1260
    %1736 = vmatprep.subr.bf16.mxu0 0
    %1737 = vmatpush2.bf16.msra.mxu0 0
    %1738 = vmatprep.subr.bf16.mxu0 0
    %1739 = vmatpush2.bf16.msra.mxu0 0
    %1740 = vmatprep.subr.bf16.mxu0 0
    %1741 = vmatpush2.bf16.msra.mxu0 0
    %1742 = vmatprep.subr.bf16.mxu0 0
    %1743 = vmatpush2.bf16.msra.mxu0 0
    %1744 = vmatprep.subr.bf16.mxu0 0
    %1745 = vmatpush2.bf16.msra.mxu0 0
    %1746 = vmatprep.subr.bf16.mxu0 0
    %1747 = vmatpush2.bf16.msra.mxu0 0
    %1748 = vmatprep.subr.bf16.mxu0 0
    %1749 = vmatpush2.bf16.msra.mxu0 0
    %1750 = vmatprep.subr.bf16.mxu0 0
    %1751 = vmatpush2.bf16.msra.mxu0 0
    %1752 = vmatprep.mubr.bf16.mxu0 0
    %1753 = vmatmul.mubr.bf16.gmra.mxu0 %v1633
    %v1754 = vpop.f32.mrf.mxu0
    %v1755 = vadd.f32 0.0, %v1754
    %v1756 = vpop.f32.mrf.mxu0
    %v1757 = vadd.f32 0.0, %v1756
    %v1758 = vpop.f32.mrf.mxu0
    %v1759 = vadd.f32 0.0, %v1758
    %v1760 = vpop.f32.mrf.mxu0
    %v1761 = vadd.f32 0.0, %v1760
    %1762 = vdwg.mxu0
    %1763 = vmatprep.subr.bf16.mxu0 %v1319
    %1764 = vmatpush1.bf16.msra.mxu0 %v1318
    %1765 = vmatprep.subr.bf16.mxu0 %v1311
    %1766 = vmatpush1.bf16.msra.mxu0 %v1310
    %1767 = vmatprep.subr.bf16.mxu0 %v1303
    %1768 = vmatpush1.bf16.msra.mxu0 %v1302
    %1769 = vmatprep.subr.bf16.mxu0 %v1295
    %1770 = vmatpush1.bf16.msra.mxu0 %v1294
    %1771 = vmatprep.subr.bf16.mxu0 %v1287
    %1772 = vmatpush1.bf16.msra.mxu0 %v1286
    %1773 = vmatprep.subr.bf16.mxu0 %v1279
    %1774 = vmatpush1.bf16.msra.mxu0 %v1278
    %1775 = vmatprep.subr.bf16.mxu0 %v1271
    %1776 = vmatpush1.bf16.msra.mxu0 %v1270
    %1777 = vmatprep.subr.bf16.mxu0 %v1263
    %1778 = vmatpush1.bf16.msra.mxu0 %v1262
    %1779 = vmatprep.subr.bf16.mxu0 0
    %1780 = vmatpush2.bf16.msra.mxu0 0
    %1781 = vmatprep.subr.bf16.mxu0 0
    %1782 = vmatpush2.bf16.msra.mxu0 0
    %1783 = vmatprep.subr.bf16.mxu0 0
    %1784 = vmatpush2.bf16.msra.mxu0 0
    %1785 = vmatprep.subr.bf16.mxu0 0
    %1786 = vmatpush2.bf16.msra.mxu0 0
    %1787 = vmatprep.subr.bf16.mxu0 0
    %1788 = vmatpush2.bf16.msra.mxu0 0
    %1789 = vmatprep.subr.bf16.mxu0 0
    %1790 = vmatpush2.bf16.msra.mxu0 0
    %1791 = vmatprep.subr.bf16.mxu0 0
    %1792 = vmatpush2.bf16.msra.mxu0 0
    %1793 = vmatprep.subr.bf16.mxu0 0
    %1794 = vmatpush2.bf16.msra.mxu0 0
    %1795 = vmatprep.mubr.bf16.mxu0 0
    %1796 = vmatmul.mubr.bf16.gmra.mxu0 %v1633
    %v1797 = vpop.f32.mrf.mxu0
    %v1798 = vadd.f32 0.0, %v1797
    %v1799 = vpop.f32.mrf.mxu0
    %v1800 = vadd.f32 0.0, %v1799
    %v1801 = vpop.f32.mrf.mxu0
    %v1802 = vadd.f32 0.0, %v1801
    %v1803 = vpop.f32.mrf.mxu0
    %v1804 = vadd.f32 0.0, %v1803
    %1805 = vdwg.mxu0
    %s1806 = scalar_lea.vmem [#allocation2], 32
    %v1807 = vld [vmem:[%s1806] sm:$0xff]
    %v1808 = vld [vmem:[%s1806 + $0x8] sm:$0xff]
    %v1809 = vld [vmem:[%s1806 + $0x10] sm:$0xff]
    %v1810 = vld [vmem:[%s1806 + $0x18] sm:$0xff]
    %s1811 = scalar_lea.vmem [#allocation3], 192
    %v1812 = vld [vmem:[%s1811] sm:$0xff]
    %v1813 = vld [vmem:[%s1811 + $0x8] sm:$0xff]
    %v1814 = vld [vmem:[%s1811 + $0x10] sm:$0xff]
    %v1815 = vld [vmem:[%s1811 + $0x18] sm:$0xff]
    %v1816 = vsel %vm1567, %v1669, %v1755
    %v1817 = vsel %vm1567, %v1671, %v1757
    %v1818 = vsel %vm1567, %v1712, %v1798
    %v1819 = vsel %vm1567, %v1714, %v1800
    %v1820 = vsel %vm1568, %v1673, %v1759
    %v1821 = vsel %vm1568, %v1675, %v1761
    %v1822 = vsel %vm1568, %v1716, %v1802
    %v1823 = vsel %vm1568, %v1718, %v1804
    %v1824 = vadd.f32 %v1807, %v1816
    %v1825 = vadd.f32 %v1808, %v1817
    %v1826 = vadd.f32 %v1809, %v1818
    %v1827 = vadd.f32 %v1810, %v1819
    %v1828 = vadd.f32 %v1812, %v1820
    %v1829 = vadd.f32 %v1813, %v1821
    %v1830 = vadd.f32 %v1814, %v1822
    %v1831 = vadd.f32 %v1815, %v1823
    %v1832 = vxor.u32 %v1824, 2147483648
    %v1833 = vxor.u32 %v1825, 2147483648
    %v1834 = vxor.u32 %v1826, 2147483648
    %v1835 = vxor.u32 %v1828, 2147483648
    %v1836 = vxor.u32 %v1829, 2147483648
    %v1837 = vxor.u32 %v1830, 2147483648
    %v1838 = vmul.f32 %v1832, 1.442695
    %v1839 = vpow.pop %v1838
    %v1840 = vmul.f32 %v1833, 1.442695
    %v1841 = vpow.pop %v1840
    %v1842 = vmul.f32 %v1834, 1.442695
    %v1843 = vpow.pop %v1842
    %v1844 = vmul.f32 %v1835, 1.442695
    %v1845 = vpow.pop %v1844
    %v1846 = vmul.f32 %v1836, 1.442695
    %v1847 = vpow.pop %v1846
    %v1848 = vmul.f32 %v1837, 1.442695
    %v1849 = vpow.pop %v1848
    %v1850 = vadd.f32 %v1839, 1.0
    %v1851 = vadd.f32 %v1841, 1.0
    %v1852 = vadd.f32 %v1843, 1.0
    %v1853 = vadd.f32 %v1845, 1.0
    %v1854 = vadd.f32 %v1847, 1.0
    %v1855 = vadd.f32 %v1849, 1.0
    %v1856 = vrcp.pop %v1850
    %v1857 = vmul.f32 1.0, %v1856
    %v1858 = vrcp.pop %v1851
    %v1859 = vmul.f32 1.0, %v1858
    %v1860 = vrcp.pop %v1852
    %v1861 = vmul.f32 1.0, %v1860
    %v1862 = vrcp.pop %v1853
    %v1863 = vmul.f32 1.0, %v1862
    %v1864 = vrcp.pop %v1854
    %v1865 = vmul.f32 1.0, %v1864
    %v1866 = vrcp.pop %v1855
    %v1867 = vmul.f32 1.0, %v1866
    %v1868 = vtanh.pop %v1827
    %v1869 = vtanh.pop %v1831
    %v1870 = vmul.f32 %v1859, %v1627
    %v1871 = vmul.f32 %v1865, %v1628
    %v1872 = vmul.f32 %v1857, %v1868
    %v1873 = vmul.f32 %v1863, %v1869
    %v1874 = vadd.f32 %v1870, %v1872
    %v1875 = vadd.f32 %v1871, %v1873
    %v1876 = vtanh.pop %v1874
    %v1877 = vtanh.pop %v1875
    %v1878 = vmul.f32 %v1861, %v1876
    %v1879 = vmul.f32 %v1867, %v1877
    %v1880 = vpack.c.bf16 %v1879, %v1878
    %1881 = vmatprep.subr.bf16.mxu0 %v1313
    %1882 = vmatpush1.bf16.msra.mxu0 %v1312
    %1883 = vmatprep.subr.bf16.mxu0 %v1305
    %1884 = vmatpush1.bf16.msra.mxu0 %v1304
    %1885 = vmatprep.subr.bf16.mxu0 %v1297
    %1886 = vmatpush1.bf16.msra.mxu0 %v1296
    %1887 = vmatprep.subr.bf16.mxu0 %v1289
    %1888 = vmatpush1.bf16.msra.mxu0 %v1288
    %1889 = vmatprep.subr.bf16.mxu0 %v1281
    %1890 = vmatpush1.bf16.msra.mxu0 %v1280
    %1891 = vmatprep.subr.bf16.mxu0 %v1273
    %1892 = vmatpush1.bf16.msra.mxu0 %v1272
    %1893 = vmatprep.subr.bf16.mxu0 %v1265
    %1894 = vmatpush1.bf16.msra.mxu0 %v1264
    %1895 = vmatprep.subr.bf16.mxu0 %v1257
    %1896 = vmatpush1.bf16.msra.mxu0 %v1256
    %1897 = vmatprep.subr.bf16.mxu0 0
    %1898 = vmatpush2.bf16.msra.mxu0 0
    %1899 = vmatprep.subr.bf16.mxu0 0
    %1900 = vmatpush2.bf16.msra.mxu0 0
    %1901 = vmatprep.subr.bf16.mxu0 0
    %1902 = vmatpush2.bf16.msra.mxu0 0
    %1903 = vmatprep.subr.bf16.mxu0 0
    %1904 = vmatpush2.bf16.msra.mxu0 0
    %1905 = vmatprep.subr.bf16.mxu0 0
    %1906 = vmatpush2.bf16.msra.mxu0 0
    %1907 = vmatprep.subr.bf16.mxu0 0
    %1908 = vmatpush2.bf16.msra.mxu0 0
    %1909 = vmatprep.subr.bf16.mxu0 0
    %1910 = vmatpush2.bf16.msra.mxu0 0
    %1911 = vmatprep.subr.bf16.mxu0 0
    %1912 = vmatpush2.bf16.msra.mxu0 0
    %1913 = vmatprep.mubr.bf16.mxu0 0
    %1914 = vmatmul.mubr.bf16.gmra.mxu0 %v1880
    %v1915 = vpop.f32.mrf.mxu0
    %v1916 = vadd.f32 0.0, %v1915
    %v1917 = vpop.f32.mrf.mxu0
    %v1918 = vadd.f32 0.0, %v1917
    %v1919 = vpop.f32.mrf.mxu0
    %v1920 = vadd.f32 0.0, %v1919
    %v1921 = vpop.f32.mrf.mxu0
    %v1922 = vadd.f32 0.0, %v1921
    %1923 = vdwg.mxu0
    %1924 = vmatprep.subr.bf16.mxu0 %v1315
    %1925 = vmatpush1.bf16.msra.mxu0 %v1314
    %1926 = vmatprep.subr.bf16.mxu0 %v1307
    %1927 = vmatpush1.bf16.msra.mxu0 %v1306
    %1928 = vmatprep.subr.bf16.mxu0 %v1299
    %1929 = vmatpush1.bf16.msra.mxu0 %v1298
    %1930 = vmatprep.subr.bf16.mxu0 %v1291
    %1931 = vmatpush1.bf16.msra.mxu0 %v1290
    %1932 = vmatprep.subr.bf16.mxu0 %v1283
    %1933 = vmatpush1.bf16.msra.mxu0 %v1282
    %1934 = vmatprep.subr.bf16.mxu0 %v1275
    %1935 = vmatpush1.bf16.msra.mxu0 %v1274
    %1936 = vmatprep.subr.bf16.mxu0 %v1267
    %1937 = vmatpush1.bf16.msra.mxu0 %v1266
    %1938 = vmatprep.subr.bf16.mxu0 %v1259
    %1939 = vmatpush1.bf16.msra.mxu0 %v1258
    %1940 = vmatprep.subr.bf16.mxu0 0
    %1941 = vmatpush2.bf16.msra.mxu0 0
    %1942 = vmatprep.subr.bf16.mxu0 0
    %1943 = vmatpush2.bf16.msra.mxu0 0
    %1944 = vmatprep.subr.bf16.mxu0 0
    %1945 = vmatpush2.bf16.msra.mxu0 0
    %1946 = vmatprep.subr.bf16.mxu0 0
    %1947 = vmatpush2.bf16.msra.mxu0 0
    %1948 = vmatprep.subr.bf16.mxu0 0
    %1949 = vmatpush2.bf16.msra.mxu0 0
    %1950 = vmatprep.subr.bf16.mxu0 0
    %1951 = vmatpush2.bf16.msra.mxu0 0
    %1952 = vmatprep.subr.bf16.mxu0 0
    %1953 = vmatpush2.bf16.msra.mxu0 0
    %1954 = vmatprep.subr.bf16.mxu0 0
    %1955 = vmatpush2.bf16.msra.mxu0 0
    %1956 = vmatprep.mubr.bf16.mxu0 0
    %1957 = vmatmul.mubr.bf16.gmra.mxu0 %v1880
    %v1958 = vpop.f32.mrf.mxu0
    %v1959 = vadd.f32 0.0, %v1958
    %v1960 = vpop.f32.mrf.mxu0
    %v1961 = vadd.f32 0.0, %v1960
    %v1962 = vpop.f32.mrf.mxu0
    %v1963 = vadd.f32 0.0, %v1962
    %v1964 = vpop.f32.mrf.mxu0
    %v1965 = vadd.f32 0.0, %v1964
    %1966 = vdwg.mxu0
    %1967 = vmatprep.subr.bf16.mxu0 %v1317
    %1968 = vmatpush1.bf16.msra.mxu0 %v1316
    %1969 = vmatprep.subr.bf16.mxu0 %v1309
    %1970 = vmatpush1.bf16.msra.mxu0 %v1308
    %1971 = vmatprep.subr.bf16.mxu0 %v1301
    %1972 = vmatpush1.bf16.msra.mxu0 %v1300
    %1973 = vmatprep.subr.bf16.mxu0 %v1293
    %1974 = vmatpush1.bf16.msra.mxu0 %v1292
    %1975 = vmatprep.subr.bf16.mxu0 %v1285
    %1976 = vmatpush1.bf16.msra.mxu0 %v1284
    %1977 = vmatprep.subr.bf16.mxu0 %v1277
    %1978 = vmatpush1.bf16.msra.mxu0 %v1276
    %1979 = vmatprep.subr.bf16.mxu0 %v1269
    %1980 = vmatpush1.bf16.msra.mxu0 %v1268
    %1981 = vmatprep.subr.bf16.mxu0 %v1261
    %1982 = vmatpush1.bf16.msra.mxu0 %v1260
    %1983 = vmatprep.subr.bf16.mxu0 0
    %1984 = vmatpush2.bf16.msra.mxu0 0
    %1985 = vmatprep.subr.bf16.mxu0 0
    %1986 = vmatpush2.bf16.msra.mxu0 0
    %1987 = vmatprep.subr.bf16.mxu0 0
    %1988 = vmatpush2.bf16.msra.mxu0 0
    %1989 = vmatprep.subr.bf16.mxu0 0
    %1990 = vmatpush2.bf16.msra.mxu0 0
    %1991 = vmatprep.subr.bf16.mxu0 0
    %1992 = vmatpush2.bf16.msra.mxu0 0
    %1993 = vmatprep.subr.bf16.mxu0 0
    %1994 = vmatpush2.bf16.msra.mxu0 0
    %1995 = vmatprep.subr.bf16.mxu0 0
    %1996 = vmatpush2.bf16.msra.mxu0 0
    %1997 = vmatprep.subr.bf16.mxu0 0
    %1998 = vmatpush2.bf16.msra.mxu0 0
    %1999 = vmatprep.mubr.bf16.mxu0 0
    %2000 = vmatmul.mubr.bf16.gmra.mxu0 %v1880
    %v2001 = vpop.f32.mrf.mxu0
    %v2002 = vadd.f32 0.0, %v2001
    %v2003 = vpop.f32.mrf.mxu0
    %v2004 = vadd.f32 0.0, %v2003
    %v2005 = vpop.f32.mrf.mxu0
    %v2006 = vadd.f32 0.0, %v2005
    %v2007 = vpop.f32.mrf.mxu0
    %v2008 = vadd.f32 0.0, %v2007
    %2009 = vdwg.mxu0
    %2010 = vmatprep.subr.bf16.mxu0 %v1319
    %2011 = vmatpush1.bf16.msra.mxu0 %v1318
    %2012 = vmatprep.subr.bf16.mxu0 %v1311
    %2013 = vmatpush1.bf16.msra.mxu0 %v1310
    %2014 = vmatprep.subr.bf16.mxu0 %v1303
    %2015 = vmatpush1.bf16.msra.mxu0 %v1302
    %2016 = vmatprep.subr.bf16.mxu0 %v1295
    %2017 = vmatpush1.bf16.msra.mxu0 %v1294
    %2018 = vmatprep.subr.bf16.mxu0 %v1287
    %2019 = vmatpush1.bf16.msra.mxu0 %v1286
    %2020 = vmatprep.subr.bf16.mxu0 %v1279
    %2021 = vmatpush1.bf16.msra.mxu0 %v1278
    %2022 = vmatprep.subr.bf16.mxu0 %v1271
    %2023 = vmatpush1.bf16.msra.mxu0 %v1270
    %2024 = vmatprep.subr.bf16.mxu0 %v1263
    %2025 = vmatpush1.bf16.msra.mxu0 %v1262
    %2026 = vmatprep.subr.bf16.mxu0 0
    %2027 = vmatpush2.bf16.msra.mxu0 0
    %2028 = vmatprep.subr.bf16.mxu0 0
    %2029 = vmatpush2.bf16.msra.mxu0 0
    %2030 = vmatprep.subr.bf16.mxu0 0
    %2031 = vmatpush2.bf16.msra.mxu0 0
    %2032 = vmatprep.subr.bf16.mxu0 0
    %2033 = vmatpush2.bf16.msra.mxu0 0
    %2034 = vmatprep.subr.bf16.mxu0 0
    %2035 = vmatpush2.bf16.msra.mxu0 0
    %2036 = vmatprep.subr.bf16.mxu0 0
    %2037 = vmatpush2.bf16.msra.mxu0 0
    %2038 = vmatprep.subr.bf16.mxu0 0
    %2039 = vmatpush2.bf16.msra.mxu0 0
    %2040 = vmatprep.subr.bf16.mxu0 0
    %2041 = vmatpush2.bf16.msra.mxu0 0
    %2042 = vmatprep.mubr.bf16.mxu0 0
    %2043 = vmatmul.mubr.bf16.gmra.mxu0 %v1880
    %v2044 = vpop.f32.mrf.mxu0
    %v2045 = vadd.f32 0.0, %v2044
    %v2046 = vpop.f32.mrf.mxu0
    %v2047 = vadd.f32 0.0, %v2046
    %v2048 = vpop.f32.mrf.mxu0
    %v2049 = vadd.f32 0.0, %v2048
    %v2050 = vpop.f32.mrf.mxu0
    %v2051 = vadd.f32 0.0, %v2050
    %2052 = vdwg.mxu0
    %s2053 = scalar_lea.vmem [#allocation2], 64
    %v2054 = vld [vmem:[%s2053] sm:$0xff]
    %v2055 = vld [vmem:[%s2053 + $0x8] sm:$0xff]
    %v2056 = vld [vmem:[%s2053 + $0x10] sm:$0xff]
    %v2057 = vld [vmem:[%s2053 + $0x18] sm:$0xff]
    %s2058 = scalar_lea.vmem [#allocation3], 160
    %v2059 = vld [vmem:[%s2058] sm:$0xff]
    %v2060 = vld [vmem:[%s2058 + $0x8] sm:$0xff]
    %v2061 = vld [vmem:[%s2058 + $0x10] sm:$0xff]
    %v2062 = vld [vmem:[%s2058 + $0x18] sm:$0xff]
    %v2063 = vsel %vm1567, %v1916, %v2002
    %v2064 = vsel %vm1567, %v1918, %v2004
    %v2065 = vsel %vm1567, %v1959, %v2045
    %v2066 = vsel %vm1567, %v1961, %v2047
    %v2067 = vsel %vm1568, %v1920, %v2006
    %v2068 = vsel %vm1568, %v1922, %v2008
    %v2069 = vsel %vm1568, %v1963, %v2049
    %v2070 = vsel %vm1568, %v1965, %v2051
    %v2071 = vadd.f32 %v2054, %v2063
    %v2072 = vadd.f32 %v2055, %v2064
    %v2073 = vadd.f32 %v2056, %v2065
    %v2074 = vadd.f32 %v2057, %v2066
    %v2075 = vadd.f32 %v2059, %v2067
    %v2076 = vadd.f32 %v2060, %v2068
    %v2077 = vadd.f32 %v2061, %v2069
    %v2078 = vadd.f32 %v2062, %v2070
    %v2079 = vxor.u32 %v2071, 2147483648
    %v2080 = vxor.u32 %v2072, 2147483648
    %v2081 = vxor.u32 %v2073, 2147483648
    %v2082 = vxor.u32 %v2075, 2147483648
    %v2083 = vxor.u32 %v2076, 2147483648
    %v2084 = vxor.u32 %v2077, 2147483648
    %v2085 = vmul.f32 %v2079, 1.442695
    %v2086 = vpow.pop %v2085
    %v2087 = vmul.f32 %v2080, 1.442695
    %v2088 = vpow.pop %v2087
    %v2089 = vmul.f32 %v2081, 1.442695
    %v2090 = vpow.pop %v2089
    %v2091 = vmul.f32 %v2082, 1.442695
    %v2092 = vpow.pop %v2091
    %v2093 = vmul.f32 %v2083, 1.442695
    %v2094 = vpow.pop %v2093
    %v2095 = vmul.f32 %v2084, 1.442695
    %v2096 = vpow.pop %v2095
    %v2097 = vadd.f32 %v2086, 1.0
    %v2098 = vadd.f32 %v2088, 1.0
    %v2099 = vadd.f32 %v2090, 1.0
    %v2100 = vadd.f32 %v2092, 1.0
    %v2101 = vadd.f32 %v2094, 1.0
    %v2102 = vadd.f32 %v2096, 1.0
    %v2103 = vrcp.pop %v2097
    %v2104 = vmul.f32 1.0, %v2103
    %v2105 = vrcp.pop %v2098
    %v2106 = vmul.f32 1.0, %v2105
    %v2107 = vrcp.pop %v2099
    %v2108 = vmul.f32 1.0, %v2107
    %v2109 = vrcp.pop %v2100
    %v2110 = vmul.f32 1.0, %v2109
    %v2111 = vrcp.pop %v2101
    %v2112 = vmul.f32 1.0, %v2111
    %v2113 = vrcp.pop %v2102
    %v2114 = vmul.f32 1.0, %v2113
    %v2115 = vtanh.pop %v2074
    %v2116 = vtanh.pop %v2078
    %v2117 = vmul.f32 %v2106, %v1874
    %v2118 = vmul.f32 %v2112, %v1875
    %v2119 = vmul.f32 %v2104, %v2115
    %v2120 = vmul.f32 %v2110, %v2116
    %v2121 = vadd.f32 %v2117, %v2119
    %v2122 = vadd.f32 %v2118, %v2120
    %v2123 = vtanh.pop %v2121
    %v2124 = vtanh.pop %v2122
    %v2125 = vmul.f32 %v2108, %v2123
    %v2126 = vmul.f32 %v2114, %v2124
    %v2127 = vpack.c.bf16 %v2126, %v2125
    %2128 = vmatprep.subr.bf16.mxu0 %v1313
    %2129 = vmatpush1.bf16.msra.mxu0 %v1312
    %2130 = vmatprep.subr.bf16.mxu0 %v1305
    %2131 = vmatpush1.bf16.msra.mxu0 %v1304
    %2132 = vmatprep.subr.bf16.mxu0 %v1297
    %2133 = vmatpush1.bf16.msra.mxu0 %v1296
    %2134 = vmatprep.subr.bf16.mxu0 %v1289
    %2135 = vmatpush1.bf16.msra.mxu0 %v1288
    %2136 = vmatprep.subr.bf16.mxu0 %v1281
    %2137 = vmatpush1.bf16.msra.mxu0 %v1280
    %2138 = vmatprep.subr.bf16.mxu0 %v1273
    %2139 = vmatpush1.bf16.msra.mxu0 %v1272
    %2140 = vmatprep.subr.bf16.mxu0 %v1265
    %2141 = vmatpush1.bf16.msra.mxu0 %v1264
    %2142 = vmatprep.subr.bf16.mxu0 %v1257
    %2143 = vmatpush1.bf16.msra.mxu0 %v1256
    %2144 = vmatprep.subr.bf16.mxu0 0
    %2145 = vmatpush2.bf16.msra.mxu0 0
    %2146 = vmatprep.subr.bf16.mxu0 0
    %2147 = vmatpush2.bf16.msra.mxu0 0
    %2148 = vmatprep.subr.bf16.mxu0 0
    %2149 = vmatpush2.bf16.msra.mxu0 0
    %2150 = vmatprep.subr.bf16.mxu0 0
    %2151 = vmatpush2.bf16.msra.mxu0 0
    %2152 = vmatprep.subr.bf16.mxu0 0
    %2153 = vmatpush2.bf16.msra.mxu0 0
    %2154 = vmatprep.subr.bf16.mxu0 0
    %2155 = vmatpush2.bf16.msra.mxu0 0
    %2156 = vmatprep.subr.bf16.mxu0 0
    %2157 = vmatpush2.bf16.msra.mxu0 0
    %2158 = vmatprep.subr.bf16.mxu0 0
    %2159 = vmatpush2.bf16.msra.mxu0 0
    %2160 = vmatprep.mubr.bf16.mxu0 0
    %2161 = vmatmul.mubr.bf16.gmra.mxu0 %v2127
    %v2162 = vpop.f32.mrf.mxu0
    %v2163 = vadd.f32 0.0, %v2162
    %v2164 = vpop.f32.mrf.mxu0
    %v2165 = vadd.f32 0.0, %v2164
    %v2166 = vpop.f32.mrf.mxu0
    %v2167 = vadd.f32 0.0, %v2166
    %v2168 = vpop.f32.mrf.mxu0
    %v2169 = vadd.f32 0.0, %v2168
    %2170 = vdwg.mxu0
    %2171 = vmatprep.subr.bf16.mxu0 %v1315
    %2172 = vmatpush1.bf16.msra.mxu0 %v1314
    %2173 = vmatprep.subr.bf16.mxu0 %v1307
    %2174 = vmatpush1.bf16.msra.mxu0 %v1306
    %2175 = vmatprep.subr.bf16.mxu0 %v1299
    %2176 = vmatpush1.bf16.msra.mxu0 %v1298
    %2177 = vmatprep.subr.bf16.mxu0 %v1291
    %2178 = vmatpush1.bf16.msra.mxu0 %v1290
    %2179 = vmatprep.subr.bf16.mxu0 %v1283
    %2180 = vmatpush1.bf16.msra.mxu0 %v1282
    %2181 = vmatprep.subr.bf16.mxu0 %v1275
    %2182 = vmatpush1.bf16.msra.mxu0 %v1274
    %2183 = vmatprep.subr.bf16.mxu0 %v1267
    %2184 = vmatpush1.bf16.msra.mxu0 %v1266
    %2185 = vmatprep.subr.bf16.mxu0 %v1259
    %2186 = vmatpush1.bf16.msra.mxu0 %v1258
    %2187 = vmatprep.subr.bf16.mxu0 0
    %2188 = vmatpush2.bf16.msra.mxu0 0
    %2189 = vmatprep.subr.bf16.mxu0 0
    %2190 = vmatpush2.bf16.msra.mxu0 0
    %2191 = vmatprep.subr.bf16.mxu0 0
    %2192 = vmatpush2.bf16.msra.mxu0 0
    %2193 = vmatprep.subr.bf16.mxu0 0
    %2194 = vmatpush2.bf16.msra.mxu0 0
    %2195 = vmatprep.subr.bf16.mxu0 0
    %2196 = vmatpush2.bf16.msra.mxu0 0
    %2197 = vmatprep.subr.bf16.mxu0 0
    %2198 = vmatpush2.bf16.msra.mxu0 0
    %2199 = vmatprep.subr.bf16.mxu0 0
    %2200 = vmatpush2.bf16.msra.mxu0 0
    %2201 = vmatprep.subr.bf16.mxu0 0
    %2202 = vmatpush2.bf16.msra.mxu0 0
    %2203 = vmatprep.mubr.bf16.mxu0 0
    %2204 = vmatmul.mubr.bf16.gmra.mxu0 %v2127
    %v2205 = vpop.f32.mrf.mxu0
    %v2206 = vadd.f32 0.0, %v2205
    %v2207 = vpop.f32.mrf.mxu0
    %v2208 = vadd.f32 0.0, %v2207
    %v2209 = vpop.f32.mrf.mxu0
    %v2210 = vadd.f32 0.0, %v2209
    %v2211 = vpop.f32.mrf.mxu0
    %v2212 = vadd.f32 0.0, %v2211
    %2213 = vdwg.mxu0
    %2214 = vmatprep.subr.bf16.mxu0 %v1317
    %2215 = vmatpush1.bf16.msra.mxu0 %v1316
    %2216 = vmatprep.subr.bf16.mxu0 %v1309
    %2217 = vmatpush1.bf16.msra.mxu0 %v1308
    %2218 = vmatprep.subr.bf16.mxu0 %v1301
    %2219 = vmatpush1.bf16.msra.mxu0 %v1300
    %2220 = vmatprep.subr.bf16.mxu0 %v1293
    %2221 = vmatpush1.bf16.msra.mxu0 %v1292
    %2222 = vmatprep.subr.bf16.mxu0 %v1285
    %2223 = vmatpush1.bf16.msra.mxu0 %v1284
    %2224 = vmatprep.subr.bf16.mxu0 %v1277
    %2225 = vmatpush1.bf16.msra.mxu0 %v1276
    %2226 = vmatprep.subr.bf16.mxu0 %v1269
    %2227 = vmatpush1.bf16.msra.mxu0 %v1268
    %2228 = vmatprep.subr.bf16.mxu0 %v1261
    %2229 = vmatpush1.bf16.msra.mxu0 %v1260
    %2230 = vmatprep.subr.bf16.mxu0 0
    %2231 = vmatpush2.bf16.msra.mxu0 0
    %2232 = vmatprep.subr.bf16.mxu0 0
    %2233 = vmatpush2.bf16.msra.mxu0 0
    %2234 = vmatprep.subr.bf16.mxu0 0
    %2235 = vmatpush2.bf16.msra.mxu0 0
    %2236 = vmatprep.subr.bf16.mxu0 0
    %2237 = vmatpush2.bf16.msra.mxu0 0
    %2238 = vmatprep.subr.bf16.mxu0 0
    %2239 = vmatpush2.bf16.msra.mxu0 0
    %2240 = vmatprep.subr.bf16.mxu0 0
    %2241 = vmatpush2.bf16.msra.mxu0 0
    %2242 = vmatprep.subr.bf16.mxu0 0
    %2243 = vmatpush2.bf16.msra.mxu0 0
    %2244 = vmatprep.subr.bf16.mxu0 0
    %2245 = vmatpush2.bf16.msra.mxu0 0
    %2246 = vmatprep.mubr.bf16.mxu0 0
    %2247 = vmatmul.mubr.bf16.gmra.mxu0 %v2127
    %v2248 = vpop.f32.mrf.mxu0
    %v2249 = vadd.f32 0.0, %v2248
    %v2250 = vpop.f32.mrf.mxu0
    %v2251 = vadd.f32 0.0, %v2250
    %v2252 = vpop.f32.mrf.mxu0
    %v2253 = vadd.f32 0.0, %v2252
    %v2254 = vpop.f32.mrf.mxu0
    %v2255 = vadd.f32 0.0, %v2254
    %2256 = vdwg.mxu0
    %2257 = vmatprep.subr.bf16.mxu0 %v1319
    %2258 = vmatpush1.bf16.msra.mxu0 %v1318
    %2259 = vmatprep.subr.bf16.mxu0 %v1311
    %2260 = vmatpush1.bf16.msra.mxu0 %v1310
    %2261 = vmatprep.subr.bf16.mxu0 %v1303
    %2262 = vmatpush1.bf16.msra.mxu0 %v1302
    %2263 = vmatprep.subr.bf16.mxu0 %v1295
    %2264 = vmatpush1.bf16.msra.mxu0 %v1294
    %2265 = vmatprep.subr.bf16.mxu0 %v1287
    %2266 = vmatpush1.bf16.msra.mxu0 %v1286
    %2267 = vmatprep.subr.bf16.mxu0 %v1279
    %2268 = vmatpush1.bf16.msra.mxu0 %v1278
    %2269 = vmatprep.subr.bf16.mxu0 %v1271
    %2270 = vmatpush1.bf16.msra.mxu0 %v1270
    %2271 = vmatprep.subr.bf16.mxu0 %v1263
    %2272 = vmatpush1.bf16.msra.mxu0 %v1262
    %2273 = vmatprep.subr.bf16.mxu0 0
    %2274 = vmatpush2.bf16.msra.mxu0 0
    %2275 = vmatprep.subr.bf16.mxu0 0
    %2276 = vmatpush2.bf16.msra.mxu0 0
    %2277 = vmatprep.subr.bf16.mxu0 0
    %2278 = vmatpush2.bf16.msra.mxu0 0
    %2279 = vmatprep.subr.bf16.mxu0 0
    %2280 = vmatpush2.bf16.msra.mxu0 0
    %2281 = vmatprep.subr.bf16.mxu0 0
    %2282 = vmatpush2.bf16.msra.mxu0 0
    %2283 = vmatprep.subr.bf16.mxu0 0
    %2284 = vmatpush2.bf16.msra.mxu0 0
    %2285 = vmatprep.subr.bf16.mxu0 0
    %2286 = vmatpush2.bf16.msra.mxu0 0
    %2287 = vmatprep.subr.bf16.mxu0 0
    %2288 = vmatpush2.bf16.msra.mxu0 0
    %2289 = vmatprep.mubr.bf16.mxu0 0
    %2290 = vmatmul.mubr.bf16.gmra.mxu0 %v2127
    %v2291 = vpop.f32.mrf.mxu0
    %v2292 = vadd.f32 0.0, %v2291
    %v2293 = vpop.f32.mrf.mxu0
    %v2294 = vadd.f32 0.0, %v2293
    %v2295 = vpop.f32.mrf.mxu0
    %v2296 = vadd.f32 0.0, %v2295
    %v2297 = vpop.f32.mrf.mxu0
    %v2298 = vadd.f32 0.0, %v2297
    %2299 = vdwg.mxu0
    %s2300 = scalar_lea.vmem [#allocation2], 96
    %v2301 = vld [vmem:[%s2300] sm:$0xff]
    %v2302 = vld [vmem:[%s2300 + $0x8] sm:$0xff]
    %v2303 = vld [vmem:[%s2300 + $0x10] sm:$0xff]
    %v2304 = vld [vmem:[%s2300 + $0x18] sm:$0xff]
    %s2305 = scalar_lea.vmem [#allocation3], 128
    %v2306 = vld [vmem:[%s2305] sm:$0xff]
    %v2307 = vld [vmem:[%s2305 + $0x8] sm:$0xff]
    %v2308 = vld [vmem:[%s2305 + $0x10] sm:$0xff]
    %v2309 = vld [vmem:[%s2305 + $0x18] sm:$0xff]
    %v2310 = vsel %vm1567, %v2163, %v2249
    %v2311 = vsel %vm1567, %v2165, %v2251
    %v2312 = vsel %vm1567, %v2206, %v2292
    %v2313 = vsel %vm1567, %v2208, %v2294
    %v2314 = vsel %vm1568, %v2167, %v2253
    %v2315 = vsel %vm1568, %v2169, %v2255
    %v2316 = vsel %vm1568, %v2210, %v2296
    %v2317 = vsel %vm1568, %v2212, %v2298
    %v2318 = vadd.f32 %v2301, %v2310
    %v2319 = vadd.f32 %v2302, %v2311
    %v2320 = vadd.f32 %v2303, %v2312
    %v2321 = vadd.f32 %v2304, %v2313
    %v2322 = vadd.f32 %v2306, %v2314
    %v2323 = vadd.f32 %v2307, %v2315
    %v2324 = vadd.f32 %v2308, %v2316
    %v2325 = vadd.f32 %v2309, %v2317
    %v2326 = vxor.u32 %v2318, 2147483648
    %v2327 = vxor.u32 %v2319, 2147483648
    %v2328 = vxor.u32 %v2320, 2147483648
    %v2329 = vxor.u32 %v2322, 2147483648
    %v2330 = vxor.u32 %v2323, 2147483648
    %v2331 = vxor.u32 %v2324, 2147483648
    %v2332 = vmul.f32 %v2326, 1.442695
    %v2333 = vpow.pop %v2332
    %v2334 = vmul.f32 %v2327, 1.442695
    %v2335 = vpow.pop %v2334
    %v2336 = vmul.f32 %v2328, 1.442695
    %v2337 = vpow.pop %v2336
    %v2338 = vmul.f32 %v2329, 1.442695
    %v2339 = vpow.pop %v2338
    %v2340 = vmul.f32 %v2330, 1.442695
    %v2341 = vpow.pop %v2340
    %v2342 = vmul.f32 %v2331, 1.442695
    %v2343 = vpow.pop %v2342
    %v2344 = vadd.f32 %v2333, 1.0
    %v2345 = vadd.f32 %v2335, 1.0
    %v2346 = vadd.f32 %v2337, 1.0
    %v2347 = vadd.f32 %v2339, 1.0
    %v2348 = vadd.f32 %v2341, 1.0
    %v2349 = vadd.f32 %v2343, 1.0
    %v2350 = vrcp.pop %v2344
    %v2351 = vmul.f32 1.0, %v2350
    %v2352 = vrcp.pop %v2345
    %v2353 = vmul.f32 1.0, %v2352
    %v2354 = vrcp.pop %v2346
    %v2355 = vmul.f32 1.0, %v2354
    %v2356 = vrcp.pop %v2347
    %v2357 = vmul.f32 1.0, %v2356
    %v2358 = vrcp.pop %v2348
    %v2359 = vmul.f32 1.0, %v2358
    %v2360 = vrcp.pop %v2349
    %v2361 = vmul.f32 1.0, %v2360
    %v2362 = vtanh.pop %v2321
    %v2363 = vtanh.pop %v2325
    %v2364 = vmul.f32 %v2353, %v2121
    %v2365 = vmul.f32 %v2359, %v2122
    %v2366 = vmul.f32 %v2351, %v2362
    %v2367 = vmul.f32 %v2357, %v2363
    %v2368 = vadd.f32 %v2364, %v2366
    %v2369 = vadd.f32 %v2365, %v2367
    %v2370 = vtanh.pop %v2368
    %v2371 = vtanh.pop %v2369
    %v2372 = vmul.f32 %v2355, %v2370
    %v2373 = vmul.f32 %v2361, %v2371
    %v2374 = vpack.c.bf16 %v2373, %v2372
    %2375 = vmatprep.subr.bf16.mxu0 %v1313
    %2376 = vmatpush1.bf16.msra.mxu0 %v1312
    %2377 = vmatprep.subr.bf16.mxu0 %v1305
    %2378 = vmatpush1.bf16.msra.mxu0 %v1304
    %2379 = vmatprep.subr.bf16.mxu0 %v1297
    %2380 = vmatpush1.bf16.msra.mxu0 %v1296
    %2381 = vmatprep.subr.bf16.mxu0 %v1289
    %2382 = vmatpush1.bf16.msra.mxu0 %v1288
    %2383 = vmatprep.subr.bf16.mxu0 %v1281
    %2384 = vmatpush1.bf16.msra.mxu0 %v1280
    %2385 = vmatprep.subr.bf16.mxu0 %v1273
    %2386 = vmatpush1.bf16.msra.mxu0 %v1272
    %2387 = vmatprep.subr.bf16.mxu0 %v1265
    %2388 = vmatpush1.bf16.msra.mxu0 %v1264
    %2389 = vmatprep.subr.bf16.mxu0 %v1257
    %2390 = vmatpush1.bf16.msra.mxu0 %v1256
    %2391 = vmatprep.subr.bf16.mxu0 0
    %2392 = vmatpush2.bf16.msra.mxu0 0
    %2393 = vmatprep.subr.bf16.mxu0 0
    %2394 = vmatpush2.bf16.msra.mxu0 0
    %2395 = vmatprep.subr.bf16.mxu0 0
    %2396 = vmatpush2.bf16.msra.mxu0 0
    %2397 = vmatprep.subr.bf16.mxu0 0
    %2398 = vmatpush2.bf16.msra.mxu0 0
    %2399 = vmatprep.subr.bf16.mxu0 0
    %2400 = vmatpush2.bf16.msra.mxu0 0
    %2401 = vmatprep.subr.bf16.mxu0 0
    %2402 = vmatpush2.bf16.msra.mxu0 0
    %2403 = vmatprep.subr.bf16.mxu0 0
    %2404 = vmatpush2.bf16.msra.mxu0 0
    %2405 = vmatprep.subr.bf16.mxu0 0
    %2406 = vmatpush2.bf16.msra.mxu0 0
    %2407 = vmatprep.mubr.bf16.mxu0 0
    %2408 = vmatmul.mubr.bf16.gmra.mxu0 %v2374
    %v2409 = vpop.f32.mrf.mxu0
    %v2410 = vadd.f32 0.0, %v2409
    %v2411 = vpop.f32.mrf.mxu0
    %v2412 = vadd.f32 0.0, %v2411
    %v2413 = vpop.f32.mrf.mxu0
    %v2414 = vadd.f32 0.0, %v2413
    %v2415 = vpop.f32.mrf.mxu0
    %v2416 = vadd.f32 0.0, %v2415
    %2417 = vdwg.mxu0
    %2418 = vmatprep.subr.bf16.mxu0 %v1315
    %2419 = vmatpush1.bf16.msra.mxu0 %v1314
    %2420 = vmatprep.subr.bf16.mxu0 %v1307
    %2421 = vmatpush1.bf16.msra.mxu0 %v1306
    %2422 = vmatprep.subr.bf16.mxu0 %v1299
    %2423 = vmatpush1.bf16.msra.mxu0 %v1298
    %2424 = vmatprep.subr.bf16.mxu0 %v1291
    %2425 = vmatpush1.bf16.msra.mxu0 %v1290
    %2426 = vmatprep.subr.bf16.mxu0 %v1283
    %2427 = vmatpush1.bf16.msra.mxu0 %v1282
    %2428 = vmatprep.subr.bf16.mxu0 %v1275
    %2429 = vmatpush1.bf16.msra.mxu0 %v1274
    %2430 = vmatprep.subr.bf16.mxu0 %v1267
    %2431 = vmatpush1.bf16.msra.mxu0 %v1266
    %2432 = vmatprep.subr.bf16.mxu0 %v1259
    %2433 = vmatpush1.bf16.msra.mxu0 %v1258
    %2434 = vmatprep.subr.bf16.mxu0 0
    %2435 = vmatpush2.bf16.msra.mxu0 0
    %2436 = vmatprep.subr.bf16.mxu0 0
    %2437 = vmatpush2.bf16.msra.mxu0 0
    %2438 = vmatprep.subr.bf16.mxu0 0
    %2439 = vmatpush2.bf16.msra.mxu0 0
    %2440 = vmatprep.subr.bf16.mxu0 0
    %2441 = vmatpush2.bf16.msra.mxu0 0
    %2442 = vmatprep.subr.bf16.mxu0 0
    %2443 = vmatpush2.bf16.msra.mxu0 0
    %2444 = vmatprep.subr.bf16.mxu0 0
    %2445 = vmatpush2.bf16.msra.mxu0 0
    %2446 = vmatprep.subr.bf16.mxu0 0
    %2447 = vmatpush2.bf16.msra.mxu0 0
    %2448 = vmatprep.subr.bf16.mxu0 0
    %2449 = vmatpush2.bf16.msra.mxu0 0
    %2450 = vmatprep.mubr.bf16.mxu0 0
    %2451 = vmatmul.mubr.bf16.gmra.mxu0 %v2374
    %v2452 = vpop.f32.mrf.mxu0
    %v2453 = vadd.f32 0.0, %v2452
    %v2454 = vpop.f32.mrf.mxu0
    %v2455 = vadd.f32 0.0, %v2454
    %v2456 = vpop.f32.mrf.mxu0
    %v2457 = vadd.f32 0.0, %v2456
    %v2458 = vpop.f32.mrf.mxu0
    %v2459 = vadd.f32 0.0, %v2458
    %2460 = vdwg.mxu0
    %2461 = vmatprep.subr.bf16.mxu0 %v1317
    %2462 = vmatpush1.bf16.msra.mxu0 %v1316
    %2463 = vmatprep.subr.bf16.mxu0 %v1309
    %2464 = vmatpush1.bf16.msra.mxu0 %v1308
    %2465 = vmatprep.subr.bf16.mxu0 %v1301
    %2466 = vmatpush1.bf16.msra.mxu0 %v1300
    %2467 = vmatprep.subr.bf16.mxu0 %v1293
    %2468 = vmatpush1.bf16.msra.mxu0 %v1292
    %2469 = vmatprep.subr.bf16.mxu0 %v1285
    %2470 = vmatpush1.bf16.msra.mxu0 %v1284
    %2471 = vmatprep.subr.bf16.mxu0 %v1277
    %2472 = vmatpush1.bf16.msra.mxu0 %v1276
    %2473 = vmatprep.subr.bf16.mxu0 %v1269
    %2474 = vmatpush1.bf16.msra.mxu0 %v1268
    %2475 = vmatprep.subr.bf16.mxu0 %v1261
    %2476 = vmatpush1.bf16.msra.mxu0 %v1260
    %2477 = vmatprep.subr.bf16.mxu0 0
    %2478 = vmatpush2.bf16.msra.mxu0 0
    %2479 = vmatprep.subr.bf16.mxu0 0
    %2480 = vmatpush2.bf16.msra.mxu0 0
    %2481 = vmatprep.subr.bf16.mxu0 0
    %2482 = vmatpush2.bf16.msra.mxu0 0
    %2483 = vmatprep.subr.bf16.mxu0 0
    %2484 = vmatpush2.bf16.msra.mxu0 0
    %2485 = vmatprep.subr.bf16.mxu0 0
    %2486 = vmatpush2.bf16.msra.mxu0 0
    %2487 = vmatprep.subr.bf16.mxu0 0
    %2488 = vmatpush2.bf16.msra.mxu0 0
    %2489 = vmatprep.subr.bf16.mxu0 0
    %2490 = vmatpush2.bf16.msra.mxu0 0
    %2491 = vmatprep.subr.bf16.mxu0 0
    %2492 = vmatpush2.bf16.msra.mxu0 0
    %2493 = vmatprep.mubr.bf16.mxu0 0
    %2494 = vmatmul.mubr.bf16.gmra.mxu0 %v2374
    %v2495 = vpop.f32.mrf.mxu0
    %v2496 = vadd.f32 0.0, %v2495
    %v2497 = vpop.f32.mrf.mxu0
    %v2498 = vadd.f32 0.0, %v2497
    %v2499 = vpop.f32.mrf.mxu0
    %v2500 = vadd.f32 0.0, %v2499
    %v2501 = vpop.f32.mrf.mxu0
    %v2502 = vadd.f32 0.0, %v2501
    %2503 = vdwg.mxu0
    %2504 = vmatprep.subr.bf16.mxu0 %v1319
    %2505 = vmatpush1.bf16.msra.mxu0 %v1318
    %2506 = vmatprep.subr.bf16.mxu0 %v1311
    %2507 = vmatpush1.bf16.msra.mxu0 %v1310
    %2508 = vmatprep.subr.bf16.mxu0 %v1303
    %2509 = vmatpush1.bf16.msra.mxu0 %v1302
    %2510 = vmatprep.subr.bf16.mxu0 %v1295
    %2511 = vmatpush1.bf16.msra.mxu0 %v1294
    %2512 = vmatprep.subr.bf16.mxu0 %v1287
    %2513 = vmatpush1.bf16.msra.mxu0 %v1286
    %2514 = vmatprep.subr.bf16.mxu0 %v1279
    %2515 = vmatpush1.bf16.msra.mxu0 %v1278
    %2516 = vmatprep.subr.bf16.mxu0 %v1271
    %2517 = vmatpush1.bf16.msra.mxu0 %v1270
    %2518 = vmatprep.subr.bf16.mxu0 %v1263
    %2519 = vmatpush1.bf16.msra.mxu0 %v1262
    %2520 = vmatprep.subr.bf16.mxu0 0
    %2521 = vmatpush2.bf16.msra.mxu0 0
    %2522 = vmatprep.subr.bf16.mxu0 0
    %2523 = vmatpush2.bf16.msra.mxu0 0
    %2524 = vmatprep.subr.bf16.mxu0 0
    %2525 = vmatpush2.bf16.msra.mxu0 0
    %2526 = vmatprep.subr.bf16.mxu0 0
    %2527 = vmatpush2.bf16.msra.mxu0 0
    %2528 = vmatprep.subr.bf16.mxu0 0
    %2529 = vmatpush2.bf16.msra.mxu0 0
    %2530 = vmatprep.subr.bf16.mxu0 0
    %2531 = vmatpush2.bf16.msra.mxu0 0
    %2532 = vmatprep.subr.bf16.mxu0 0
    %2533 = vmatpush2.bf16.msra.mxu0 0
    %2534 = vmatprep.subr.bf16.mxu0 0
    %2535 = vmatpush2.bf16.msra.mxu0 0
    %2536 = vmatprep.mubr.bf16.mxu0 0
    %2537 = vmatmul.mubr.bf16.gmra.mxu0 %v2374
    %v2538 = vpop.f32.mrf.mxu0
    %v2539 = vadd.f32 0.0, %v2538
    %v2540 = vpop.f32.mrf.mxu0
    %v2541 = vadd.f32 0.0, %v2540
    %v2542 = vpop.f32.mrf.mxu0
    %v2543 = vadd.f32 0.0, %v2542
    %v2544 = vpop.f32.mrf.mxu0
    %v2545 = vadd.f32 0.0, %v2544
    %2546 = vdwg.mxu0
    %s2547 = scalar_lea.vmem [#allocation2], 128
    %v2548 = vld [vmem:[%s2547] sm:$0xff]
    %v2549 = vld [vmem:[%s2547 + $0x8] sm:$0xff]
    %v2550 = vld [vmem:[%s2547 + $0x10] sm:$0xff]
    %v2551 = vld [vmem:[%s2547 + $0x18] sm:$0xff]
    %s2552 = scalar_lea.vmem [#allocation3], 96
    %v2553 = vld [vmem:[%s2552] sm:$0xff]
    %v2554 = vld [vmem:[%s2552 + $0x8] sm:$0xff]
    %v2555 = vld [vmem:[%s2552 + $0x10] sm:$0xff]
    %v2556 = vld [vmem:[%s2552 + $0x18] sm:$0xff]
    %v2557 = vsel %vm1567, %v2410, %v2496
    %v2558 = vsel %vm1567, %v2412, %v2498
    %v2559 = vsel %vm1567, %v2453, %v2539
    %v2560 = vsel %vm1567, %v2455, %v2541
    %v2561 = vsel %vm1568, %v2414, %v2500
    %v2562 = vsel %vm1568, %v2416, %v2502
    %v2563 = vsel %vm1568, %v2457, %v2543
    %v2564 = vsel %vm1568, %v2459, %v2545
    %v2565 = vadd.f32 %v2548, %v2557
    %v2566 = vadd.f32 %v2549, %v2558
    %v2567 = vadd.f32 %v2550, %v2559
    %v2568 = vadd.f32 %v2551, %v2560
    %v2569 = vadd.f32 %v2553, %v2561
    %v2570 = vadd.f32 %v2554, %v2562
    %v2571 = vadd.f32 %v2555, %v2563
    %v2572 = vadd.f32 %v2556, %v2564
    %v2573 = vxor.u32 %v2565, 2147483648
    %v2574 = vxor.u32 %v2566, 2147483648
    %v2575 = vxor.u32 %v2567, 2147483648
    %v2576 = vxor.u32 %v2569, 2147483648
    %v2577 = vxor.u32 %v2570, 2147483648
    %v2578 = vxor.u32 %v2571, 2147483648
    %v2579 = vmul.f32 %v2573, 1.442695
    %v2580 = vpow.pop %v2579
    %v2581 = vmul.f32 %v2574, 1.442695
    %v2582 = vpow.pop %v2581
    %v2583 = vmul.f32 %v2575, 1.442695
    %v2584 = vpow.pop %v2583
    %v2585 = vmul.f32 %v2576, 1.442695
    %v2586 = vpow.pop %v2585
    %v2587 = vmul.f32 %v2577, 1.442695
    %v2588 = vpow.pop %v2587
    %v2589 = vmul.f32 %v2578, 1.442695
    %v2590 = vpow.pop %v2589
    %v2591 = vadd.f32 %v2580, 1.0
    %v2592 = vadd.f32 %v2582, 1.0
    %v2593 = vadd.f32 %v2584, 1.0
    %v2594 = vadd.f32 %v2586, 1.0
    %v2595 = vadd.f32 %v2588, 1.0
    %v2596 = vadd.f32 %v2590, 1.0
    %v2597 = vrcp.pop %v2591
    %v2598 = vmul.f32 1.0, %v2597
    %v2599 = vrcp.pop %v2592
    %v2600 = vmul.f32 1.0, %v2599
    %v2601 = vrcp.pop %v2593
    %v2602 = vmul.f32 1.0, %v2601
    %v2603 = vrcp.pop %v2594
    %v2604 = vmul.f32 1.0, %v2603
    %v2605 = vrcp.pop %v2595
    %v2606 = vmul.f32 1.0, %v2605
    %v2607 = vrcp.pop %v2596
    %v2608 = vmul.f32 1.0, %v2607
    %v2609 = vtanh.pop %v2568
    %v2610 = vtanh.pop %v2572
    %v2611 = vmul.f32 %v2600, %v2368
    %v2612 = vmul.f32 %v2606, %v2369
    %v2613 = vmul.f32 %v2598, %v2609
    %v2614 = vmul.f32 %v2604, %v2610
    %v2615 = vadd.f32 %v2611, %v2613
    %v2616 = vadd.f32 %v2612, %v2614
    %v2617 = vtanh.pop %v2615
    %v2618 = vtanh.pop %v2616
    %v2619 = vmul.f32 %v2602, %v2617
    %v2620 = vmul.f32 %v2608, %v2618
    %v2621 = vpack.c.bf16 %v2620, %v2619
    %2622 = vmatprep.subr.bf16.mxu0 %v1313
    %2623 = vmatpush1.bf16.msra.mxu0 %v1312
    %2624 = vmatprep.subr.bf16.mxu0 %v1305
    %2625 = vmatpush1.bf16.msra.mxu0 %v1304
    %2626 = vmatprep.subr.bf16.mxu0 %v1297
    %2627 = vmatpush1.bf16.msra.mxu0 %v1296
    %2628 = vmatprep.subr.bf16.mxu0 %v1289
    %2629 = vmatpush1.bf16.msra.mxu0 %v1288
    %2630 = vmatprep.subr.bf16.mxu0 %v1281
    %2631 = vmatpush1.bf16.msra.mxu0 %v1280
    %2632 = vmatprep.subr.bf16.mxu0 %v1273
    %2633 = vmatpush1.bf16.msra.mxu0 %v1272
    %2634 = vmatprep.subr.bf16.mxu0 %v1265
    %2635 = vmatpush1.bf16.msra.mxu0 %v1264
    %2636 = vmatprep.subr.bf16.mxu0 %v1257
    %2637 = vmatpush1.bf16.msra.mxu0 %v1256
    %2638 = vmatprep.subr.bf16.mxu0 0
    %2639 = vmatpush2.bf16.msra.mxu0 0
    %2640 = vmatprep.subr.bf16.mxu0 0
    %2641 = vmatpush2.bf16.msra.mxu0 0
    %2642 = vmatprep.subr.bf16.mxu0 0
    %2643 = vmatpush2.bf16.msra.mxu0 0
    %2644 = vmatprep.subr.bf16.mxu0 0
    %2645 = vmatpush2.bf16.msra.mxu0 0
    %2646 = vmatprep.subr.bf16.mxu0 0
    %2647 = vmatpush2.bf16.msra.mxu0 0
    %2648 = vmatprep.subr.bf16.mxu0 0
    %2649 = vmatpush2.bf16.msra.mxu0 0
    %2650 = vmatprep.subr.bf16.mxu0 0
    %2651 = vmatpush2.bf16.msra.mxu0 0
    %2652 = vmatprep.subr.bf16.mxu0 0
    %2653 = vmatpush2.bf16.msra.mxu0 0
    %2654 = vmatprep.mubr.bf16.mxu0 0
    %2655 = vmatmul.mubr.bf16.gmra.mxu0 %v2621
    %v2656 = vpop.f32.mrf.mxu0
    %v2657 = vadd.f32 0.0, %v2656
    %v2658 = vpop.f32.mrf.mxu0
    %v2659 = vadd.f32 0.0, %v2658
    %v2660 = vpop.f32.mrf.mxu0
    %v2661 = vadd.f32 0.0, %v2660
    %v2662 = vpop.f32.mrf.mxu0
    %v2663 = vadd.f32 0.0, %v2662
    %2664 = vdwg.mxu0
    %2665 = vmatprep.subr.bf16.mxu0 %v1315
    %2666 = vmatpush1.bf16.msra.mxu0 %v1314
    %2667 = vmatprep.subr.bf16.mxu0 %v1307
    %2668 = vmatpush1.bf16.msra.mxu0 %v1306
    %2669 = vmatprep.subr.bf16.mxu0 %v1299
    %2670 = vmatpush1.bf16.msra.mxu0 %v1298
    %2671 = vmatprep.subr.bf16.mxu0 %v1291
    %2672 = vmatpush1.bf16.msra.mxu0 %v1290
    %2673 = vmatprep.subr.bf16.mxu0 %v1283
    %2674 = vmatpush1.bf16.msra.mxu0 %v1282
    %2675 = vmatprep.subr.bf16.mxu0 %v1275
    %2676 = vmatpush1.bf16.msra.mxu0 %v1274
    %2677 = vmatprep.subr.bf16.mxu0 %v1267
    %2678 = vmatpush1.bf16.msra.mxu0 %v1266
    %2679 = vmatprep.subr.bf16.mxu0 %v1259
    %2680 = vmatpush1.bf16.msra.mxu0 %v1258
    %2681 = vmatprep.subr.bf16.mxu0 0
    %2682 = vmatpush2.bf16.msra.mxu0 0
    %2683 = vmatprep.subr.bf16.mxu0 0
    %2684 = vmatpush2.bf16.msra.mxu0 0
    %2685 = vmatprep.subr.bf16.mxu0 0
    %2686 = vmatpush2.bf16.msra.mxu0 0
    %2687 = vmatprep.subr.bf16.mxu0 0
    %2688 = vmatpush2.bf16.msra.mxu0 0
    %2689 = vmatprep.subr.bf16.mxu0 0
    %2690 = vmatpush2.bf16.msra.mxu0 0
    %2691 = vmatprep.subr.bf16.mxu0 0
    %2692 = vmatpush2.bf16.msra.mxu0 0
    %2693 = vmatprep.subr.bf16.mxu0 0
    %2694 = vmatpush2.bf16.msra.mxu0 0
    %2695 = vmatprep.subr.bf16.mxu0 0
    %2696 = vmatpush2.bf16.msra.mxu0 0
    %2697 = vmatprep.mubr.bf16.mxu0 0
    %2698 = vmatmul.mubr.bf16.gmra.mxu0 %v2621
    %v2699 = vpop.f32.mrf.mxu0
    %v2700 = vadd.f32 0.0, %v2699
    %v2701 = vpop.f32.mrf.mxu0
    %v2702 = vadd.f32 0.0, %v2701
    %v2703 = vpop.f32.mrf.mxu0
    %v2704 = vadd.f32 0.0, %v2703
    %v2705 = vpop.f32.mrf.mxu0
    %v2706 = vadd.f32 0.0, %v2705
    %2707 = vdwg.mxu0
    %2708 = vmatprep.subr.bf16.mxu0 %v1317
    %2709 = vmatpush1.bf16.msra.mxu0 %v1316
    %2710 = vmatprep.subr.bf16.mxu0 %v1309
    %2711 = vmatpush1.bf16.msra.mxu0 %v1308
    %2712 = vmatprep.subr.bf16.mxu0 %v1301
    %2713 = vmatpush1.bf16.msra.mxu0 %v1300
    %2714 = vmatprep.subr.bf16.mxu0 %v1293
    %2715 = vmatpush1.bf16.msra.mxu0 %v1292
    %2716 = vmatprep.subr.bf16.mxu0 %v1285
    %2717 = vmatpush1.bf16.msra.mxu0 %v1284
    %2718 = vmatprep.subr.bf16.mxu0 %v1277
    %2719 = vmatpush1.bf16.msra.mxu0 %v1276
    %2720 = vmatprep.subr.bf16.mxu0 %v1269
    %2721 = vmatpush1.bf16.msra.mxu0 %v1268
    %2722 = vmatprep.subr.bf16.mxu0 %v1261
    %2723 = vmatpush1.bf16.msra.mxu0 %v1260
    %2724 = vmatprep.subr.bf16.mxu0 0
    %2725 = vmatpush2.bf16.msra.mxu0 0
    %2726 = vmatprep.subr.bf16.mxu0 0
    %2727 = vmatpush2.bf16.msra.mxu0 0
    %2728 = vmatprep.subr.bf16.mxu0 0
    %2729 = vmatpush2.bf16.msra.mxu0 0
    %2730 = vmatprep.subr.bf16.mxu0 0
    %2731 = vmatpush2.bf16.msra.mxu0 0
    %2732 = vmatprep.subr.bf16.mxu0 0
    %2733 = vmatpush2.bf16.msra.mxu0 0
    %2734 = vmatprep.subr.bf16.mxu0 0
    %2735 = vmatpush2.bf16.msra.mxu0 0
    %2736 = vmatprep.subr.bf16.mxu0 0
    %2737 = vmatpush2.bf16.msra.mxu0 0
    %2738 = vmatprep.subr.bf16.mxu0 0
    %2739 = vmatpush2.bf16.msra.mxu0 0
    %2740 = vmatprep.mubr.bf16.mxu0 0
    %2741 = vmatmul.mubr.bf16.gmra.mxu0 %v2621
    %v2742 = vpop.f32.mrf.mxu0
    %v2743 = vadd.f32 0.0, %v2742
    %v2744 = vpop.f32.mrf.mxu0
    %v2745 = vadd.f32 0.0, %v2744
    %v2746 = vpop.f32.mrf.mxu0
    %v2747 = vadd.f32 0.0, %v2746
    %v2748 = vpop.f32.mrf.mxu0
    %v2749 = vadd.f32 0.0, %v2748
    %2750 = vdwg.mxu0
    %2751 = vmatprep.subr.bf16.mxu0 %v1319
    %2752 = vmatpush1.bf16.msra.mxu0 %v1318
    %2753 = vmatprep.subr.bf16.mxu0 %v1311
    %2754 = vmatpush1.bf16.msra.mxu0 %v1310
    %2755 = vmatprep.subr.bf16.mxu0 %v1303
    %2756 = vmatpush1.bf16.msra.mxu0 %v1302
    %2757 = vmatprep.subr.bf16.mxu0 %v1295
    %2758 = vmatpush1.bf16.msra.mxu0 %v1294
    %2759 = vmatprep.subr.bf16.mxu0 %v1287
    %2760 = vmatpush1.bf16.msra.mxu0 %v1286
    %2761 = vmatprep.subr.bf16.mxu0 %v1279
    %2762 = vmatpush1.bf16.msra.mxu0 %v1278
    %2763 = vmatprep.subr.bf16.mxu0 %v1271
    %2764 = vmatpush1.bf16.msra.mxu0 %v1270
    %2765 = vmatprep.subr.bf16.mxu0 %v1263
    %2766 = vmatpush1.bf16.msra.mxu0 %v1262
    %2767 = vmatprep.subr.bf16.mxu0 0
    %2768 = vmatpush2.bf16.msra.mxu0 0
    %2769 = vmatprep.subr.bf16.mxu0 0
    %2770 = vmatpush2.bf16.msra.mxu0 0
    %2771 = vmatprep.subr.bf16.mxu0 0
    %2772 = vmatpush2.bf16.msra.mxu0 0
    %2773 = vmatprep.subr.bf16.mxu0 0
    %2774 = vmatpush2.bf16.msra.mxu0 0
    %2775 = vmatprep.subr.bf16.mxu0 0
    %2776 = vmatpush2.bf16.msra.mxu0 0
    %2777 = vmatprep.subr.bf16.mxu0 0
    %2778 = vmatpush2.bf16.msra.mxu0 0
    %2779 = vmatprep.subr.bf16.mxu0 0
    %2780 = vmatpush2.bf16.msra.mxu0 0
    %2781 = vmatprep.subr.bf16.mxu0 0
    %2782 = vmatpush2.bf16.msra.mxu0 0
    %2783 = vmatprep.mubr.bf16.mxu0 0
    %2784 = vmatmul.mubr.bf16.gmra.mxu0 %v2621
    %v2785 = vpop.f32.mrf.mxu0
    %v2786 = vadd.f32 0.0, %v2785
    %v2787 = vpop.f32.mrf.mxu0
    %v2788 = vadd.f32 0.0, %v2787
    %v2789 = vpop.f32.mrf.mxu0
    %v2790 = vadd.f32 0.0, %v2789
    %v2791 = vpop.f32.mrf.mxu0
    %v2792 = vadd.f32 0.0, %v2791
    %2793 = vdwg.mxu0
    %s2794 = scalar_lea.vmem [#allocation2], 160
    %v2795 = vld [vmem:[%s2794] sm:$0xff]
    %v2796 = vld [vmem:[%s2794 + $0x8] sm:$0xff]
    %v2797 = vld [vmem:[%s2794 + $0x10] sm:$0xff]
    %v2798 = vld [vmem:[%s2794 + $0x18] sm:$0xff]
    %s2799 = scalar_lea.vmem [#allocation3], 64
    %v2800 = vld [vmem:[%s2799] sm:$0xff]
    %v2801 = vld [vmem:[%s2799 + $0x8] sm:$0xff]
    %v2802 = vld [vmem:[%s2799 + $0x10] sm:$0xff]
    %v2803 = vld [vmem:[%s2799 + $0x18] sm:$0xff]
    %v2804 = vsel %vm1567, %v2657, %v2743
    %v2805 = vsel %vm1567, %v2659, %v2745
    %v2806 = vsel %vm1567, %v2700, %v2786
    %v2807 = vsel %vm1567, %v2702, %v2788
    %v2808 = vsel %vm1568, %v2661, %v2747
    %v2809 = vsel %vm1568, %v2663, %v2749
    %v2810 = vsel %vm1568, %v2704, %v2790
    %v2811 = vsel %vm1568, %v2706, %v2792
    %v2812 = vadd.f32 %v2795, %v2804
    %v2813 = vadd.f32 %v2796, %v2805
    %v2814 = vadd.f32 %v2797, %v2806
    %v2815 = vadd.f32 %v2798, %v2807
    %v2816 = vadd.f32 %v2800, %v2808
    %v2817 = vadd.f32 %v2801, %v2809
    %v2818 = vadd.f32 %v2802, %v2810
    %v2819 = vadd.f32 %v2803, %v2811
    %v2820 = vxor.u32 %v2812, 2147483648
    %v2821 = vxor.u32 %v2813, 2147483648
    %v2822 = vxor.u32 %v2814, 2147483648
    %v2823 = vxor.u32 %v2816, 2147483648
    %v2824 = vxor.u32 %v2817, 2147483648
    %v2825 = vxor.u32 %v2818, 2147483648
    %v2826 = vmul.f32 %v2820, 1.442695
    %v2827 = vpow.pop %v2826
    %v2828 = vmul.f32 %v2821, 1.442695
    %v2829 = vpow.pop %v2828
    %v2830 = vmul.f32 %v2822, 1.442695
    %v2831 = vpow.pop %v2830
    %v2832 = vmul.f32 %v2823, 1.442695
    %v2833 = vpow.pop %v2832
    %v2834 = vmul.f32 %v2824, 1.442695
    %v2835 = vpow.pop %v2834
    %v2836 = vmul.f32 %v2825, 1.442695
    %v2837 = vpow.pop %v2836
    %v2838 = vadd.f32 %v2827, 1.0
    %v2839 = vadd.f32 %v2829, 1.0
    %v2840 = vadd.f32 %v2831, 1.0
    %v2841 = vadd.f32 %v2833, 1.0
    %v2842 = vadd.f32 %v2835, 1.0
    %v2843 = vadd.f32 %v2837, 1.0
    %v2844 = vrcp.pop %v2838
    %v2845 = vmul.f32 1.0, %v2844
    %v2846 = vrcp.pop %v2839
    %v2847 = vmul.f32 1.0, %v2846
    %v2848 = vrcp.pop %v2840
    %v2849 = vmul.f32 1.0, %v2848
    %v2850 = vrcp.pop %v2841
    %v2851 = vmul.f32 1.0, %v2850
    %v2852 = vrcp.pop %v2842
    %v2853 = vmul.f32 1.0, %v2852
    %v2854 = vrcp.pop %v2843
    %v2855 = vmul.f32 1.0, %v2854
    %v2856 = vtanh.pop %v2815
    %v2857 = vtanh.pop %v2819
    %v2858 = vmul.f32 %v2847, %v2615
    %v2859 = vmul.f32 %v2853, %v2616
    %v2860 = vmul.f32 %v2845, %v2856
    %v2861 = vmul.f32 %v2851, %v2857
    %v2862 = vadd.f32 %v2858, %v2860
    %v2863 = vadd.f32 %v2859, %v2861
    %v2864 = vtanh.pop %v2862
    %v2865 = vtanh.pop %v2863
    %v2866 = vmul.f32 %v2849, %v2864
    %v2867 = vmul.f32 %v2855, %v2865
    %v2868 = vpack.c.bf16 %v2867, %v2866
    %2869 = vmatprep.subr.bf16.mxu0 %v1313
    %2870 = vmatpush1.bf16.msra.mxu0 %v1312
    %2871 = vmatprep.subr.bf16.mxu0 %v1305
    %2872 = vmatpush1.bf16.msra.mxu0 %v1304
    %2873 = vmatprep.subr.bf16.mxu0 %v1297
    %2874 = vmatpush1.bf16.msra.mxu0 %v1296
    %2875 = vmatprep.subr.bf16.mxu0 %v1289
    %2876 = vmatpush1.bf16.msra.mxu0 %v1288
    %2877 = vmatprep.subr.bf16.mxu0 %v1281
    %2878 = vmatpush1.bf16.msra.mxu0 %v1280
    %2879 = vmatprep.subr.bf16.mxu0 %v1273
    %2880 = vmatpush1.bf16.msra.mxu0 %v1272
    %2881 = vmatprep.subr.bf16.mxu0 %v1265
    %2882 = vmatpush1.bf16.msra.mxu0 %v1264
    %2883 = vmatprep.subr.bf16.mxu0 %v1257
    %2884 = vmatpush1.bf16.msra.mxu0 %v1256
    %2885 = vmatprep.subr.bf16.mxu0 0
    %2886 = vmatpush2.bf16.msra.mxu0 0
    %2887 = vmatprep.subr.bf16.mxu0 0
    %2888 = vmatpush2.bf16.msra.mxu0 0
    %2889 = vmatprep.subr.bf16.mxu0 0
    %2890 = vmatpush2.bf16.msra.mxu0 0
    %2891 = vmatprep.subr.bf16.mxu0 0
    %2892 = vmatpush2.bf16.msra.mxu0 0
    %2893 = vmatprep.subr.bf16.mxu0 0
    %2894 = vmatpush2.bf16.msra.mxu0 0
    %2895 = vmatprep.subr.bf16.mxu0 0
    %2896 = vmatpush2.bf16.msra.mxu0 0
    %2897 = vmatprep.subr.bf16.mxu0 0
    %2898 = vmatpush2.bf16.msra.mxu0 0
    %2899 = vmatprep.subr.bf16.mxu0 0
    %2900 = vmatpush2.bf16.msra.mxu0 0
    %2901 = vmatprep.mubr.bf16.mxu0 0
    %2902 = vmatmul.mubr.bf16.gmra.mxu0 %v2868
    %v2903 = vpop.f32.mrf.mxu0
    %v2904 = vadd.f32 0.0, %v2903
    %v2905 = vpop.f32.mrf.mxu0
    %v2906 = vadd.f32 0.0, %v2905
    %v2907 = vpop.f32.mrf.mxu0
    %v2908 = vadd.f32 0.0, %v2907
    %v2909 = vpop.f32.mrf.mxu0
    %v2910 = vadd.f32 0.0, %v2909
    %2911 = vdwg.mxu0
    %2912 = vmatprep.subr.bf16.mxu0 %v1315
    %2913 = vmatpush1.bf16.msra.mxu0 %v1314
    %2914 = vmatprep.subr.bf16.mxu0 %v1307
    %2915 = vmatpush1.bf16.msra.mxu0 %v1306
    %2916 = vmatprep.subr.bf16.mxu0 %v1299
    %2917 = vmatpush1.bf16.msra.mxu0 %v1298
    %2918 = vmatprep.subr.bf16.mxu0 %v1291
    %2919 = vmatpush1.bf16.msra.mxu0 %v1290
    %2920 = vmatprep.subr.bf16.mxu0 %v1283
    %2921 = vmatpush1.bf16.msra.mxu0 %v1282
    %2922 = vmatprep.subr.bf16.mxu0 %v1275
    %2923 = vmatpush1.bf16.msra.mxu0 %v1274
    %2924 = vmatprep.subr.bf16.mxu0 %v1267
    %2925 = vmatpush1.bf16.msra.mxu0 %v1266
    %2926 = vmatprep.subr.bf16.mxu0 %v1259
    %2927 = vmatpush1.bf16.msra.mxu0 %v1258
    %2928 = vmatprep.subr.bf16.mxu0 0
    %2929 = vmatpush2.bf16.msra.mxu0 0
    %2930 = vmatprep.subr.bf16.mxu0 0
    %2931 = vmatpush2.bf16.msra.mxu0 0
    %2932 = vmatprep.subr.bf16.mxu0 0
    %2933 = vmatpush2.bf16.msra.mxu0 0
    %2934 = vmatprep.subr.bf16.mxu0 0
    %2935 = vmatpush2.bf16.msra.mxu0 0
    %2936 = vmatprep.subr.bf16.mxu0 0
    %2937 = vmatpush2.bf16.msra.mxu0 0
    %2938 = vmatprep.subr.bf16.mxu0 0
    %2939 = vmatpush2.bf16.msra.mxu0 0
    %2940 = vmatprep.subr.bf16.mxu0 0
    %2941 = vmatpush2.bf16.msra.mxu0 0
    %2942 = vmatprep.subr.bf16.mxu0 0
    %2943 = vmatpush2.bf16.msra.mxu0 0
    %2944 = vmatprep.mubr.bf16.mxu0 0
    %2945 = vmatmul.mubr.bf16.gmra.mxu0 %v2868
    %v2946 = vpop.f32.mrf.mxu0
    %v2947 = vadd.f32 0.0, %v2946
    %v2948 = vpop.f32.mrf.mxu0
    %v2949 = vadd.f32 0.0, %v2948
    %v2950 = vpop.f32.mrf.mxu0
    %v2951 = vadd.f32 0.0, %v2950
    %v2952 = vpop.f32.mrf.mxu0
    %v2953 = vadd.f32 0.0, %v2952
    %2954 = vdwg.mxu0
    %2955 = vmatprep.subr.bf16.mxu0 %v1317
    %2956 = vmatpush1.bf16.msra.mxu0 %v1316
    %2957 = vmatprep.subr.bf16.mxu0 %v1309
    %2958 = vmatpush1.bf16.msra.mxu0 %v1308
    %2959 = vmatprep.subr.bf16.mxu0 %v1301
    %2960 = vmatpush1.bf16.msra.mxu0 %v1300
    %2961 = vmatprep.subr.bf16.mxu0 %v1293
    %2962 = vmatpush1.bf16.msra.mxu0 %v1292
    %2963 = vmatprep.subr.bf16.mxu0 %v1285
    %2964 = vmatpush1.bf16.msra.mxu0 %v1284
    %2965 = vmatprep.subr.bf16.mxu0 %v1277
    %2966 = vmatpush1.bf16.msra.mxu0 %v1276
    %2967 = vmatprep.subr.bf16.mxu0 %v1269
    %2968 = vmatpush1.bf16.msra.mxu0 %v1268
    %2969 = vmatprep.subr.bf16.mxu0 %v1261
    %2970 = vmatpush1.bf16.msra.mxu0 %v1260
    %2971 = vmatprep.subr.bf16.mxu0 0
    %2972 = vmatpush2.bf16.msra.mxu0 0
    %2973 = vmatprep.subr.bf16.mxu0 0
    %2974 = vmatpush2.bf16.msra.mxu0 0
    %2975 = vmatprep.subr.bf16.mxu0 0
    %2976 = vmatpush2.bf16.msra.mxu0 0
    %2977 = vmatprep.subr.bf16.mxu0 0
    %2978 = vmatpush2.bf16.msra.mxu0 0
    %2979 = vmatprep.subr.bf16.mxu0 0
    %2980 = vmatpush2.bf16.msra.mxu0 0
    %2981 = vmatprep.subr.bf16.mxu0 0
    %2982 = vmatpush2.bf16.msra.mxu0 0
    %2983 = vmatprep.subr.bf16.mxu0 0
    %2984 = vmatpush2.bf16.msra.mxu0 0
    %2985 = vmatprep.subr.bf16.mxu0 0
    %2986 = vmatpush2.bf16.msra.mxu0 0
    %2987 = vmatprep.mubr.bf16.mxu0 0
    %2988 = vmatmul.mubr.bf16.gmra.mxu0 %v2868
    %v2989 = vpop.f32.mrf.mxu0
    %v2990 = vadd.f32 0.0, %v2989
    %v2991 = vpop.f32.mrf.mxu0
    %v2992 = vadd.f32 0.0, %v2991
    %v2993 = vpop.f32.mrf.mxu0
    %v2994 = vadd.f32 0.0, %v2993
    %v2995 = vpop.f32.mrf.mxu0
    %v2996 = vadd.f32 0.0, %v2995
    %2997 = vdwg.mxu0
    %2998 = vmatprep.subr.bf16.mxu0 %v1319
    %2999 = vmatpush1.bf16.msra.mxu0 %v1318
    %3000 = vmatprep.subr.bf16.mxu0 %v1311
    %3001 = vmatpush1.bf16.msra.mxu0 %v1310
    %3002 = vmatprep.subr.bf16.mxu0 %v1303
    %3003 = vmatpush1.bf16.msra.mxu0 %v1302
    %3004 = vmatprep.subr.bf16.mxu0 %v1295
    %3005 = vmatpush1.bf16.msra.mxu0 %v1294
    %3006 = vmatprep.subr.bf16.mxu0 %v1287
    %3007 = vmatpush1.bf16.msra.mxu0 %v1286
    %3008 = vmatprep.subr.bf16.mxu0 %v1279
    %3009 = vmatpush1.bf16.msra.mxu0 %v1278
    %3010 = vmatprep.subr.bf16.mxu0 %v1271
    %3011 = vmatpush1.bf16.msra.mxu0 %v1270
    %3012 = vmatprep.subr.bf16.mxu0 %v1263
    %3013 = vmatpush1.bf16.msra.mxu0 %v1262
    %3014 = vmatprep.subr.bf16.mxu0 0
    %3015 = vmatpush2.bf16.msra.mxu0 0
    %3016 = vmatprep.subr.bf16.mxu0 0
    %3017 = vmatpush2.bf16.msra.mxu0 0
    %3018 = vmatprep.subr.bf16.mxu0 0
    %3019 = vmatpush2.bf16.msra.mxu0 0
    %3020 = vmatprep.subr.bf16.mxu0 0
    %3021 = vmatpush2.bf16.msra.mxu0 0
    %3022 = vmatprep.subr.bf16.mxu0 0
    %3023 = vmatpush2.bf16.msra.mxu0 0
    %3024 = vmatprep.subr.bf16.mxu0 0
    %3025 = vmatpush2.bf16.msra.mxu0 0
    %3026 = vmatprep.subr.bf16.mxu0 0
    %3027 = vmatpush2.bf16.msra.mxu0 0
    %3028 = vmatprep.subr.bf16.mxu0 0
    %3029 = vmatpush2.bf16.msra.mxu0 0
    %3030 = vmatprep.mubr.bf16.mxu0 0
    %3031 = vmatmul.mubr.bf16.gmra.mxu0 %v2868
    %v3032 = vpop.f32.mrf.mxu0
    %v3033 = vadd.f32 0.0, %v3032
    %v3034 = vpop.f32.mrf.mxu0
    %v3035 = vadd.f32 0.0, %v3034
    %v3036 = vpop.f32.mrf.mxu0
    %v3037 = vadd.f32 0.0, %v3036
    %v3038 = vpop.f32.mrf.mxu0
    %v3039 = vadd.f32 0.0, %v3038
    %3040 = vdwg.mxu0
    %s3041 = scalar_lea.vmem [#allocation2], 192
    %v3042 = vld [vmem:[%s3041] sm:$0xff]
    %v3043 = vld [vmem:[%s3041 + $0x8] sm:$0xff]
    %v3044 = vld [vmem:[%s3041 + $0x10] sm:$0xff]
    %v3045 = vld [vmem:[%s3041 + $0x18] sm:$0xff]
    %s3046 = scalar_lea.vmem [#allocation3], 32
    %v3047 = vld [vmem:[%s3046] sm:$0xff]
    %v3048 = vld [vmem:[%s3046 + $0x8] sm:$0xff]
    %v3049 = vld [vmem:[%s3046 + $0x10] sm:$0xff]
    %v3050 = vld [vmem:[%s3046 + $0x18] sm:$0xff]
    %v3051 = vsel %vm1567, %v2904, %v2990
    %v3052 = vsel %vm1567, %v2906, %v2992
    %v3053 = vsel %vm1567, %v2947, %v3033
    %v3054 = vsel %vm1567, %v2949, %v3035
    %v3055 = vsel %vm1568, %v2908, %v2994
    %v3056 = vsel %vm1568, %v2910, %v2996
    %v3057 = vsel %vm1568, %v2951, %v3037
    %v3058 = vsel %vm1568, %v2953, %v3039
    %v3059 = vadd.f32 %v3042, %v3051
    %v3060 = vadd.f32 %v3043, %v3052
    %v3061 = vadd.f32 %v3044, %v3053
    %v3062 = vadd.f32 %v3045, %v3054
    %v3063 = vadd.f32 %v3047, %v3055
    %v3064 = vadd.f32 %v3048, %v3056
    %v3065 = vadd.f32 %v3049, %v3057
    %v3066 = vadd.f32 %v3050, %v3058
    %v3067 = vxor.u32 %v3059, 2147483648
    %v3068 = vxor.u32 %v3060, 2147483648
    %v3069 = vxor.u32 %v3061, 2147483648
    %v3070 = vxor.u32 %v3063, 2147483648
    %v3071 = vxor.u32 %v3064, 2147483648
    %v3072 = vxor.u32 %v3065, 2147483648
    %v3073 = vmul.f32 %v3067, 1.442695
    %v3074 = vpow.pop %v3073
    %v3075 = vmul.f32 %v3068, 1.442695
    %v3076 = vpow.pop %v3075
    %v3077 = vmul.f32 %v3069, 1.442695
    %v3078 = vpow.pop %v3077
    %v3079 = vmul.f32 %v3070, 1.442695
    %v3080 = vpow.pop %v3079
    %v3081 = vmul.f32 %v3071, 1.442695
    %v3082 = vpow.pop %v3081
    %v3083 = vmul.f32 %v3072, 1.442695
    %v3084 = vpow.pop %v3083
    %v3085 = vadd.f32 %v3074, 1.0
    %v3086 = vadd.f32 %v3076, 1.0
    %v3087 = vadd.f32 %v3078, 1.0
    %v3088 = vadd.f32 %v3080, 1.0
    %v3089 = vadd.f32 %v3082, 1.0
    %v3090 = vadd.f32 %v3084, 1.0
    %v3091 = vrcp.pop %v3085
    %v3092 = vmul.f32 1.0, %v3091
    %v3093 = vrcp.pop %v3086
    %v3094 = vmul.f32 1.0, %v3093
    %v3095 = vrcp.pop %v3087
    %v3096 = vmul.f32 1.0, %v3095
    %v3097 = vrcp.pop %v3088
    %v3098 = vmul.f32 1.0, %v3097
    %v3099 = vrcp.pop %v3089
    %v3100 = vmul.f32 1.0, %v3099
    %v3101 = vrcp.pop %v3090
    %v3102 = vmul.f32 1.0, %v3101
    %v3103 = vtanh.pop %v3062
    %v3104 = vtanh.pop %v3066
    %v3105 = vmul.f32 %v3094, %v2862
    %v3106 = vmul.f32 %v3100, %v2863
    %v3107 = vmul.f32 %v3092, %v3103
    %v3108 = vmul.f32 %v3098, %v3104
    %v3109 = vadd.f32 %v3105, %v3107
    %v3110 = vadd.f32 %v3106, %v3108
    %v3111 = vtanh.pop %v3109
    %v3112 = vtanh.pop %v3110
    %v3113 = vmul.f32 %v3096, %v3111
    %v3114 = vmul.f32 %v3102, %v3112
    %v3115 = vpack.c.bf16 %v3114, %v3113
    %3116 = vmatprep.subr.bf16.mxu0 %v1313
    %3117 = vmatpush1.bf16.msra.mxu0 %v1312
    %3118 = vmatprep.subr.bf16.mxu0 %v1305
    %3119 = vmatpush1.bf16.msra.mxu0 %v1304
    %3120 = vmatprep.subr.bf16.mxu0 %v1297
    %3121 = vmatpush1.bf16.msra.mxu0 %v1296
    %3122 = vmatprep.subr.bf16.mxu0 %v1289
    %3123 = vmatpush1.bf16.msra.mxu0 %v1288
    %3124 = vmatprep.subr.bf16.mxu0 %v1281
    %3125 = vmatpush1.bf16.msra.mxu0 %v1280
    %3126 = vmatprep.subr.bf16.mxu0 %v1273
    %3127 = vmatpush1.bf16.msra.mxu0 %v1272
    %3128 = vmatprep.subr.bf16.mxu0 %v1265
    %3129 = vmatpush1.bf16.msra.mxu0 %v1264
    %3130 = vmatprep.subr.bf16.mxu0 %v1257
    %3131 = vmatpush1.bf16.msra.mxu0 %v1256
    %3132 = vmatprep.subr.bf16.mxu0 0
    %3133 = vmatpush2.bf16.msra.mxu0 0
    %3134 = vmatprep.subr.bf16.mxu0 0
    %3135 = vmatpush2.bf16.msra.mxu0 0
    %3136 = vmatprep.subr.bf16.mxu0 0
    %3137 = vmatpush2.bf16.msra.mxu0 0
    %3138 = vmatprep.subr.bf16.mxu0 0
    %3139 = vmatpush2.bf16.msra.mxu0 0
    %3140 = vmatprep.subr.bf16.mxu0 0
    %3141 = vmatpush2.bf16.msra.mxu0 0
    %3142 = vmatprep.subr.bf16.mxu0 0
    %3143 = vmatpush2.bf16.msra.mxu0 0
    %3144 = vmatprep.subr.bf16.mxu0 0
    %3145 = vmatpush2.bf16.msra.mxu0 0
    %3146 = vmatprep.subr.bf16.mxu0 0
    %3147 = vmatpush2.bf16.msra.mxu0 0
    %3148 = vmatprep.mubr.bf16.mxu0 0
    %3149 = vmatmul.mubr.bf16.gmra.mxu0 %v3115
    %v3150 = vpop.f32.mrf.mxu0
    %v3151 = vadd.f32 0.0, %v3150
    %v3152 = vpop.f32.mrf.mxu0
    %v3153 = vadd.f32 0.0, %v3152
    %v3154 = vpop.f32.mrf.mxu0
    %v3155 = vadd.f32 0.0, %v3154
    %v3156 = vpop.f32.mrf.mxu0
    %v3157 = vadd.f32 0.0, %v3156
    %3158 = vdwg.mxu0
    %3159 = vmatprep.subr.bf16.mxu0 %v1315
    %3160 = vmatpush1.bf16.msra.mxu0 %v1314
    %3161 = vmatprep.subr.bf16.mxu0 %v1307
    %3162 = vmatpush1.bf16.msra.mxu0 %v1306
    %3163 = vmatprep.subr.bf16.mxu0 %v1299
    %3164 = vmatpush1.bf16.msra.mxu0 %v1298
    %3165 = vmatprep.subr.bf16.mxu0 %v1291
    %3166 = vmatpush1.bf16.msra.mxu0 %v1290
    %3167 = vmatprep.subr.bf16.mxu0 %v1283
    %3168 = vmatpush1.bf16.msra.mxu0 %v1282
    %3169 = vmatprep.subr.bf16.mxu0 %v1275
    %3170 = vmatpush1.bf16.msra.mxu0 %v1274
    %3171 = vmatprep.subr.bf16.mxu0 %v1267
    %3172 = vmatpush1.bf16.msra.mxu0 %v1266
    %3173 = vmatprep.subr.bf16.mxu0 %v1259
    %3174 = vmatpush1.bf16.msra.mxu0 %v1258
    %3175 = vmatprep.subr.bf16.mxu0 0
    %3176 = vmatpush2.bf16.msra.mxu0 0
    %3177 = vmatprep.subr.bf16.mxu0 0
    %3178 = vmatpush2.bf16.msra.mxu0 0
    %3179 = vmatprep.subr.bf16.mxu0 0
    %3180 = vmatpush2.bf16.msra.mxu0 0
    %3181 = vmatprep.subr.bf16.mxu0 0
    %3182 = vmatpush2.bf16.msra.mxu0 0
    %3183 = vmatprep.subr.bf16.mxu0 0
    %3184 = vmatpush2.bf16.msra.mxu0 0
    %3185 = vmatprep.subr.bf16.mxu0 0
    %3186 = vmatpush2.bf16.msra.mxu0 0
    %3187 = vmatprep.subr.bf16.mxu0 0
    %3188 = vmatpush2.bf16.msra.mxu0 0
    %3189 = vmatprep.subr.bf16.mxu0 0
    %3190 = vmatpush2.bf16.msra.mxu0 0
    %3191 = vmatprep.mubr.bf16.mxu0 0
    %3192 = vmatmul.mubr.bf16.gmra.mxu0 %v3115
    %v3193 = vpop.f32.mrf.mxu0
    %v3194 = vadd.f32 0.0, %v3193
    %v3195 = vpop.f32.mrf.mxu0
    %v3196 = vadd.f32 0.0, %v3195
    %v3197 = vpop.f32.mrf.mxu0
    %v3198 = vadd.f32 0.0, %v3197
    %v3199 = vpop.f32.mrf.mxu0
    %v3200 = vadd.f32 0.0, %v3199
    %3201 = vdwg.mxu0
    %3202 = vmatprep.subr.bf16.mxu0 %v1317
    %3203 = vmatpush1.bf16.msra.mxu0 %v1316
    %3204 = vmatprep.subr.bf16.mxu0 %v1309
    %3205 = vmatpush1.bf16.msra.mxu0 %v1308
    %3206 = vmatprep.subr.bf16.mxu0 %v1301
    %3207 = vmatpush1.bf16.msra.mxu0 %v1300
    %3208 = vmatprep.subr.bf16.mxu0 %v1293
    %3209 = vmatpush1.bf16.msra.mxu0 %v1292
    %3210 = vmatprep.subr.bf16.mxu0 %v1285
    %3211 = vmatpush1.bf16.msra.mxu0 %v1284
    %3212 = vmatprep.subr.bf16.mxu0 %v1277
    %3213 = vmatpush1.bf16.msra.mxu0 %v1276
    %3214 = vmatprep.subr.bf16.mxu0 %v1269
    %3215 = vmatpush1.bf16.msra.mxu0 %v1268
    %3216 = vmatprep.subr.bf16.mxu0 %v1261
    %3217 = vmatpush1.bf16.msra.mxu0 %v1260
    %3218 = vmatprep.subr.bf16.mxu0 0
    %3219 = vmatpush2.bf16.msra.mxu0 0
    %3220 = vmatprep.subr.bf16.mxu0 0
    %3221 = vmatpush2.bf16.msra.mxu0 0
    %3222 = vmatprep.subr.bf16.mxu0 0
    %3223 = vmatpush2.bf16.msra.mxu0 0
    %3224 = vmatprep.subr.bf16.mxu0 0
    %3225 = vmatpush2.bf16.msra.mxu0 0
    %3226 = vmatprep.subr.bf16.mxu0 0
    %3227 = vmatpush2.bf16.msra.mxu0 0
    %3228 = vmatprep.subr.bf16.mxu0 0
    %3229 = vmatpush2.bf16.msra.mxu0 0
    %3230 = vmatprep.subr.bf16.mxu0 0
    %3231 = vmatpush2.bf16.msra.mxu0 0
    %3232 = vmatprep.subr.bf16.mxu0 0
    %3233 = vmatpush2.bf16.msra.mxu0 0
    %3234 = vmatprep.mubr.bf16.mxu0 0
    %3235 = vmatmul.mubr.bf16.gmra.mxu0 %v3115
    %v3236 = vpop.f32.mrf.mxu0
    %v3237 = vadd.f32 0.0, %v3236
    %v3238 = vpop.f32.mrf.mxu0
    %v3239 = vadd.f32 0.0, %v3238
    %v3240 = vpop.f32.mrf.mxu0
    %v3241 = vadd.f32 0.0, %v3240
    %v3242 = vpop.f32.mrf.mxu0
    %v3243 = vadd.f32 0.0, %v3242
    %3244 = vdwg.mxu0
    %3245 = vmatprep.subr.bf16.mxu0 %v1319
    %3246 = vmatpush1.bf16.msra.mxu0 %v1318
    %3247 = vmatprep.subr.bf16.mxu0 %v1311
    %3248 = vmatpush1.bf16.msra.mxu0 %v1310
    %3249 = vmatprep.subr.bf16.mxu0 %v1303
    %3250 = vmatpush1.bf16.msra.mxu0 %v1302
    %3251 = vmatprep.subr.bf16.mxu0 %v1295
    %3252 = vmatpush1.bf16.msra.mxu0 %v1294
    %3253 = vmatprep.subr.bf16.mxu0 %v1287
    %3254 = vmatpush1.bf16.msra.mxu0 %v1286
    %3255 = vmatprep.subr.bf16.mxu0 %v1279
    %3256 = vmatpush1.bf16.msra.mxu0 %v1278
    %3257 = vmatprep.subr.bf16.mxu0 %v1271
    %3258 = vmatpush1.bf16.msra.mxu0 %v1270
    %3259 = vmatprep.subr.bf16.mxu0 %v1263
    %3260 = vmatpush1.bf16.msra.mxu0 %v1262
    %3261 = vmatprep.subr.bf16.mxu0 0
    %3262 = vmatpush2.bf16.msra.mxu0 0
    %3263 = vmatprep.subr.bf16.mxu0 0
    %3264 = vmatpush2.bf16.msra.mxu0 0
    %3265 = vmatprep.subr.bf16.mxu0 0
    %3266 = vmatpush2.bf16.msra.mxu0 0
    %3267 = vmatprep.subr.bf16.mxu0 0
    %3268 = vmatpush2.bf16.msra.mxu0 0
    %3269 = vmatprep.subr.bf16.mxu0 0
    %3270 = vmatpush2.bf16.msra.mxu0 0
    %3271 = vmatprep.subr.bf16.mxu0 0
    %3272 = vmatpush2.bf16.msra.mxu0 0
    %3273 = vmatprep.subr.bf16.mxu0 0
    %3274 = vmatpush2.bf16.msra.mxu0 0
    %3275 = vmatprep.subr.bf16.mxu0 0
    %3276 = vmatpush2.bf16.msra.mxu0 0
    %3277 = vmatprep.mubr.bf16.mxu0 0
    %3278 = vmatmul.mubr.bf16.gmra.mxu0 %v3115
    %v3279 = vpop.f32.mrf.mxu0
    %v3280 = vadd.f32 0.0, %v3279
    %v3281 = vpop.f32.mrf.mxu0
    %v3282 = vadd.f32 0.0, %v3281
    %v3283 = vpop.f32.mrf.mxu0
    %v3284 = vadd.f32 0.0, %v3283
    %v3285 = vpop.f32.mrf.mxu0
    %v3286 = vadd.f32 0.0, %v3285
    %3287 = vdwg.mxu0
    %s3288 = scalar_lea.vmem [#allocation2], 224
    %v3289 = vld [vmem:[%s3288] sm:$0xff]
    %v3290 = vld [vmem:[%s3288 + $0x8] sm:$0xff]
    %v3291 = vld [vmem:[%s3288 + $0x10] sm:$0xff]
    %v3292 = vld [vmem:[%s3288 + $0x18] sm:$0xff]
    %v3293 = vld [vmem:[#allocation3] sm:$0xff]
    %v3294 = vld [vmem:[#allocation3 + $0x8] sm:$0xff]
    %v3295 = vld [vmem:[#allocation3 + $0x10] sm:$0xff]
    %v3296 = vld [vmem:[#allocation3 + $0x18] sm:$0xff]
    %v3297 = vsel %vm1567, %v3151, %v3237
    %v3298 = vsel %vm1567, %v3153, %v3239
    %v3299 = vsel %vm1567, %v3194, %v3280
    %v3300 = vsel %vm1567, %v3196, %v3282
    %v3301 = vsel %vm1568, %v3155, %v3241
    %v3302 = vsel %vm1568, %v3157, %v3243
    %v3303 = vsel %vm1568, %v3198, %v3284
    %v3304 = vsel %vm1568, %v3200, %v3286
    %v3305 = vadd.f32 %v3289, %v3297
    %v3306 = vadd.f32 %v3290, %v3298
    %v3307 = vadd.f32 %v3291, %v3299
    %v3308 = vadd.f32 %v3292, %v3300
    %v3309 = vadd.f32 %v3293, %v3301
    %v3310 = vadd.f32 %v3294, %v3302
    %v3311 = vadd.f32 %v3295, %v3303
    %v3312 = vadd.f32 %v3296, %v3304
    %v3313 = vxor.u32 %v3305, 2147483648
    %v3314 = vxor.u32 %v3306, 2147483648
    %v3315 = vxor.u32 %v3307, 2147483648
    %v3316 = vxor.u32 %v3309, 2147483648
    %v3317 = vxor.u32 %v3310, 2147483648
    %v3318 = vxor.u32 %v3311, 2147483648
    %v3319 = vmul.f32 %v3313, 1.442695
    %v3320 = vpow.pop %v3319
    %v3321 = vmul.f32 %v3314, 1.442695
    %v3322 = vpow.pop %v3321
    %v3323 = vmul.f32 %v3315, 1.442695
    %v3324 = vpow.pop %v3323
    %v3325 = vmul.f32 %v3316, 1.442695
    %v3326 = vpow.pop %v3325
    %v3327 = vmul.f32 %v3317, 1.442695
    %v3328 = vpow.pop %v3327
    %v3329 = vmul.f32 %v3318, 1.442695
    %v3330 = vpow.pop %v3329
    %v3331 = vadd.f32 %v3320, 1.0
    %v3332 = vadd.f32 %v3322, 1.0
    %v3333 = vadd.f32 %v3324, 1.0
    %v3334 = vadd.f32 %v3326, 1.0
    %v3335 = vadd.f32 %v3328, 1.0
    %v3336 = vadd.f32 %v3330, 1.0
    %v3337 = vrcp.pop %v3331
    %v3338 = vmul.f32 1.0, %v3337
    %v3339 = vrcp.pop %v3332
    %v3340 = vmul.f32 1.0, %v3339
    %v3341 = vrcp.pop %v3333
    %v3342 = vmul.f32 1.0, %v3341
    %v3343 = vrcp.pop %v3334
    %v3344 = vmul.f32 1.0, %v3343
    %v3345 = vrcp.pop %v3335
    %v3346 = vmul.f32 1.0, %v3345
    %v3347 = vrcp.pop %v3336
    %v3348 = vmul.f32 1.0, %v3347
    %v3349 = vtanh.pop %v3308
    %v3350 = vtanh.pop %v3312
    %v3351 = vmul.f32 %v3340, %v3109
    %v3352 = vmul.f32 %v3346, %v3110
    %v3353 = vmul.f32 %v3338, %v3349
    %v3354 = vmul.f32 %v3344, %v3350
    %v3355 = vadd.f32 %v3351, %v3353
    %v3356 = vadd.f32 %v3352, %v3354
    %v3357 = vtanh.pop %v3355
    %v3358 = vtanh.pop %v3356
    %v3359 = vmul.f32 %v3342, %v3357
    %v3360 = vmul.f32 %v3348, %v3358
    %3361 = vst [vmem:[#allocation4] sm:$0xff] %v3359
    %3362 = vst [vmem:[#allocation4 + $0x8] sm:$0xff] %v3360
    %3363 = vst [vmem:[#allocation5] sm:$0xff] %v3355
    %3364 = vst [vmem:[#allocation5 + $0x8] sm:$0xff] %v3356
    // Predicated region
    $region70: #{tpu_custom_call.1} parent=1 // pred_check
      %p3365 = pneg %p133
    $region71: #{tpu_custom_call.1} parent=1 // pred_check_branch
      %3367 = sbr.rel (%p3365) target = $region73
    $region72: #{tpu_custom_call.1} parent=1 // pred_region
      %v3368 = vpack.c.bf16 %v3359, %v3359
      %v3369 = vpack.c.bf16 %v3360, %v3360
      %v3370 = vld [vmem:[#allocation15] sm:$0xf]
      %v3371 = vld [vmem:[#allocation15 + $0x4] sm:$0xf]
      %v3372 = vld [vmem:[#allocation15 + $0x8] sm:$0xf]
      %v3373 = vld [vmem:[#allocation15 + $0xc] sm:$0xf]
      %v3374 = vld [vmem:[#allocation15 + $0x10] sm:$0xf]
      %v3375 = vld [vmem:[#allocation15 + $0x14] sm:$0xf]
      %v3376 = vld [vmem:[#allocation15 + $0x18] sm:$0xf]
      %v3377 = vld [vmem:[#allocation15 + $0x1c] sm:$0xf]
      %v3378 = vld [vmem:[#allocation15 + $0x20] sm:$0xf]
      %v3379 = vld [vmem:[#allocation15 + $0x24] sm:$0xf]
      %v3380 = vld [vmem:[#allocation15 + $0x28] sm:$0xf]
      %v3381 = vld [vmem:[#allocation15 + $0x2c] sm:$0xf]
      %v3382 = vld [vmem:[#allocation15 + $0x30] sm:$0xf]
      %v3383 = vld [vmem:[#allocation15 + $0x34] sm:$0xf]
      %v3384 = vld [vmem:[#allocation15 + $0x38] sm:$0xf]
      %v3385 = vld [vmem:[#allocation15 + $0x3c] sm:$0xf]
      %v3386 = vld [vmem:[#allocation15 + $0x40] sm:$0xf]
      %v3387 = vld [vmem:[#allocation15 + $0x44] sm:$0xf]
      %v3388 = vld [vmem:[#allocation15 + $0x48] sm:$0xf]
      %v3389 = vld [vmem:[#allocation15 + $0x4c] sm:$0xf]
      %v3390 = vld [vmem:[#allocation15 + $0x50] sm:$0xf]
      %v3391 = vld [vmem:[#allocation15 + $0x54] sm:$0xf]
      %v3392 = vld [vmem:[#allocation15 + $0x58] sm:$0xf]
      %v3393 = vld [vmem:[#allocation15 + $0x5c] sm:$0xf]
      %v3394 = vld [vmem:[#allocation15 + $0x60] sm:$0xf]
      %v3395 = vld [vmem:[#allocation15 + $0x64] sm:$0xf]
      %v3396 = vld [vmem:[#allocation15 + $0x68] sm:$0xf]
      %v3397 = vld [vmem:[#allocation15 + $0x6c] sm:$0xf]
      %v3398 = vld [vmem:[#allocation15 + $0x70] sm:$0xf]
      %v3399 = vld [vmem:[#allocation15 + $0x74] sm:$0xf]
      %v3400 = vld [vmem:[#allocation15 + $0x78] sm:$0xf]
      %v3401 = vld [vmem:[#allocation15 + $0x7c] sm:$0xf]
      %v3402 = vld [vmem:[%s6] sm:$0x1]
      %v3404 = vlaneseq
      %v3405 = vshrl.u32 %v3404, 7
      %v3406 = vsub.s32 0, %v3405
      %v3407 = vrot.slane %v3402, %v3406
      %v3441 = vunpack.c.l.b16 %v3370
      %v3442 = vunpack.c.l.b16 %v3371
      %v3443 = vunpack.c.l.b16 %v3372
      %v3444 = vunpack.c.l.b16 %v3373
      %v3445 = vunpack.c.l.b16 %v3374
      %v3446 = vunpack.c.l.b16 %v3375
      %v3447 = vunpack.c.l.b16 %v3376
      %v3448 = vunpack.c.l.b16 %v3377
      %v3449 = vunpack.c.l.b16 %v3378
      %v3450 = vunpack.c.l.b16 %v3379
      %v3451 = vunpack.c.l.b16 %v3380
      %v3452 = vunpack.c.l.b16 %v3381
      %v3453 = vunpack.c.l.b16 %v3382
      %v3454 = vunpack.c.l.b16 %v3383
      %v3455 = vunpack.c.l.b16 %v3384
      %v3456 = vunpack.c.l.b16 %v3385
      %v3457 = vunpack.c.l.b16 %v3386
      %v3458 = vunpack.c.l.b16 %v3387
      %v3459 = vunpack.c.l.b16 %v3388
      %v3460 = vunpack.c.l.b16 %v3389
      %v3461 = vunpack.c.l.b16 %v3390
      %v3462 = vunpack.c.l.b16 %v3391
      %v3463 = vunpack.c.l.b16 %v3392
      %v3464 = vunpack.c.l.b16 %v3393
      %v3465 = vunpack.c.l.b16 %v3394
      %v3466 = vunpack.c.l.b16 %v3395
      %v3467 = vunpack.c.l.b16 %v3396
      %v3468 = vunpack.c.l.b16 %v3397
      %v3469 = vunpack.c.l.b16 %v3398
      %v3470 = vunpack.c.l.b16 %v3399
      %v3471 = vunpack.c.l.b16 %v3400
      %v3472 = vunpack.c.l.b16 %v3401
      %v3473 = vpack.c.b16 %v3442, %v3441
      %v3474 = vpack.c.b16 %v3444, %v3443
      %v3475 = vpack.c.b16 %v3446, %v3445
      %v3476 = vpack.c.b16 %v3448, %v3447
      %v3477 = vpack.c.b16 %v3450, %v3449
      %v3478 = vpack.c.b16 %v3452, %v3451
      %v3479 = vpack.c.b16 %v3454, %v3453
      %v3480 = vpack.c.b16 %v3456, %v3455
      %v3481 = vpack.c.b16 %v3458, %v3457
      %v3482 = vpack.c.b16 %v3460, %v3459
      %v3483 = vpack.c.b16 %v3462, %v3461
      %v3484 = vpack.c.b16 %v3464, %v3463
      %v3485 = vpack.c.b16 %v3466, %v3465
      %v3486 = vpack.c.b16 %v3468, %v3467
      %v3487 = vpack.c.b16 %v3470, %v3469
      %v3488 = vpack.c.b16 %v3472, %v3471
      %3505 = vmatprep.subr.bf16.mxu0 0
      %3506 = vmatpush1.bf16.msra.mxu0 %v3480
      %3507 = vmatprep.subr.bf16.mxu0 0
      %3508 = vmatpush1.bf16.msra.mxu0 %v3479
      %3509 = vmatprep.subr.bf16.mxu0 0
      %3510 = vmatpush1.bf16.msra.mxu0 %v3478
      %3511 = vmatprep.subr.bf16.mxu0 0
      %3512 = vmatpush1.bf16.msra.mxu0 %v3477
      %3513 = vmatprep.subr.bf16.mxu0 0
      %3514 = vmatpush1.bf16.msra.mxu0 %v3476
      %3515 = vmatprep.subr.bf16.mxu0 0
      %3516 = vmatpush1.bf16.msra.mxu0 %v3475
      %3517 = vmatprep.subr.bf16.mxu0 0
      %3518 = vmatpush1.bf16.msra.mxu0 %v3474
      %3519 = vmatprep.subr.bf16.mxu0 0
      %3520 = vmatpush1.bf16.msra.mxu0 %v3473
      %3521 = vmatprep.subr.bf16.mxu0 0
      %3522 = vmatpush2.bf16.msra.mxu0 %v3488
      %3523 = vmatprep.subr.bf16.mxu0 0
      %3524 = vmatpush2.bf16.msra.mxu0 %v3487
      %3525 = vmatprep.subr.bf16.mxu0 0
      %3526 = vmatpush2.bf16.msra.mxu0 %v3486
      %3527 = vmatprep.subr.bf16.mxu0 0
      %3528 = vmatpush2.bf16.msra.mxu0 %v3485
      %3529 = vmatprep.subr.bf16.mxu0 0
      %3530 = vmatpush2.bf16.msra.mxu0 %v3484
      %3531 = vmatprep.subr.bf16.mxu0 0
      %3532 = vmatpush2.bf16.msra.mxu0 %v3483
      %3533 = vmatprep.subr.bf16.mxu0 0
      %3534 = vmatpush2.bf16.msra.mxu0 %v3482
      %3535 = vmatprep.subr.bf16.mxu0 0
      %3536 = vmatpush2.bf16.msra.mxu0 %v3481
      %3537 = vmatprep.mubr.bf16.mxu0 %v3369
      %3538 = vmatmul.mubr.bf16.gmra.mxu0 %v3368
      %v3539 = vpop.f32.mrf.mxu0
      %v3540 = vadd.f32 %v3407, %v3539
      %v3541 = vpop.f32.mrf.mxu0
      %v3542 = vpop.f32.mrf.mxu0
      %v3543 = vpop.f32.mrf.mxu0
      %3544 = vdwg.mxu0
      %v3545 = vtanh.pop %v3540
      %v3546 = vpack.c.bf16 %v3545, %v3545
      %v3547 = vld [vmem:[#allocation17] sm:$0xf]
      %v3548 = vld [vmem:[#allocation17 + $0x4] sm:$0xf]
      %v3549 = vld [vmem:[#allocation17 + $0x8] sm:$0xf]
      %v3550 = vld [vmem:[#allocation17 + $0xc] sm:$0xf]
      %v3551 = vld [vmem:[#allocation17 + $0x10] sm:$0xf]
      %v3552 = vld [vmem:[#allocation17 + $0x14] sm:$0xf]
      %v3553 = vld [vmem:[#allocation17 + $0x18] sm:$0xf]
      %v3554 = vld [vmem:[#allocation17 + $0x1c] sm:$0xf]
      %v3555 = vld [vmem:[#allocation17 + $0x20] sm:$0xf]
      %v3556 = vld [vmem:[#allocation17 + $0x24] sm:$0xf]
      %v3557 = vld [vmem:[#allocation17 + $0x28] sm:$0xf]
      %v3558 = vld [vmem:[#allocation17 + $0x2c] sm:$0xf]
      %v3559 = vld [vmem:[#allocation17 + $0x30] sm:$0xf]
      %v3560 = vld [vmem:[#allocation17 + $0x34] sm:$0xf]
      %v3561 = vld [vmem:[#allocation17 + $0x38] sm:$0xf]
      %v3562 = vld [vmem:[#allocation17 + $0x3c] sm:$0xf]
      %v3563 = vld [vmem:[%s8] sm:$0x1]
      %v3565 = vlaneseq
      %v3566 = vshrl.u32 %v3565, 7
      %v3567 = vsub.s32 0, %v3566
      %v3568 = vrot.slane %v3563, %v3567
      %v3586 = vunpack.c.l.b16 %v3547
      %v3587 = vunpack.c.l.b16 %v3548
      %v3588 = vunpack.c.l.b16 %v3549
      %v3589 = vunpack.c.l.b16 %v3550
      %v3590 = vunpack.c.l.b16 %v3551
      %v3591 = vunpack.c.l.b16 %v3552
      %v3592 = vunpack.c.l.b16 %v3553
      %v3593 = vunpack.c.l.b16 %v3554
      %v3594 = vunpack.c.l.b16 %v3555
      %v3595 = vunpack.c.l.b16 %v3556
      %v3596 = vunpack.c.l.b16 %v3557
      %v3597 = vunpack.c.l.b16 %v3558
      %v3598 = vunpack.c.l.b16 %v3559
      %v3599 = vunpack.c.l.b16 %v3560
      %v3600 = vunpack.c.l.b16 %v3561
      %v3601 = vunpack.c.l.b16 %v3562
      %v3602 = vpack.c.b16 %v3587, %v3586
      %v3603 = vpack.c.b16 %v3589, %v3588
      %v3604 = vpack.c.b16 %v3591, %v3590
      %v3605 = vpack.c.b16 %v3593, %v3592
      %v3606 = vpack.c.b16 %v3595, %v3594
      %v3607 = vpack.c.b16 %v3597, %v3596
      %v3608 = vpack.c.b16 %v3599, %v3598
      %v3609 = vpack.c.b16 %v3601, %v3600
      %3618 = vmatprep.subr.bf16.mxu0 0
      %3619 = vmatpush1.bf16.msra.mxu0 %v3609
      %3620 = vmatprep.subr.bf16.mxu0 0
      %3621 = vmatpush1.bf16.msra.mxu0 %v3608
      %3622 = vmatprep.subr.bf16.mxu0 0
      %3623 = vmatpush1.bf16.msra.mxu0 %v3607
      %3624 = vmatprep.subr.bf16.mxu0 0
      %3625 = vmatpush1.bf16.msra.mxu0 %v3606
      %3626 = vmatprep.subr.bf16.mxu0 0
      %3627 = vmatpush1.bf16.msra.mxu0 %v3605
      %3628 = vmatprep.subr.bf16.mxu0 0
      %3629 = vmatpush1.bf16.msra.mxu0 %v3604
      %3630 = vmatprep.subr.bf16.mxu0 0
      %3631 = vmatpush1.bf16.msra.mxu0 %v3603
      %3632 = vmatprep.subr.bf16.mxu0 0
      %3633 = vmatpush1.bf16.msra.mxu0 %v3602
      %3634 = vmatprep.subr.bf16.mxu0 0
      %3635 = vmatpush2.bf16.msra.mxu0 0
      %3636 = vmatprep.subr.bf16.mxu0 0
      %3637 = vmatpush2.bf16.msra.mxu0 0
      %3638 = vmatprep.subr.bf16.mxu0 0
      %3639 = vmatpush2.bf16.msra.mxu0 0
      %3640 = vmatprep.subr.bf16.mxu0 0
      %3641 = vmatpush2.bf16.msra.mxu0 0
      %3642 = vmatprep.subr.bf16.mxu0 0
      %3643 = vmatpush2.bf16.msra.mxu0 0
      %3644 = vmatprep.subr.bf16.mxu0 0
      %3645 = vmatpush2.bf16.msra.mxu0 0
      %3646 = vmatprep.subr.bf16.mxu0 0
      %3647 = vmatpush2.bf16.msra.mxu0 0
      %3648 = vmatprep.subr.bf16.mxu0 0
      %3649 = vmatpush2.bf16.msra.mxu0 0
      %3650 = vmatprep.mubr.bf16.mxu0 0
      %3651 = vmatmul.mubr.bf16.gmra.mxu0 %v3546
      %v3652 = vpop.f32.mrf.mxu0
      %v3653 = vadd.f32 %v3568, %v3652
      %v3654 = vpop.f32.mrf.mxu0
      %v3655 = vpop.f32.mrf.mxu0
      %v3656 = vpop.f32.mrf.mxu0
      %3657 = vdwg.mxu0
      %3658 = vst [vmem:[#allocation18] sm:$0xff] %v3653
    $region73: #{tpu_custom_call.1} parent=1 // pred_fallthru
      _
    // Predicated region
    $region74: #{tpu_custom_call.1} parent=1 // pred_check
      _
    $region75: #{tpu_custom_call.1} parent=1 // pred_check_branch
      %3660 = sbr.rel (0) target = $region77
    $region76: #{tpu_custom_call.1} parent=1 // pred_region
      %s3662 = ssub.s32 128, 128
      %3663 = vsyncadd [#allocation8], %s3662
      %s3665 = sshll.u32 [#allocation18], 4
      %s3666 = int_to_ptr.vmem [resolvable:$true] %s3665
      %3668 = dma.vmem_to_hbm [thread:$0]  %s3666, 128, %s9, [#allocation8]
    $region77: #{tpu_custom_call.1} parent=1 // pred_fallthru
      _
    // Predicated region
    $region78: #{tpu_custom_call.1} parent=1 // pred_check
      _
    $region79: #{tpu_custom_call.1} parent=1 // pred_check_branch
      %3670 = sbr.rel (0) target = $region81
    $region80: #{tpu_custom_call.1} parent=1 // pred_region
      %3671 = dma.done [#allocation8], 128
    $region81: #{tpu_custom_call.1} parent=1 // pred_fallthru
      _
    %3672 = vsyncpa [#allocation7], 1
    %3673 = vsyncpa [#allocation10], 1
    %3674 = vsyncpa [#allocation13], 1
    %3675 = vsyncpa [#allocation16], 1
    %3676 = vsyncpa [#allocation8], 1

</llo_original>
